<compile_context>
chip_gen: v7x
topology: tpu7x:2x2x1
jax: 0.10.0
libtpu: 0.0.40
codegen_flags: <defaults>
</compile_context>

<pallas_src>
import functools

import jax
import jax.numpy as jnp
from jax import lax
from jax.experimental import pallas as pl
from jax.experimental.pallas import tpu as pltpu

BN_EPS = 1e-3


# ----------------------------------------------------------------------------
# Config (mirrors the PyTorch InvertedResidualConfig)
# ----------------------------------------------------------------------------
def _make_divisible(v, divisor, min_value=None):
    if min_value is None:
        min_value = divisor
    new_v = max(min_value, int(v + divisor / 2) // divisor * divisor)
    if new_v < 0.9 * v:
        new_v += divisor
    return new_v


class InvertedResidualConfig:
    def __init__(self, input_channels, kernel, expanded_channels, out_channels,
                 use_se, activation, stride, dilation, width_mult):
        self.input_channels = self.adjust_channels(input_channels, width_mult)
        self.kernel = kernel
        self.expanded_channels = self.adjust_channels(expanded_channels, width_mult)
        self.out_channels = self.adjust_channels(out_channels, width_mult)
        self.use_se = use_se
        self.use_hs = activation == "HS"
        self.stride = stride
        self.dilation = dilation

    @staticmethod
    def adjust_channels(channels, width_mult):
        return _make_divisible(channels * width_mult, 8)

    @property
    def use_res_connect(self):
        return self.stride == 1 and self.input_channels == self.out_channels

    @property
    def has_expand(self):
        return self.expanded_channels != self.input_channels

    @property
    def se_channels(self):
        # The quantizable module passes `squeeze_channels` into SqueezeExcitation's
        # `squeeze_factor` positional slot -> replicate that literal behaviour.
        squeeze_factor = _make_divisible(self.expanded_channels // 4, 8)
        return _make_divisible(self.expanded_channels // squeeze_factor, 8)


def _hardswish(x):
    return x * (jnp.clip(x + 3.0, 0.0, 6.0) * (1.0 / 6.0))


def _hardsigmoid(x):
    return jnp.clip(x + 3.0, 0.0, 6.0) * (1.0 / 6.0)


def _act(x, use_hs):
    return _hardswish(x) if use_hs else jnp.maximum(x, 0.0)


def _strips(total, size):
    return [(s, min(size, total - s)) for s in range(0, total, size)]


# ----------------------------------------------------------------------------
# Pallas kernel
# ----------------------------------------------------------------------------
def _inverted_residual_kernel(*refs, nb, h, w, ho, wo, k, stride, dilation, pad,
                              row_block, has_expand, use_se, use_hs, use_res):
    it = iter(refs)
    x_ref = next(it)
    if has_expand:
        w_exp_ref = next(it)
        b_exp_ref = next(it)
    w_dw_ref = next(it)
    b_dw_ref = next(it)
    if use_se:
        w1_ref = next(it)
        b1_ref = next(it)
        w2_ref = next(it)
        b2_ref = next(it)
    w_pj_ref = next(it)
    b_pj_ref = next(it)
    o_ref = next(it)
    xp_ref = next(it)                              # padded activation scratch
    dw_ref = next(it) if use_se else None          # depthwise output scratch (SE only)

    c_in = x_ref.shape[-1]
    c_exp = xp_ref.shape[-1]
    c_out = o_ref.shape[-1]
    mm_dt = w_pj_ref.dtype                         # matmul operand dtype (f32 or bf16)

    # ---- zero only the halo ring of the padded scratch --------------------------
    # The interior is fully overwritten every grid step; the ring is a tiny
    # fraction of the buffer and zeroing it each step stays correct even when the
    # "parallel" grid is sharded across TensorCores.
    if pad > 0:
        hp, wp = h + 2 * pad, w + 2 * pad
        xp_ref[:, 0:pad, :, :] = jnp.zeros((nb, pad, wp, c_exp), xp_ref.dtype)
        xp_ref[:, pad + h:hp, :, :] = jnp.zeros((nb, pad, wp, c_exp), xp_ref.dtype)
        xp_ref[:, pad:pad + h, 0:pad, :] = jnp.zeros((nb, h, pad, c_exp), xp_ref.dtype)
        xp_ref[:, pad:pad + h, pad + w:wp, :] = jnp.zeros((nb, h, pad, c_exp), xp_ref.dtype)

    # ---- expand: 1x1 conv (+folded BN) + activation, strip-by-strip -------------
    for r0, rows in _strips(h, row_block):
        xs = x_ref[:, r0:r0 + rows, :, :]
        if has_expand:
            y = jnp.dot(xs.reshape(nb * rows * w, c_in).astype(mm_dt), w_exp_ref[...],
                        preferred_element_type=jnp.float32) + b_exp_ref[...]
            y = _act(y, use_hs).reshape(nb, rows, w, c_exp)
        else:
            y = xs.astype(jnp.float32)
        xp_ref[:, pad + r0:pad + r0 + rows, pad:pad + w, :] = y.astype(xp_ref.dtype)

    ws_len = (wo - 1) * stride + 1

    def dw_strip(r0, rows):
        """Depthwise k x k conv + folded BN for output rows [r0, r0+rows)."""
        hs_len = (rows - 1) * stride + 1
        acc = jnp.broadcast_to(b_dw_ref[...], (nb, rows, wo, c_exp)).astype(jnp.float32)
        for dy in range(k):
            for dx in range(k):
                rr = r0 * stride + dy * dilation
                cc = dx * dilation
                # Per-tap window read straight from the ref (small live range).
                win = xp_ref[:, rr:rr + hs_len, cc:cc + ws_len, :].astype(jnp.float32)
                if stride > 1:
                    win = lax.slice(win, (0, 0, 0, 0), (nb, hs_len, ws_len, c_exp),
                                    (1, stride, stride, 1))
                acc = acc + win * w_dw_ref[dy * k + dx, :].astype(jnp.float32)
        return acc

    def project_store(r0, rows, y):
        """Activation, 1x1 projection (+folded BN), residual, store one strip."""
        y = _act(y, use_hs)
        out = jnp.dot(y.reshape(nb * rows * wo, c_exp).astype(mm_dt), w_pj_ref[...],
                      preferred_element_type=jnp.float32) + b_pj_ref[...]
        out = out.reshape(nb, rows, wo, c_out)
        if use_res:
            # Re-read x here instead of keeping it live through the whole kernel.
            out = out + x_ref[:, r0:r0 + rows, :, :].astype(jnp.float32)
        o_ref[:, r0:r0 + rows, :, :] = out.astype(o_ref.dtype)

    if use_se:
        # Pass 1: depthwise per strip -> VMEM scratch, accumulate SE pooled sums.
        pooled = jnp.zeros((nb, c_exp), jnp.float32)
        for r0, rows in _strips(ho, row_block):
            acc = dw_strip(r0, rows)
            dw_ref[:, r0:r0 + rows, :, :] = acc
            # Reduce H first (cheap VPU adds), then the small W axis (XLU).
            pooled = pooled + jnp.sum(jnp.sum(acc, axis=1), axis=1)
        pooled = pooled * (1.0 / (ho * wo))
        t = jnp.dot(pooled.astype(mm_dt), w1_ref[...],
                    preferred_element_type=jnp.float32) + b1_ref[...]
        t = jnp.maximum(t, 0.0)
        se = jnp.dot(t.astype(mm_dt), w2_ref[...],
                     preferred_element_type=jnp.float32) + b2_ref[...]
        se = _hardsigmoid(se)                                   # (nb, c_exp)
        # Pass 2: scale, activate, project, residual, store per strip.
        for r0, rows in _strips(ho, row_block):
            y = dw_ref[:, r0:r0 + rows, :, :] * se[:, None, None, :]
            project_store(r0, rows, y)
    else:
        for r0, rows in _strips(ho, row_block):
            project_store(r0, rows, dw_strip(r0, rows))


# ----------------------------------------------------------------------------
# Host-side wrapper: BN folding, layout, pallas_call
# ----------------------------------------------------------------------------
def _prepare_kernel_params(params, cnf, weight_dtype):
    """Fold BN into convs, lay weights out channels-last / contraction-first."""
    ops = []

    def fold_1x1(w_oihw, bn):
        g, b, m, v = bn
        sc = g / jnp.sqrt(v + BN_EPS)
        wmat = w_oihw[:, :, 0, 0]                                    # (O, I)
        return [(wmat * sc[:, None]).T.astype(weight_dtype),         # (I, O)
                ((b - m * sc)[None, :]).astype(jnp.float32)]         # (1, O)

    if cnf.has_expand:
        ops += fold_1x1(params["w_exp"], params["bn_exp"])

    g, b, m, v = params["bn_dw"]
    sc = g / jnp.sqrt(v + BN_EPS)
    k = cnf.kernel
    wd = params["w_dw"][:, 0, :, :]                                  # (C_exp, k, k)
    w_dw = (wd * sc[:, None, None]).transpose(1, 2, 0).reshape(k * k, -1)
    ops += [w_dw.astype(weight_dtype),                               # (k*k, C_exp)
            ((b - m * sc)[None, :]).astype(jnp.float32)]             # (1, C_exp)

    if cnf.use_se:
        ops += [params["w_se1"][:, :, 0, 0].T.astype(weight_dtype),  # (C_exp, S)
                params["b_se1"][None, :].astype(jnp.float32),        # (1, S)
                params["w_se2"][:, :, 0, 0].T.astype(weight_dtype),  # (S, C_exp)
                params["b_se2"][None, :].astype(jnp.float32)]        # (1, C_exp)

    ops += fold_1x1(params["w_pj"], params["bn_pj"])
    return ops


def _padded_bytes(shape, dtype):
    """VMEM footprint estimate with (8, 128) tile padding on the last two dims."""
    dims = list(shape)
    dims[-1] = -(-dims[-1] // 128) * 128
    if len(dims) >= 2:
        dims[-2] = -(-dims[-2] // 8) * 8
    n = 1
    for d in dims:
        n *= d
    return n * jnp.dtype(dtype).itemsize


def inverted_residual(x_nhwc, params, cnf, *, block_n=2, row_block=4,
                      weight_dtype=jnp.float32):
    """Fused InvertedResidual forward.  Input/output are NHWC (channels on lanes).

    weight_dtype=jnp.bfloat16 halves weight/activation-scratch traffic and doubles
    MXU throughput on v6e/v7x (f32 accumulation is kept); default f32 for accuracy.
    """
    N, H, W, c_in = x_nhwc.shape
    assert c_in == cnf.input_channels
    assert N % block_n == 0
    k, s, d = cnf.kernel, cnf.stride, cnf.dilation
    # NOTE: follows the given spec literally (stride is NOT forced to 1 when dilation>1).
    pad = (k - 1) // 2 * d
    Ho = (H + 2 * pad - d * (k - 1) - 1) // s + 1
    Wo = (W + 2 * pad - d * (k - 1) - 1) // s + 1
    c_exp, c_out = cnf.expanded_channels, cnf.out_channels
    row_block = max(1, min(row_block, Ho))

    weight_ops = _prepare_kernel_params(params, cnf, weight_dtype)

    in_specs = [pl.BlockSpec((block_n, H, W, c_in), lambda n: (n, 0, 0, 0))]
    in_specs += [pl.BlockSpec(a.shape, lambda n: (0, 0)) for a in weight_ops]
    out_spec = pl.BlockSpec((block_n, Ho, Wo, c_out), lambda n: (n, 0, 0, 0))

    xp_shape = (block_n, H + 2 * pad, W + 2 * pad, c_exp)
    dw_shape = (block_n, Ho, Wo, c_exp)
    scratch_shapes = [pltpu.VMEM(xp_shape, weight_dtype)]
    if cnf.use_se:
        scratch_shapes.append(pltpu.VMEM(dw_shape, jnp.float32))

    # Explicit VMEM budget (default scoped limit is far below physical).
    vmem_need = 2 * (_padded_bytes((block_n, H, W, c_in), x_nhwc.dtype)
                     + _padded_bytes((block_n, Ho, Wo, c_out), x_nhwc.dtype)
                     + sum(_padded_bytes(a.shape, a.dtype) for a in weight_ops))
    vmem_need += _padded_bytes(xp_shape, weight_dtype)
    if cnf.use_se:
        vmem_need += _padded_bytes(dw_shape, jnp.float32)
    vmem_limit = int(min(64 * 1024 * 1024, max(32 * 1024 * 1024, 2 * vmem_need)))

    # Advisory cost estimate so XLA schedules/overlaps the custom call correctly.
    flops = 2 * N * Ho * Wo * c_exp * (k * k + c_out)
    if cnf.has_expand:
        flops += 2 * N * H * W * c_in * c_exp
    if cnf.use_se:
        flops += 4 * N * c_exp * cnf.se_channels
    bytes_accessed = (int(x_nhwc.size) * x_nhwc.dtype.itemsize
                      + N * Ho * Wo * c_out * x_nhwc.dtype.itemsize
                      + sum(int(a.size) * a.dtype.itemsize for a in weight_ops))

    kernel = functools.partial(
        _inverted_residual_kernel,
        nb=block_n, h=H, w=W, ho=Ho, wo=Wo, k=k, stride=s, dilation=d, pad=pad,
        row_block=row_block, has_expand=cnf.has_expand, use_se=cnf.use_se,
        use_hs=cnf.use_hs, use_res=cnf.use_res_connect)

    return pl.pallas_call(
        kernel,
        out_shape=jax.ShapeDtypeStruct((N, Ho, Wo, c_out), x_nhwc.dtype),
        grid_spec=pltpu.PrefetchScalarGridSpec(
            num_scalar_prefetch=0,
            grid=(N // block_n,),
            in_specs=in_specs,
            out_specs=out_spec,
            scratch_shapes=scratch_shapes),
        compiler_params=pltpu.CompilerParams(
            dimension_semantics=("parallel",),
            vmem_limit_bytes=vmem_limit),
        cost_estimate=pl.CostEstimate(flops=flops, transcendentals=0,
                                      bytes_accessed=bytes_accessed),
    )(x_nhwc, *weight_ops)


# ----------------------------------------------------------------------------
# Pure-JAX reference (unfolded BN, NHWC) and synthetic params
# ----------------------------------------------------------------------------
def _reference_nhwc(x, params, cnf):
    k, s, d = cnf.kernel, cnf.stride, cnf.dilation
    pad = (k - 1) // 2 * d

    def bn(t, stats):
        g, b, m, v = stats
        sc = g / jnp.sqrt(v + BN_EPS)
        return (t - m) * sc + b

    def act(t):
        return _hardswish(t) if cnf.use_hs else jnp.maximum(t, 0.0)

    h = x
    if cnf.has_expand:
        h = jnp.einsum("nhwc,oc->nhwo", h, params["w_exp"][:, :, 0, 0])
        h = act(bn(h, params["bn_exp"]))
    w_dw = jnp.transpose(params["w_dw"], (2, 3, 1, 0))          # (k, k, 1, C_exp)
    h = lax.conv_general_dilated(h, w_dw, (s, s), [(pad, pad), (pad, pad)],
                                 rhs_dilation=(d, d),
                                 dimension_numbers=("NHWC", "HWIO", "NHWC"),
                                 feature_group_count=cnf.expanded_channels)
    h = bn(h, params["bn_dw"])
    if cnf.use_se:
        pooled = jnp.mean(h, axis=(1, 2))                       # (N, C_exp)
        t = jnp.maximum(pooled @ params["w_se1"][:, :, 0, 0].T + params["b_se1"], 0.0)
        scale = _hardsigmoid(t @ params["w_se2"][:, :, 0, 0].T + params["b_se2"])
        h = h * scale[:, None, None, :]
    h = act(h)
    h = jnp.einsum("nhwc,oc->nhwo", h, params["w_pj"][:, :, 0, 0])
    h = bn(h, params["bn_pj"])
    if cnf.use_res_connect:
        h = h + x
    return h


def _init_params(key, cnf):
    c_in, c_exp, c_out = cnf.input_channels, cnf.expanded_channels, cnf.out_channels
    s_ch, k = cnf.se_channels, cnf.kernel
    keys = jax.random.split(key, 10)

    def bn_stats(kk, c):
        k1, k2, k3, k4 = jax.random.split(kk, 4)
        return (1.0 + 0.1 * jax.random.normal(k1, (c,), jnp.float32),
                0.1 * jax.random.normal(k2, (c,), jnp.float32),
                0.1 * jax.random.normal(k3, (c,), jnp.float32),
                jnp.abs(1.0 + 0.1 * jax.random.normal(k4, (c,), jnp.float32)))

    p = {}
    if cnf.has_expand:
        p["w_exp"] = 0.2 * jax.random.normal(keys[0], (c_exp, c_in, 1, 1), jnp.float32)
        p["bn_exp"] = bn_stats(keys[1], c_exp)
    p["w_dw"] = 0.2 * jax.random.normal(keys[2], (c_exp, 1, k, k), jnp.float32)
    p["bn_dw"] = bn_stats(keys[3], c_exp)
    if cnf.use_se:
        p["w_se1"] = 0.2 * jax.random.normal(keys[4], (s_ch, c_exp, 1, 1), jnp.float32)
        p["b_se1"] = 0.1 * jax.random.normal(keys[5], (s_ch,), jnp.float32)
        p["w_se2"] = 0.2 * jax.random.normal(keys[6], (c_exp, s_ch, 1, 1), jnp.float32)
        p["b_se2"] = 0.1 * jax.random.normal(keys[7], (c_exp,), jnp.float32)
    p["w_pj"] = 0.2 * jax.random.normal(keys[8], (c_out, c_exp, 1, 1), jnp.float32)
    p["bn_pj"] = bn_stats(keys[9], c_out)
    return p


if __name__ == "__main__":
    cnf = InvertedResidualConfig(
        input_channels=16, kernel=3, expanded_channels=64, out_channels=16,
        use_se=True, activation="HS", stride=1, dilation=1, width_mult=1.0)

    key = jax.random.PRNGKey(0)
    kx, kp = jax.random.split(key)
    N, H, W = 8, 16, 16
    x = jax.random.normal(kx, (N, H, W, cnf.input_channels), dtype=jnp.float32)  # NHWC
    params = _init_params(kp, cnf)

    out = inverted_residual(x, params, cnf, block_n=2, row_block=4)
    out = jax.block_until_ready(out)

    ref = _reference_nhwc(x, params, cnf)
    assert out.shape == ref.shape and out.dtype == ref.dtype
    max_err = float(jnp.max(jnp.abs(out - ref)))
    assert jnp.allclose(out, ref, atol=1e-2, rtol=1e-2), f"max abs err = {max_err}"
    print("KERNEL_OK")
</pallas_src>

<mosaic_0001>
module attributes {stable_mosaic.version = 11 : i64} {
  func.func @_inverted_residual_kernel(%arg0: i32, %arg1: memref<2x16x16x16xf32, #tpu.memory_space<vmem>>, %arg2: memref<16x64xf32, #tpu.memory_space<vmem>>, %arg3: memref<1x64xf32, #tpu.memory_space<vmem>>, %arg4: memref<9x64xf32, #tpu.memory_space<vmem>>, %arg5: memref<1x64xf32, #tpu.memory_space<vmem>>, %arg6: memref<64x8xf32, #tpu.memory_space<vmem>>, %arg7: memref<1x8xf32, #tpu.memory_space<vmem>>, %arg8: memref<8x64xf32, #tpu.memory_space<vmem>>, %arg9: memref<1x64xf32, #tpu.memory_space<vmem>>, %arg10: memref<64x16xf32, #tpu.memory_space<vmem>>, %arg11: memref<1x16xf32, #tpu.memory_space<vmem>>, %arg12: memref<2x16x16x16xf32, #tpu.memory_space<vmem>>, %arg13: memref<2x18x18x64xf32, #tpu.memory_space<vmem>>, %arg14: memref<2x16x16x64xf32, #tpu.memory_space<vmem>>) attributes {dimension_semantics = [#tpu.dimension_semantics<parallel>], iteration_bounds = array<i64: 4>, scalar_prefetch = 0 : i64, scratch_operands = 2 : i64, tpu.core_type = #tpu.core_type<tc>, window_params = [{transform_indices = @transform_0, window_bounds = array<i64: 2, 16, 16, 16>}, {pipeline_mode = #tpu.pipeline_mode<synchronous>, transform_indices = @transform_1, window_bounds = array<i64: 16, 64>}, {pipeline_mode = #tpu.pipeline_mode<synchronous>, transform_indices = @transform_2, window_bounds = array<i64: 1, 64>}, {pipeline_mode = #tpu.pipeline_mode<synchronous>, transform_indices = @transform_3, window_bounds = array<i64: 9, 64>}, {pipeline_mode = #tpu.pipeline_mode<synchronous>, transform_indices = @transform_4, window_bounds = array<i64: 1, 64>}, {pipeline_mode = #tpu.pipeline_mode<synchronous>, transform_indices = @transform_5, window_bounds = array<i64: 64, 8>}, {pipeline_mode = #tpu.pipeline_mode<synchronous>, transform_indices = @transform_6, window_bounds = array<i64: 1, 8>}, {pipeline_mode = #tpu.pipeline_mode<synchronous>, transform_indices = @transform_7, window_bounds = array<i64: 8, 64>}, {pipeline_mode = #tpu.pipeline_mode<synchronous>, transform_indices = @transform_8, window_bounds = array<i64: 1, 64>}, {pipeline_mode = #tpu.pipeline_mode<synchronous>, transform_indices = @transform_9, window_bounds = array<i64: 64, 16>}, {pipeline_mode = #tpu.pipeline_mode<synchronous>, transform_indices = @transform_10, window_bounds = array<i64: 1, 16>}, {transform_indices = @transform_11, window_bounds = array<i64: 2, 16, 16, 16>}]} {
    %cst = arith.constant 0.000000e+00 : f32
    %0 = vector.broadcast %cst : f32 to vector<2x1x18x64xf32>
    %c0 = arith.constant 0 : index
    %c0_0 = arith.constant 0 : index
    %c0_1 = arith.constant 0 : index
    %c0_2 = arith.constant 0 : index
    %1 = vector.load %arg13[%c0, %c0_0, %c0_1, %c0_2] : memref<2x18x18x64xf32, #tpu.memory_space<vmem>>, vector<2x1x18x64xf32>
    tpu.vector_store %arg13[%c0, %c0_0, %c0_1, %c0_2], %0 {strides = array<i32>} : memref<2x18x18x64xf32, #tpu.memory_space<vmem>>, vector<2x1x18x64xf32>,
    %cst_3 = arith.constant 0.000000e+00 : f32
    %2 = vector.broadcast %cst_3 : f32 to vector<2x1x18x64xf32>
    %c0_4 = arith.constant 0 : index
    %c17 = arith.constant 17 : index
    %c0_5 = arith.constant 0 : index
    %c0_6 = arith.constant 0 : index
    %3 = vector.load %arg13[%c0_4, %c17, %c0_5, %c0_6] : memref<2x18x18x64xf32, #tpu.memory_space<vmem>>, vector<2x1x18x64xf32>
    tpu.vector_store %arg13[%c0_4, %c17, %c0_5, %c0_6], %2 {strides = array<i32>} : memref<2x18x18x64xf32, #tpu.memory_space<vmem>>, vector<2x1x18x64xf32>,
    %cst_7 = arith.constant 0.000000e+00 : f32
    %4 = vector.broadcast %cst_7 : f32 to vector<2x16x1x64xf32>
    %c0_8 = arith.constant 0 : index
    %c1 = arith.constant 1 : index
    %c0_9 = arith.constant 0 : index
    %c0_10 = arith.constant 0 : index
    %5 = vector.load %arg13[%c0_8, %c1, %c0_9, %c0_10] : memref<2x18x18x64xf32, #tpu.memory_space<vmem>>, vector<2x16x1x64xf32>
    tpu.vector_store %arg13[%c0_8, %c1, %c0_9, %c0_10], %4 {strides = array<i32>} : memref<2x18x18x64xf32, #tpu.memory_space<vmem>>, vector<2x16x1x64xf32>,
    %cst_11 = arith.constant 0.000000e+00 : f32
    %6 = vector.broadcast %cst_11 : f32 to vector<2x16x1x64xf32>
    %c0_12 = arith.constant 0 : index
    %c1_13 = arith.constant 1 : index
    %c17_14 = arith.constant 17 : index
    %c0_15 = arith.constant 0 : index
    %7 = vector.load %arg13[%c0_12, %c1_13, %c17_14, %c0_15] : memref<2x18x18x64xf32, #tpu.memory_space<vmem>>, vector<2x16x1x64xf32>
    tpu.vector_store %arg13[%c0_12, %c1_13, %c17_14, %c0_15], %6 {strides = array<i32>} : memref<2x18x18x64xf32, #tpu.memory_space<vmem>>, vector<2x16x1x64xf32>,
    %c0_16 = arith.constant 0 : index
    %c0_17 = arith.constant 0 : index
    %c0_18 = arith.constant 0 : index
    %c0_19 = arith.constant 0 : index
    %8 = vector.load %arg1[%c0_16, %c0_17, %c0_18, %c0_19] : memref<2x16x16x16xf32, #tpu.memory_space<vmem>>, vector<2x4x16x16xf32>
    %9 = vector.shape_cast %8 : vector<2x4x16x16xf32> to vector<128x16xf32>
    %c0_20 = arith.constant 0 : index
    %c0_21 = arith.constant 0 : index
    %10 = vector.load %arg2[%c0_20, %c0_21] : memref<16x64xf32, #tpu.memory_space<vmem>>, vector<16x64xf32>
    %cst_22 = arith.constant dense<0.000000e+00> : vector<128x64xf32>
    %11 = tpu.matmul %9, %10, %cst_22 {dimension_numbers = #tpu.dot_dimension_numbers<[1], [0], [0], [1], [0, 0, 1, 1], [], []>} : vector<128x16xf32>, vector<16x64xf32>, vector<128x64xf32> -> vector<128x64xf32>
    %c0_23 = arith.constant 0 : index
    %c0_24 = arith.constant 0 : index
    %12 = vector.load %arg3[%c0_23, %c0_24] : memref<1x64xf32, #tpu.memory_space<vmem>>, vector<1x64xf32>
    %13 = vector.broadcast %12 : vector<1x64xf32> to vector<128x64xf32>
    %14 = arith.addf %11, %13 : vector<128x64xf32>
    %cst_25 = arith.constant 3.000000e+00 : f32
    %15 = vector.broadcast %cst_25 : f32 to vector<128x64xf32>
    %16 = arith.addf %14, %15 : vector<128x64xf32>
    %cst_26 = arith.constant 0.000000e+00 : f32
    %cst_27 = arith.constant 6.000000e+00 : f32
    %17 = vector.broadcast %cst_26 : f32 to vector<128x64xf32>
    %18 = arith.maximumf %17, %16 : vector<128x64xf32>
    %19 = vector.broadcast %cst_27 : f32 to vector<128x64xf32>
    %20 = arith.minimumf %19, %18 : vector<128x64xf32>
    %cst_28 = arith.constant 0.166666672 : f32
    %21 = vector.broadcast %cst_28 : f32 to vector<128x64xf32>
    %22 = arith.mulf %20, %21 : vector<128x64xf32>
    %23 = arith.mulf %14, %22 : vector<128x64xf32>
    %24 = vector.shape_cast %23 : vector<128x64xf32> to vector<2x4x16x64xf32>
    %c0_29 = arith.constant 0 : index
    %c1_30 = arith.constant 1 : index
    %c1_31 = arith.constant 1 : index
    %c0_32 = arith.constant 0 : index
    %25 = vector.load %arg13[%c0_29, %c1_30, %c1_31, %c0_32] : memref<2x18x18x64xf32, #tpu.memory_space<vmem>>, vector<2x4x16x64xf32>
    tpu.vector_store %arg13[%c0_29, %c1_30, %c1_31, %c0_32], %24 {strides = array<i32>} : memref<2x18x18x64xf32, #tpu.memory_space<vmem>>, vector<2x4x16x64xf32>,
    %c0_33 = arith.constant 0 : index
    %c4 = arith.constant 4 : index
    %c0_34 = arith.constant 0 : index
    %c0_35 = arith.constant 0 : index
    %26 = vector.load %arg1[%c0_33, %c4, %c0_34, %c0_35] : memref<2x16x16x16xf32, #tpu.memory_space<vmem>>, vector<2x4x16x16xf32>
    %27 = vector.shape_cast %26 : vector<2x4x16x16xf32> to vector<128x16xf32>
    %c0_36 = arith.constant 0 : index
    %c0_37 = arith.constant 0 : index
    %28 = vector.load %arg2[%c0_36, %c0_37] : memref<16x64xf32, #tpu.memory_space<vmem>>, vector<16x64xf32>
    %cst_38 = arith.constant dense<0.000000e+00> : vector<128x64xf32>
    %29 = tpu.matmul %27, %28, %cst_38 {dimension_numbers = #tpu.dot_dimension_numbers<[1], [0], [0], [1], [0, 0, 1, 1], [], []>} : vector<128x16xf32>, vector<16x64xf32>, vector<128x64xf32> -> vector<128x64xf32>
    %c0_39 = arith.constant 0 : index
    %c0_40 = arith.constant 0 : index
    %30 = vector.load %arg3[%c0_39, %c0_40] : memref<1x64xf32, #tpu.memory_space<vmem>>, vector<1x64xf32>
    %31 = vector.broadcast %30 : vector<1x64xf32> to vector<128x64xf32>
    %32 = arith.addf %29, %31 : vector<128x64xf32>
    %cst_41 = arith.constant 3.000000e+00 : f32
    %33 = vector.broadcast %cst_41 : f32 to vector<128x64xf32>
    %34 = arith.addf %32, %33 : vector<128x64xf32>
    %cst_42 = arith.constant 0.000000e+00 : f32
    %cst_43 = arith.constant 6.000000e+00 : f32
    %35 = vector.broadcast %cst_42 : f32 to vector<128x64xf32>
    %36 = arith.maximumf %35, %34 : vector<128x64xf32>
    %37 = vector.broadcast %cst_43 : f32 to vector<128x64xf32>
    %38 = arith.minimumf %37, %36 : vector<128x64xf32>
    %cst_44 = arith.constant 0.166666672 : f32
    %39 = vector.broadcast %cst_44 : f32 to vector<128x64xf32>
    %40 = arith.mulf %38, %39 : vector<128x64xf32>
    %41 = arith.mulf %32, %40 : vector<128x64xf32>
    %42 = vector.shape_cast %41 : vector<128x64xf32> to vector<2x4x16x64xf32>
    %c0_45 = arith.constant 0 : index
    %c5 = arith.constant 5 : index
    %c1_46 = arith.constant 1 : index
    %c0_47 = arith.constant 0 : index
    %43 = vector.load %arg13[%c0_45, %c5, %c1_46, %c0_47] : memref<2x18x18x64xf32, #tpu.memory_space<vmem>>, vector<2x4x16x64xf32>
    tpu.vector_store %arg13[%c0_45, %c5, %c1_46, %c0_47], %42 {strides = array<i32>} : memref<2x18x18x64xf32, #tpu.memory_space<vmem>>, vector<2x4x16x64xf32>,
    %c0_48 = arith.constant 0 : index
    %c8 = arith.constant 8 : index
    %c0_49 = arith.constant 0 : index
    %c0_50 = arith.constant 0 : index
    %44 = vector.load %arg1[%c0_48, %c8, %c0_49, %c0_50] : memref<2x16x16x16xf32, #tpu.memory_space<vmem>>, vector<2x4x16x16xf32>
    %45 = vector.shape_cast %44 : vector<2x4x16x16xf32> to vector<128x16xf32>
    %c0_51 = arith.constant 0 : index
    %c0_52 = arith.constant 0 : index
    %46 = vector.load %arg2[%c0_51, %c0_52] : memref<16x64xf32, #tpu.memory_space<vmem>>, vector<16x64xf32>
    %cst_53 = arith.constant dense<0.000000e+00> : vector<128x64xf32>
    %47 = tpu.matmul %45, %46, %cst_53 {dimension_numbers = #tpu.dot_dimension_numbers<[1], [0], [0], [1], [0, 0, 1, 1], [], []>} : vector<128x16xf32>, vector<16x64xf32>, vector<128x64xf32> -> vector<128x64xf32>
    %c0_54 = arith.constant 0 : index
    %c0_55 = arith.constant 0 : index
    %48 = vector.load %arg3[%c0_54, %c0_55] : memref<1x64xf32, #tpu.memory_space<vmem>>, vector<1x64xf32>
    %49 = vector.broadcast %48 : vector<1x64xf32> to vector<128x64xf32>
    %50 = arith.addf %47, %49 : vector<128x64xf32>
    %cst_56 = arith.constant 3.000000e+00 : f32
    %51 = vector.broadcast %cst_56 : f32 to vector<128x64xf32>
    %52 = arith.addf %50, %51 : vector<128x64xf32>
    %cst_57 = arith.constant 0.000000e+00 : f32
    %cst_58 = arith.constant 6.000000e+00 : f32
    %53 = vector.broadcast %cst_57 : f32 to vector<128x64xf32>
    %54 = arith.maximumf %53, %52 : vector<128x64xf32>
    %55 = vector.broadcast %cst_58 : f32 to vector<128x64xf32>
    %56 = arith.minimumf %55, %54 : vector<128x64xf32>
    %cst_59 = arith.constant 0.166666672 : f32
    %57 = vector.broadcast %cst_59 : f32 to vector<128x64xf32>
    %58 = arith.mulf %56, %57 : vector<128x64xf32>
    %59 = arith.mulf %50, %58 : vector<128x64xf32>
    %60 = vector.shape_cast %59 : vector<128x64xf32> to vector<2x4x16x64xf32>
    %c0_60 = arith.constant 0 : index
    %c9 = arith.constant 9 : index
    %c1_61 = arith.constant 1 : index
    %c0_62 = arith.constant 0 : index
    %61 = vector.load %arg13[%c0_60, %c9, %c1_61, %c0_62] : memref<2x18x18x64xf32, #tpu.memory_space<vmem>>, vector<2x4x16x64xf32>
    tpu.vector_store %arg13[%c0_60, %c9, %c1_61, %c0_62], %60 {strides = array<i32>} : memref<2x18x18x64xf32, #tpu.memory_space<vmem>>, vector<2x4x16x64xf32>,
    %c0_63 = arith.constant 0 : index
    %c12 = arith.constant 12 : index
    %c0_64 = arith.constant 0 : index
    %c0_65 = arith.constant 0 : index
    %62 = vector.load %arg1[%c0_63, %c12, %c0_64, %c0_65] : memref<2x16x16x16xf32, #tpu.memory_space<vmem>>, vector<2x4x16x16xf32>
    %63 = vector.shape_cast %62 : vector<2x4x16x16xf32> to vector<128x16xf32>
    %c0_66 = arith.constant 0 : index
    %c0_67 = arith.constant 0 : index
    %64 = vector.load %arg2[%c0_66, %c0_67] : memref<16x64xf32, #tpu.memory_space<vmem>>, vector<16x64xf32>
    %cst_68 = arith.constant dense<0.000000e+00> : vector<128x64xf32>
    %65 = tpu.matmul %63, %64, %cst_68 {dimension_numbers = #tpu.dot_dimension_numbers<[1], [0], [0], [1], [0, 0, 1, 1], [], []>} : vector<128x16xf32>, vector<16x64xf32>, vector<128x64xf32> -> vector<128x64xf32>
    %c0_69 = arith.constant 0 : index
    %c0_70 = arith.constant 0 : index
    %66 = vector.load %arg3[%c0_69, %c0_70] : memref<1x64xf32, #tpu.memory_space<vmem>>, vector<1x64xf32>
    %67 = vector.broadcast %66 : vector<1x64xf32> to vector<128x64xf32>
    %68 = arith.addf %65, %67 : vector<128x64xf32>
    %cst_71 = arith.constant 3.000000e+00 : f32
    %69 = vector.broadcast %cst_71 : f32 to vector<128x64xf32>
    %70 = arith.addf %68, %69 : vector<128x64xf32>
    %cst_72 = arith.constant 0.000000e+00 : f32
    %cst_73 = arith.constant 6.000000e+00 : f32
    %71 = vector.broadcast %cst_72 : f32 to vector<128x64xf32>
    %72 = arith.maximumf %71, %70 : vector<128x64xf32>
    %73 = vector.broadcast %cst_73 : f32 to vector<128x64xf32>
    %74 = arith.minimumf %73, %72 : vector<128x64xf32>
    %cst_74 = arith.constant 0.166666672 : f32
    %75 = vector.broadcast %cst_74 : f32 to vector<128x64xf32>
    %76 = arith.mulf %74, %75 : vector<128x64xf32>
    %77 = arith.mulf %68, %76 : vector<128x64xf32>
    %78 = vector.shape_cast %77 : vector<128x64xf32> to vector<2x4x16x64xf32>
    %c0_75 = arith.constant 0 : index
    %c13 = arith.constant 13 : index
    %c1_76 = arith.constant 1 : index
    %c0_77 = arith.constant 0 : index
    %79 = vector.load %arg13[%c0_75, %c13, %c1_76, %c0_77] : memref<2x18x18x64xf32, #tpu.memory_space<vmem>>, vector<2x4x16x64xf32>
    tpu.vector_store %arg13[%c0_75, %c13, %c1_76, %c0_77], %78 {strides = array<i32>} : memref<2x18x18x64xf32, #tpu.memory_space<vmem>>, vector<2x4x16x64xf32>,
    %cst_78 = arith.constant 0.000000e+00 : f32
    %80 = vector.broadcast %cst_78 : f32 to vector<2x64xf32>
    %c0_79 = arith.constant 0 : index
    %c0_80 = arith.constant 0 : index
    %81 = vector.load %arg5[%c0_79, %c0_80] : memref<1x64xf32, #tpu.memory_space<vmem>>, vector<1x64xf32>
    %82 = vector.shape_cast %81 : vector<1x64xf32> to vector<1x1x1x64xf32>
    %83 = vector.broadcast %82 : vector<1x1x1x64xf32> to vector<2x4x16x64xf32>
    %c0_81 = arith.constant 0 : index
    %c0_82 = arith.constant 0 : index
    %c0_83 = arith.constant 0 : index
    %c0_84 = arith.constant 0 : index
    %84 = vector.load %arg13[%c0_81, %c0_82, %c0_83, %c0_84] : memref<2x18x18x64xf32, #tpu.memory_space<vmem>>, vector<2x4x16x64xf32>
    %c0_85 = arith.constant 0 : index
    %c0_86 = arith.constant 0 : index
    %85 = vector.load %arg4[%c0_85, %c0_86] : memref<9x64xf32, #tpu.memory_space<vmem>>, vector<1x64xf32>
    %86 = vector.shape_cast %85 : vector<1x64xf32> to vector<64xf32>
    %87 = vector.shape_cast %86 : vector<64xf32> to vector<1x1x1x64xf32>
    %88 = vector.broadcast %87 : vector<1x1x1x64xf32> to vector<2x4x16x64xf32>
    %89 = arith.mulf %84, %88 : vector<2x4x16x64xf32>
    %90 = arith.addf %83, %89 : vector<2x4x16x64xf32>
    %c0_87 = arith.constant 0 : index
    %c0_88 = arith.constant 0 : index
    %c1_89 = arith.constant 1 : index
    %c0_90 = arith.constant 0 : index
    %91 = vector.load %arg13[%c0_87, %c0_88, %c1_89, %c0_90] : memref<2x18x18x64xf32, #tpu.memory_space<vmem>>, vector<2x4x16x64xf32>
    %c1_91 = arith.constant 1 : index
    %c0_92 = arith.constant 0 : index
    %92 = vector.load %arg4[%c1_91, %c0_92] : memref<9x64xf32, #tpu.memory_space<vmem>>, vector<1x64xf32>
    %93 = vector.shape_cast %92 : vector<1x64xf32> to vector<64xf32>
    %94 = vector.shape_cast %93 : vector<64xf32> to vector<1x1x1x64xf32>
    %95 = vector.broadcast %94 : vector<1x1x1x64xf32> to vector<2x4x16x64xf32>
    %96 = arith.mulf %91, %95 : vector<2x4x16x64xf32>
    %97 = arith.addf %90, %96 : vector<2x4x16x64xf32>
    %c0_93 = arith.constant 0 : index
    %c0_94 = arith.constant 0 : index
    %c2 = arith.constant 2 : index
    %c0_95 = arith.constant 0 : index
    %98 = vector.load %arg13[%c0_93, %c0_94, %c2, %c0_95] : memref<2x18x18x64xf32, #tpu.memory_space<vmem>>, vector<2x4x16x64xf32>
    %c2_96 = arith.constant 2 : index
    %c0_97 = arith.constant 0 : index
    %99 = vector.load %arg4[%c2_96, %c0_97] : memref<9x64xf32, #tpu.memory_space<vmem>>, vector<1x64xf32>
    %100 = vector.shape_cast %99 : vector<1x64xf32> to vector<64xf32>
    %101 = vector.shape_cast %100 : vector<64xf32> to vector<1x1x1x64xf32>
    %102 = vector.broadcast %101 : vector<1x1x1x64xf32> to vector<2x4x16x64xf32>
    %103 = arith.mulf %98, %102 : vector<2x4x16x64xf32>
    %104 = arith.addf %97, %103 : vector<2x4x16x64xf32>
    %c0_98 = arith.constant 0 : index
    %c1_99 = arith.constant 1 : index
    %c0_100 = arith.constant 0 : index
    %c0_101 = arith.constant 0 : index
    %105 = vector.load %arg13[%c0_98, %c1_99, %c0_100, %c0_101] : memref<2x18x18x64xf32, #tpu.memory_space<vmem>>, vector<2x4x16x64xf32>
    %c3 = arith.constant 3 : index
    %c0_102 = arith.constant 0 : index
    %106 = vector.load %arg4[%c3, %c0_102] : memref<9x64xf32, #tpu.memory_space<vmem>>, vector<1x64xf32>
    %107 = vector.shape_cast %106 : vector<1x64xf32> to vector<64xf32>
    %108 = vector.shape_cast %107 : vector<64xf32> to vector<1x1x1x64xf32>
    %109 = vector.broadcast %108 : vector<1x1x1x64xf32> to vector<2x4x16x64xf32>
    %110 = arith.mulf %105, %109 : vector<2x4x16x64xf32>
    %111 = arith.addf %104, %110 : vector<2x4x16x64xf32>
    %c0_103 = arith.constant 0 : index
    %c1_104 = arith.constant 1 : index
    %c1_105 = arith.constant 1 : index
    %c0_106 = arith.constant 0 : index
    %112 = vector.load %arg13[%c0_103, %c1_104, %c1_105, %c0_106] : memref<2x18x18x64xf32, #tpu.memory_space<vmem>>, vector<2x4x16x64xf32>
    %c4_107 = arith.constant 4 : index
    %c0_108 = arith.constant 0 : index
    %113 = vector.load %arg4[%c4_107, %c0_108] : memref<9x64xf32, #tpu.memory_space<vmem>>, vector<1x64xf32>
    %114 = vector.shape_cast %113 : vector<1x64xf32> to vector<64xf32>
    %115 = vector.shape_cast %114 : vector<64xf32> to vector<1x1x1x64xf32>
    %116 = vector.broadcast %115 : vector<1x1x1x64xf32> to vector<2x4x16x64xf32>
    %117 = arith.mulf %112, %116 : vector<2x4x16x64xf32>
    %118 = arith.addf %111, %117 : vector<2x4x16x64xf32>
    %c0_109 = arith.constant 0 : index
    %c1_110 = arith.constant 1 : index
    %c2_111 = arith.constant 2 : index
    %c0_112 = arith.constant 0 : index
    %119 = vector.load %arg13[%c0_109, %c1_110, %c2_111, %c0_112] : memref<2x18x18x64xf32, #tpu.memory_space<vmem>>, vector<2x4x16x64xf32>
    %c5_113 = arith.constant 5 : index
    %c0_114 = arith.constant 0 : index
    %120 = vector.load %arg4[%c5_113, %c0_114] : memref<9x64xf32, #tpu.memory_space<vmem>>, vector<1x64xf32>
    %121 = vector.shape_cast %120 : vector<1x64xf32> to vector<64xf32>
    %122 = vector.shape_cast %121 : vector<64xf32> to vector<1x1x1x64xf32>
    %123 = vector.broadcast %122 : vector<1x1x1x64xf32> to vector<2x4x16x64xf32>
    %124 = arith.mulf %119, %123 : vector<2x4x16x64xf32>
    %125 = arith.addf %118, %124 : vector<2x4x16x64xf32>
    %c0_115 = arith.constant 0 : index
    %c2_116 = arith.constant 2 : index
    %c0_117 = arith.constant 0 : index
    %c0_118 = arith.constant 0 : index
    %126 = vector.load %arg13[%c0_115, %c2_116, %c0_117, %c0_118] : memref<2x18x18x64xf32, #tpu.memory_space<vmem>>, vector<2x4x16x64xf32>
    %c6 = arith.constant 6 : index
    %c0_119 = arith.constant 0 : index
    %127 = vector.load %arg4[%c6, %c0_119] : memref<9x64xf32, #tpu.memory_space<vmem>>, vector<1x64xf32>
    %128 = vector.shape_cast %127 : vector<1x64xf32> to vector<64xf32>
    %129 = vector.shape_cast %128 : vector<64xf32> to vector<1x1x1x64xf32>
    %130 = vector.broadcast %129 : vector<1x1x1x64xf32> to vector<2x4x16x64xf32>
    %131 = arith.mulf %126, %130 : vector<2x4x16x64xf32>
    %132 = arith.addf %125, %131 : vector<2x4x16x64xf32>
    %c0_120 = arith.constant 0 : index
    %c2_121 = arith.constant 2 : index
    %c1_122 = arith.constant 1 : index
    %c0_123 = arith.constant 0 : index
    %133 = vector.load %arg13[%c0_120, %c2_121, %c1_122, %c0_123] : memref<2x18x18x64xf32, #tpu.memory_space<vmem>>, vector<2x4x16x64xf32>
    %c7 = arith.constant 7 : index
    %c0_124 = arith.constant 0 : index
    %134 = vector.load %arg4[%c7, %c0_124] : memref<9x64xf32, #tpu.memory_space<vmem>>, vector<1x64xf32>
    %135 = vector.shape_cast %134 : vector<1x64xf32> to vector<64xf32>
    %136 = vector.shape_cast %135 : vector<64xf32> to vector<1x1x1x64xf32>
    %137 = vector.broadcast %136 : vector<1x1x1x64xf32> to vector<2x4x16x64xf32>
    %138 = arith.mulf %133, %137 : vector<2x4x16x64xf32>
    %139 = arith.addf %132, %138 : vector<2x4x16x64xf32>
    %c0_125 = arith.constant 0 : index
    %c2_126 = arith.constant 2 : index
    %c2_127 = arith.constant 2 : index
    %c0_128 = arith.constant 0 : index
    %140 = vector.load %arg13[%c0_125, %c2_126, %c2_127, %c0_128] : memref<2x18x18x64xf32, #tpu.memory_space<vmem>>, vector<2x4x16x64xf32>
    %c8_129 = arith.constant 8 : index
    %c0_130 = arith.constant 0 : index
    %141 = vector.load %arg4[%c8_129, %c0_130] : memref<9x64xf32, #tpu.memory_space<vmem>>, vector<1x64xf32>
    %142 = vector.shape_cast %141 : vector<1x64xf32> to vector<64xf32>
    %143 = vector.shape_cast %142 : vector<64xf32> to vector<1x1x1x64xf32>
    %144 = vector.broadcast %143 : vector<1x1x1x64xf32> to vector<2x4x16x64xf32>
    %145 = arith.mulf %140, %144 : vector<2x4x16x64xf32>
    %146 = arith.addf %139, %145 : vector<2x4x16x64xf32>
    %c0_131 = arith.constant 0 : index
    %c0_132 = arith.constant 0 : index
    %c0_133 = arith.constant 0 : index
    %c0_134 = arith.constant 0 : index
    %147 = vector.load %arg14[%c0_131, %c0_132, %c0_133, %c0_134] : memref<2x16x16x64xf32, #tpu.memory_space<vmem>>, vector<2x4x16x64xf32>
    tpu.vector_store %arg14[%c0_131, %c0_132, %c0_133, %c0_134], %146 {strides = array<i32>} : memref<2x16x16x64xf32, #tpu.memory_space<vmem>>, vector<2x4x16x64xf32>,
    %cst_135 = arith.constant dense<0.000000e+00> : vector<2x16x64xf32>
    %148 = vector.multi_reduction <add>, %146, %cst_135 [1] : vector<2x4x16x64xf32> to vector<2x16x64xf32>
    %cst_136 = arith.constant dense<0.000000e+00> : vector<2x64xf32>
    %149 = vector.multi_reduction <add>, %148, %cst_136 [1] : vector<2x16x64xf32> to vector<2x64xf32>
    %150 = arith.addf %80, %149 : vector<2x64xf32>
    %c0_137 = arith.constant 0 : index
    %c0_138 = arith.constant 0 : index
    %151 = vector.load %arg5[%c0_137, %c0_138] : memref<1x64xf32, #tpu.memory_space<vmem>>, vector<1x64xf32>
    %152 = vector.shape_cast %151 : vector<1x64xf32> to vector<1x1x1x64xf32>
    %153 = vector.broadcast %152 : vector<1x1x1x64xf32> to vector<2x4x16x64xf32>
    %c0_139 = arith.constant 0 : index
    %c4_140 = arith.constant 4 : index
    %c0_141 = arith.constant 0 : index
    %c0_142 = arith.constant 0 : index
    %154 = vector.load %arg13[%c0_139, %c4_140, %c0_141, %c0_142] : memref<2x18x18x64xf32, #tpu.memory_space<vmem>>, vector<2x4x16x64xf32>
    %c0_143 = arith.constant 0 : index
    %c0_144 = arith.constant 0 : index
    %155 = vector.load %arg4[%c0_143, %c0_144] : memref<9x64xf32, #tpu.memory_space<vmem>>, vector<1x64xf32>
    %156 = vector.shape_cast %155 : vector<1x64xf32> to vector<64xf32>
    %157 = vector.shape_cast %156 : vector<64xf32> to vector<1x1x1x64xf32>
    %158 = vector.broadcast %157 : vector<1x1x1x64xf32> to vector<2x4x16x64xf32>
    %159 = arith.mulf %154, %158 : vector<2x4x16x64xf32>
    %160 = arith.addf %153, %159 : vector<2x4x16x64xf32>
    %c0_145 = arith.constant 0 : index
    %c4_146 = arith.constant 4 : index
    %c1_147 = arith.constant 1 : index
    %c0_148 = arith.constant 0 : index
    %161 = vector.load %arg13[%c0_145, %c4_146, %c1_147, %c0_148] : memref<2x18x18x64xf32, #tpu.memory_space<vmem>>, vector<2x4x16x64xf32>
    %c1_149 = arith.constant 1 : index
    %c0_150 = arith.constant 0 : index
    %162 = vector.load %arg4[%c1_149, %c0_150] : memref<9x64xf32, #tpu.memory_space<vmem>>, vector<1x64xf32>
    %163 = vector.shape_cast %162 : vector<1x64xf32> to vector<64xf32>
    %164 = vector.shape_cast %163 : vector<64xf32> to vector<1x1x1x64xf32>
    %165 = vector.broadcast %164 : vector<1x1x1x64xf32> to vector<2x4x16x64xf32>
    %166 = arith.mulf %161, %165 : vector<2x4x16x64xf32>
    %167 = arith.addf %160, %166 : vector<2x4x16x64xf32>
    %c0_151 = arith.constant 0 : index
    %c4_152 = arith.constant 4 : index
    %c2_153 = arith.constant 2 : index
    %c0_154 = arith.constant 0 : index
    %168 = vector.load %arg13[%c0_151, %c4_152, %c2_153, %c0_154] : memref<2x18x18x64xf32, #tpu.memory_space<vmem>>, vector<2x4x16x64xf32>
    %c2_155 = arith.constant 2 : index
    %c0_156 = arith.constant 0 : index
    %169 = vector.load %arg4[%c2_155, %c0_156] : memref<9x64xf32, #tpu.memory_space<vmem>>, vector<1x64xf32>
    %170 = vector.shape_cast %169 : vector<1x64xf32> to vector<64xf32>
    %171 = vector.shape_cast %170 : vector<64xf32> to vector<1x1x1x64xf32>
    %172 = vector.broadcast %171 : vector<1x1x1x64xf32> to vector<2x4x16x64xf32>
    %173 = arith.mulf %168, %172 : vector<2x4x16x64xf32>
    %174 = arith.addf %167, %173 : vector<2x4x16x64xf32>
    %c0_157 = arith.constant 0 : index
    %c5_158 = arith.constant 5 : index
    %c0_159 = arith.constant 0 : index
    %c0_160 = arith.constant 0 : index
    %175 = vector.load %arg13[%c0_157, %c5_158, %c0_159, %c0_160] : memref<2x18x18x64xf32, #tpu.memory_space<vmem>>, vector<2x4x16x64xf32>
    %c3_161 = arith.constant 3 : index
    %c0_162 = arith.constant 0 : index
    %176 = vector.load %arg4[%c3_161, %c0_162] : memref<9x64xf32, #tpu.memory_space<vmem>>, vector<1x64xf32>
    %177 = vector.shape_cast %176 : vector<1x64xf32> to vector<64xf32>
    %178 = vector.shape_cast %177 : vector<64xf32> to vector<1x1x1x64xf32>
    %179 = vector.broadcast %178 : vector<1x1x1x64xf32> to vector<2x4x16x64xf32>
    %180 = arith.mulf %175, %179 : vector<2x4x16x64xf32>
    %181 = arith.addf %174, %180 : vector<2x4x16x64xf32>
    %c0_163 = arith.constant 0 : index
    %c5_164 = arith.constant 5 : index
    %c1_165 = arith.constant 1 : index
    %c0_166 = arith.constant 0 : index
    %182 = vector.load %arg13[%c0_163, %c5_164, %c1_165, %c0_166] : memref<2x18x18x64xf32, #tpu.memory_space<vmem>>, vector<2x4x16x64xf32>
    %c4_167 = arith.constant 4 : index
    %c0_168 = arith.constant 0 : index
    %183 = vector.load %arg4[%c4_167, %c0_168] : memref<9x64xf32, #tpu.memory_space<vmem>>, vector<1x64xf32>
    %184 = vector.shape_cast %183 : vector<1x64xf32> to vector<64xf32>
    %185 = vector.shape_cast %184 : vector<64xf32> to vector<1x1x1x64xf32>
    %186 = vector.broadcast %185 : vector<1x1x1x64xf32> to vector<2x4x16x64xf32>
    %187 = arith.mulf %182, %186 : vector<2x4x16x64xf32>
    %188 = arith.addf %181, %187 : vector<2x4x16x64xf32>
    %c0_169 = arith.constant 0 : index
    %c5_170 = arith.constant 5 : index
    %c2_171 = arith.constant 2 : index
    %c0_172 = arith.constant 0 : index
    %189 = vector.load %arg13[%c0_169, %c5_170, %c2_171, %c0_172] : memref<2x18x18x64xf32, #tpu.memory_space<vmem>>, vector<2x4x16x64xf32>
    %c5_173 = arith.constant 5 : index
    %c0_174 = arith.constant 0 : index
    %190 = vector.load %arg4[%c5_173, %c0_174] : memref<9x64xf32, #tpu.memory_space<vmem>>, vector<1x64xf32>
    %191 = vector.shape_cast %190 : vector<1x64xf32> to vector<64xf32>
    %192 = vector.shape_cast %191 : vector<64xf32> to vector<1x1x1x64xf32>
    %193 = vector.broadcast %192 : vector<1x1x1x64xf32> to vector<2x4x16x64xf32>
    %194 = arith.mulf %189, %193 : vector<2x4x16x64xf32>
    %195 = arith.addf %188, %194 : vector<2x4x16x64xf32>
    %c0_175 = arith.constant 0 : index
    %c6_176 = arith.constant 6 : index
    %c0_177 = arith.constant 0 : index
    %c0_178 = arith.constant 0 : index
    %196 = vector.load %arg13[%c0_175, %c6_176, %c0_177, %c0_178] : memref<2x18x18x64xf32, #tpu.memory_space<vmem>>, vector<2x4x16x64xf32>
    %c6_179 = arith.constant 6 : index
    %c0_180 = arith.constant 0 : index
    %197 = vector.load %arg4[%c6_179, %c0_180] : memref<9x64xf32, #tpu.memory_space<vmem>>, vector<1x64xf32>
    %198 = vector.shape_cast %197 : vector<1x64xf32> to vector<64xf32>
    %199 = vector.shape_cast %198 : vector<64xf32> to vector<1x1x1x64xf32>
    %200 = vector.broadcast %199 : vector<1x1x1x64xf32> to vector<2x4x16x64xf32>
    %201 = arith.mulf %196, %200 : vector<2x4x16x64xf32>
    %202 = arith.addf %195, %201 : vector<2x4x16x64xf32>
    %c0_181 = arith.constant 0 : index
    %c6_182 = arith.constant 6 : index
    %c1_183 = arith.constant 1 : index
    %c0_184 = arith.constant 0 : index
    %203 = vector.load %arg13[%c0_181, %c6_182, %c1_183, %c0_184] : memref<2x18x18x64xf32, #tpu.memory_space<vmem>>, vector<2x4x16x64xf32>
    %c7_185 = arith.constant 7 : index
    %c0_186 = arith.constant 0 : index
    %204 = vector.load %arg4[%c7_185, %c0_186] : memref<9x64xf32, #tpu.memory_space<vmem>>, vector<1x64xf32>
    %205 = vector.shape_cast %204 : vector<1x64xf32> to vector<64xf32>
    %206 = vector.shape_cast %205 : vector<64xf32> to vector<1x1x1x64xf32>
    %207 = vector.broadcast %206 : vector<1x1x1x64xf32> to vector<2x4x16x64xf32>
    %208 = arith.mulf %203, %207 : vector<2x4x16x64xf32>
    %209 = arith.addf %202, %208 : vector<2x4x16x64xf32>
    %c0_187 = arith.constant 0 : index
    %c6_188 = arith.constant 6 : index
    %c2_189 = arith.constant 2 : index
    %c0_190 = arith.constant 0 : index
    %210 = vector.load %arg13[%c0_187, %c6_188, %c2_189, %c0_190] : memref<2x18x18x64xf32, #tpu.memory_space<vmem>>, vector<2x4x16x64xf32>
    %c8_191 = arith.constant 8 : index
    %c0_192 = arith.constant 0 : index
    %211 = vector.load %arg4[%c8_191, %c0_192] : memref<9x64xf32, #tpu.memory_space<vmem>>, vector<1x64xf32>
    %212 = vector.shape_cast %211 : vector<1x64xf32> to vector<64xf32>
    %213 = vector.shape_cast %212 : vector<64xf32> to vector<1x1x1x64xf32>
    %214 = vector.broadcast %213 : vector<1x1x1x64xf32> to vector<2x4x16x64xf32>
    %215 = arith.mulf %210, %214 : vector<2x4x16x64xf32>
    %216 = arith.addf %209, %215 : vector<2x4x16x64xf32>
    %c0_193 = arith.constant 0 : index
    %c4_194 = arith.constant 4 : index
    %c0_195 = arith.constant 0 : index
    %c0_196 = arith.constant 0 : index
    %217 = vector.load %arg14[%c0_193, %c4_194, %c0_195, %c0_196] : memref<2x16x16x64xf32, #tpu.memory_space<vmem>>, vector<2x4x16x64xf32>
    tpu.vector_store %arg14[%c0_193, %c4_194, %c0_195, %c0_196], %216 {strides = array<i32>} : memref<2x16x16x64xf32, #tpu.memory_space<vmem>>, vector<2x4x16x64xf32>,
    %cst_197 = arith.constant dense<0.000000e+00> : vector<2x16x64xf32>
    %218 = vector.multi_reduction <add>, %216, %cst_197 [1] : vector<2x4x16x64xf32> to vector<2x16x64xf32>
    %cst_198 = arith.constant dense<0.000000e+00> : vector<2x64xf32>
    %219 = vector.multi_reduction <add>, %218, %cst_198 [1] : vector<2x16x64xf32> to vector<2x64xf32>
    %220 = arith.addf %150, %219 : vector<2x64xf32>
    %c0_199 = arith.constant 0 : index
    %c0_200 = arith.constant 0 : index
    %221 = vector.load %arg5[%c0_199, %c0_200] : memref<1x64xf32, #tpu.memory_space<vmem>>, vector<1x64xf32>
    %222 = vector.shape_cast %221 : vector<1x64xf32> to vector<1x1x1x64xf32>
    %223 = vector.broadcast %222 : vector<1x1x1x64xf32> to vector<2x4x16x64xf32>
    %c0_201 = arith.constant 0 : index
    %c8_202 = arith.constant 8 : index
    %c0_203 = arith.constant 0 : index
    %c0_204 = arith.constant 0 : index
    %224 = vector.load %arg13[%c0_201, %c8_202, %c0_203, %c0_204] : memref<2x18x18x64xf32, #tpu.memory_space<vmem>>, vector<2x4x16x64xf32>
    %c0_205 = arith.constant 0 : index
    %c0_206 = arith.constant 0 : index
    %225 = vector.load %arg4[%c0_205, %c0_206] : memref<9x64xf32, #tpu.memory_space<vmem>>, vector<1x64xf32>
    %226 = vector.shape_cast %225 : vector<1x64xf32> to vector<64xf32>
    %227 = vector.shape_cast %226 : vector<64xf32> to vector<1x1x1x64xf32>
    %228 = vector.broadcast %227 : vector<1x1x1x64xf32> to vector<2x4x16x64xf32>
    %229 = arith.mulf %224, %228 : vector<2x4x16x64xf32>
    %230 = arith.addf %223, %229 : vector<2x4x16x64xf32>
    %c0_207 = arith.constant 0 : index
    %c8_208 = arith.constant 8 : index
    %c1_209 = arith.constant 1 : index
    %c0_210 = arith.constant 0 : index
    %231 = vector.load %arg13[%c0_207, %c8_208, %c1_209, %c0_210] : memref<2x18x18x64xf32, #tpu.memory_space<vmem>>, vector<2x4x16x64xf32>
    %c1_211 = arith.constant 1 : index
    %c0_212 = arith.constant 0 : index
    %232 = vector.load %arg4[%c1_211, %c0_212] : memref<9x64xf32, #tpu.memory_space<vmem>>, vector<1x64xf32>
    %233 = vector.shape_cast %232 : vector<1x64xf32> to vector<64xf32>
    %234 = vector.shape_cast %233 : vector<64xf32> to vector<1x1x1x64xf32>
    %235 = vector.broadcast %234 : vector<1x1x1x64xf32> to vector<2x4x16x64xf32>
    %236 = arith.mulf %231, %235 : vector<2x4x16x64xf32>
    %237 = arith.addf %230, %236 : vector<2x4x16x64xf32>
    %c0_213 = arith.constant 0 : index
    %c8_214 = arith.constant 8 : index
    %c2_215 = arith.constant 2 : index
    %c0_216 = arith.constant 0 : index
    %238 = vector.load %arg13[%c0_213, %c8_214, %c2_215, %c0_216] : memref<2x18x18x64xf32, #tpu.memory_space<vmem>>, vector<2x4x16x64xf32>
    %c2_217 = arith.constant 2 : index
    %c0_218 = arith.constant 0 : index
    %239 = vector.load %arg4[%c2_217, %c0_218] : memref<9x64xf32, #tpu.memory_space<vmem>>, vector<1x64xf32>
    %240 = vector.shape_cast %239 : vector<1x64xf32> to vector<64xf32>
    %241 = vector.shape_cast %240 : vector<64xf32> to vector<1x1x1x64xf32>
    %242 = vector.broadcast %241 : vector<1x1x1x64xf32> to vector<2x4x16x64xf32>
    %243 = arith.mulf %238, %242 : vector<2x4x16x64xf32>
    %244 = arith.addf %237, %243 : vector<2x4x16x64xf32>
    %c0_219 = arith.constant 0 : index
    %c9_220 = arith.constant 9 : index
    %c0_221 = arith.constant 0 : index
    %c0_222 = arith.constant 0 : index
    %245 = vector.load %arg13[%c0_219, %c9_220, %c0_221, %c0_222] : memref<2x18x18x64xf32, #tpu.memory_space<vmem>>, vector<2x4x16x64xf32>
    %c3_223 = arith.constant 3 : index
    %c0_224 = arith.constant 0 : index
    %246 = vector.load %arg4[%c3_223, %c0_224] : memref<9x64xf32, #tpu.memory_space<vmem>>, vector<1x64xf32>
    %247 = vector.shape_cast %246 : vector<1x64xf32> to vector<64xf32>
    %248 = vector.shape_cast %247 : vector<64xf32> to vector<1x1x1x64xf32>
    %249 = vector.broadcast %248 : vector<1x1x1x64xf32> to vector<2x4x16x64xf32>
    %250 = arith.mulf %245, %249 : vector<2x4x16x64xf32>
    %251 = arith.addf %244, %250 : vector<2x4x16x64xf32>
    %c0_225 = arith.constant 0 : index
    %c9_226 = arith.constant 9 : index
    %c1_227 = arith.constant 1 : index
    %c0_228 = arith.constant 0 : index
    %252 = vector.load %arg13[%c0_225, %c9_226, %c1_227, %c0_228] : memref<2x18x18x64xf32, #tpu.memory_space<vmem>>, vector<2x4x16x64xf32>
    %c4_229 = arith.constant 4 : index
    %c0_230 = arith.constant 0 : index
    %253 = vector.load %arg4[%c4_229, %c0_230] : memref<9x64xf32, #tpu.memory_space<vmem>>, vector<1x64xf32>
    %254 = vector.shape_cast %253 : vector<1x64xf32> to vector<64xf32>
    %255 = vector.shape_cast %254 : vector<64xf32> to vector<1x1x1x64xf32>
    %256 = vector.broadcast %255 : vector<1x1x1x64xf32> to vector<2x4x16x64xf32>
    %257 = arith.mulf %252, %256 : vector<2x4x16x64xf32>
    %258 = arith.addf %251, %257 : vector<2x4x16x64xf32>
    %c0_231 = arith.constant 0 : index
    %c9_232 = arith.constant 9 : index
    %c2_233 = arith.constant 2 : index
    %c0_234 = arith.constant 0 : index
    %259 = vector.load %arg13[%c0_231, %c9_232, %c2_233, %c0_234] : memref<2x18x18x64xf32, #tpu.memory_space<vmem>>, vector<2x4x16x64xf32>
    %c5_235 = arith.constant 5 : index
    %c0_236 = arith.constant 0 : index
    %260 = vector.load %arg4[%c5_235, %c0_236] : memref<9x64xf32, #tpu.memory_space<vmem>>, vector<1x64xf32>
    %261 = vector.shape_cast %260 : vector<1x64xf32> to vector<64xf32>
    %262 = vector.shape_cast %261 : vector<64xf32> to vector<1x1x1x64xf32>
    %263 = vector.broadcast %262 : vector<1x1x1x64xf32> to vector<2x4x16x64xf32>
    %264 = arith.mulf %259, %263 : vector<2x4x16x64xf32>
    %265 = arith.addf %258, %264 : vector<2x4x16x64xf32>
    %c0_237 = arith.constant 0 : index
    %c10 = arith.constant 10 : index
    %c0_238 = arith.constant 0 : index
    %c0_239 = arith.constant 0 : index
    %266 = vector.load %arg13[%c0_237, %c10, %c0_238, %c0_239] : memref<2x18x18x64xf32, #tpu.memory_space<vmem>>, vector<2x4x16x64xf32>
    %c6_240 = arith.constant 6 : index
    %c0_241 = arith.constant 0 : index
    %267 = vector.load %arg4[%c6_240, %c0_241] : memref<9x64xf32, #tpu.memory_space<vmem>>, vector<1x64xf32>
    %268 = vector.shape_cast %267 : vector<1x64xf32> to vector<64xf32>
    %269 = vector.shape_cast %268 : vector<64xf32> to vector<1x1x1x64xf32>
    %270 = vector.broadcast %269 : vector<1x1x1x64xf32> to vector<2x4x16x64xf32>
    %271 = arith.mulf %266, %270 : vector<2x4x16x64xf32>
    %272 = arith.addf %265, %271 : vector<2x4x16x64xf32>
    %c0_242 = arith.constant 0 : index
    %c10_243 = arith.constant 10 : index
    %c1_244 = arith.constant 1 : index
    %c0_245 = arith.constant 0 : index
    %273 = vector.load %arg13[%c0_242, %c10_243, %c1_244, %c0_245] : memref<2x18x18x64xf32, #tpu.memory_space<vmem>>, vector<2x4x16x64xf32>
    %c7_246 = arith.constant 7 : index
    %c0_247 = arith.constant 0 : index
    %274 = vector.load %arg4[%c7_246, %c0_247] : memref<9x64xf32, #tpu.memory_space<vmem>>, vector<1x64xf32>
    %275 = vector.shape_cast %274 : vector<1x64xf32> to vector<64xf32>
    %276 = vector.shape_cast %275 : vector<64xf32> to vector<1x1x1x64xf32>
    %277 = vector.broadcast %276 : vector<1x1x1x64xf32> to vector<2x4x16x64xf32>
    %278 = arith.mulf %273, %277 : vector<2x4x16x64xf32>
    %279 = arith.addf %272, %278 : vector<2x4x16x64xf32>
    %c0_248 = arith.constant 0 : index
    %c10_249 = arith.constant 10 : index
    %c2_250 = arith.constant 2 : index
    %c0_251 = arith.constant 0 : index
    %280 = vector.load %arg13[%c0_248, %c10_249, %c2_250, %c0_251] : memref<2x18x18x64xf32, #tpu.memory_space<vmem>>, vector<2x4x16x64xf32>
    %c8_252 = arith.constant 8 : index
    %c0_253 = arith.constant 0 : index
    %281 = vector.load %arg4[%c8_252, %c0_253] : memref<9x64xf32, #tpu.memory_space<vmem>>, vector<1x64xf32>
    %282 = vector.shape_cast %281 : vector<1x64xf32> to vector<64xf32>
    %283 = vector.shape_cast %282 : vector<64xf32> to vector<1x1x1x64xf32>
    %284 = vector.broadcast %283 : vector<1x1x1x64xf32> to vector<2x4x16x64xf32>
    %285 = arith.mulf %280, %284 : vector<2x4x16x64xf32>
    %286 = arith.addf %279, %285 : vector<2x4x16x64xf32>
    %c0_254 = arith.constant 0 : index
    %c8_255 = arith.constant 8 : index
    %c0_256 = arith.constant 0 : index
    %c0_257 = arith.constant 0 : index
    %287 = vector.load %arg14[%c0_254, %c8_255, %c0_256, %c0_257] : memref<2x16x16x64xf32, #tpu.memory_space<vmem>>, vector<2x4x16x64xf32>
    tpu.vector_store %arg14[%c0_254, %c8_255, %c0_256, %c0_257], %286 {strides = array<i32>} : memref<2x16x16x64xf32, #tpu.memory_space<vmem>>, vector<2x4x16x64xf32>,
    %cst_258 = arith.constant dense<0.000000e+00> : vector<2x16x64xf32>
    %288 = vector.multi_reduction <add>, %286, %cst_258 [1] : vector<2x4x16x64xf32> to vector<2x16x64xf32>
    %cst_259 = arith.constant dense<0.000000e+00> : vector<2x64xf32>
    %289 = vector.multi_reduction <add>, %288, %cst_259 [1] : vector<2x16x64xf32> to vector<2x64xf32>
    %290 = arith.addf %220, %289 : vector<2x64xf32>
    %c0_260 = arith.constant 0 : index
    %c0_261 = arith.constant 0 : index
    %291 = vector.load %arg5[%c0_260, %c0_261] : memref<1x64xf32, #tpu.memory_space<vmem>>, vector<1x64xf32>
    %292 = vector.shape_cast %291 : vector<1x64xf32> to vector<1x1x1x64xf32>
    %293 = vector.broadcast %292 : vector<1x1x1x64xf32> to vector<2x4x16x64xf32>
    %c0_262 = arith.constant 0 : index
    %c12_263 = arith.constant 12 : index
    %c0_264 = arith.constant 0 : index
    %c0_265 = arith.constant 0 : index
    %294 = vector.load %arg13[%c0_262, %c12_263, %c0_264, %c0_265] : memref<2x18x18x64xf32, #tpu.memory_space<vmem>>, vector<2x4x16x64xf32>
    %c0_266 = arith.constant 0 : index
    %c0_267 = arith.constant 0 : index
    %295 = vector.load %arg4[%c0_266, %c0_267] : memref<9x64xf32, #tpu.memory_space<vmem>>, vector<1x64xf32>
    %296 = vector.shape_cast %295 : vector<1x64xf32> to vector<64xf32>
    %297 = vector.shape_cast %296 : vector<64xf32> to vector<1x1x1x64xf32>
    %298 = vector.broadcast %297 : vector<1x1x1x64xf32> to vector<2x4x16x64xf32>
    %299 = arith.mulf %294, %298 : vector<2x4x16x64xf32>
    %300 = arith.addf %293, %299 : vector<2x4x16x64xf32>
    %c0_268 = arith.constant 0 : index
    %c12_269 = arith.constant 12 : index
    %c1_270 = arith.constant 1 : index
    %c0_271 = arith.constant 0 : index
    %301 = vector.load %arg13[%c0_268, %c12_269, %c1_270, %c0_271] : memref<2x18x18x64xf32, #tpu.memory_space<vmem>>, vector<2x4x16x64xf32>
    %c1_272 = arith.constant 1 : index
    %c0_273 = arith.constant 0 : index
    %302 = vector.load %arg4[%c1_272, %c0_273] : memref<9x64xf32, #tpu.memory_space<vmem>>, vector<1x64xf32>
    %303 = vector.shape_cast %302 : vector<1x64xf32> to vector<64xf32>
    %304 = vector.shape_cast %303 : vector<64xf32> to vector<1x1x1x64xf32>
    %305 = vector.broadcast %304 : vector<1x1x1x64xf32> to vector<2x4x16x64xf32>
    %306 = arith.mulf %301, %305 : vector<2x4x16x64xf32>
    %307 = arith.addf %300, %306 : vector<2x4x16x64xf32>
    %c0_274 = arith.constant 0 : index
    %c12_275 = arith.constant 12 : index
    %c2_276 = arith.constant 2 : index
    %c0_277 = arith.constant 0 : index
    %308 = vector.load %arg13[%c0_274, %c12_275, %c2_276, %c0_277] : memref<2x18x18x64xf32, #tpu.memory_space<vmem>>, vector<2x4x16x64xf32>
    %c2_278 = arith.constant 2 : index
    %c0_279 = arith.constant 0 : index
    %309 = vector.load %arg4[%c2_278, %c0_279] : memref<9x64xf32, #tpu.memory_space<vmem>>, vector<1x64xf32>
    %310 = vector.shape_cast %309 : vector<1x64xf32> to vector<64xf32>
    %311 = vector.shape_cast %310 : vector<64xf32> to vector<1x1x1x64xf32>
    %312 = vector.broadcast %311 : vector<1x1x1x64xf32> to vector<2x4x16x64xf32>
    %313 = arith.mulf %308, %312 : vector<2x4x16x64xf32>
    %314 = arith.addf %307, %313 : vector<2x4x16x64xf32>
    %c0_280 = arith.constant 0 : index
    %c13_281 = arith.constant 13 : index
    %c0_282 = arith.constant 0 : index
    %c0_283 = arith.constant 0 : index
    %315 = vector.load %arg13[%c0_280, %c13_281, %c0_282, %c0_283] : memref<2x18x18x64xf32, #tpu.memory_space<vmem>>, vector<2x4x16x64xf32>
    %c3_284 = arith.constant 3 : index
    %c0_285 = arith.constant 0 : index
    %316 = vector.load %arg4[%c3_284, %c0_285] : memref<9x64xf32, #tpu.memory_space<vmem>>, vector<1x64xf32>
    %317 = vector.shape_cast %316 : vector<1x64xf32> to vector<64xf32>
    %318 = vector.shape_cast %317 : vector<64xf32> to vector<1x1x1x64xf32>
    %319 = vector.broadcast %318 : vector<1x1x1x64xf32> to vector<2x4x16x64xf32>
    %320 = arith.mulf %315, %319 : vector<2x4x16x64xf32>
    %321 = arith.addf %314, %320 : vector<2x4x16x64xf32>
    %c0_286 = arith.constant 0 : index
    %c13_287 = arith.constant 13 : index
    %c1_288 = arith.constant 1 : index
    %c0_289 = arith.constant 0 : index
    %322 = vector.load %arg13[%c0_286, %c13_287, %c1_288, %c0_289] : memref<2x18x18x64xf32, #tpu.memory_space<vmem>>, vector<2x4x16x64xf32>
    %c4_290 = arith.constant 4 : index
    %c0_291 = arith.constant 0 : index
    %323 = vector.load %arg4[%c4_290, %c0_291] : memref<9x64xf32, #tpu.memory_space<vmem>>, vector<1x64xf32>
    %324 = vector.shape_cast %323 : vector<1x64xf32> to vector<64xf32>
    %325 = vector.shape_cast %324 : vector<64xf32> to vector<1x1x1x64xf32>
    %326 = vector.broadcast %325 : vector<1x1x1x64xf32> to vector<2x4x16x64xf32>
    %327 = arith.mulf %322, %326 : vector<2x4x16x64xf32>
    %328 = arith.addf %321, %327 : vector<2x4x16x64xf32>
    %c0_292 = arith.constant 0 : index
    %c13_293 = arith.constant 13 : index
    %c2_294 = arith.constant 2 : index
    %c0_295 = arith.constant 0 : index
    %329 = vector.load %arg13[%c0_292, %c13_293, %c2_294, %c0_295] : memref<2x18x18x64xf32, #tpu.memory_space<vmem>>, vector<2x4x16x64xf32>
    %c5_296 = arith.constant 5 : index
    %c0_297 = arith.constant 0 : index
    %330 = vector.load %arg4[%c5_296, %c0_297] : memref<9x64xf32, #tpu.memory_space<vmem>>, vector<1x64xf32>
    %331 = vector.shape_cast %330 : vector<1x64xf32> to vector<64xf32>
    %332 = vector.shape_cast %331 : vector<64xf32> to vector<1x1x1x64xf32>
    %333 = vector.broadcast %332 : vector<1x1x1x64xf32> to vector<2x4x16x64xf32>
    %334 = arith.mulf %329, %333 : vector<2x4x16x64xf32>
    %335 = arith.addf %328, %334 : vector<2x4x16x64xf32>
    %c0_298 = arith.constant 0 : index
    %c14 = arith.constant 14 : index
    %c0_299 = arith.constant 0 : index
    %c0_300 = arith.constant 0 : index
    %336 = vector.load %arg13[%c0_298, %c14, %c0_299, %c0_300] : memref<2x18x18x64xf32, #tpu.memory_space<vmem>>, vector<2x4x16x64xf32>
    %c6_301 = arith.constant 6 : index
    %c0_302 = arith.constant 0 : index
    %337 = vector.load %arg4[%c6_301, %c0_302] : memref<9x64xf32, #tpu.memory_space<vmem>>, vector<1x64xf32>
    %338 = vector.shape_cast %337 : vector<1x64xf32> to vector<64xf32>
    %339 = vector.shape_cast %338 : vector<64xf32> to vector<1x1x1x64xf32>
    %340 = vector.broadcast %339 : vector<1x1x1x64xf32> to vector<2x4x16x64xf32>
    %341 = arith.mulf %336, %340 : vector<2x4x16x64xf32>
    %342 = arith.addf %335, %341 : vector<2x4x16x64xf32>
    %c0_303 = arith.constant 0 : index
    %c14_304 = arith.constant 14 : index
    %c1_305 = arith.constant 1 : index
    %c0_306 = arith.constant 0 : index
    %343 = vector.load %arg13[%c0_303, %c14_304, %c1_305, %c0_306] : memref<2x18x18x64xf32, #tpu.memory_space<vmem>>, vector<2x4x16x64xf32>
    %c7_307 = arith.constant 7 : index
    %c0_308 = arith.constant 0 : index
    %344 = vector.load %arg4[%c7_307, %c0_308] : memref<9x64xf32, #tpu.memory_space<vmem>>, vector<1x64xf32>
    %345 = vector.shape_cast %344 : vector<1x64xf32> to vector<64xf32>
    %346 = vector.shape_cast %345 : vector<64xf32> to vector<1x1x1x64xf32>
    %347 = vector.broadcast %346 : vector<1x1x1x64xf32> to vector<2x4x16x64xf32>
    %348 = arith.mulf %343, %347 : vector<2x4x16x64xf32>
    %349 = arith.addf %342, %348 : vector<2x4x16x64xf32>
    %c0_309 = arith.constant 0 : index
    %c14_310 = arith.constant 14 : index
    %c2_311 = arith.constant 2 : index
    %c0_312 = arith.constant 0 : index
    %350 = vector.load %arg13[%c0_309, %c14_310, %c2_311, %c0_312] : memref<2x18x18x64xf32, #tpu.memory_space<vmem>>, vector<2x4x16x64xf32>
    %c8_313 = arith.constant 8 : index
    %c0_314 = arith.constant 0 : index
    %351 = vector.load %arg4[%c8_313, %c0_314] : memref<9x64xf32, #tpu.memory_space<vmem>>, vector<1x64xf32>
    %352 = vector.shape_cast %351 : vector<1x64xf32> to vector<64xf32>
    %353 = vector.shape_cast %352 : vector<64xf32> to vector<1x1x1x64xf32>
    %354 = vector.broadcast %353 : vector<1x1x1x64xf32> to vector<2x4x16x64xf32>
    %355 = arith.mulf %350, %354 : vector<2x4x16x64xf32>
    %356 = arith.addf %349, %355 : vector<2x4x16x64xf32>
    %c0_315 = arith.constant 0 : index
    %c12_316 = arith.constant 12 : index
    %c0_317 = arith.constant 0 : index
    %c0_318 = arith.constant 0 : index
    %357 = vector.load %arg14[%c0_315, %c12_316, %c0_317, %c0_318] : memref<2x16x16x64xf32, #tpu.memory_space<vmem>>, vector<2x4x16x64xf32>
    tpu.vector_store %arg14[%c0_315, %c12_316, %c0_317, %c0_318], %356 {strides = array<i32>} : memref<2x16x16x64xf32, #tpu.memory_space<vmem>>, vector<2x4x16x64xf32>,
    %cst_319 = arith.constant dense<0.000000e+00> : vector<2x16x64xf32>
    %358 = vector.multi_reduction <add>, %356, %cst_319 [1] : vector<2x4x16x64xf32> to vector<2x16x64xf32>
    %cst_320 = arith.constant dense<0.000000e+00> : vector<2x64xf32>
    %359 = vector.multi_reduction <add>, %358, %cst_320 [1] : vector<2x16x64xf32> to vector<2x64xf32>
    %360 = arith.addf %290, %359 : vector<2x64xf32>
    %cst_321 = arith.constant 3.906250e-03 : f32
    %361 = vector.broadcast %cst_321 : f32 to vector<2x64xf32>
    %362 = arith.mulf %360, %361 : vector<2x64xf32>
    %c0_322 = arith.constant 0 : index
    %c0_323 = arith.constant 0 : index
    %363 = vector.load %arg6[%c0_322, %c0_323] : memref<64x8xf32, #tpu.memory_space<vmem>>, vector<64x8xf32>
    %cst_324 = arith.constant dense<0.000000e+00> : vector<2x8xf32>
    %364 = tpu.matmul %362, %363, %cst_324 {dimension_numbers = #tpu.dot_dimension_numbers<[1], [0], [0], [1], [0, 0, 1, 1], [], []>} : vector<2x64xf32>, vector<64x8xf32>, vector<2x8xf32> -> vector<2x8xf32>
    %c0_325 = arith.constant 0 : index
    %c0_326 = arith.constant 0 : index
    %365 = vector.load %arg7[%c0_325, %c0_326] : memref<1x8xf32, #tpu.memory_space<vmem>>, vector<1x8xf32>
    %366 = vector.broadcast %365 : vector<1x8xf32> to vector<2x8xf32>
    %367 = arith.addf %364, %366 : vector<2x8xf32>
    %cst_327 = arith.constant 0.000000e+00 : f32
    %368 = vector.broadcast %cst_327 : f32 to vector<2x8xf32>
    %369 = arith.maximumf %367, %368 : vector<2x8xf32>
    %c0_328 = arith.constant 0 : index
    %c0_329 = arith.constant 0 : index
    %370 = vector.load %arg8[%c0_328, %c0_329] : memref<8x64xf32, #tpu.memory_space<vmem>>, vector<8x64xf32>
    %cst_330 = arith.constant dense<0.000000e+00> : vector<2x64xf32>
    %371 = tpu.matmul %369, %370, %cst_330 {dimension_numbers = #tpu.dot_dimension_numbers<[1], [0], [0], [1], [0, 0, 1, 1], [], []>} : vector<2x8xf32>, vector<8x64xf32>, vector<2x64xf32> -> vector<2x64xf32>
    %c0_331 = arith.constant 0 : index
    %c0_332 = arith.constant 0 : index
    %372 = vector.load %arg9[%c0_331, %c0_332] : memref<1x64xf32, #tpu.memory_space<vmem>>, vector<1x64xf32>
    %373 = vector.broadcast %372 : vector<1x64xf32> to vector<2x64xf32>
    %374 = arith.addf %371, %373 : vector<2x64xf32>
    %cst_333 = arith.constant 3.000000e+00 : f32
    %375 = vector.broadcast %cst_333 : f32 to vector<2x64xf32>
    %376 = arith.addf %374, %375 : vector<2x64xf32>
    %cst_334 = arith.constant 0.000000e+00 : f32
    %cst_335 = arith.constant 6.000000e+00 : f32
    %377 = vector.broadcast %cst_334 : f32 to vector<2x64xf32>
    %378 = arith.maximumf %377, %376 : vector<2x64xf32>
    %379 = vector.broadcast %cst_335 : f32 to vector<2x64xf32>
    %380 = arith.minimumf %379, %378 : vector<2x64xf32>
    %cst_336 = arith.constant 0.166666672 : f32
    %381 = vector.broadcast %cst_336 : f32 to vector<2x64xf32>
    %382 = arith.mulf %380, %381 : vector<2x64xf32>
    %c0_337 = arith.constant 0 : index
    %c0_338 = arith.constant 0 : index
    %c0_339 = arith.constant 0 : index
    %c0_340 = arith.constant 0 : index
    %383 = vector.load %arg14[%c0_337, %c0_338, %c0_339, %c0_340] : memref<2x16x16x64xf32, #tpu.memory_space<vmem>>, vector<2x4x16x64xf32>
    %384 = vector.shape_cast %382 : vector<2x64xf32> to vector<2x1x1x64xf32>
    %385 = vector.broadcast %384 : vector<2x1x1x64xf32> to vector<2x4x16x64xf32>
    %386 = arith.mulf %383, %385 : vector<2x4x16x64xf32>
    %cst_341 = arith.constant 3.000000e+00 : f32
    %387 = vector.broadcast %cst_341 : f32 to vector<2x4x16x64xf32>
    %388 = arith.addf %386, %387 : vector<2x4x16x64xf32>
    %cst_342 = arith.constant 0.000000e+00 : f32
    %cst_343 = arith.constant 6.000000e+00 : f32
    %389 = vector.broadcast %cst_342 : f32 to vector<2x4x16x64xf32>
    %390 = arith.maximumf %389, %388 : vector<2x4x16x64xf32>
    %391 = vector.broadcast %cst_343 : f32 to vector<2x4x16x64xf32>
    %392 = arith.minimumf %391, %390 : vector<2x4x16x64xf32>
    %cst_344 = arith.constant 0.166666672 : f32
    %393 = vector.broadcast %cst_344 : f32 to vector<2x4x16x64xf32>
    %394 = arith.mulf %392, %393 : vector<2x4x16x64xf32>
    %395 = arith.mulf %386, %394 : vector<2x4x16x64xf32>
    %396 = vector.shape_cast %395 : vector<2x4x16x64xf32> to vector<128x64xf32>
    %c0_345 = arith.constant 0 : index
    %c0_346 = arith.constant 0 : index
    %397 = vector.load %arg10[%c0_345, %c0_346] : memref<64x16xf32, #tpu.memory_space<vmem>>, vector<64x16xf32>
    %cst_347 = arith.constant dense<0.000000e+00> : vector<128x16xf32>
    %398 = tpu.matmul %396, %397, %cst_347 {dimension_numbers = #tpu.dot_dimension_numbers<[1], [0], [0], [1], [0, 0, 1, 1], [], []>} : vector<128x64xf32>, vector<64x16xf32>, vector<128x16xf32> -> vector<128x16xf32>
    %c0_348 = arith.constant 0 : index
    %c0_349 = arith.constant 0 : index
    %399 = vector.load %arg11[%c0_348, %c0_349] : memref<1x16xf32, #tpu.memory_space<vmem>>, vector<1x16xf32>
    %400 = vector.broadcast %399 : vector<1x16xf32> to vector<128x16xf32>
    %401 = arith.addf %398, %400 : vector<128x16xf32>
    %402 = vector.shape_cast %401 : vector<128x16xf32> to vector<2x4x16x16xf32>
    %c0_350 = arith.constant 0 : index
    %c0_351 = arith.constant 0 : index
    %c0_352 = arith.constant 0 : index
    %c0_353 = arith.constant 0 : index
    %403 = vector.load %arg1[%c0_350, %c0_351, %c0_352, %c0_353] : memref<2x16x16x16xf32, #tpu.memory_space<vmem>>, vector<2x4x16x16xf32>
    %404 = arith.addf %402, %403 : vector<2x4x16x16xf32>
    %c0_354 = arith.constant 0 : index
    %c0_355 = arith.constant 0 : index
    %c0_356 = arith.constant 0 : index
    %c0_357 = arith.constant 0 : index
    %405 = vector.load %arg12[%c0_354, %c0_355, %c0_356, %c0_357] : memref<2x16x16x16xf32, #tpu.memory_space<vmem>>, vector<2x4x16x16xf32>
    tpu.vector_store %arg12[%c0_354, %c0_355, %c0_356, %c0_357], %404 {strides = array<i32>} : memref<2x16x16x16xf32, #tpu.memory_space<vmem>>, vector<2x4x16x16xf32>,
    %c0_358 = arith.constant 0 : index
    %c4_359 = arith.constant 4 : index
    %c0_360 = arith.constant 0 : index
    %c0_361 = arith.constant 0 : index
    %406 = vector.load %arg14[%c0_358, %c4_359, %c0_360, %c0_361] : memref<2x16x16x64xf32, #tpu.memory_space<vmem>>, vector<2x4x16x64xf32>
    %407 = vector.shape_cast %382 : vector<2x64xf32> to vector<2x1x1x64xf32>
    %408 = vector.broadcast %407 : vector<2x1x1x64xf32> to vector<2x4x16x64xf32>
    %409 = arith.mulf %406, %408 : vector<2x4x16x64xf32>
    %cst_362 = arith.constant 3.000000e+00 : f32
    %410 = vector.broadcast %cst_362 : f32 to vector<2x4x16x64xf32>
    %411 = arith.addf %409, %410 : vector<2x4x16x64xf32>
    %cst_363 = arith.constant 0.000000e+00 : f32
    %cst_364 = arith.constant 6.000000e+00 : f32
    %412 = vector.broadcast %cst_363 : f32 to vector<2x4x16x64xf32>
    %413 = arith.maximumf %412, %411 : vector<2x4x16x64xf32>
    %414 = vector.broadcast %cst_364 : f32 to vector<2x4x16x64xf32>
    %415 = arith.minimumf %414, %413 : vector<2x4x16x64xf32>
    %cst_365 = arith.constant 0.166666672 : f32
    %416 = vector.broadcast %cst_365 : f32 to vector<2x4x16x64xf32>
    %417 = arith.mulf %415, %416 : vector<2x4x16x64xf32>
    %418 = arith.mulf %409, %417 : vector<2x4x16x64xf32>
    %419 = vector.shape_cast %418 : vector<2x4x16x64xf32> to vector<128x64xf32>
    %c0_366 = arith.constant 0 : index
    %c0_367 = arith.constant 0 : index
    %420 = vector.load %arg10[%c0_366, %c0_367] : memref<64x16xf32, #tpu.memory_space<vmem>>, vector<64x16xf32>
    %cst_368 = arith.constant dense<0.000000e+00> : vector<128x16xf32>
    %421 = tpu.matmul %419, %420, %cst_368 {dimension_numbers = #tpu.dot_dimension_numbers<[1], [0], [0], [1], [0, 0, 1, 1], [], []>} : vector<128x64xf32>, vector<64x16xf32>, vector<128x16xf32> -> vector<128x16xf32>
    %c0_369 = arith.constant 0 : index
    %c0_370 = arith.constant 0 : index
    %422 = vector.load %arg11[%c0_369, %c0_370] : memref<1x16xf32, #tpu.memory_space<vmem>>, vector<1x16xf32>
    %423 = vector.broadcast %422 : vector<1x16xf32> to vector<128x16xf32>
    %424 = arith.addf %421, %423 : vector<128x16xf32>
    %425 = vector.shape_cast %424 : vector<128x16xf32> to vector<2x4x16x16xf32>
    %c0_371 = arith.constant 0 : index
    %c4_372 = arith.constant 4 : index
    %c0_373 = arith.constant 0 : index
    %c0_374 = arith.constant 0 : index
    %426 = vector.load %arg1[%c0_371, %c4_372, %c0_373, %c0_374] : memref<2x16x16x16xf32, #tpu.memory_space<vmem>>, vector<2x4x16x16xf32>
    %427 = arith.addf %425, %426 : vector<2x4x16x16xf32>
    %c0_375 = arith.constant 0 : index
    %c4_376 = arith.constant 4 : index
    %c0_377 = arith.constant 0 : index
    %c0_378 = arith.constant 0 : index
    %428 = vector.load %arg12[%c0_375, %c4_376, %c0_377, %c0_378] : memref<2x16x16x16xf32, #tpu.memory_space<vmem>>, vector<2x4x16x16xf32>
    tpu.vector_store %arg12[%c0_375, %c4_376, %c0_377, %c0_378], %427 {strides = array<i32>} : memref<2x16x16x16xf32, #tpu.memory_space<vmem>>, vector<2x4x16x16xf32>,
    %c0_379 = arith.constant 0 : index
    %c8_380 = arith.constant 8 : index
    %c0_381 = arith.constant 0 : index
    %c0_382 = arith.constant 0 : index
    %429 = vector.load %arg14[%c0_379, %c8_380, %c0_381, %c0_382] : memref<2x16x16x64xf32, #tpu.memory_space<vmem>>, vector<2x4x16x64xf32>
    %430 = vector.shape_cast %382 : vector<2x64xf32> to vector<2x1x1x64xf32>
    %431 = vector.broadcast %430 : vector<2x1x1x64xf32> to vector<2x4x16x64xf32>
    %432 = arith.mulf %429, %431 : vector<2x4x16x64xf32>
    %cst_383 = arith.constant 3.000000e+00 : f32
    %433 = vector.broadcast %cst_383 : f32 to vector<2x4x16x64xf32>
    %434 = arith.addf %432, %433 : vector<2x4x16x64xf32>
    %cst_384 = arith.constant 0.000000e+00 : f32
    %cst_385 = arith.constant 6.000000e+00 : f32
    %435 = vector.broadcast %cst_384 : f32 to vector<2x4x16x64xf32>
    %436 = arith.maximumf %435, %434 : vector<2x4x16x64xf32>
    %437 = vector.broadcast %cst_385 : f32 to vector<2x4x16x64xf32>
    %438 = arith.minimumf %437, %436 : vector<2x4x16x64xf32>
    %cst_386 = arith.constant 0.166666672 : f32
    %439 = vector.broadcast %cst_386 : f32 to vector<2x4x16x64xf32>
    %440 = arith.mulf %438, %439 : vector<2x4x16x64xf32>
    %441 = arith.mulf %432, %440 : vector<2x4x16x64xf32>
    %442 = vector.shape_cast %441 : vector<2x4x16x64xf32> to vector<128x64xf32>
    %c0_387 = arith.constant 0 : index
    %c0_388 = arith.constant 0 : index
    %443 = vector.load %arg10[%c0_387, %c0_388] : memref<64x16xf32, #tpu.memory_space<vmem>>, vector<64x16xf32>
    %cst_389 = arith.constant dense<0.000000e+00> : vector<128x16xf32>
    %444 = tpu.matmul %442, %443, %cst_389 {dimension_numbers = #tpu.dot_dimension_numbers<[1], [0], [0], [1], [0, 0, 1, 1], [], []>} : vector<128x64xf32>, vector<64x16xf32>, vector<128x16xf32> -> vector<128x16xf32>
    %c0_390 = arith.constant 0 : index
    %c0_391 = arith.constant 0 : index
    %445 = vector.load %arg11[%c0_390, %c0_391] : memref<1x16xf32, #tpu.memory_space<vmem>>, vector<1x16xf32>
    %446 = vector.broadcast %445 : vector<1x16xf32> to vector<128x16xf32>
    %447 = arith.addf %444, %446 : vector<128x16xf32>
    %448 = vector.shape_cast %447 : vector<128x16xf32> to vector<2x4x16x16xf32>
    %c0_392 = arith.constant 0 : index
    %c8_393 = arith.constant 8 : index
    %c0_394 = arith.constant 0 : index
    %c0_395 = arith.constant 0 : index
    %449 = vector.load %arg1[%c0_392, %c8_393, %c0_394, %c0_395] : memref<2x16x16x16xf32, #tpu.memory_space<vmem>>, vector<2x4x16x16xf32>
    %450 = arith.addf %448, %449 : vector<2x4x16x16xf32>
    %c0_396 = arith.constant 0 : index
    %c8_397 = arith.constant 8 : index
    %c0_398 = arith.constant 0 : index
    %c0_399 = arith.constant 0 : index
    %451 = vector.load %arg12[%c0_396, %c8_397, %c0_398, %c0_399] : memref<2x16x16x16xf32, #tpu.memory_space<vmem>>, vector<2x4x16x16xf32>
    tpu.vector_store %arg12[%c0_396, %c8_397, %c0_398, %c0_399], %450 {strides = array<i32>} : memref<2x16x16x16xf32, #tpu.memory_space<vmem>>, vector<2x4x16x16xf32>,
    %c0_400 = arith.constant 0 : index
    %c12_401 = arith.constant 12 : index
    %c0_402 = arith.constant 0 : index
    %c0_403 = arith.constant 0 : index
    %452 = vector.load %arg14[%c0_400, %c12_401, %c0_402, %c0_403] : memref<2x16x16x64xf32, #tpu.memory_space<vmem>>, vector<2x4x16x64xf32>
    %453 = vector.shape_cast %382 : vector<2x64xf32> to vector<2x1x1x64xf32>
    %454 = vector.broadcast %453 : vector<2x1x1x64xf32> to vector<2x4x16x64xf32>
    %455 = arith.mulf %452, %454 : vector<2x4x16x64xf32>
    %cst_404 = arith.constant 3.000000e+00 : f32
    %456 = vector.broadcast %cst_404 : f32 to vector<2x4x16x64xf32>
    %457 = arith.addf %455, %456 : vector<2x4x16x64xf32>
    %cst_405 = arith.constant 0.000000e+00 : f32
    %cst_406 = arith.constant 6.000000e+00 : f32
    %458 = vector.broadcast %cst_405 : f32 to vector<2x4x16x64xf32>
    %459 = arith.maximumf %458, %457 : vector<2x4x16x64xf32>
    %460 = vector.broadcast %cst_406 : f32 to vector<2x4x16x64xf32>
    %461 = arith.minimumf %460, %459 : vector<2x4x16x64xf32>
    %cst_407 = arith.constant 0.166666672 : f32
    %462 = vector.broadcast %cst_407 : f32 to vector<2x4x16x64xf32>
    %463 = arith.mulf %461, %462 : vector<2x4x16x64xf32>
    %464 = arith.mulf %455, %463 : vector<2x4x16x64xf32>
    %465 = vector.shape_cast %464 : vector<2x4x16x64xf32> to vector<128x64xf32>
    %c0_408 = arith.constant 0 : index
    %c0_409 = arith.constant 0 : index
    %466 = vector.load %arg10[%c0_408, %c0_409] : memref<64x16xf32, #tpu.memory_space<vmem>>, vector<64x16xf32>
    %cst_410 = arith.constant dense<0.000000e+00> : vector<128x16xf32>
    %467 = tpu.matmul %465, %466, %cst_410 {dimension_numbers = #tpu.dot_dimension_numbers<[1], [0], [0], [1], [0, 0, 1, 1], [], []>} : vector<128x64xf32>, vector<64x16xf32>, vector<128x16xf32> -> vector<128x16xf32>
    %c0_411 = arith.constant 0 : index
    %c0_412 = arith.constant 0 : index
    %468 = vector.load %arg11[%c0_411, %c0_412] : memref<1x16xf32, #tpu.memory_space<vmem>>, vector<1x16xf32>
    %469 = vector.broadcast %468 : vector<1x16xf32> to vector<128x16xf32>
    %470 = arith.addf %467, %469 : vector<128x16xf32>
    %471 = vector.shape_cast %470 : vector<128x16xf32> to vector<2x4x16x16xf32>
    %c0_413 = arith.constant 0 : index
    %c12_414 = arith.constant 12 : index
    %c0_415 = arith.constant 0 : index
    %c0_416 = arith.constant 0 : index
    %472 = vector.load %arg1[%c0_413, %c12_414, %c0_415, %c0_416] : memref<2x16x16x16xf32, #tpu.memory_space<vmem>>, vector<2x4x16x16xf32>
    %473 = arith.addf %471, %472 : vector<2x4x16x16xf32>
    %c0_417 = arith.constant 0 : index
    %c12_418 = arith.constant 12 : index
    %c0_419 = arith.constant 0 : index
    %c0_420 = arith.constant 0 : index
    %474 = vector.load %arg12[%c0_417, %c12_418, %c0_419, %c0_420] : memref<2x16x16x16xf32, #tpu.memory_space<vmem>>, vector<2x4x16x16xf32>
    tpu.vector_store %arg12[%c0_417, %c12_418, %c0_419, %c0_420], %473 {strides = array<i32>} : memref<2x16x16x16xf32, #tpu.memory_space<vmem>>, vector<2x4x16x16xf32>,
    return
  }
  func.func @transform_0(%arg0: i32) -> (i32, i32, i32, i32) {
    %c0_i32 = arith.constant 0 : i32
    %c0_i32_0 = arith.constant 0 : i32
    %c0_i32_1 = arith.constant 0 : i32
    %c0_i32_2 = arith.constant 0 : i32
    return %arg0, %c0_i32, %c0_i32_0, %c0_i32_1 : i32, i32, i32, i32
  }
  func.func @transform_1(%arg0: i32) -> (i32, i32) {
    %c0_i32 = arith.constant 0 : i32
    %c0_i32_0 = arith.constant 0 : i32
    %c0_i32_1 = arith.constant 0 : i32
    return %c0_i32, %c0_i32_0 : i32, i32
  }
  func.func @transform_2(%arg0: i32) -> (i32, i32) {
    %c0_i32 = arith.constant 0 : i32
    %c0_i32_0 = arith.constant 0 : i32
    %c0_i32_1 = arith.constant 0 : i32
    return %c0_i32, %c0_i32_0 : i32, i32
  }
  func.func @transform_3(%arg0: i32) -> (i32, i32) {
    %c0_i32 = arith.constant 0 : i32
    %c0_i32_0 = arith.constant 0 : i32
    %c0_i32_1 = arith.constant 0 : i32
    return %c0_i32, %c0_i32_0 : i32, i32
  }
  func.func @transform_4(%arg0: i32) -> (i32, i32) {
    %c0_i32 = arith.constant 0 : i32
    %c0_i32_0 = arith.constant 0 : i32
    %c0_i32_1 = arith.constant 0 : i32
    return %c0_i32, %c0_i32_0 : i32, i32
  }
  func.func @transform_5(%arg0: i32) -> (i32, i32) {
    %c0_i32 = arith.constant 0 : i32
    %c0_i32_0 = arith.constant 0 : i32
    %c0_i32_1 = arith.constant 0 : i32
    return %c0_i32, %c0_i32_0 : i32, i32
  }
  func.func @transform_6(%arg0: i32) -> (i32, i32) {
    %c0_i32 = arith.constant 0 : i32
    %c0_i32_0 = arith.constant 0 : i32
    %c0_i32_1 = arith.constant 0 : i32
    return %c0_i32, %c0_i32_0 : i32, i32
  }
  func.func @transform_7(%arg0: i32) -> (i32, i32) {
    %c0_i32 = arith.constant 0 : i32
    %c0_i32_0 = arith.constant 0 : i32
    %c0_i32_1 = arith.constant 0 : i32
    return %c0_i32, %c0_i32_0 : i32, i32
  }
  func.func @transform_8(%arg0: i32) -> (i32, i32) {
    %c0_i32 = arith.constant 0 : i32
    %c0_i32_0 = arith.constant 0 : i32
    %c0_i32_1 = arith.constant 0 : i32
    return %c0_i32, %c0_i32_0 : i32, i32
  }
  func.func @transform_9(%arg0: i32) -> (i32, i32) {
    %c0_i32 = arith.constant 0 : i32
    %c0_i32_0 = arith.constant 0 : i32
    %c0_i32_1 = arith.constant 0 : i32
    return %c0_i32, %c0_i32_0 : i32, i32
  }
  func.func @transform_10(%arg0: i32) -> (i32, i32) {
    %c0_i32 = arith.constant 0 : i32
    %c0_i32_0 = arith.constant 0 : i32
    %c0_i32_1 = arith.constant 0 : i32
    return %c0_i32, %c0_i32_0 : i32, i32
  }
  func.func @transform_11(%arg0: i32) -> (i32, i32, i32, i32) {
    %c0_i32 = arith.constant 0 : i32
    %c0_i32_0 = arith.constant 0 : i32
    %c0_i32_1 = arith.constant 0 : i32
    %c0_i32_2 = arith.constant 0 : i32
    return %arg0, %c0_i32, %c0_i32_0, %c0_i32_1 : i32, i32, i32, i32
  }
}

</mosaic_0001>

<llo_original>
// kernel: tpu_custom_call.1
$region0: #{tpu_custom_call.1}
  #allocation0 [shape = 'u32[]', space=smem, size = 0x4, offset = 0x4, fixed_abs, tag = 'smem constant byte address 0x4 - core index']
  #allocation1 [shape = 'u32[144,128]{1,0:T(1,128)}', space=vmem, size = 0x12000, scoped, tag = 'internal scratch']
  #allocation2 [shape = 'f32[2,18,18,64]{3,2,1,0:T(8,128)}', space=vmem, size = 0x6c000, scoped, tag = 'scratch operand']
  #allocation3 [shape = 'f32[2,16,16,64]{3,2,1,0:T(8,128)}', space=vmem, size = 0x40000, scoped, tag = 'scratch operand']
  %s0 = inlined_call_operand.hbm [shape: f32[8,16,16,16], index: 0, kind: input, shape index: {}]
  %s1 = inlined_call_operand.vmem [shape: f32[16,64], index: 1, kind: input, shape index: {}]
  %s2 = inlined_call_operand.vmem [shape: f32[1,64], index: 2, kind: input, shape index: {}]
  %s3 = inlined_call_operand.vmem [shape: f32[9,64], index: 3, kind: input, shape index: {}]
  %s4 = inlined_call_operand.vmem [shape: f32[1,64], index: 4, kind: input, shape index: {}]
  %s5 = inlined_call_operand.vmem [shape: f32[64,8], index: 5, kind: input, shape index: {}]
  %s6 = inlined_call_operand.vmem [shape: f32[1,8], index: 6, kind: input, shape index: {}]
  %s7 = inlined_call_operand.vmem [shape: f32[8,64], index: 7, kind: input, shape index: {}]
  %s8 = inlined_call_operand.vmem [shape: f32[1,64], index: 8, kind: input, shape index: {}]
  %s9 = inlined_call_operand.vmem [shape: f32[64,16], index: 9, kind: input, shape index: {}]
  %s10 = inlined_call_operand.vmem [shape: f32[1,16], index: 10, kind: input, shape index: {}]
  %s11 = inlined_call_operand.hbm [shape: f32[8,16,16,16], index: 11, kind: output, shape index: {}]
  %s12 = sld [smem:[#allocation0]]
  $region81: #{tpu_custom_call.1} parent=0
    _
  %s14 = ssub.s32 1, %s12
  %s15 = scalar_select 0, %s14, %s12
  $region1: #{tpu_custom_call.1} parent=0
    #allocation4 [shape = 'u8[524288]{0}', space=vmem, size = 0x80000, scoped, tag = 'input window, operand 0']
    #allocation5 [shape = 's32[2]{0}', space=sflag, size = 0x8, scoped, tag = 'scoped memory for tpu_custom_call.1']
    #allocation6 [shape = 's32[2]{0}', space=sflag, size = 0x8, scoped, tag = 'scoped memory for tpu_custom_call.1']
    #allocation7 [shape = 'u8[524288]{0}', space=vmem, size = 0x80000, scoped, tag = 'output window, operand 0']
    %16 = vsyncpa [#allocation5], 0
    %s17 = scalar_lea.sflag [#allocation5], 1
    %18 = vsyncpa %s17, 0
    %19 = vsyncpa [#allocation6], 0
    %s20 = scalar_lea.sflag [#allocation6], 1
    %21 = vsyncpa %s20, 0
    loop: start=0, step=1, limit=6
    $region2: #{tpu_custom_call.1} parent=1 // loop_pre_header
      _
    $region3: #{tpu_custom_call.1} parent=1 // loop_header
      %s23 = sphi 0, %s27
      %p24 = scmp.ge.s32.totalorder %s23, 6
      %s33 = sphi 0, %s35
      %s36 = sphi 0, %s33
      %s37 = sphi 0, %s36
      %s53 = sphi 0, %s37
      %s57 = sphi 0, %s57
      %s59 = sphi 0, %s57
      %s60 = sphi 0, %s59
      %s74 = sphi 0, %s60
      %s78 = sphi 0, %s78
      %s80 = sphi 0, %s78
      %s81 = sphi 0, %s80
      %s95 = sphi 0, %s81
      %s99 = sphi 0, %s99
      %s101 = sphi 0, %s99
      %s102 = sphi 0, %s101
      %s116 = sphi 0, %s102
      %s120 = sphi 0, %s120
      %s122 = sphi 0, %s120
      %s123 = sphi 0, %s122
      %s137 = sphi 0, %s123
      %s141 = sphi 0, %s141
      %s143 = sphi 0, %s141
      %s144 = sphi 0, %s143
      %s158 = sphi 0, %s144
      %s162 = sphi 0, %s162
      %s164 = sphi 0, %s162
      %s165 = sphi 0, %s164
      %s179 = sphi 0, %s165
      %s183 = sphi 0, %s183
      %s185 = sphi 0, %s183
      %s186 = sphi 0, %s185
      %s200 = sphi 0, %s186
      %s204 = sphi 0, %s204
      %s206 = sphi 0, %s204
      %s207 = sphi 0, %s206
      %s221 = sphi 0, %s207
      %s225 = sphi 0, %s225
      %s227 = sphi 0, %s225
      %s228 = sphi 0, %s227
      %s242 = sphi 0, %s228
      %s246 = sphi 0, %s246
      %s248 = sphi 0, %s246
      %s249 = sphi 0, %s248
      %s263 = sphi 0, %s249
      %s269 = sphi 0, %s271
      %s272 = sphi 0, %s269
      %s273 = sphi 0, %s272
      %s289 = sphi 0, %s273
    $region4: #{tpu_custom_call.1} parent=1 // loop_header_branch
      %26 = sbr.rel (%p24) target = $region8
    $region5: #{tpu_custom_call.1} parent=1 // loop_body
      %s28 = ssub.s32 %s23, 1
      %s29 = ssub.s32 %s23, 2
      %s30 = sadd.s32 %s23, 1
      %s31 = ssub.s32 %s23, %s30
      %p32 = scmp.eq.s32.totalorder %s31, 0
      %s34 = sadd.s32 %s33, 1
      %s35 = scalar_select %p32, %s33, %s34
      %p38 = pneg %p32
      %p39 = scmp.eq.s32.totalorder %s23, 3
      %p40 = por %p38, %p39
      %p41 = scmp.ne.s32.totalorder %s33, %s36
      %p42 = scmp.eq.s32.totalorder %s23, 0
      %p43 = por %p41, %p42
      %p44 = scmp.ne.s32.totalorder %s33, %s36
      %p45 = scmp.eq.s32.totalorder %s28, 3
      %p46 = por %p44, %p45
      %p47 = scmp.ne.s32.totalorder %s36, %s37
      %p48 = scmp.eq.s32.totalorder %s28, 0
      %p49 = por %p47, %p48
      %p50 = scmp.ne.s32.totalorder %s36, %s37
      %p51 = scmp.eq.s32.totalorder %s29, 3
      %p52 = por %p50, %p51
      %p54 = scmp.ne.s32.totalorder %s37, %s53
      %p55 = scmp.eq.s32.totalorder %s29, 0
      %p56 = por %p54, %p55
      %s58 = sadd.s32 %s57, 1
      %p61 = scmp.eq.s32.totalorder %s23, 3
      %p62 = scmp.ne.s32.totalorder %s57, %s59
      %p63 = scmp.eq.s32.totalorder %s23, 0
      %p64 = por %p62, %p63
      %p65 = scmp.ne.s32.totalorder %s57, %s59
      %p66 = scmp.eq.s32.totalorder %s28, 3
      %p67 = por %p65, %p66
      %p68 = scmp.ne.s32.totalorder %s59, %s60
      %p69 = scmp.eq.s32.totalorder %s28, 0
      %p70 = por %p68, %p69
      %p71 = scmp.ne.s32.totalorder %s59, %s60
      %p72 = scmp.eq.s32.totalorder %s29, 3
      %p73 = por %p71, %p72
      %p75 = scmp.ne.s32.totalorder %s60, %s74
      %p76 = scmp.eq.s32.totalorder %s29, 0
      %p77 = por %p75, %p76
      %s79 = sadd.s32 %s78, 1
      %p82 = scmp.eq.s32.totalorder %s23, 3
      %p83 = scmp.ne.s32.totalorder %s78, %s80
      %p84 = scmp.eq.s32.totalorder %s23, 0
      %p85 = por %p83, %p84
      %p86 = scmp.ne.s32.totalorder %s78, %s80
      %p87 = scmp.eq.s32.totalorder %s28, 3
      %p88 = por %p86, %p87
      %p89 = scmp.ne.s32.totalorder %s80, %s81
      %p90 = scmp.eq.s32.totalorder %s28, 0
      %p91 = por %p89, %p90
      %p92 = scmp.ne.s32.totalorder %s80, %s81
      %p93 = scmp.eq.s32.totalorder %s29, 3
      %p94 = por %p92, %p93
      %p96 = scmp.ne.s32.totalorder %s81, %s95
      %p97 = scmp.eq.s32.totalorder %s29, 0
      %p98 = por %p96, %p97
      %s100 = sadd.s32 %s99, 1
      %p103 = scmp.eq.s32.totalorder %s23, 3
      %p104 = scmp.ne.s32.totalorder %s99, %s101
      %p105 = scmp.eq.s32.totalorder %s23, 0
      %p106 = por %p104, %p105
      %p107 = scmp.ne.s32.totalorder %s99, %s101
      %p108 = scmp.eq.s32.totalorder %s28, 3
      %p109 = por %p107, %p108
      %p110 = scmp.ne.s32.totalorder %s101, %s102
      %p111 = scmp.eq.s32.totalorder %s28, 0
      %p112 = por %p110, %p111
      %p113 = scmp.ne.s32.totalorder %s101, %s102
      %p114 = scmp.eq.s32.totalorder %s29, 3
      %p115 = por %p113, %p114
      %p117 = scmp.ne.s32.totalorder %s102, %s116
      %p118 = scmp.eq.s32.totalorder %s29, 0
      %p119 = por %p117, %p118
      %s121 = sadd.s32 %s120, 1
      %p124 = scmp.eq.s32.totalorder %s23, 3
      %p125 = scmp.ne.s32.totalorder %s120, %s122
      %p126 = scmp.eq.s32.totalorder %s23, 0
      %p127 = por %p125, %p126
      %p128 = scmp.ne.s32.totalorder %s120, %s122
      %p129 = scmp.eq.s32.totalorder %s28, 3
      %p130 = por %p128, %p129
      %p131 = scmp.ne.s32.totalorder %s122, %s123
      %p132 = scmp.eq.s32.totalorder %s28, 0
      %p133 = por %p131, %p132
      %p134 = scmp.ne.s32.totalorder %s122, %s123
      %p135 = scmp.eq.s32.totalorder %s29, 3
      %p136 = por %p134, %p135
      %p138 = scmp.ne.s32.totalorder %s123, %s137
      %p139 = scmp.eq.s32.totalorder %s29, 0
      %p140 = por %p138, %p139
      %s142 = sadd.s32 %s141, 1
      %p145 = scmp.eq.s32.totalorder %s23, 3
      %p146 = scmp.ne.s32.totalorder %s141, %s143
      %p147 = scmp.eq.s32.totalorder %s23, 0
      %p148 = por %p146, %p147
      %p149 = scmp.ne.s32.totalorder %s141, %s143
      %p150 = scmp.eq.s32.totalorder %s28, 3
      %p151 = por %p149, %p150
      %p152 = scmp.ne.s32.totalorder %s143, %s144
      %p153 = scmp.eq.s32.totalorder %s28, 0
      %p154 = por %p152, %p153
      %p155 = scmp.ne.s32.totalorder %s143, %s144
      %p156 = scmp.eq.s32.totalorder %s29, 3
      %p157 = por %p155, %p156
      %p159 = scmp.ne.s32.totalorder %s144, %s158
      %p160 = scmp.eq.s32.totalorder %s29, 0
      %p161 = por %p159, %p160
      %s163 = sadd.s32 %s162, 1
      %p166 = scmp.eq.s32.totalorder %s23, 3
      %p167 = scmp.ne.s32.totalorder %s162, %s164
      %p168 = scmp.eq.s32.totalorder %s23, 0
      %p169 = por %p167, %p168
      %p170 = scmp.ne.s32.totalorder %s162, %s164
      %p171 = scmp.eq.s32.totalorder %s28, 3
      %p172 = por %p170, %p171
      %p173 = scmp.ne.s32.totalorder %s164, %s165
      %p174 = scmp.eq.s32.totalorder %s28, 0
      %p175 = por %p173, %p174
      %p176 = scmp.ne.s32.totalorder %s164, %s165
      %p177 = scmp.eq.s32.totalorder %s29, 3
      %p178 = por %p176, %p177
      %p180 = scmp.ne.s32.totalorder %s165, %s179
      %p181 = scmp.eq.s32.totalorder %s29, 0
      %p182 = por %p180, %p181
      %s184 = sadd.s32 %s183, 1
      %p187 = scmp.eq.s32.totalorder %s23, 3
      %p188 = scmp.ne.s32.totalorder %s183, %s185
      %p189 = scmp.eq.s32.totalorder %s23, 0
      %p190 = por %p188, %p189
      %p191 = scmp.ne.s32.totalorder %s183, %s185
      %p192 = scmp.eq.s32.totalorder %s28, 3
      %p193 = por %p191, %p192
      %p194 = scmp.ne.s32.totalorder %s185, %s186
      %p195 = scmp.eq.s32.totalorder %s28, 0
      %p196 = por %p194, %p195
      %p197 = scmp.ne.s32.totalorder %s185, %s186
      %p198 = scmp.eq.s32.totalorder %s29, 3
      %p199 = por %p197, %p198
      %p201 = scmp.ne.s32.totalorder %s186, %s200
      %p202 = scmp.eq.s32.totalorder %s29, 0
      %p203 = por %p201, %p202
      %s205 = sadd.s32 %s204, 1
      %p208 = scmp.eq.s32.totalorder %s23, 3
      %p209 = scmp.ne.s32.totalorder %s204, %s206
      %p210 = scmp.eq.s32.totalorder %s23, 0
      %p211 = por %p209, %p210
      %p212 = scmp.ne.s32.totalorder %s204, %s206
      %p213 = scmp.eq.s32.totalorder %s28, 3
      %p214 = por %p212, %p213
      %p215 = scmp.ne.s32.totalorder %s206, %s207
      %p216 = scmp.eq.s32.totalorder %s28, 0
      %p217 = por %p215, %p216
      %p218 = scmp.ne.s32.totalorder %s206, %s207
      %p219 = scmp.eq.s32.totalorder %s29, 3
      %p220 = por %p218, %p219
      %p222 = scmp.ne.s32.totalorder %s207, %s221
      %p223 = scmp.eq.s32.totalorder %s29, 0
      %p224 = por %p222, %p223
      %s226 = sadd.s32 %s225, 1
      %p229 = scmp.eq.s32.totalorder %s23, 3
      %p230 = scmp.ne.s32.totalorder %s225, %s227
      %p231 = scmp.eq.s32.totalorder %s23, 0
      %p232 = por %p230, %p231
      %p233 = scmp.ne.s32.totalorder %s225, %s227
      %p234 = scmp.eq.s32.totalorder %s28, 3
      %p235 = por %p233, %p234
      %p236 = scmp.ne.s32.totalorder %s227, %s228
      %p237 = scmp.eq.s32.totalorder %s28, 0
      %p238 = por %p236, %p237
      %p239 = scmp.ne.s32.totalorder %s227, %s228
      %p240 = scmp.eq.s32.totalorder %s29, 3
      %p241 = por %p239, %p240
      %p243 = scmp.ne.s32.totalorder %s228, %s242
      %p244 = scmp.eq.s32.totalorder %s29, 0
      %p245 = por %p243, %p244
      %s247 = sadd.s32 %s246, 1
      %p250 = scmp.eq.s32.totalorder %s23, 3
      %p251 = scmp.ne.s32.totalorder %s246, %s248
      %p252 = scmp.eq.s32.totalorder %s23, 0
      %p253 = por %p251, %p252
      %p254 = scmp.ne.s32.totalorder %s246, %s248
      %p255 = scmp.eq.s32.totalorder %s28, 3
      %p256 = por %p254, %p255
      %p257 = scmp.ne.s32.totalorder %s248, %s249
      %p258 = scmp.eq.s32.totalorder %s28, 0
      %p259 = por %p257, %p258
      %p260 = scmp.ne.s32.totalorder %s248, %s249
      %p261 = scmp.eq.s32.totalorder %s29, 3
      %p262 = por %p260, %p261
      %p264 = scmp.ne.s32.totalorder %s249, %s263
      %p265 = scmp.eq.s32.totalorder %s29, 0
      %p266 = por %p264, %p265
      %s267 = ssub.s32 %s23, %s30
      %p268 = scmp.eq.s32.totalorder %s267, 0
      %s270 = sadd.s32 %s269, 1
      %s271 = scalar_select %p268, %s269, %s270
      %p274 = pneg %p268
      %p275 = scmp.eq.s32.totalorder %s23, 3
      %p276 = por %p274, %p275
      %p277 = scmp.ne.s32.totalorder %s269, %s272
      %p278 = scmp.eq.s32.totalorder %s23, 0
      %p279 = por %p277, %p278
      %p280 = scmp.ne.s32.totalorder %s269, %s272
      %p281 = scmp.eq.s32.totalorder %s28, 3
      %p282 = por %p280, %p281
      %p283 = scmp.ne.s32.totalorder %s272, %s273
      %p284 = scmp.eq.s32.totalorder %s28, 0
      %p285 = por %p283, %p284
      %p286 = scmp.ne.s32.totalorder %s272, %s273
      %p287 = scmp.eq.s32.totalorder %s29, 3
      %p288 = por %p286, %p287
      %p290 = scmp.ne.s32.totalorder %s273, %s289
      %p291 = scmp.eq.s32.totalorder %s29, 0
      %p292 = por %p290, %p291
      %p293 = scmp.le.s32.totalorder 1, %s23
      %p294 = scmp.lt.s32.totalorder %s23, 5
      %p295 = pnand %p293, %p294
      %p296 = pneg %p295
      // Predicated region
      $region9: #{tpu_custom_call.1} parent=5 // pred_check
        _
      $region10: #{tpu_custom_call.1} parent=5 // pred_check_branch
        %298 = sbr.rel (%p295) target = $region12
      $region11: #{tpu_custom_call.1} parent=5 // pred_region
        %s299 = ssub.s32 %s23, 1
        // Predicated region
        $region13: #{tpu_custom_call.1} parent=11 // pred_check
          %p300 = pneg %p70
        $region14: #{tpu_custom_call.1} parent=11 // pred_check_branch
          %302 = sbr.rel (%p300) target = $region16
        $region15: #{tpu_custom_call.1} parent=11 // pred_region
          _
        $region16: #{tpu_custom_call.1} parent=11 // pred_fallthru
          _
        // Predicated region
        $region17: #{tpu_custom_call.1} parent=11 // pred_check
          %p303 = pneg %p91
        $region18: #{tpu_custom_call.1} parent=11 // pred_check_branch
          %305 = sbr.rel (%p303) target = $region20
        $region19: #{tpu_custom_call.1} parent=11 // pred_region
          _
        $region20: #{tpu_custom_call.1} parent=11 // pred_fallthru
          _
        // Predicated region
        $region21: #{tpu_custom_call.1} parent=11 // pred_check
          %p306 = pneg %p112
        $region22: #{tpu_custom_call.1} parent=11 // pred_check_branch
          %308 = sbr.rel (%p306) target = $region24
        $region23: #{tpu_custom_call.1} parent=11 // pred_region
          _
        $region24: #{tpu_custom_call.1} parent=11 // pred_fallthru
          _
        // Predicated region
        $region25: #{tpu_custom_call.1} parent=11 // pred_check
          %p309 = pneg %p133
        $region26: #{tpu_custom_call.1} parent=11 // pred_check_branch
          %311 = sbr.rel (%p309) target = $region28
        $region27: #{tpu_custom_call.1} parent=11 // pred_region
          _
        $region28: #{tpu_custom_call.1} parent=11 // pred_fallthru
          _
        // Predicated region
        $region29: #{tpu_custom_call.1} parent=11 // pred_check
          %p312 = pneg %p154
        $region30: #{tpu_custom_call.1} parent=11 // pred_check_branch
          %314 = sbr.rel (%p312) target = $region32
        $region31: #{tpu_custom_call.1} parent=11 // pred_region
          _
        $region32: #{tpu_custom_call.1} parent=11 // pred_fallthru
          _
        // Predicated region
        $region33: #{tpu_custom_call.1} parent=11 // pred_check
          %p315 = pneg %p175
        $region34: #{tpu_custom_call.1} parent=11 // pred_check_branch
          %317 = sbr.rel (%p315) target = $region36
        $region35: #{tpu_custom_call.1} parent=11 // pred_region
          _
        $region36: #{tpu_custom_call.1} parent=11 // pred_fallthru
          _
        // Predicated region
        $region37: #{tpu_custom_call.1} parent=11 // pred_check
          %p318 = pneg %p196
        $region38: #{tpu_custom_call.1} parent=11 // pred_check_branch
          %320 = sbr.rel (%p318) target = $region40
        $region39: #{tpu_custom_call.1} parent=11 // pred_region
          _
        $region40: #{tpu_custom_call.1} parent=11 // pred_fallthru
          _
        // Predicated region
        $region41: #{tpu_custom_call.1} parent=11 // pred_check
          %p321 = pneg %p217
        $region42: #{tpu_custom_call.1} parent=11 // pred_check_branch
          %323 = sbr.rel (%p321) target = $region44
        $region43: #{tpu_custom_call.1} parent=11 // pred_region
          _
        $region44: #{tpu_custom_call.1} parent=11 // pred_fallthru
          _
        // Predicated region
        $region45: #{tpu_custom_call.1} parent=11 // pred_check
          %p324 = pneg %p238
        $region46: #{tpu_custom_call.1} parent=11 // pred_check_branch
          %326 = sbr.rel (%p324) target = $region48
        $region47: #{tpu_custom_call.1} parent=11 // pred_region
          _
        $region48: #{tpu_custom_call.1} parent=11 // pred_fallthru
          _
        // Predicated region
        $region49: #{tpu_custom_call.1} parent=11 // pred_check
          %p327 = pneg %p259
        $region50: #{tpu_custom_call.1} parent=11 // pred_check_branch
          %329 = sbr.rel (%p327) target = $region52
        $region51: #{tpu_custom_call.1} parent=11 // pred_region
          _
        $region52: #{tpu_custom_call.1} parent=11 // pred_fallthru
          _
      $region12: #{tpu_custom_call.1} parent=5 // pred_fallthru
        _
      %p330 = scmp.lt.s32.totalorder %s23, 4
      // Predicated region
      $region53: #{tpu_custom_call.1} parent=5 // pred_check
        %p331 = pneg %p330
      $region54: #{tpu_custom_call.1} parent=5 // pred_check_branch
        %333 = sbr.rel (%p331) target = $region56
      $region55: #{tpu_custom_call.1} parent=5 // pred_region
        // Predicated region
        $region57: #{tpu_custom_call.1} parent=55 // pred_check
          %p334 = pneg %p43
        $region58: #{tpu_custom_call.1} parent=55 // pred_check_branch
          %336 = sbr.rel (%p334) target = $region60
        $region59: #{tpu_custom_call.1} parent=55 // pred_region
          %s337 = sand.u32 %s33, 1
          %s338 = scalar_lea.sflag [#allocation5], %s337
          %s339 = sand.u32 %s33, 1
          %s340 = smul.addr %s339, 512
          %s341 = scalar_lea.vmem [#allocation4], %s340
          %s342 = smul.u32 2, %s23
          %s344 = ssub.s32 8192, 8192
          %345 = vsyncadd %s338, %s344
          %s346 = smul.addr %s342, 32
          %s347 = smul.addr %s346, 128
          %s348 = scalar_lea.hbm %s0, %s347
          %s349 = sshll.u32 %s341, 4
          %s350 = int_to_ptr.vmem [resolvable:$true] %s349
          %355 = dma.hbm_to_vmem [thread:$0]  %s348, 8192, %s350, %s338, 128, 128, 8
        $region60: #{tpu_custom_call.1} parent=55 // pred_fallthru
          _
      $region56: #{tpu_custom_call.1} parent=5 // pred_fallthru
        _
      %p356 = scmp.le.s32.totalorder 1, %s23
      %p357 = scmp.lt.s32.totalorder %s23, 5
      %p358 = pnand %p356, %p357
      %p359 = pneg %p358
      // Predicated region
      $region61: #{tpu_custom_call.1} parent=5 // pred_check
        _
      $region62: #{tpu_custom_call.1} parent=5 // pred_check_branch
        %361 = sbr.rel (%p358) target = $region64
      $region63: #{tpu_custom_call.1} parent=5 // pred_region
        %s362 = ssub.s32 %s23, 1
        %s363 = sand.u32 %s36, 1
        %s364 = scalar_lea.sflag [#allocation5], %s363
        %s365 = sand.u32 %s36, 1
        %s366 = smul.addr %s365, 512
        %s367 = scalar_lea.vmem [#allocation4], %s366
        // Predicated region
        $region65: #{tpu_custom_call.1} parent=63 // pred_check
          %p368 = pneg %p49
        $region66: #{tpu_custom_call.1} parent=63 // pred_check_branch
          %370 = sbr.rel (%p368) target = $region68
        $region67: #{tpu_custom_call.1} parent=63 // pred_region
          %371 = dma.done %s364, 8192
        $region68: #{tpu_custom_call.1} parent=63 // pred_fallthru
          _
        %s372 = sand.u32 %s36, 1
        %s373 = scalar_lea.sflag [#allocation5], %s372
        %s374 = sand.u32 %s36, 1
        %s375 = smul.addr %s374, 512
        %s376 = scalar_lea.vmem [#allocation4], %s375
        %p377 = pneg %p49
        %p378 = pneg %p46
        %p379 = pneg %p70
        %p380 = pneg %p67
        %p381 = pneg %p91
        %p382 = pneg %p88
        %p383 = pneg %p112
        %p384 = pneg %p109
        %p385 = pneg %p133
        %p386 = pneg %p130
        %p387 = pneg %p154
        %p388 = pneg %p151
        %p389 = pneg %p175
        %p390 = pneg %p172
        %p391 = pneg %p196
        %p392 = pneg %p193
        %p393 = pneg %p217
        %p394 = pneg %p214
        %p395 = pneg %p238
        %p396 = pneg %p235
        %p397 = pneg %p259
        %p398 = pneg %p256
        %p399 = pneg %p285
        %p400 = pneg %p282
        %s401 = sand.u32 %s272, 1
        %s402 = scalar_lea.sflag [#allocation6], %s401
        %s403 = sand.u32 %s272, 1
        %s404 = smul.addr %s403, 512
        %s405 = scalar_lea.vmem [#allocation7], %s404
        %s406 = smul.u32 2, %s28
        %s407 = smul.u32 2, %s28
        %vm408 = vcmask 523264
        %409 = vst.msk [vmem:[#allocation2] sm:$0xff] %vm408, 0.0
        %410 = vst.msk [vmem:[#allocation2 + $0x8] sm:$0xff] %vm408, 0.0
        %vm411 = vcmask 517120
        %412 = vst.msk [vmem:[#allocation2 + $0x10] sm:$0x3] %vm411, 0.0
        %413 = vst.msk [vmem:[#allocation2 + $0x1b0] sm:$0xff] %vm408, 0.0
        %414 = vst.msk [vmem:[#allocation2 + $0x1b8] sm:$0xff] %vm408, 0.0
        %415 = vst.msk [vmem:[#allocation2 + $0x1c0] sm:$0x3] %vm411, 0.0
        %s416 = scalar_lea.vmem [#allocation2], 408
        %417 = vst.msk [vmem:[%s416] sm:$0xff] %vm408, 0.0
        %418 = vst.msk [vmem:[%s416 + $0x8] sm:$0xff] %vm408, 0.0
        %419 = vst.msk [vmem:[%s416 + $0x10] sm:$0x3] %vm411, 0.0
        %420 = vst.msk [vmem:[%s416 + $0x1b0] sm:$0xff] %vm408, 0.0
        %421 = vst.msk [vmem:[%s416 + $0x1b8] sm:$0xff] %vm408, 0.0
        %422 = vst.msk [vmem:[%s416 + $0x1c0] sm:$0x3] %vm411, 0.0
        %s423 = scalar_lea.vmem [#allocation2], 24
        %vm424 = vcmask 516096
        %425 = vst.msk [vmem:[%s423] sm:$0x1] %vm424, 0.0
        %426 = vst.msk [vmem:[%s423 + $0x18] sm:$0x1] %vm424, 0.0
        %427 = vst.msk [vmem:[%s423 + $0x30] sm:$0x1] %vm424, 0.0
        %428 = vst.msk [vmem:[%s423 + $0x48] sm:$0x1] %vm424, 0.0
        %429 = vst.msk [vmem:[%s423 + $0x60] sm:$0x1] %vm424, 0.0
        %430 = vst.msk [vmem:[%s423 + $0x78] sm:$0x1] %vm424, 0.0
        %431 = vst.msk [vmem:[%s423 + $0x90] sm:$0x1] %vm424, 0.0
        %432 = vst.msk [vmem:[%s423 + $0xa8] sm:$0x1] %vm424, 0.0
        %433 = vst.msk [vmem:[%s423 + $0xc0] sm:$0x1] %vm424, 0.0
        %434 = vst.msk [vmem:[%s423 + $0xd8] sm:$0x1] %vm424, 0.0
        %435 = vst.msk [vmem:[%s423 + $0xf0] sm:$0x1] %vm424, 0.0
        %436 = vst.msk [vmem:[%s423 + $0x108] sm:$0x1] %vm424, 0.0
        %437 = vst.msk [vmem:[%s423 + $0x120] sm:$0x1] %vm424, 0.0
        %438 = vst.msk [vmem:[%s423 + $0x138] sm:$0x1] %vm424, 0.0
        %439 = vst.msk [vmem:[%s423 + $0x150] sm:$0x1] %vm424, 0.0
        %440 = vst.msk [vmem:[%s423 + $0x168] sm:$0x1] %vm424, 0.0
        %441 = vst.msk [vmem:[%s423 + $0x1b0] sm:$0x1] %vm424, 0.0
        %442 = vst.msk [vmem:[%s423 + $0x1c8] sm:$0x1] %vm424, 0.0
        %443 = vst.msk [vmem:[%s423 + $0x1e0] sm:$0x1] %vm424, 0.0
        %444 = vst.msk [vmem:[%s423 + $0x1f8] sm:$0x1] %vm424, 0.0
        %445 = vst.msk [vmem:[%s423 + $0x210] sm:$0x1] %vm424, 0.0
        %446 = vst.msk [vmem:[%s423 + $0x228] sm:$0x1] %vm424, 0.0
        %447 = vst.msk [vmem:[%s423 + $0x240] sm:$0x1] %vm424, 0.0
        %448 = vst.msk [vmem:[%s423 + $0x258] sm:$0x1] %vm424, 0.0
        %449 = vst.msk [vmem:[%s423 + $0x270] sm:$0x1] %vm424, 0.0
        %450 = vst.msk [vmem:[%s423 + $0x288] sm:$0x1] %vm424, 0.0
        %451 = vst.msk [vmem:[%s423 + $0x2a0] sm:$0x1] %vm424, 0.0
        %452 = vst.msk [vmem:[%s423 + $0x2b8] sm:$0x1] %vm424, 0.0
        %453 = vst.msk [vmem:[%s423 + $0x2d0] sm:$0x1] %vm424, 0.0
        %454 = vst.msk [vmem:[%s423 + $0x2e8] sm:$0x1] %vm424, 0.0
        %455 = vst.msk [vmem:[%s423 + $0x300] sm:$0x1] %vm424, 0.0
        %456 = vst.msk [vmem:[%s423 + $0x318] sm:$0x1] %vm424, 0.0
        %457 = vst.msk [vmem:[%s423 + $0x11] sm:$0x1] %vm424, 0.0
        %458 = vst.msk [vmem:[%s423 + $0x29] sm:$0x1] %vm424, 0.0
        %459 = vst.msk [vmem:[%s423 + $0x41] sm:$0x1] %vm424, 0.0
        %460 = vst.msk [vmem:[%s423 + $0x59] sm:$0x1] %vm424, 0.0
        %461 = vst.msk [vmem:[%s423 + $0x71] sm:$0x1] %vm424, 0.0
        %462 = vst.msk [vmem:[%s423 + $0x89] sm:$0x1] %vm424, 0.0
        %463 = vst.msk [vmem:[%s423 + $0xa1] sm:$0x1] %vm424, 0.0
        %464 = vst.msk [vmem:[%s423 + $0xb9] sm:$0x1] %vm424, 0.0
        %465 = vst.msk [vmem:[%s423 + $0xd1] sm:$0x1] %vm424, 0.0
        %466 = vst.msk [vmem:[%s423 + $0xe9] sm:$0x1] %vm424, 0.0
        %467 = vst.msk [vmem:[%s423 + $0x101] sm:$0x1] %vm424, 0.0
        %468 = vst.msk [vmem:[%s423 + $0x119] sm:$0x1] %vm424, 0.0
        %469 = vst.msk [vmem:[%s423 + $0x131] sm:$0x1] %vm424, 0.0
        %470 = vst.msk [vmem:[%s423 + $0x149] sm:$0x1] %vm424, 0.0
        %471 = vst.msk [vmem:[%s423 + $0x161] sm:$0x1] %vm424, 0.0
        %472 = vst.msk [vmem:[%s423 + $0x179] sm:$0x1] %vm424, 0.0
        %473 = vst.msk [vmem:[%s423 + $0x1c1] sm:$0x1] %vm424, 0.0
        %474 = vst.msk [vmem:[%s423 + $0x1d9] sm:$0x1] %vm424, 0.0
        %475 = vst.msk [vmem:[%s423 + $0x1f1] sm:$0x1] %vm424, 0.0
        %476 = vst.msk [vmem:[%s423 + $0x209] sm:$0x1] %vm424, 0.0
        %477 = vst.msk [vmem:[%s423 + $0x221] sm:$0x1] %vm424, 0.0
        %478 = vst.msk [vmem:[%s423 + $0x239] sm:$0x1] %vm424, 0.0
        %479 = vst.msk [vmem:[%s423 + $0x251] sm:$0x1] %vm424, 0.0
        %480 = vst.msk [vmem:[%s423 + $0x269] sm:$0x1] %vm424, 0.0
        %481 = vst.msk [vmem:[%s423 + $0x281] sm:$0x1] %vm424, 0.0
        %482 = vst.msk [vmem:[%s423 + $0x299] sm:$0x1] %vm424, 0.0
        %483 = vst.msk [vmem:[%s423 + $0x2b1] sm:$0x1] %vm424, 0.0
        %484 = vst.msk [vmem:[%s423 + $0x2c9] sm:$0x1] %vm424, 0.0
        %485 = vst.msk [vmem:[%s423 + $0x2e1] sm:$0x1] %vm424, 0.0
        %486 = vst.msk [vmem:[%s423 + $0x2f9] sm:$0x1] %vm424, 0.0
        %487 = vst.msk [vmem:[%s423 + $0x311] sm:$0x1] %vm424, 0.0
        %488 = vst.msk [vmem:[%s423 + $0x329] sm:$0x1] %vm424, 0.0
        %v489 = vld [vmem:[%s367] sm:$0xff]
        %v490 = vld [vmem:[%s367 + $0x8] sm:$0xff]
        %v491 = vld [vmem:[%s367 + $0x10] sm:$0xff]
        %v492 = vld [vmem:[%s367 + $0x18] sm:$0xff]
        %v493 = vld [vmem:[%s367 + $0x20] sm:$0xff]
        %v494 = vld [vmem:[%s367 + $0x28] sm:$0xff]
        %v495 = vld [vmem:[%s367 + $0x30] sm:$0xff]
        %v496 = vld [vmem:[%s367 + $0x38] sm:$0xff]
        %v497 = vld [vmem:[%s367 + $0x100] sm:$0xff]
        %v498 = vld [vmem:[%s367 + $0x108] sm:$0xff]
        %v499 = vld [vmem:[%s367 + $0x110] sm:$0xff]
        %v500 = vld [vmem:[%s367 + $0x118] sm:$0xff]
        %v501 = vld [vmem:[%s367 + $0x120] sm:$0xff]
        %v502 = vld [vmem:[%s367 + $0x128] sm:$0xff]
        %v503 = vld [vmem:[%s367 + $0x130] sm:$0xff]
        %v504 = vld [vmem:[%s367 + $0x138] sm:$0xff]
        %v505 = vld [vmem:[%s1] sm:$0xff]
        %v506 = vld [vmem:[%s1 + $0x8] sm:$0xff]
        %v507 = vld [vmem:[%s2] sm:$0x1]
        %v509 = vlaneseq
        %v510 = vshrl.u32 %v509, 7
        %v511 = vsub.s32 0, %v510
        %v512 = vrot.slane %v507, %v511
        %vm514 = vcmask 130048
        %v516 = vsel %vm514, %v489, 0
        %v519 = vsel %vm514, %v490, 0
        %v522 = vsel %vm514, %v491, 0
        %v525 = vsel %vm514, %v492, 0
        %v528 = vsel %vm514, %v493, 0
        %v531 = vsel %vm514, %v494, 0
        %v534 = vsel %vm514, %v495, 0
        %v537 = vsel %vm514, %v496, 0
        %v540 = vsel %vm514, %v497, 0
        %v543 = vsel %vm514, %v498, 0
        %v546 = vsel %vm514, %v499, 0
        %v549 = vsel %vm514, %v500, 0
        %v552 = vsel %vm514, %v501, 0
        %v555 = vsel %vm514, %v502, 0
        %v558 = vsel %vm514, %v503, 0
        %v561 = vsel %vm514, %v504, 0
        %563 = vmatprep.subr.mxu0 0.0
        %564 = vmatpush1.msra.mxu0 %v505
        %565 = vmatprep.subr.mxu0 0.0
        %566 = vmatpush1.msra.mxu0 %v506
        %567 = vmatprep.subr.mxu0 0.0
        %568 = vmatpush1.msra.mxu0 0.0
        %569 = vmatprep.subr.mxu0 0.0
        %570 = vmatpush1.msra.mxu0 0.0
        %571 = vmatprep.subr.mxu0 0.0
        %572 = vmatpush1.msra.mxu0 0.0
        %573 = vmatprep.subr.mxu0 0.0
        %574 = vmatpush1.msra.mxu0 0.0
        %575 = vmatprep.subr.mxu0 0.0
        %576 = vmatpush1.msra.mxu0 0.0
        %577 = vmatprep.subr.mxu0 0.0
        %578 = vmatpush1.msra.mxu0 0.0
        %579 = vmatprep.subr.mxu0 0.0
        %580 = vmatpush1.msra.mxu0 0.0
        %581 = vmatprep.subr.mxu0 0.0
        %582 = vmatpush1.msra.mxu0 0.0
        %583 = vmatprep.subr.mxu0 0.0
        %584 = vmatpush1.msra.mxu0 0.0
        %585 = vmatprep.subr.mxu0 0.0
        %586 = vmatpush1.msra.mxu0 0.0
        %587 = vmatprep.subr.mxu0 0.0
        %588 = vmatpush1.msra.mxu0 0.0
        %589 = vmatprep.subr.mxu0 0.0
        %590 = vmatpush1.msra.mxu0 0.0
        %591 = vmatprep.subr.mxu0 0.0
        %592 = vmatpush1.msra.mxu0 0.0
        %593 = vmatprep.subr.mxu0 0.0
        %594 = vmatpush1.msra.mxu0 0.0
        %595 = vmatprep.subr.mxu0 0.0
        %596 = vmatpush1.msra.mxu0 0.0
        %597 = vmatprep.subr.mxu0 0.0
        %598 = vmatpush1.msra.mxu0 0.0
        %599 = vmatprep.subr.mxu0 0.0
        %600 = vmatpush1.msra.mxu0 0.0
        %601 = vmatprep.subr.mxu0 0.0
        %602 = vmatpush1.msra.mxu0 0.0
        %603 = vmatprep.subr.mxu0 0.0
        %604 = vmatpush1.msra.mxu0 0.0
        %605 = vmatprep.subr.mxu0 0.0
        %606 = vmatpush1.msra.mxu0 0.0
        %607 = vmatprep.subr.mxu0 0.0
        %608 = vmatpush1.msra.mxu0 0.0
        %609 = vmatprep.subr.mxu0 0.0
        %610 = vmatpush1.msra.mxu0 0.0
        %611 = vmatprep.subr.mxu0 0.0
        %612 = vmatpush1.msra.mxu0 0.0
        %613 = vmatprep.subr.mxu0 0.0
        %614 = vmatpush1.msra.mxu0 0.0
        %615 = vmatprep.subr.mxu0 0.0
        %616 = vmatpush1.msra.mxu0 0.0
        %617 = vmatprep.subr.mxu0 0.0
        %618 = vmatpush1.msra.mxu0 0.0
        %619 = vmatprep.subr.mxu0 0.0
        %620 = vmatpush1.msra.mxu0 0.0
        %621 = vmatprep.subr.mxu0 0.0
        %622 = vmatpush1.msra.mxu0 0.0
        %623 = vmatprep.subr.mxu0 0.0
        %624 = vmatpush1.msra.mxu0 0.0
        %625 = vmatprep.subr.mxu0 0.0
        %626 = vmatpush1.msra.mxu0 0.0
        %627 = vmatprep.mubr.f32.mxu0 0.0
        %628 = vmatmul.mubr.f32.gmra.mrb[0].mxu0 %v516
        %v629 = vpop.f32.mrb[0].mxu0
        %v630 = vadd.f32 %v512, %v629
        %v631 = vpop.f32.mrb[0].mxu0
        %632 = vmatprep.mubr.f32.mxu0 0.0
        %633 = vmatmul.mubr.f32.gmra.mrb[0].mxu0 %v519
        %v634 = vpop.f32.mrb[0].mxu0
        %v635 = vadd.f32 %v512, %v634
        %v636 = vpop.f32.mrb[0].mxu0
        %637 = vmatprep.mubr.f32.mxu0 0.0
        %638 = vmatmul.mubr.f32.gmra.mrb[0].mxu0 %v522
        %v639 = vpop.f32.mrb[0].mxu0
        %v640 = vadd.f32 %v512, %v639
        %v641 = vpop.f32.mrb[0].mxu0
        %642 = vmatprep.mubr.f32.mxu0 0.0
        %643 = vmatmul.mubr.f32.gmra.mrb[0].mxu0 %v525
        %v644 = vpop.f32.mrb[0].mxu0
        %v645 = vadd.f32 %v512, %v644
        %v646 = vpop.f32.mrb[0].mxu0
        %647 = vmatprep.mubr.f32.mxu0 0.0
        %648 = vmatmul.mubr.f32.gmra.mrb[0].mxu0 %v528
        %v649 = vpop.f32.mrb[0].mxu0
        %v650 = vadd.f32 %v512, %v649
        %v651 = vpop.f32.mrb[0].mxu0
        %652 = vmatprep.mubr.f32.mxu0 0.0
        %653 = vmatmul.mubr.f32.gmra.mrb[0].mxu0 %v531
        %v654 = vpop.f32.mrb[0].mxu0
        %v655 = vadd.f32 %v512, %v654
        %v656 = vpop.f32.mrb[0].mxu0
        %657 = vmatprep.mubr.f32.mxu0 0.0
        %658 = vmatmul.mubr.f32.gmra.mrb[0].mxu0 %v534
        %v659 = vpop.f32.mrb[0].mxu0
        %v660 = vadd.f32 %v512, %v659
        %v661 = vpop.f32.mrb[0].mxu0
        %662 = vmatprep.mubr.f32.mxu0 0.0
        %663 = vmatmul.mubr.f32.gmra.mrb[0].mxu0 %v537
        %v664 = vpop.f32.mrb[0].mxu0
        %v665 = vadd.f32 %v512, %v664
        %v666 = vpop.f32.mrb[0].mxu0
        %667 = vmatprep.mubr.f32.mxu0 0.0
        %668 = vmatmul.mubr.f32.gmra.mrb[0].mxu0 %v540
        %v669 = vpop.f32.mrb[0].mxu0
        %v670 = vadd.f32 %v512, %v669
        %v671 = vpop.f32.mrb[0].mxu0
        %672 = vmatprep.mubr.f32.mxu0 0.0
        %673 = vmatmul.mubr.f32.gmra.mrb[0].mxu0 %v543
        %v674 = vpop.f32.mrb[0].mxu0
        %v675 = vadd.f32 %v512, %v674
        %v676 = vpop.f32.mrb[0].mxu0
        %677 = vmatprep.mubr.f32.mxu0 0.0
        %678 = vmatmul.mubr.f32.gmra.mrb[0].mxu0 %v546
        %v679 = vpop.f32.mrb[0].mxu0
        %v680 = vadd.f32 %v512, %v679
        %v681 = vpop.f32.mrb[0].mxu0
        %682 = vmatprep.mubr.f32.mxu0 0.0
        %683 = vmatmul.mubr.f32.gmra.mrb[0].mxu0 %v549
        %v684 = vpop.f32.mrb[0].mxu0
        %v685 = vadd.f32 %v512, %v684
        %v686 = vpop.f32.mrb[0].mxu0
        %687 = vmatprep.mubr.f32.mxu0 0.0
        %688 = vmatmul.mubr.f32.gmra.mrb[0].mxu0 %v552
        %v689 = vpop.f32.mrb[0].mxu0
        %v690 = vadd.f32 %v512, %v689
        %v691 = vpop.f32.mrb[0].mxu0
        %692 = vmatprep.mubr.f32.mxu0 0.0
        %693 = vmatmul.mubr.f32.gmra.mrb[0].mxu0 %v555
        %v694 = vpop.f32.mrb[0].mxu0
        %v695 = vadd.f32 %v512, %v694
        %v696 = vpop.f32.mrb[0].mxu0
        %697 = vmatprep.mubr.f32.mxu0 0.0
        %698 = vmatmul.mubr.f32.gmra.mrb[0].mxu0 %v558
        %v699 = vpop.f32.mrb[0].mxu0
        %v700 = vadd.f32 %v512, %v699
        %v701 = vpop.f32.mrb[0].mxu0
        %702 = vmatprep.mubr.f32.mxu0 0.0
        %703 = vmatmul.mubr.f32.gmra.mrb[0].mxu0 %v561
        %v704 = vpop.f32.mrb[0].mxu0
        %v705 = vadd.f32 %v512, %v704
        %v706 = vpop.f32.mrb[0].mxu0
        %707 = vdwg.mxu0
        %v708 = vadd.f32 %v630, 3.0
        %v709 = vadd.f32 %v635, 3.0
        %v710 = vadd.f32 %v640, 3.0
        %v711 = vadd.f32 %v645, 3.0
        %v712 = vadd.f32 %v650, 3.0
        %v713 = vadd.f32 %v655, 3.0
        %v714 = vadd.f32 %v660, 3.0
        %v715 = vadd.f32 %v665, 3.0
        %v716 = vadd.f32 %v670, 3.0
        %v717 = vadd.f32 %v675, 3.0
        %v718 = vadd.f32 %v680, 3.0
        %v719 = vadd.f32 %v685, 3.0
        %v720 = vadd.f32 %v690, 3.0
        %v721 = vadd.f32 %v695, 3.0
        %v722 = vadd.f32 %v700, 3.0
        %v723 = vadd.f32 %v705, 3.0
        %v724 = vmax.f32 %v708, 0.0
        %v725 = vmax.f32 %v709, 0.0
        %v726 = vmax.f32 %v710, 0.0
        %v727 = vmax.f32 %v711, 0.0
        %v728 = vmax.f32 %v712, 0.0
        %v729 = vmax.f32 %v713, 0.0
        %v730 = vmax.f32 %v714, 0.0
        %v731 = vmax.f32 %v715, 0.0
        %v732 = vmax.f32 %v716, 0.0
        %v733 = vmax.f32 %v717, 0.0
        %v734 = vmax.f32 %v718, 0.0
        %v735 = vmax.f32 %v719, 0.0
        %v736 = vmax.f32 %v720, 0.0
        %v737 = vmax.f32 %v721, 0.0
        %v738 = vmax.f32 %v722, 0.0
        %v739 = vmax.f32 %v723, 0.0
        %v740 = vmin.f32 %v724, 6.0
        %v741 = vmin.f32 %v725, 6.0
        %v742 = vmin.f32 %v726, 6.0
        %v743 = vmin.f32 %v727, 6.0
        %v744 = vmin.f32 %v728, 6.0
        %v745 = vmin.f32 %v729, 6.0
        %v746 = vmin.f32 %v730, 6.0
        %v747 = vmin.f32 %v731, 6.0
        %v748 = vmin.f32 %v732, 6.0
        %v749 = vmin.f32 %v733, 6.0
        %v750 = vmin.f32 %v734, 6.0
        %v751 = vmin.f32 %v735, 6.0
        %v752 = vmin.f32 %v736, 6.0
        %v753 = vmin.f32 %v737, 6.0
        %v754 = vmin.f32 %v738, 6.0
        %v755 = vmin.f32 %v739, 6.0
        %v756 = vmul.f32 %v740, 0.16666667
        %v757 = vmul.f32 %v741, 0.16666667
        %v758 = vmul.f32 %v742, 0.16666667
        %v759 = vmul.f32 %v743, 0.16666667
        %v760 = vmul.f32 %v744, 0.16666667
        %v761 = vmul.f32 %v745, 0.16666667
        %v762 = vmul.f32 %v746, 0.16666667
        %v763 = vmul.f32 %v747, 0.16666667
        %v764 = vmul.f32 %v748, 0.16666667
        %v765 = vmul.f32 %v749, 0.16666667
        %v766 = vmul.f32 %v750, 0.16666667
        %v767 = vmul.f32 %v751, 0.16666667
        %v768 = vmul.f32 %v752, 0.16666667
        %v769 = vmul.f32 %v753, 0.16666667
        %v770 = vmul.f32 %v754, 0.16666667
        %v771 = vmul.f32 %v755, 0.16666667
        %v772 = vmul.f32 %v630, %v756
        %v773 = vmul.f32 %v635, %v757
        %v774 = vmul.f32 %v640, %v758
        %v775 = vmul.f32 %v645, %v759
        %v776 = vmul.f32 %v650, %v760
        %v777 = vmul.f32 %v655, %v761
        %v778 = vmul.f32 %v660, %v762
        %v779 = vmul.f32 %v665, %v763
        %v780 = vmul.f32 %v670, %v764
        %v781 = vmul.f32 %v675, %v765
        %v782 = vmul.f32 %v680, %v766
        %v783 = vmul.f32 %v685, %v767
        %v784 = vmul.f32 %v690, %v768
        %v785 = vmul.f32 %v695, %v769
        %v786 = vmul.f32 %v700, %v770
        %v787 = vmul.f32 %v705, %v771
        %788 = vst.msk [vmem:[%s423 + $0x1] sm:$0xff] %vm408, %v772
        %789 = vst.msk [vmem:[%s423 + $0x9] sm:$0xff] %vm408, %v773
        %790 = vst.msk [vmem:[%s423 + $0x19] sm:$0xff] %vm408, %v774
        %791 = vst.msk [vmem:[%s423 + $0x21] sm:$0xff] %vm408, %v775
        %792 = vst.msk [vmem:[%s423 + $0x31] sm:$0xff] %vm408, %v776
        %793 = vst.msk [vmem:[%s423 + $0x39] sm:$0xff] %vm408, %v777
        %794 = vst.msk [vmem:[%s423 + $0x49] sm:$0xff] %vm408, %v778
        %795 = vst.msk [vmem:[%s423 + $0x51] sm:$0xff] %vm408, %v779
        %796 = vst.msk [vmem:[%s423 + $0x1b1] sm:$0xff] %vm408, %v780
        %797 = vst.msk [vmem:[%s423 + $0x1b9] sm:$0xff] %vm408, %v781
        %798 = vst.msk [vmem:[%s423 + $0x1c9] sm:$0xff] %vm408, %v782
        %799 = vst.msk [vmem:[%s423 + $0x1d1] sm:$0xff] %vm408, %v783
        %800 = vst.msk [vmem:[%s423 + $0x1e1] sm:$0xff] %vm408, %v784
        %801 = vst.msk [vmem:[%s423 + $0x1e9] sm:$0xff] %vm408, %v785
        %802 = vst.msk [vmem:[%s423 + $0x1f9] sm:$0xff] %vm408, %v786
        %803 = vst.msk [vmem:[%s423 + $0x201] sm:$0xff] %vm408, %v787
        %s804 = scalar_lea.vmem %s367, 64 [#allocation4]
        %v805 = vld [vmem:[%s804] sm:$0xff]
        %v806 = vld [vmem:[%s804 + $0x8] sm:$0xff]
        %v807 = vld [vmem:[%s804 + $0x10] sm:$0xff]
        %v808 = vld [vmem:[%s804 + $0x18] sm:$0xff]
        %v809 = vld [vmem:[%s804 + $0x20] sm:$0xff]
        %v810 = vld [vmem:[%s804 + $0x28] sm:$0xff]
        %v811 = vld [vmem:[%s804 + $0x30] sm:$0xff]
        %v812 = vld [vmem:[%s804 + $0x38] sm:$0xff]
        %v813 = vld [vmem:[%s804 + $0x100] sm:$0xff]
        %v814 = vld [vmem:[%s804 + $0x108] sm:$0xff]
        %v815 = vld [vmem:[%s804 + $0x110] sm:$0xff]
        %v816 = vld [vmem:[%s804 + $0x118] sm:$0xff]
        %v817 = vld [vmem:[%s804 + $0x120] sm:$0xff]
        %v818 = vld [vmem:[%s804 + $0x128] sm:$0xff]
        %v819 = vld [vmem:[%s804 + $0x130] sm:$0xff]
        %v820 = vld [vmem:[%s804 + $0x138] sm:$0xff]
        %v821 = vld [vmem:[%s1] sm:$0xff]
        %v822 = vld [vmem:[%s1 + $0x8] sm:$0xff]
        %v823 = vld [vmem:[%s2] sm:$0x1]
        %v825 = vlaneseq
        %v826 = vshrl.u32 %v825, 7
        %v827 = vsub.s32 0, %v826
        %v828 = vrot.slane %v823, %v827
        %v831 = vsel %vm514, %v805, 0
        %v834 = vsel %vm514, %v806, 0
        %v837 = vsel %vm514, %v807, 0
        %v840 = vsel %vm514, %v808, 0
        %v843 = vsel %vm514, %v809, 0
        %v846 = vsel %vm514, %v810, 0
        %v849 = vsel %vm514, %v811, 0
        %v852 = vsel %vm514, %v812, 0
        %v855 = vsel %vm514, %v813, 0
        %v858 = vsel %vm514, %v814, 0
        %v861 = vsel %vm514, %v815, 0
        %v864 = vsel %vm514, %v816, 0
        %v867 = vsel %vm514, %v817, 0
        %v870 = vsel %vm514, %v818, 0
        %v873 = vsel %vm514, %v819, 0
        %v876 = vsel %vm514, %v820, 0
        %878 = vmatprep.subr.mxu0 0.0
        %879 = vmatpush1.msra.mxu0 %v821
        %880 = vmatprep.subr.mxu0 0.0
        %881 = vmatpush1.msra.mxu0 %v822
        %882 = vmatprep.subr.mxu0 0.0
        %883 = vmatpush1.msra.mxu0 0.0
        %884 = vmatprep.subr.mxu0 0.0
        %885 = vmatpush1.msra.mxu0 0.0
        %886 = vmatprep.subr.mxu0 0.0
        %887 = vmatpush1.msra.mxu0 0.0
        %888 = vmatprep.subr.mxu0 0.0
        %889 = vmatpush1.msra.mxu0 0.0
        %890 = vmatprep.subr.mxu0 0.0
        %891 = vmatpush1.msra.mxu0 0.0
        %892 = vmatprep.subr.mxu0 0.0
        %893 = vmatpush1.msra.mxu0 0.0
        %894 = vmatprep.subr.mxu0 0.0
        %895 = vmatpush1.msra.mxu0 0.0
        %896 = vmatprep.subr.mxu0 0.0
        %897 = vmatpush1.msra.mxu0 0.0
        %898 = vmatprep.subr.mxu0 0.0
        %899 = vmatpush1.msra.mxu0 0.0
        %900 = vmatprep.subr.mxu0 0.0
        %901 = vmatpush1.msra.mxu0 0.0
        %902 = vmatprep.subr.mxu0 0.0
        %903 = vmatpush1.msra.mxu0 0.0
        %904 = vmatprep.subr.mxu0 0.0
        %905 = vmatpush1.msra.mxu0 0.0
        %906 = vmatprep.subr.mxu0 0.0
        %907 = vmatpush1.msra.mxu0 0.0
        %908 = vmatprep.subr.mxu0 0.0
        %909 = vmatpush1.msra.mxu0 0.0
        %910 = vmatprep.subr.mxu0 0.0
        %911 = vmatpush1.msra.mxu0 0.0
        %912 = vmatprep.subr.mxu0 0.0
        %913 = vmatpush1.msra.mxu0 0.0
        %914 = vmatprep.subr.mxu0 0.0
        %915 = vmatpush1.msra.mxu0 0.0
        %916 = vmatprep.subr.mxu0 0.0
        %917 = vmatpush1.msra.mxu0 0.0
        %918 = vmatprep.subr.mxu0 0.0
        %919 = vmatpush1.msra.mxu0 0.0
        %920 = vmatprep.subr.mxu0 0.0
        %921 = vmatpush1.msra.mxu0 0.0
        %922 = vmatprep.subr.mxu0 0.0
        %923 = vmatpush1.msra.mxu0 0.0
        %924 = vmatprep.subr.mxu0 0.0
        %925 = vmatpush1.msra.mxu0 0.0
        %926 = vmatprep.subr.mxu0 0.0
        %927 = vmatpush1.msra.mxu0 0.0
        %928 = vmatprep.subr.mxu0 0.0
        %929 = vmatpush1.msra.mxu0 0.0
        %930 = vmatprep.subr.mxu0 0.0
        %931 = vmatpush1.msra.mxu0 0.0
        %932 = vmatprep.subr.mxu0 0.0
        %933 = vmatpush1.msra.mxu0 0.0
        %934 = vmatprep.subr.mxu0 0.0
        %935 = vmatpush1.msra.mxu0 0.0
        %936 = vmatprep.subr.mxu0 0.0
        %937 = vmatpush1.msra.mxu0 0.0
        %938 = vmatprep.subr.mxu0 0.0
        %939 = vmatpush1.msra.mxu0 0.0
        %940 = vmatprep.subr.mxu0 0.0
        %941 = vmatpush1.msra.mxu0 0.0
        %942 = vmatprep.mubr.f32.mxu0 0.0
        %943 = vmatmul.mubr.f32.gmra.mrb[0].mxu0 %v831
        %v944 = vpop.f32.mrb[0].mxu0
        %v945 = vadd.f32 %v828, %v944
        %v946 = vpop.f32.mrb[0].mxu0
        %947 = vmatprep.mubr.f32.mxu0 0.0
        %948 = vmatmul.mubr.f32.gmra.mrb[0].mxu0 %v834
        %v949 = vpop.f32.mrb[0].mxu0
        %v950 = vadd.f32 %v828, %v949
        %v951 = vpop.f32.mrb[0].mxu0
        %952 = vmatprep.mubr.f32.mxu0 0.0
        %953 = vmatmul.mubr.f32.gmra.mrb[0].mxu0 %v837
        %v954 = vpop.f32.mrb[0].mxu0
        %v955 = vadd.f32 %v828, %v954
        %v956 = vpop.f32.mrb[0].mxu0
        %957 = vmatprep.mubr.f32.mxu0 0.0
        %958 = vmatmul.mubr.f32.gmra.mrb[0].mxu0 %v840
        %v959 = vpop.f32.mrb[0].mxu0
        %v960 = vadd.f32 %v828, %v959
        %v961 = vpop.f32.mrb[0].mxu0
        %962 = vmatprep.mubr.f32.mxu0 0.0
        %963 = vmatmul.mubr.f32.gmra.mrb[0].mxu0 %v843
        %v964 = vpop.f32.mrb[0].mxu0
        %v965 = vadd.f32 %v828, %v964
        %v966 = vpop.f32.mrb[0].mxu0
        %967 = vmatprep.mubr.f32.mxu0 0.0
        %968 = vmatmul.mubr.f32.gmra.mrb[0].mxu0 %v846
        %v969 = vpop.f32.mrb[0].mxu0
        %v970 = vadd.f32 %v828, %v969
        %v971 = vpop.f32.mrb[0].mxu0
        %972 = vmatprep.mubr.f32.mxu0 0.0
        %973 = vmatmul.mubr.f32.gmra.mrb[0].mxu0 %v849
        %v974 = vpop.f32.mrb[0].mxu0
        %v975 = vadd.f32 %v828, %v974
        %v976 = vpop.f32.mrb[0].mxu0
        %977 = vmatprep.mubr.f32.mxu0 0.0
        %978 = vmatmul.mubr.f32.gmra.mrb[0].mxu0 %v852
        %v979 = vpop.f32.mrb[0].mxu0
        %v980 = vadd.f32 %v828, %v979
        %v981 = vpop.f32.mrb[0].mxu0
        %982 = vmatprep.mubr.f32.mxu0 0.0
        %983 = vmatmul.mubr.f32.gmra.mrb[0].mxu0 %v855
        %v984 = vpop.f32.mrb[0].mxu0
        %v985 = vadd.f32 %v828, %v984
        %v986 = vpop.f32.mrb[0].mxu0
        %987 = vmatprep.mubr.f32.mxu0 0.0
        %988 = vmatmul.mubr.f32.gmra.mrb[0].mxu0 %v858
        %v989 = vpop.f32.mrb[0].mxu0
        %v990 = vadd.f32 %v828, %v989
        %v991 = vpop.f32.mrb[0].mxu0
        %992 = vmatprep.mubr.f32.mxu0 0.0
        %993 = vmatmul.mubr.f32.gmra.mrb[0].mxu0 %v861
        %v994 = vpop.f32.mrb[0].mxu0
        %v995 = vadd.f32 %v828, %v994
        %v996 = vpop.f32.mrb[0].mxu0
        %997 = vmatprep.mubr.f32.mxu0 0.0
        %998 = vmatmul.mubr.f32.gmra.mrb[0].mxu0 %v864
        %v999 = vpop.f32.mrb[0].mxu0
        %v1000 = vadd.f32 %v828, %v999
        %v1001 = vpop.f32.mrb[0].mxu0
        %1002 = vmatprep.mubr.f32.mxu0 0.0
        %1003 = vmatmul.mubr.f32.gmra.mrb[0].mxu0 %v867
        %v1004 = vpop.f32.mrb[0].mxu0
        %v1005 = vadd.f32 %v828, %v1004
        %v1006 = vpop.f32.mrb[0].mxu0
        %1007 = vmatprep.mubr.f32.mxu0 0.0
        %1008 = vmatmul.mubr.f32.gmra.mrb[0].mxu0 %v870
        %v1009 = vpop.f32.mrb[0].mxu0
        %v1010 = vadd.f32 %v828, %v1009
        %v1011 = vpop.f32.mrb[0].mxu0
        %1012 = vmatprep.mubr.f32.mxu0 0.0
        %1013 = vmatmul.mubr.f32.gmra.mrb[0].mxu0 %v873
        %v1014 = vpop.f32.mrb[0].mxu0
        %v1015 = vadd.f32 %v828, %v1014
        %v1016 = vpop.f32.mrb[0].mxu0
        %1017 = vmatprep.mubr.f32.mxu0 0.0
        %1018 = vmatmul.mubr.f32.gmra.mrb[0].mxu0 %v876
        %v1019 = vpop.f32.mrb[0].mxu0
        %v1020 = vadd.f32 %v828, %v1019
        %v1021 = vpop.f32.mrb[0].mxu0
        %1022 = vdwg.mxu0
        %v1023 = vadd.f32 %v945, 3.0
        %v1024 = vadd.f32 %v950, 3.0
        %v1025 = vadd.f32 %v955, 3.0
        %v1026 = vadd.f32 %v960, 3.0
        %v1027 = vadd.f32 %v965, 3.0
        %v1028 = vadd.f32 %v970, 3.0
        %v1029 = vadd.f32 %v975, 3.0
        %v1030 = vadd.f32 %v980, 3.0
        %v1031 = vadd.f32 %v985, 3.0
        %v1032 = vadd.f32 %v990, 3.0
        %v1033 = vadd.f32 %v995, 3.0
        %v1034 = vadd.f32 %v1000, 3.0
        %v1035 = vadd.f32 %v1005, 3.0
        %v1036 = vadd.f32 %v1010, 3.0
        %v1037 = vadd.f32 %v1015, 3.0
        %v1038 = vadd.f32 %v1020, 3.0
        %v1039 = vmax.f32 %v1023, 0.0
        %v1040 = vmax.f32 %v1024, 0.0
        %v1041 = vmax.f32 %v1025, 0.0
        %v1042 = vmax.f32 %v1026, 0.0
        %v1043 = vmax.f32 %v1027, 0.0
        %v1044 = vmax.f32 %v1028, 0.0
        %v1045 = vmax.f32 %v1029, 0.0
        %v1046 = vmax.f32 %v1030, 0.0
        %v1047 = vmax.f32 %v1031, 0.0
        %v1048 = vmax.f32 %v1032, 0.0
        %v1049 = vmax.f32 %v1033, 0.0
        %v1050 = vmax.f32 %v1034, 0.0
        %v1051 = vmax.f32 %v1035, 0.0
        %v1052 = vmax.f32 %v1036, 0.0
        %v1053 = vmax.f32 %v1037, 0.0
        %v1054 = vmax.f32 %v1038, 0.0
        %v1055 = vmin.f32 %v1039, 6.0
        %v1056 = vmin.f32 %v1040, 6.0
        %v1057 = vmin.f32 %v1041, 6.0
        %v1058 = vmin.f32 %v1042, 6.0
        %v1059 = vmin.f32 %v1043, 6.0
        %v1060 = vmin.f32 %v1044, 6.0
        %v1061 = vmin.f32 %v1045, 6.0
        %v1062 = vmin.f32 %v1046, 6.0
        %v1063 = vmin.f32 %v1047, 6.0
        %v1064 = vmin.f32 %v1048, 6.0
        %v1065 = vmin.f32 %v1049, 6.0
        %v1066 = vmin.f32 %v1050, 6.0
        %v1067 = vmin.f32 %v1051, 6.0
        %v1068 = vmin.f32 %v1052, 6.0
        %v1069 = vmin.f32 %v1053, 6.0
        %v1070 = vmin.f32 %v1054, 6.0
        %v1071 = vmul.f32 %v1055, 0.16666667
        %v1072 = vmul.f32 %v1056, 0.16666667
        %v1073 = vmul.f32 %v1057, 0.16666667
        %v1074 = vmul.f32 %v1058, 0.16666667
        %v1075 = vmul.f32 %v1059, 0.16666667
        %v1076 = vmul.f32 %v1060, 0.16666667
        %v1077 = vmul.f32 %v1061, 0.16666667
        %v1078 = vmul.f32 %v1062, 0.16666667
        %v1079 = vmul.f32 %v1063, 0.16666667
        %v1080 = vmul.f32 %v1064, 0.16666667
        %v1081 = vmul.f32 %v1065, 0.16666667
        %v1082 = vmul.f32 %v1066, 0.16666667
        %v1083 = vmul.f32 %v1067, 0.16666667
        %v1084 = vmul.f32 %v1068, 0.16666667
        %v1085 = vmul.f32 %v1069, 0.16666667
        %v1086 = vmul.f32 %v1070, 0.16666667
        %v1087 = vmul.f32 %v945, %v1071
        %v1088 = vmul.f32 %v950, %v1072
        %v1089 = vmul.f32 %v955, %v1073
        %v1090 = vmul.f32 %v960, %v1074
        %v1091 = vmul.f32 %v965, %v1075
        %v1092 = vmul.f32 %v970, %v1076
        %v1093 = vmul.f32 %v975, %v1077
        %v1094 = vmul.f32 %v980, %v1078
        %v1095 = vmul.f32 %v985, %v1079
        %v1096 = vmul.f32 %v990, %v1080
        %v1097 = vmul.f32 %v995, %v1081
        %v1098 = vmul.f32 %v1000, %v1082
        %v1099 = vmul.f32 %v1005, %v1083
        %v1100 = vmul.f32 %v1010, %v1084
        %v1101 = vmul.f32 %v1015, %v1085
        %v1102 = vmul.f32 %v1020, %v1086
        %s1103 = scalar_lea.vmem [#allocation2], 120
        %1104 = vst.msk [vmem:[%s1103 + $0x1] sm:$0xff] %vm408, %v1087
        %1105 = vst.msk [vmem:[%s1103 + $0x9] sm:$0xff] %vm408, %v1088
        %1106 = vst.msk [vmem:[%s1103 + $0x19] sm:$0xff] %vm408, %v1089
        %1107 = vst.msk [vmem:[%s1103 + $0x21] sm:$0xff] %vm408, %v1090
        %1108 = vst.msk [vmem:[%s1103 + $0x31] sm:$0xff] %vm408, %v1091
        %1109 = vst.msk [vmem:[%s1103 + $0x39] sm:$0xff] %vm408, %v1092
        %1110 = vst.msk [vmem:[%s1103 + $0x49] sm:$0xff] %vm408, %v1093
        %1111 = vst.msk [vmem:[%s1103 + $0x51] sm:$0xff] %vm408, %v1094
        %1112 = vst.msk [vmem:[%s1103 + $0x1b1] sm:$0xff] %vm408, %v1095
        %1113 = vst.msk [vmem:[%s1103 + $0x1b9] sm:$0xff] %vm408, %v1096
        %1114 = vst.msk [vmem:[%s1103 + $0x1c9] sm:$0xff] %vm408, %v1097
        %1115 = vst.msk [vmem:[%s1103 + $0x1d1] sm:$0xff] %vm408, %v1098
        %1116 = vst.msk [vmem:[%s1103 + $0x1e1] sm:$0xff] %vm408, %v1099
        %1117 = vst.msk [vmem:[%s1103 + $0x1e9] sm:$0xff] %vm408, %v1100
        %1118 = vst.msk [vmem:[%s1103 + $0x1f9] sm:$0xff] %vm408, %v1101
        %1119 = vst.msk [vmem:[%s1103 + $0x201] sm:$0xff] %vm408, %v1102
        %s1120 = scalar_lea.vmem %s367, 128 [#allocation4]
        %v1121 = vld [vmem:[%s1120] sm:$0xff]
        %v1122 = vld [vmem:[%s1120 + $0x8] sm:$0xff]
        %v1123 = vld [vmem:[%s1120 + $0x10] sm:$0xff]
        %v1124 = vld [vmem:[%s1120 + $0x18] sm:$0xff]
        %v1125 = vld [vmem:[%s1120 + $0x20] sm:$0xff]
        %v1126 = vld [vmem:[%s1120 + $0x28] sm:$0xff]
        %v1127 = vld [vmem:[%s1120 + $0x30] sm:$0xff]
        %v1128 = vld [vmem:[%s1120 + $0x38] sm:$0xff]
        %v1129 = vld [vmem:[%s1120 + $0x100] sm:$0xff]
        %v1130 = vld [vmem:[%s1120 + $0x108] sm:$0xff]
        %v1131 = vld [vmem:[%s1120 + $0x110] sm:$0xff]
        %v1132 = vld [vmem:[%s1120 + $0x118] sm:$0xff]
        %v1133 = vld [vmem:[%s1120 + $0x120] sm:$0xff]
        %v1134 = vld [vmem:[%s1120 + $0x128] sm:$0xff]
        %v1135 = vld [vmem:[%s1120 + $0x130] sm:$0xff]
        %v1136 = vld [vmem:[%s1120 + $0x138] sm:$0xff]
        %v1137 = vld [vmem:[%s1] sm:$0xff]
        %v1138 = vld [vmem:[%s1 + $0x8] sm:$0xff]
        %v1139 = vld [vmem:[%s2] sm:$0x1]
        %v1141 = vlaneseq
        %v1142 = vshrl.u32 %v1141, 7
        %v1143 = vsub.s32 0, %v1142
        %v1144 = vrot.slane %v1139, %v1143
        %v1147 = vsel %vm514, %v1121, 0
        %v1150 = vsel %vm514, %v1122, 0
        %v1153 = vsel %vm514, %v1123, 0
        %v1156 = vsel %vm514, %v1124, 0
        %v1159 = vsel %vm514, %v1125, 0
        %v1162 = vsel %vm514, %v1126, 0
        %v1165 = vsel %vm514, %v1127, 0
        %v1168 = vsel %vm514, %v1128, 0
        %v1171 = vsel %vm514, %v1129, 0
        %v1174 = vsel %vm514, %v1130, 0
        %v1177 = vsel %vm514, %v1131, 0
        %v1180 = vsel %vm514, %v1132, 0
        %v1183 = vsel %vm514, %v1133, 0
        %v1186 = vsel %vm514, %v1134, 0
        %v1189 = vsel %vm514, %v1135, 0
        %v1192 = vsel %vm514, %v1136, 0
        %1194 = vmatprep.subr.mxu0 0.0
        %1195 = vmatpush1.msra.mxu0 %v1137
        %1196 = vmatprep.subr.mxu0 0.0
        %1197 = vmatpush1.msra.mxu0 %v1138
        %1198 = vmatprep.subr.mxu0 0.0
        %1199 = vmatpush1.msra.mxu0 0.0
        %1200 = vmatprep.subr.mxu0 0.0
        %1201 = vmatpush1.msra.mxu0 0.0
        %1202 = vmatprep.subr.mxu0 0.0
        %1203 = vmatpush1.msra.mxu0 0.0
        %1204 = vmatprep.subr.mxu0 0.0
        %1205 = vmatpush1.msra.mxu0 0.0
        %1206 = vmatprep.subr.mxu0 0.0
        %1207 = vmatpush1.msra.mxu0 0.0
        %1208 = vmatprep.subr.mxu0 0.0
        %1209 = vmatpush1.msra.mxu0 0.0
        %1210 = vmatprep.subr.mxu0 0.0
        %1211 = vmatpush1.msra.mxu0 0.0
        %1212 = vmatprep.subr.mxu0 0.0
        %1213 = vmatpush1.msra.mxu0 0.0
        %1214 = vmatprep.subr.mxu0 0.0
        %1215 = vmatpush1.msra.mxu0 0.0
        %1216 = vmatprep.subr.mxu0 0.0
        %1217 = vmatpush1.msra.mxu0 0.0
        %1218 = vmatprep.subr.mxu0 0.0
        %1219 = vmatpush1.msra.mxu0 0.0
        %1220 = vmatprep.subr.mxu0 0.0
        %1221 = vmatpush1.msra.mxu0 0.0
        %1222 = vmatprep.subr.mxu0 0.0
        %1223 = vmatpush1.msra.mxu0 0.0
        %1224 = vmatprep.subr.mxu0 0.0
        %1225 = vmatpush1.msra.mxu0 0.0
        %1226 = vmatprep.subr.mxu0 0.0
        %1227 = vmatpush1.msra.mxu0 0.0
        %1228 = vmatprep.subr.mxu0 0.0
        %1229 = vmatpush1.msra.mxu0 0.0
        %1230 = vmatprep.subr.mxu0 0.0
        %1231 = vmatpush1.msra.mxu0 0.0
        %1232 = vmatprep.subr.mxu0 0.0
        %1233 = vmatpush1.msra.mxu0 0.0
        %1234 = vmatprep.subr.mxu0 0.0
        %1235 = vmatpush1.msra.mxu0 0.0
        %1236 = vmatprep.subr.mxu0 0.0
        %1237 = vmatpush1.msra.mxu0 0.0
        %1238 = vmatprep.subr.mxu0 0.0
        %1239 = vmatpush1.msra.mxu0 0.0
        %1240 = vmatprep.subr.mxu0 0.0
        %1241 = vmatpush1.msra.mxu0 0.0
        %1242 = vmatprep.subr.mxu0 0.0
        %1243 = vmatpush1.msra.mxu0 0.0
        %1244 = vmatprep.subr.mxu0 0.0
        %1245 = vmatpush1.msra.mxu0 0.0
        %1246 = vmatprep.subr.mxu0 0.0
        %1247 = vmatpush1.msra.mxu0 0.0
        %1248 = vmatprep.subr.mxu0 0.0
        %1249 = vmatpush1.msra.mxu0 0.0
        %1250 = vmatprep.subr.mxu0 0.0
        %1251 = vmatpush1.msra.mxu0 0.0
        %1252 = vmatprep.subr.mxu0 0.0
        %1253 = vmatpush1.msra.mxu0 0.0
        %1254 = vmatprep.subr.mxu0 0.0
        %1255 = vmatpush1.msra.mxu0 0.0
        %1256 = vmatprep.subr.mxu0 0.0
        %1257 = vmatpush1.msra.mxu0 0.0
        %1258 = vmatprep.mubr.f32.mxu0 0.0
        %1259 = vmatmul.mubr.f32.gmra.mrb[0].mxu0 %v1147
        %v1260 = vpop.f32.mrb[0].mxu0
        %v1261 = vadd.f32 %v1144, %v1260
        %v1262 = vpop.f32.mrb[0].mxu0
        %1263 = vmatprep.mubr.f32.mxu0 0.0
        %1264 = vmatmul.mubr.f32.gmra.mrb[0].mxu0 %v1150
        %v1265 = vpop.f32.mrb[0].mxu0
        %v1266 = vadd.f32 %v1144, %v1265
        %v1267 = vpop.f32.mrb[0].mxu0
        %1268 = vmatprep.mubr.f32.mxu0 0.0
        %1269 = vmatmul.mubr.f32.gmra.mrb[0].mxu0 %v1153
        %v1270 = vpop.f32.mrb[0].mxu0
        %v1271 = vadd.f32 %v1144, %v1270
        %v1272 = vpop.f32.mrb[0].mxu0
        %1273 = vmatprep.mubr.f32.mxu0 0.0
        %1274 = vmatmul.mubr.f32.gmra.mrb[0].mxu0 %v1156
        %v1275 = vpop.f32.mrb[0].mxu0
        %v1276 = vadd.f32 %v1144, %v1275
        %v1277 = vpop.f32.mrb[0].mxu0
        %1278 = vmatprep.mubr.f32.mxu0 0.0
        %1279 = vmatmul.mubr.f32.gmra.mrb[0].mxu0 %v1159
        %v1280 = vpop.f32.mrb[0].mxu0
        %v1281 = vadd.f32 %v1144, %v1280
        %v1282 = vpop.f32.mrb[0].mxu0
        %1283 = vmatprep.mubr.f32.mxu0 0.0
        %1284 = vmatmul.mubr.f32.gmra.mrb[0].mxu0 %v1162
        %v1285 = vpop.f32.mrb[0].mxu0
        %v1286 = vadd.f32 %v1144, %v1285
        %v1287 = vpop.f32.mrb[0].mxu0
        %1288 = vmatprep.mubr.f32.mxu0 0.0
        %1289 = vmatmul.mubr.f32.gmra.mrb[0].mxu0 %v1165
        %v1290 = vpop.f32.mrb[0].mxu0
        %v1291 = vadd.f32 %v1144, %v1290
        %v1292 = vpop.f32.mrb[0].mxu0
        %1293 = vmatprep.mubr.f32.mxu0 0.0
        %1294 = vmatmul.mubr.f32.gmra.mrb[0].mxu0 %v1168
        %v1295 = vpop.f32.mrb[0].mxu0
        %v1296 = vadd.f32 %v1144, %v1295
        %v1297 = vpop.f32.mrb[0].mxu0
        %1298 = vmatprep.mubr.f32.mxu0 0.0
        %1299 = vmatmul.mubr.f32.gmra.mrb[0].mxu0 %v1171
        %v1300 = vpop.f32.mrb[0].mxu0
        %v1301 = vadd.f32 %v1144, %v1300
        %v1302 = vpop.f32.mrb[0].mxu0
        %1303 = vmatprep.mubr.f32.mxu0 0.0
        %1304 = vmatmul.mubr.f32.gmra.mrb[0].mxu0 %v1174
        %v1305 = vpop.f32.mrb[0].mxu0
        %v1306 = vadd.f32 %v1144, %v1305
        %v1307 = vpop.f32.mrb[0].mxu0
        %1308 = vmatprep.mubr.f32.mxu0 0.0
        %1309 = vmatmul.mubr.f32.gmra.mrb[0].mxu0 %v1177
        %v1310 = vpop.f32.mrb[0].mxu0
        %v1311 = vadd.f32 %v1144, %v1310
        %v1312 = vpop.f32.mrb[0].mxu0
        %1313 = vmatprep.mubr.f32.mxu0 0.0
        %1314 = vmatmul.mubr.f32.gmra.mrb[0].mxu0 %v1180
        %v1315 = vpop.f32.mrb[0].mxu0
        %v1316 = vadd.f32 %v1144, %v1315
        %v1317 = vpop.f32.mrb[0].mxu0
        %1318 = vmatprep.mubr.f32.mxu0 0.0
        %1319 = vmatmul.mubr.f32.gmra.mrb[0].mxu0 %v1183
        %v1320 = vpop.f32.mrb[0].mxu0
        %v1321 = vadd.f32 %v1144, %v1320
        %v1322 = vpop.f32.mrb[0].mxu0
        %1323 = vmatprep.mubr.f32.mxu0 0.0
        %1324 = vmatmul.mubr.f32.gmra.mrb[0].mxu0 %v1186
        %v1325 = vpop.f32.mrb[0].mxu0
        %v1326 = vadd.f32 %v1144, %v1325
        %v1327 = vpop.f32.mrb[0].mxu0
        %1328 = vmatprep.mubr.f32.mxu0 0.0
        %1329 = vmatmul.mubr.f32.gmra.mrb[0].mxu0 %v1189
        %v1330 = vpop.f32.mrb[0].mxu0
        %v1331 = vadd.f32 %v1144, %v1330
        %v1332 = vpop.f32.mrb[0].mxu0
        %1333 = vmatprep.mubr.f32.mxu0 0.0
        %1334 = vmatmul.mubr.f32.gmra.mrb[0].mxu0 %v1192
        %v1335 = vpop.f32.mrb[0].mxu0
        %v1336 = vadd.f32 %v1144, %v1335
        %v1337 = vpop.f32.mrb[0].mxu0
        %1338 = vdwg.mxu0
        %v1339 = vadd.f32 %v1261, 3.0
        %v1340 = vadd.f32 %v1266, 3.0
        %v1341 = vadd.f32 %v1271, 3.0
        %v1342 = vadd.f32 %v1276, 3.0
        %v1343 = vadd.f32 %v1281, 3.0
        %v1344 = vadd.f32 %v1286, 3.0
        %v1345 = vadd.f32 %v1291, 3.0
        %v1346 = vadd.f32 %v1296, 3.0
        %v1347 = vadd.f32 %v1301, 3.0
        %v1348 = vadd.f32 %v1306, 3.0
        %v1349 = vadd.f32 %v1311, 3.0
        %v1350 = vadd.f32 %v1316, 3.0
        %v1351 = vadd.f32 %v1321, 3.0
        %v1352 = vadd.f32 %v1326, 3.0
        %v1353 = vadd.f32 %v1331, 3.0
        %v1354 = vadd.f32 %v1336, 3.0
        %v1355 = vmax.f32 %v1339, 0.0
        %v1356 = vmax.f32 %v1340, 0.0
        %v1357 = vmax.f32 %v1341, 0.0
        %v1358 = vmax.f32 %v1342, 0.0
        %v1359 = vmax.f32 %v1343, 0.0
        %v1360 = vmax.f32 %v1344, 0.0
        %v1361 = vmax.f32 %v1345, 0.0
        %v1362 = vmax.f32 %v1346, 0.0
        %v1363 = vmax.f32 %v1347, 0.0
        %v1364 = vmax.f32 %v1348, 0.0
        %v1365 = vmax.f32 %v1349, 0.0
        %v1366 = vmax.f32 %v1350, 0.0
        %v1367 = vmax.f32 %v1351, 0.0
        %v1368 = vmax.f32 %v1352, 0.0
        %v1369 = vmax.f32 %v1353, 0.0
        %v1370 = vmax.f32 %v1354, 0.0
        %v1371 = vmin.f32 %v1355, 6.0
        %v1372 = vmin.f32 %v1356, 6.0
        %v1373 = vmin.f32 %v1357, 6.0
        %v1374 = vmin.f32 %v1358, 6.0
        %v1375 = vmin.f32 %v1359, 6.0
        %v1376 = vmin.f32 %v1360, 6.0
        %v1377 = vmin.f32 %v1361, 6.0
        %v1378 = vmin.f32 %v1362, 6.0
        %v1379 = vmin.f32 %v1363, 6.0
        %v1380 = vmin.f32 %v1364, 6.0
        %v1381 = vmin.f32 %v1365, 6.0
        %v1382 = vmin.f32 %v1366, 6.0
        %v1383 = vmin.f32 %v1367, 6.0
        %v1384 = vmin.f32 %v1368, 6.0
        %v1385 = vmin.f32 %v1369, 6.0
        %v1386 = vmin.f32 %v1370, 6.0
        %v1387 = vmul.f32 %v1371, 0.16666667
        %v1388 = vmul.f32 %v1372, 0.16666667
        %v1389 = vmul.f32 %v1373, 0.16666667
        %v1390 = vmul.f32 %v1374, 0.16666667
        %v1391 = vmul.f32 %v1375, 0.16666667
        %v1392 = vmul.f32 %v1376, 0.16666667
        %v1393 = vmul.f32 %v1377, 0.16666667
        %v1394 = vmul.f32 %v1378, 0.16666667
        %v1395 = vmul.f32 %v1379, 0.16666667
        %v1396 = vmul.f32 %v1380, 0.16666667
        %v1397 = vmul.f32 %v1381, 0.16666667
        %v1398 = vmul.f32 %v1382, 0.16666667
        %v1399 = vmul.f32 %v1383, 0.16666667
        %v1400 = vmul.f32 %v1384, 0.16666667
        %v1401 = vmul.f32 %v1385, 0.16666667
        %v1402 = vmul.f32 %v1386, 0.16666667
        %v1403 = vmul.f32 %v1261, %v1387
        %v1404 = vmul.f32 %v1266, %v1388
        %v1405 = vmul.f32 %v1271, %v1389
        %v1406 = vmul.f32 %v1276, %v1390
        %v1407 = vmul.f32 %v1281, %v1391
        %v1408 = vmul.f32 %v1286, %v1392
        %v1409 = vmul.f32 %v1291, %v1393
        %v1410 = vmul.f32 %v1296, %v1394
        %v1411 = vmul.f32 %v1301, %v1395
        %v1412 = vmul.f32 %v1306, %v1396
        %v1413 = vmul.f32 %v1311, %v1397
        %v1414 = vmul.f32 %v1316, %v1398
        %v1415 = vmul.f32 %v1321, %v1399
        %v1416 = vmul.f32 %v1326, %v1400
        %v1417 = vmul.f32 %v1331, %v1401
        %v1418 = vmul.f32 %v1336, %v1402
        %s1419 = scalar_lea.vmem [#allocation2], 216
        %1420 = vst.msk [vmem:[%s1419 + $0x1] sm:$0xff] %vm408, %v1403
        %1421 = vst.msk [vmem:[%s1419 + $0x9] sm:$0xff] %vm408, %v1404
        %1422 = vst.msk [vmem:[%s1419 + $0x19] sm:$0xff] %vm408, %v1405
        %1423 = vst.msk [vmem:[%s1419 + $0x21] sm:$0xff] %vm408, %v1406
        %1424 = vst.msk [vmem:[%s1419 + $0x31] sm:$0xff] %vm408, %v1407
        %1425 = vst.msk [vmem:[%s1419 + $0x39] sm:$0xff] %vm408, %v1408
        %1426 = vst.msk [vmem:[%s1419 + $0x49] sm:$0xff] %vm408, %v1409
        %1427 = vst.msk [vmem:[%s1419 + $0x51] sm:$0xff] %vm408, %v1410
        %1428 = vst.msk [vmem:[%s1419 + $0x1b1] sm:$0xff] %vm408, %v1411
        %1429 = vst.msk [vmem:[%s1419 + $0x1b9] sm:$0xff] %vm408, %v1412
        %1430 = vst.msk [vmem:[%s1419 + $0x1c9] sm:$0xff] %vm408, %v1413
        %1431 = vst.msk [vmem:[%s1419 + $0x1d1] sm:$0xff] %vm408, %v1414
        %1432 = vst.msk [vmem:[%s1419 + $0x1e1] sm:$0xff] %vm408, %v1415
        %1433 = vst.msk [vmem:[%s1419 + $0x1e9] sm:$0xff] %vm408, %v1416
        %1434 = vst.msk [vmem:[%s1419 + $0x1f9] sm:$0xff] %vm408, %v1417
        %1435 = vst.msk [vmem:[%s1419 + $0x201] sm:$0xff] %vm408, %v1418
        %s1436 = scalar_lea.vmem %s367, 192 [#allocation4]
        %v1437 = vld [vmem:[%s1436] sm:$0xff]
        %v1438 = vld [vmem:[%s1436 + $0x8] sm:$0xff]
        %v1439 = vld [vmem:[%s1436 + $0x10] sm:$0xff]
        %v1440 = vld [vmem:[%s1436 + $0x18] sm:$0xff]
        %v1441 = vld [vmem:[%s1436 + $0x20] sm:$0xff]
        %v1442 = vld [vmem:[%s1436 + $0x28] sm:$0xff]
        %v1443 = vld [vmem:[%s1436 + $0x30] sm:$0xff]
        %v1444 = vld [vmem:[%s1436 + $0x38] sm:$0xff]
        %v1445 = vld [vmem:[%s1436 + $0x100] sm:$0xff]
        %v1446 = vld [vmem:[%s1436 + $0x108] sm:$0xff]
        %v1447 = vld [vmem:[%s1436 + $0x110] sm:$0xff]
        %v1448 = vld [vmem:[%s1436 + $0x118] sm:$0xff]
        %v1449 = vld [vmem:[%s1436 + $0x120] sm:$0xff]
        %v1450 = vld [vmem:[%s1436 + $0x128] sm:$0xff]
        %v1451 = vld [vmem:[%s1436 + $0x130] sm:$0xff]
        %v1452 = vld [vmem:[%s1436 + $0x138] sm:$0xff]
        %v1453 = vld [vmem:[%s1] sm:$0xff]
        %v1454 = vld [vmem:[%s1 + $0x8] sm:$0xff]
        %v1455 = vld [vmem:[%s2] sm:$0x1]
        %v1457 = vlaneseq
        %v1458 = vshrl.u32 %v1457, 7
        %v1459 = vsub.s32 0, %v1458
        %v1460 = vrot.slane %v1455, %v1459
        %v1463 = vsel %vm514, %v1437, 0
        %v1466 = vsel %vm514, %v1438, 0
        %v1469 = vsel %vm514, %v1439, 0
        %v1472 = vsel %vm514, %v1440, 0
        %v1475 = vsel %vm514, %v1441, 0
        %v1478 = vsel %vm514, %v1442, 0
        %v1481 = vsel %vm514, %v1443, 0
        %v1484 = vsel %vm514, %v1444, 0
        %v1487 = vsel %vm514, %v1445, 0
        %v1490 = vsel %vm514, %v1446, 0
        %v1493 = vsel %vm514, %v1447, 0
        %v1496 = vsel %vm514, %v1448, 0
        %v1499 = vsel %vm514, %v1449, 0
        %v1502 = vsel %vm514, %v1450, 0
        %v1505 = vsel %vm514, %v1451, 0
        %v1508 = vsel %vm514, %v1452, 0
        %1510 = vmatprep.subr.mxu0 0.0
        %1511 = vmatpush1.msra.mxu0 %v1453
        %1512 = vmatprep.subr.mxu0 0.0
        %1513 = vmatpush1.msra.mxu0 %v1454
        %1514 = vmatprep.subr.mxu0 0.0
        %1515 = vmatpush1.msra.mxu0 0.0
        %1516 = vmatprep.subr.mxu0 0.0
        %1517 = vmatpush1.msra.mxu0 0.0
        %1518 = vmatprep.subr.mxu0 0.0
        %1519 = vmatpush1.msra.mxu0 0.0
        %1520 = vmatprep.subr.mxu0 0.0
        %1521 = vmatpush1.msra.mxu0 0.0
        %1522 = vmatprep.subr.mxu0 0.0
        %1523 = vmatpush1.msra.mxu0 0.0
        %1524 = vmatprep.subr.mxu0 0.0
        %1525 = vmatpush1.msra.mxu0 0.0
        %1526 = vmatprep.subr.mxu0 0.0
        %1527 = vmatpush1.msra.mxu0 0.0
        %1528 = vmatprep.subr.mxu0 0.0
        %1529 = vmatpush1.msra.mxu0 0.0
        %1530 = vmatprep.subr.mxu0 0.0
        %1531 = vmatpush1.msra.mxu0 0.0
        %1532 = vmatprep.subr.mxu0 0.0
        %1533 = vmatpush1.msra.mxu0 0.0
        %1534 = vmatprep.subr.mxu0 0.0
        %1535 = vmatpush1.msra.mxu0 0.0
        %1536 = vmatprep.subr.mxu0 0.0
        %1537 = vmatpush1.msra.mxu0 0.0
        %1538 = vmatprep.subr.mxu0 0.0
        %1539 = vmatpush1.msra.mxu0 0.0
        %1540 = vmatprep.subr.mxu0 0.0
        %1541 = vmatpush1.msra.mxu0 0.0
        %1542 = vmatprep.subr.mxu0 0.0
        %1543 = vmatpush1.msra.mxu0 0.0
        %1544 = vmatprep.subr.mxu0 0.0
        %1545 = vmatpush1.msra.mxu0 0.0
        %1546 = vmatprep.subr.mxu0 0.0
        %1547 = vmatpush1.msra.mxu0 0.0
        %1548 = vmatprep.subr.mxu0 0.0
        %1549 = vmatpush1.msra.mxu0 0.0
        %1550 = vmatprep.subr.mxu0 0.0
        %1551 = vmatpush1.msra.mxu0 0.0
        %1552 = vmatprep.subr.mxu0 0.0
        %1553 = vmatpush1.msra.mxu0 0.0
        %1554 = vmatprep.subr.mxu0 0.0
        %1555 = vmatpush1.msra.mxu0 0.0
        %1556 = vmatprep.subr.mxu0 0.0
        %1557 = vmatpush1.msra.mxu0 0.0
        %1558 = vmatprep.subr.mxu0 0.0
        %1559 = vmatpush1.msra.mxu0 0.0
        %1560 = vmatprep.subr.mxu0 0.0
        %1561 = vmatpush1.msra.mxu0 0.0
        %1562 = vmatprep.subr.mxu0 0.0
        %1563 = vmatpush1.msra.mxu0 0.0
        %1564 = vmatprep.subr.mxu0 0.0
        %1565 = vmatpush1.msra.mxu0 0.0
        %1566 = vmatprep.subr.mxu0 0.0
        %1567 = vmatpush1.msra.mxu0 0.0
        %1568 = vmatprep.subr.mxu0 0.0
        %1569 = vmatpush1.msra.mxu0 0.0
        %1570 = vmatprep.subr.mxu0 0.0
        %1571 = vmatpush1.msra.mxu0 0.0
        %1572 = vmatprep.subr.mxu0 0.0
        %1573 = vmatpush1.msra.mxu0 0.0
        %1574 = vmatprep.mubr.f32.mxu0 0.0
        %1575 = vmatmul.mubr.f32.gmra.mrb[0].mxu0 %v1463
        %v1576 = vpop.f32.mrb[0].mxu0
        %v1577 = vadd.f32 %v1460, %v1576
        %v1578 = vpop.f32.mrb[0].mxu0
        %1579 = vmatprep.mubr.f32.mxu0 0.0
        %1580 = vmatmul.mubr.f32.gmra.mrb[0].mxu0 %v1466
        %v1581 = vpop.f32.mrb[0].mxu0
        %v1582 = vadd.f32 %v1460, %v1581
        %v1583 = vpop.f32.mrb[0].mxu0
        %1584 = vmatprep.mubr.f32.mxu0 0.0
        %1585 = vmatmul.mubr.f32.gmra.mrb[0].mxu0 %v1469
        %v1586 = vpop.f32.mrb[0].mxu0
        %v1587 = vadd.f32 %v1460, %v1586
        %v1588 = vpop.f32.mrb[0].mxu0
        %1589 = vmatprep.mubr.f32.mxu0 0.0
        %1590 = vmatmul.mubr.f32.gmra.mrb[0].mxu0 %v1472
        %v1591 = vpop.f32.mrb[0].mxu0
        %v1592 = vadd.f32 %v1460, %v1591
        %v1593 = vpop.f32.mrb[0].mxu0
        %1594 = vmatprep.mubr.f32.mxu0 0.0
        %1595 = vmatmul.mubr.f32.gmra.mrb[0].mxu0 %v1475
        %v1596 = vpop.f32.mrb[0].mxu0
        %v1597 = vadd.f32 %v1460, %v1596
        %v1598 = vpop.f32.mrb[0].mxu0
        %1599 = vmatprep.mubr.f32.mxu0 0.0
        %1600 = vmatmul.mubr.f32.gmra.mrb[0].mxu0 %v1478
        %v1601 = vpop.f32.mrb[0].mxu0
        %v1602 = vadd.f32 %v1460, %v1601
        %v1603 = vpop.f32.mrb[0].mxu0
        %1604 = vmatprep.mubr.f32.mxu0 0.0
        %1605 = vmatmul.mubr.f32.gmra.mrb[0].mxu0 %v1481
        %v1606 = vpop.f32.mrb[0].mxu0
        %v1607 = vadd.f32 %v1460, %v1606
        %v1608 = vpop.f32.mrb[0].mxu0
        %1609 = vmatprep.mubr.f32.mxu0 0.0
        %1610 = vmatmul.mubr.f32.gmra.mrb[0].mxu0 %v1484
        %v1611 = vpop.f32.mrb[0].mxu0
        %v1612 = vadd.f32 %v1460, %v1611
        %v1613 = vpop.f32.mrb[0].mxu0
        %1614 = vmatprep.mubr.f32.mxu0 0.0
        %1615 = vmatmul.mubr.f32.gmra.mrb[0].mxu0 %v1487
        %v1616 = vpop.f32.mrb[0].mxu0
        %v1617 = vadd.f32 %v1460, %v1616
        %v1618 = vpop.f32.mrb[0].mxu0
        %1619 = vmatprep.mubr.f32.mxu0 0.0
        %1620 = vmatmul.mubr.f32.gmra.mrb[0].mxu0 %v1490
        %v1621 = vpop.f32.mrb[0].mxu0
        %v1622 = vadd.f32 %v1460, %v1621
        %v1623 = vpop.f32.mrb[0].mxu0
        %1624 = vmatprep.mubr.f32.mxu0 0.0
        %1625 = vmatmul.mubr.f32.gmra.mrb[0].mxu0 %v1493
        %v1626 = vpop.f32.mrb[0].mxu0
        %v1627 = vadd.f32 %v1460, %v1626
        %v1628 = vpop.f32.mrb[0].mxu0
        %1629 = vmatprep.mubr.f32.mxu0 0.0
        %1630 = vmatmul.mubr.f32.gmra.mrb[0].mxu0 %v1496
        %v1631 = vpop.f32.mrb[0].mxu0
        %v1632 = vadd.f32 %v1460, %v1631
        %v1633 = vpop.f32.mrb[0].mxu0
        %1634 = vmatprep.mubr.f32.mxu0 0.0
        %1635 = vmatmul.mubr.f32.gmra.mrb[0].mxu0 %v1499
        %v1636 = vpop.f32.mrb[0].mxu0
        %v1637 = vadd.f32 %v1460, %v1636
        %v1638 = vpop.f32.mrb[0].mxu0
        %1639 = vmatprep.mubr.f32.mxu0 0.0
        %1640 = vmatmul.mubr.f32.gmra.mrb[0].mxu0 %v1502
        %v1641 = vpop.f32.mrb[0].mxu0
        %v1642 = vadd.f32 %v1460, %v1641
        %v1643 = vpop.f32.mrb[0].mxu0
        %1644 = vmatprep.mubr.f32.mxu0 0.0
        %1645 = vmatmul.mubr.f32.gmra.mrb[0].mxu0 %v1505
        %v1646 = vpop.f32.mrb[0].mxu0
        %v1647 = vadd.f32 %v1460, %v1646
        %v1648 = vpop.f32.mrb[0].mxu0
        %1649 = vmatprep.mubr.f32.mxu0 0.0
        %1650 = vmatmul.mubr.f32.gmra.mrb[0].mxu0 %v1508
        %v1651 = vpop.f32.mrb[0].mxu0
        %v1652 = vadd.f32 %v1460, %v1651
        %v1653 = vpop.f32.mrb[0].mxu0
        %1654 = vdwg.mxu0
        %v1655 = vadd.f32 %v1577, 3.0
        %v1656 = vadd.f32 %v1582, 3.0
        %v1657 = vadd.f32 %v1587, 3.0
        %v1658 = vadd.f32 %v1592, 3.0
        %v1659 = vadd.f32 %v1597, 3.0
        %v1660 = vadd.f32 %v1602, 3.0
        %v1661 = vadd.f32 %v1607, 3.0
        %v1662 = vadd.f32 %v1612, 3.0
        %v1663 = vadd.f32 %v1617, 3.0
        %v1664 = vadd.f32 %v1622, 3.0
        %v1665 = vadd.f32 %v1627, 3.0
        %v1666 = vadd.f32 %v1632, 3.0
        %v1667 = vadd.f32 %v1637, 3.0
        %v1668 = vadd.f32 %v1642, 3.0
        %v1669 = vadd.f32 %v1647, 3.0
        %v1670 = vadd.f32 %v1652, 3.0
        %v1671 = vmax.f32 %v1655, 0.0
        %v1672 = vmax.f32 %v1656, 0.0
        %v1673 = vmax.f32 %v1657, 0.0
        %v1674 = vmax.f32 %v1658, 0.0
        %v1675 = vmax.f32 %v1659, 0.0
        %v1676 = vmax.f32 %v1660, 0.0
        %v1677 = vmax.f32 %v1661, 0.0
        %v1678 = vmax.f32 %v1662, 0.0
        %v1679 = vmax.f32 %v1663, 0.0
        %v1680 = vmax.f32 %v1664, 0.0
        %v1681 = vmax.f32 %v1665, 0.0
        %v1682 = vmax.f32 %v1666, 0.0
        %v1683 = vmax.f32 %v1667, 0.0
        %v1684 = vmax.f32 %v1668, 0.0
        %v1685 = vmax.f32 %v1669, 0.0
        %v1686 = vmax.f32 %v1670, 0.0
        %v1687 = vmin.f32 %v1671, 6.0
        %v1688 = vmin.f32 %v1672, 6.0
        %v1689 = vmin.f32 %v1673, 6.0
        %v1690 = vmin.f32 %v1674, 6.0
        %v1691 = vmin.f32 %v1675, 6.0
        %v1692 = vmin.f32 %v1676, 6.0
        %v1693 = vmin.f32 %v1677, 6.0
        %v1694 = vmin.f32 %v1678, 6.0
        %v1695 = vmin.f32 %v1679, 6.0
        %v1696 = vmin.f32 %v1680, 6.0
        %v1697 = vmin.f32 %v1681, 6.0
        %v1698 = vmin.f32 %v1682, 6.0
        %v1699 = vmin.f32 %v1683, 6.0
        %v1700 = vmin.f32 %v1684, 6.0
        %v1701 = vmin.f32 %v1685, 6.0
        %v1702 = vmin.f32 %v1686, 6.0
        %v1703 = vmul.f32 %v1687, 0.16666667
        %v1704 = vmul.f32 %v1688, 0.16666667
        %v1705 = vmul.f32 %v1689, 0.16666667
        %v1706 = vmul.f32 %v1690, 0.16666667
        %v1707 = vmul.f32 %v1691, 0.16666667
        %v1708 = vmul.f32 %v1692, 0.16666667
        %v1709 = vmul.f32 %v1693, 0.16666667
        %v1710 = vmul.f32 %v1694, 0.16666667
        %v1711 = vmul.f32 %v1695, 0.16666667
        %v1712 = vmul.f32 %v1696, 0.16666667
        %v1713 = vmul.f32 %v1697, 0.16666667
        %v1714 = vmul.f32 %v1698, 0.16666667
        %v1715 = vmul.f32 %v1699, 0.16666667
        %v1716 = vmul.f32 %v1700, 0.16666667
        %v1717 = vmul.f32 %v1701, 0.16666667
        %v1718 = vmul.f32 %v1702, 0.16666667
        %v1719 = vmul.f32 %v1577, %v1703
        %v1720 = vmul.f32 %v1582, %v1704
        %v1721 = vmul.f32 %v1587, %v1705
        %v1722 = vmul.f32 %v1592, %v1706
        %v1723 = vmul.f32 %v1597, %v1707
        %v1724 = vmul.f32 %v1602, %v1708
        %v1725 = vmul.f32 %v1607, %v1709
        %v1726 = vmul.f32 %v1612, %v1710
        %v1727 = vmul.f32 %v1617, %v1711
        %v1728 = vmul.f32 %v1622, %v1712
        %v1729 = vmul.f32 %v1627, %v1713
        %v1730 = vmul.f32 %v1632, %v1714
        %v1731 = vmul.f32 %v1637, %v1715
        %v1732 = vmul.f32 %v1642, %v1716
        %v1733 = vmul.f32 %v1647, %v1717
        %v1734 = vmul.f32 %v1652, %v1718
        %s1735 = scalar_lea.vmem [#allocation2], 312
        %1736 = vst.msk [vmem:[%s1735 + $0x1] sm:$0xff] %vm408, %v1719
        %1737 = vst.msk [vmem:[%s1735 + $0x9] sm:$0xff] %vm408, %v1720
        %1738 = vst.msk [vmem:[%s1735 + $0x19] sm:$0xff] %vm408, %v1721
        %1739 = vst.msk [vmem:[%s1735 + $0x21] sm:$0xff] %vm408, %v1722
        %1740 = vst.msk [vmem:[%s1735 + $0x31] sm:$0xff] %vm408, %v1723
        %1741 = vst.msk [vmem:[%s1735 + $0x39] sm:$0xff] %vm408, %v1724
        %1742 = vst.msk [vmem:[%s1735 + $0x49] sm:$0xff] %vm408, %v1725
        %1743 = vst.msk [vmem:[%s1735 + $0x51] sm:$0xff] %vm408, %v1726
        %1744 = vst.msk [vmem:[%s1735 + $0x1b1] sm:$0xff] %vm408, %v1727
        %1745 = vst.msk [vmem:[%s1735 + $0x1b9] sm:$0xff] %vm408, %v1728
        %1746 = vst.msk [vmem:[%s1735 + $0x1c9] sm:$0xff] %vm408, %v1729
        %1747 = vst.msk [vmem:[%s1735 + $0x1d1] sm:$0xff] %vm408, %v1730
        %1748 = vst.msk [vmem:[%s1735 + $0x1e1] sm:$0xff] %vm408, %v1731
        %1749 = vst.msk [vmem:[%s1735 + $0x1e9] sm:$0xff] %vm408, %v1732
        %1750 = vst.msk [vmem:[%s1735 + $0x1f9] sm:$0xff] %vm408, %v1733
        %1751 = vst.msk [vmem:[%s1735 + $0x201] sm:$0xff] %vm408, %v1734
        %v1752 = vld [vmem:[%s4] sm:$0x1]
        %v1754 = vlaneseq
        %v1755 = vshrl.u32 %v1754, 7
        %v1756 = vsub.s32 0, %v1755
        %v1757 = vrot.slane %v1752, %v1756
        %v1759 = vld [vmem:[#allocation2] sm:$0xff]
        %v1760 = vld [vmem:[#allocation2 + $0x8] sm:$0xff]
        %v1761 = vld [vmem:[#allocation2 + $0x18] sm:$0xff]
        %v1762 = vld [vmem:[#allocation2 + $0x20] sm:$0xff]
        %v1763 = vld [vmem:[#allocation2 + $0x30] sm:$0xff]
        %v1764 = vld [vmem:[#allocation2 + $0x38] sm:$0xff]
        %v1765 = vld [vmem:[#allocation2 + $0x48] sm:$0xff]
        %v1766 = vld [vmem:[#allocation2 + $0x50] sm:$0xff]
        %v1767 = vld [vmem:[#allocation2 + $0x1b0] sm:$0xff]
        %v1768 = vld [vmem:[#allocation2 + $0x1b8] sm:$0xff]
        %v1769 = vld [vmem:[#allocation2 + $0x1c8] sm:$0xff]
        %v1770 = vld [vmem:[#allocation2 + $0x1d0] sm:$0xff]
        %v1771 = vld [vmem:[#allocation2 + $0x1e0] sm:$0xff]
        %v1772 = vld [vmem:[#allocation2 + $0x1e8] sm:$0xff]
        %v1773 = vld [vmem:[#allocation2 + $0x1f8] sm:$0xff]
        %v1774 = vld [vmem:[#allocation2 + $0x200] sm:$0xff]
        %v1775 = vld [vmem:[%s3] sm:$0x1]
        %v1776 = vlaneseq
        %v1777 = vshrl.u32 %v1776, 7
        %v1778 = vsub.s32 0, %v1777
        %v1779 = vrot.slane %v1775, %v1778
        %v1780 = vmul.f32 %v1759, %v1779
        %v1781 = vmul.f32 %v1760, %v1779
        %v1782 = vmul.f32 %v1761, %v1779
        %v1783 = vmul.f32 %v1762, %v1779
        %v1784 = vmul.f32 %v1763, %v1779
        %v1785 = vmul.f32 %v1764, %v1779
        %v1786 = vmul.f32 %v1765, %v1779
        %v1787 = vmul.f32 %v1766, %v1779
        %v1788 = vmul.f32 %v1767, %v1779
        %v1789 = vmul.f32 %v1768, %v1779
        %v1790 = vmul.f32 %v1769, %v1779
        %v1791 = vmul.f32 %v1770, %v1779
        %v1792 = vmul.f32 %v1771, %v1779
        %v1793 = vmul.f32 %v1772, %v1779
        %v1794 = vmul.f32 %v1773, %v1779
        %v1795 = vmul.f32 %v1774, %v1779
        %v1796 = vadd.f32 %v1757, %v1780
        %v1797 = vadd.f32 %v1757, %v1781
        %v1798 = vadd.f32 %v1757, %v1782
        %v1799 = vadd.f32 %v1757, %v1783
        %v1800 = vadd.f32 %v1757, %v1784
        %v1801 = vadd.f32 %v1757, %v1785
        %v1802 = vadd.f32 %v1757, %v1786
        %v1803 = vadd.f32 %v1757, %v1787
        %v1804 = vadd.f32 %v1757, %v1788
        %v1805 = vadd.f32 %v1757, %v1789
        %v1806 = vadd.f32 %v1757, %v1790
        %v1807 = vadd.f32 %v1757, %v1791
        %v1808 = vadd.f32 %v1757, %v1792
        %v1809 = vadd.f32 %v1757, %v1793
        %v1810 = vadd.f32 %v1757, %v1794
        %v1811 = vadd.f32 %v1757, %v1795
        %v1812 = vld [vmem:[#allocation2 + $0x1] sm:$0xff]
        %v1813 = vld [vmem:[#allocation2 + $0x9] sm:$0xff]
        %v1814 = vld [vmem:[#allocation2 + $0x19] sm:$0xff]
        %v1815 = vld [vmem:[#allocation2 + $0x21] sm:$0xff]
        %v1816 = vld [vmem:[#allocation2 + $0x31] sm:$0xff]
        %v1817 = vld [vmem:[#allocation2 + $0x39] sm:$0xff]
        %v1818 = vld [vmem:[#allocation2 + $0x49] sm:$0xff]
        %v1819 = vld [vmem:[#allocation2 + $0x51] sm:$0xff]
        %v1820 = vld [vmem:[#allocation2 + $0x1b1] sm:$0xff]
        %v1821 = vld [vmem:[#allocation2 + $0x1b9] sm:$0xff]
        %v1822 = vld [vmem:[#allocation2 + $0x1c9] sm:$0xff]
        %v1823 = vld [vmem:[#allocation2 + $0x1d1] sm:$0xff]
        %v1824 = vld [vmem:[#allocation2 + $0x1e1] sm:$0xff]
        %v1825 = vld [vmem:[#allocation2 + $0x1e9] sm:$0xff]
        %v1826 = vld [vmem:[#allocation2 + $0x1f9] sm:$0xff]
        %v1827 = vld [vmem:[#allocation2 + $0x201] sm:$0xff]
        %v1828 = vld [vmem:[%s3 + $0x1] sm:$0x1]
        %v1829 = vlaneseq
        %v1830 = vshrl.u32 %v1829, 7
        %v1831 = vsub.s32 0, %v1830
        %v1832 = vrot.slane %v1828, %v1831
        %v1833 = vmul.f32 %v1812, %v1832
        %v1834 = vmul.f32 %v1813, %v1832
        %v1835 = vmul.f32 %v1814, %v1832
        %v1836 = vmul.f32 %v1815, %v1832
        %v1837 = vmul.f32 %v1816, %v1832
        %v1838 = vmul.f32 %v1817, %v1832
        %v1839 = vmul.f32 %v1818, %v1832
        %v1840 = vmul.f32 %v1819, %v1832
        %v1841 = vmul.f32 %v1820, %v1832
        %v1842 = vmul.f32 %v1821, %v1832
        %v1843 = vmul.f32 %v1822, %v1832
        %v1844 = vmul.f32 %v1823, %v1832
        %v1845 = vmul.f32 %v1824, %v1832
        %v1846 = vmul.f32 %v1825, %v1832
        %v1847 = vmul.f32 %v1826, %v1832
        %v1848 = vmul.f32 %v1827, %v1832
        %v1849 = vadd.f32 %v1796, %v1833
        %v1850 = vadd.f32 %v1797, %v1834
        %v1851 = vadd.f32 %v1798, %v1835
        %v1852 = vadd.f32 %v1799, %v1836
        %v1853 = vadd.f32 %v1800, %v1837
        %v1854 = vadd.f32 %v1801, %v1838
        %v1855 = vadd.f32 %v1802, %v1839
        %v1856 = vadd.f32 %v1803, %v1840
        %v1857 = vadd.f32 %v1804, %v1841
        %v1858 = vadd.f32 %v1805, %v1842
        %v1859 = vadd.f32 %v1806, %v1843
        %v1860 = vadd.f32 %v1807, %v1844
        %v1861 = vadd.f32 %v1808, %v1845
        %v1862 = vadd.f32 %v1809, %v1846
        %v1863 = vadd.f32 %v1810, %v1847
        %v1864 = vadd.f32 %v1811, %v1848
        %v1865 = vld [vmem:[#allocation2 + $0x2] sm:$0xff]
        %v1866 = vld [vmem:[#allocation2 + $0xa] sm:$0xff]
        %v1867 = vld [vmem:[#allocation2 + $0x1a] sm:$0xff]
        %v1868 = vld [vmem:[#allocation2 + $0x22] sm:$0xff]
        %v1869 = vld [vmem:[#allocation2 + $0x32] sm:$0xff]
        %v1870 = vld [vmem:[#allocation2 + $0x3a] sm:$0xff]
        %v1871 = vld [vmem:[#allocation2 + $0x4a] sm:$0xff]
        %v1872 = vld [vmem:[#allocation2 + $0x52] sm:$0xff]
        %v1873 = vld [vmem:[#allocation2 + $0x1b2] sm:$0xff]
        %v1874 = vld [vmem:[#allocation2 + $0x1ba] sm:$0xff]
        %v1875 = vld [vmem:[#allocation2 + $0x1ca] sm:$0xff]
        %v1876 = vld [vmem:[#allocation2 + $0x1d2] sm:$0xff]
        %v1877 = vld [vmem:[#allocation2 + $0x1e2] sm:$0xff]
        %v1878 = vld [vmem:[#allocation2 + $0x1ea] sm:$0xff]
        %v1879 = vld [vmem:[#allocation2 + $0x1fa] sm:$0xff]
        %v1880 = vld [vmem:[#allocation2 + $0x202] sm:$0xff]
        %v1881 = vld [vmem:[%s3 + $0x2] sm:$0x1]
        %v1882 = vlaneseq
        %v1883 = vshrl.u32 %v1882, 7
        %v1884 = vsub.s32 0, %v1883
        %v1885 = vrot.slane %v1881, %v1884
        %v1886 = vmul.f32 %v1865, %v1885
        %v1887 = vmul.f32 %v1866, %v1885
        %v1888 = vmul.f32 %v1867, %v1885
        %v1889 = vmul.f32 %v1868, %v1885
        %v1890 = vmul.f32 %v1869, %v1885
        %v1891 = vmul.f32 %v1870, %v1885
        %v1892 = vmul.f32 %v1871, %v1885
        %v1893 = vmul.f32 %v1872, %v1885
        %v1894 = vmul.f32 %v1873, %v1885
        %v1895 = vmul.f32 %v1874, %v1885
        %v1896 = vmul.f32 %v1875, %v1885
        %v1897 = vmul.f32 %v1876, %v1885
        %v1898 = vmul.f32 %v1877, %v1885
        %v1899 = vmul.f32 %v1878, %v1885
        %v1900 = vmul.f32 %v1879, %v1885
        %v1901 = vmul.f32 %v1880, %v1885
        %v1902 = vadd.f32 %v1849, %v1886
        %v1903 = vadd.f32 %v1850, %v1887
        %v1904 = vadd.f32 %v1851, %v1888
        %v1905 = vadd.f32 %v1852, %v1889
        %v1906 = vadd.f32 %v1853, %v1890
        %v1907 = vadd.f32 %v1854, %v1891
        %v1908 = vadd.f32 %v1855, %v1892
        %v1909 = vadd.f32 %v1856, %v1893
        %v1910 = vadd.f32 %v1857, %v1894
        %v1911 = vadd.f32 %v1858, %v1895
        %v1912 = vadd.f32 %v1859, %v1896
        %v1913 = vadd.f32 %v1860, %v1897
        %v1914 = vadd.f32 %v1861, %v1898
        %v1915 = vadd.f32 %v1862, %v1899
        %v1916 = vadd.f32 %v1863, %v1900
        %v1917 = vadd.f32 %v1864, %v1901
        %v1918 = vld [vmem:[%s423] sm:$0xff]
        %v1919 = vld [vmem:[%s423 + $0x8] sm:$0xff]
        %v1920 = vld [vmem:[%s423 + $0x18] sm:$0xff]
        %v1921 = vld [vmem:[%s423 + $0x20] sm:$0xff]
        %v1922 = vld [vmem:[%s423 + $0x30] sm:$0xff]
        %v1923 = vld [vmem:[%s423 + $0x38] sm:$0xff]
        %v1924 = vld [vmem:[%s423 + $0x48] sm:$0xff]
        %v1925 = vld [vmem:[%s423 + $0x50] sm:$0xff]
        %v1926 = vld [vmem:[%s423 + $0x1b0] sm:$0xff]
        %v1927 = vld [vmem:[%s423 + $0x1b8] sm:$0xff]
        %v1928 = vld [vmem:[%s423 + $0x1c8] sm:$0xff]
        %v1929 = vld [vmem:[%s423 + $0x1d0] sm:$0xff]
        %v1930 = vld [vmem:[%s423 + $0x1e0] sm:$0xff]
        %v1931 = vld [vmem:[%s423 + $0x1e8] sm:$0xff]
        %v1932 = vld [vmem:[%s423 + $0x1f8] sm:$0xff]
        %v1933 = vld [vmem:[%s423 + $0x200] sm:$0xff]
        %v1934 = vld [vmem:[%s3 + $0x3] sm:$0x1]
        %v1935 = vlaneseq
        %v1936 = vshrl.u32 %v1935, 7
        %v1937 = vsub.s32 0, %v1936
        %v1938 = vrot.slane %v1934, %v1937
        %v1939 = vmul.f32 %v1918, %v1938
        %v1940 = vmul.f32 %v1919, %v1938
        %v1941 = vmul.f32 %v1920, %v1938
        %v1942 = vmul.f32 %v1921, %v1938
        %v1943 = vmul.f32 %v1922, %v1938
        %v1944 = vmul.f32 %v1923, %v1938
        %v1945 = vmul.f32 %v1924, %v1938
        %v1946 = vmul.f32 %v1925, %v1938
        %v1947 = vmul.f32 %v1926, %v1938
        %v1948 = vmul.f32 %v1927, %v1938
        %v1949 = vmul.f32 %v1928, %v1938
        %v1950 = vmul.f32 %v1929, %v1938
        %v1951 = vmul.f32 %v1930, %v1938
        %v1952 = vmul.f32 %v1931, %v1938
        %v1953 = vmul.f32 %v1932, %v1938
        %v1954 = vmul.f32 %v1933, %v1938
        %v1955 = vadd.f32 %v1902, %v1939
        %v1956 = vadd.f32 %v1903, %v1940
        %v1957 = vadd.f32 %v1904, %v1941
        %v1958 = vadd.f32 %v1905, %v1942
        %v1959 = vadd.f32 %v1906, %v1943
        %v1960 = vadd.f32 %v1907, %v1944
        %v1961 = vadd.f32 %v1908, %v1945
        %v1962 = vadd.f32 %v1909, %v1946
        %v1963 = vadd.f32 %v1910, %v1947
        %v1964 = vadd.f32 %v1911, %v1948
        %v1965 = vadd.f32 %v1912, %v1949
        %v1966 = vadd.f32 %v1913, %v1950
        %v1967 = vadd.f32 %v1914, %v1951
        %v1968 = vadd.f32 %v1915, %v1952
        %v1969 = vadd.f32 %v1916, %v1953
        %v1970 = vadd.f32 %v1917, %v1954
        %v1971 = vld [vmem:[%s423 + $0x1] sm:$0xff]
        %v1972 = vld [vmem:[%s423 + $0x9] sm:$0xff]
        %v1973 = vld [vmem:[%s423 + $0x19] sm:$0xff]
        %v1974 = vld [vmem:[%s423 + $0x21] sm:$0xff]
        %v1975 = vld [vmem:[%s423 + $0x31] sm:$0xff]
        %v1976 = vld [vmem:[%s423 + $0x39] sm:$0xff]
        %v1977 = vld [vmem:[%s423 + $0x49] sm:$0xff]
        %v1978 = vld [vmem:[%s423 + $0x51] sm:$0xff]
        %v1979 = vld [vmem:[%s423 + $0x1b1] sm:$0xff]
        %v1980 = vld [vmem:[%s423 + $0x1b9] sm:$0xff]
        %v1981 = vld [vmem:[%s423 + $0x1c9] sm:$0xff]
        %v1982 = vld [vmem:[%s423 + $0x1d1] sm:$0xff]
        %v1983 = vld [vmem:[%s423 + $0x1e1] sm:$0xff]
        %v1984 = vld [vmem:[%s423 + $0x1e9] sm:$0xff]
        %v1985 = vld [vmem:[%s423 + $0x1f9] sm:$0xff]
        %v1986 = vld [vmem:[%s423 + $0x201] sm:$0xff]
        %v1987 = vld [vmem:[%s3 + $0x4] sm:$0x1]
        %v1988 = vlaneseq
        %v1989 = vshrl.u32 %v1988, 7
        %v1990 = vsub.s32 0, %v1989
        %v1991 = vrot.slane %v1987, %v1990
        %v1992 = vmul.f32 %v1971, %v1991
        %v1993 = vmul.f32 %v1972, %v1991
        %v1994 = vmul.f32 %v1973, %v1991
        %v1995 = vmul.f32 %v1974, %v1991
        %v1996 = vmul.f32 %v1975, %v1991
        %v1997 = vmul.f32 %v1976, %v1991
        %v1998 = vmul.f32 %v1977, %v1991
        %v1999 = vmul.f32 %v1978, %v1991
        %v2000 = vmul.f32 %v1979, %v1991
        %v2001 = vmul.f32 %v1980, %v1991
        %v2002 = vmul.f32 %v1981, %v1991
        %v2003 = vmul.f32 %v1982, %v1991
        %v2004 = vmul.f32 %v1983, %v1991
        %v2005 = vmul.f32 %v1984, %v1991
        %v2006 = vmul.f32 %v1985, %v1991
        %v2007 = vmul.f32 %v1986, %v1991
        %v2008 = vadd.f32 %v1955, %v1992
        %v2009 = vadd.f32 %v1956, %v1993
        %v2010 = vadd.f32 %v1957, %v1994
        %v2011 = vadd.f32 %v1958, %v1995
        %v2012 = vadd.f32 %v1959, %v1996
        %v2013 = vadd.f32 %v1960, %v1997
        %v2014 = vadd.f32 %v1961, %v1998
        %v2015 = vadd.f32 %v1962, %v1999
        %v2016 = vadd.f32 %v1963, %v2000
        %v2017 = vadd.f32 %v1964, %v2001
        %v2018 = vadd.f32 %v1965, %v2002
        %v2019 = vadd.f32 %v1966, %v2003
        %v2020 = vadd.f32 %v1967, %v2004
        %v2021 = vadd.f32 %v1968, %v2005
        %v2022 = vadd.f32 %v1969, %v2006
        %v2023 = vadd.f32 %v1970, %v2007
        %v2024 = vld [vmem:[%s423 + $0x2] sm:$0xff]
        %v2025 = vld [vmem:[%s423 + $0xa] sm:$0xff]
        %v2026 = vld [vmem:[%s423 + $0x1a] sm:$0xff]
        %v2027 = vld [vmem:[%s423 + $0x22] sm:$0xff]
        %v2028 = vld [vmem:[%s423 + $0x32] sm:$0xff]
        %v2029 = vld [vmem:[%s423 + $0x3a] sm:$0xff]
        %v2030 = vld [vmem:[%s423 + $0x4a] sm:$0xff]
        %v2031 = vld [vmem:[%s423 + $0x52] sm:$0xff]
        %v2032 = vld [vmem:[%s423 + $0x1b2] sm:$0xff]
        %v2033 = vld [vmem:[%s423 + $0x1ba] sm:$0xff]
        %v2034 = vld [vmem:[%s423 + $0x1ca] sm:$0xff]
        %v2035 = vld [vmem:[%s423 + $0x1d2] sm:$0xff]
        %v2036 = vld [vmem:[%s423 + $0x1e2] sm:$0xff]
        %v2037 = vld [vmem:[%s423 + $0x1ea] sm:$0xff]
        %v2038 = vld [vmem:[%s423 + $0x1fa] sm:$0xff]
        %v2039 = vld [vmem:[%s423 + $0x202] sm:$0xff]
        %v2040 = vld [vmem:[%s3 + $0x5] sm:$0x1]
        %v2041 = vlaneseq
        %v2042 = vshrl.u32 %v2041, 7
        %v2043 = vsub.s32 0, %v2042
        %v2044 = vrot.slane %v2040, %v2043
        %v2045 = vmul.f32 %v2024, %v2044
        %v2046 = vmul.f32 %v2025, %v2044
        %v2047 = vmul.f32 %v2026, %v2044
        %v2048 = vmul.f32 %v2027, %v2044
        %v2049 = vmul.f32 %v2028, %v2044
        %v2050 = vmul.f32 %v2029, %v2044
        %v2051 = vmul.f32 %v2030, %v2044
        %v2052 = vmul.f32 %v2031, %v2044
        %v2053 = vmul.f32 %v2032, %v2044
        %v2054 = vmul.f32 %v2033, %v2044
        %v2055 = vmul.f32 %v2034, %v2044
        %v2056 = vmul.f32 %v2035, %v2044
        %v2057 = vmul.f32 %v2036, %v2044
        %v2058 = vmul.f32 %v2037, %v2044
        %v2059 = vmul.f32 %v2038, %v2044
        %v2060 = vmul.f32 %v2039, %v2044
        %v2061 = vadd.f32 %v2008, %v2045
        %v2062 = vadd.f32 %v2009, %v2046
        %v2063 = vadd.f32 %v2010, %v2047
        %v2064 = vadd.f32 %v2011, %v2048
        %v2065 = vadd.f32 %v2012, %v2049
        %v2066 = vadd.f32 %v2013, %v2050
        %v2067 = vadd.f32 %v2014, %v2051
        %v2068 = vadd.f32 %v2015, %v2052
        %v2069 = vadd.f32 %v2016, %v2053
        %v2070 = vadd.f32 %v2017, %v2054
        %v2071 = vadd.f32 %v2018, %v2055
        %v2072 = vadd.f32 %v2019, %v2056
        %v2073 = vadd.f32 %v2020, %v2057
        %v2074 = vadd.f32 %v2021, %v2058
        %v2075 = vadd.f32 %v2022, %v2059
        %v2076 = vadd.f32 %v2023, %v2060
        %s2077 = scalar_lea.vmem [#allocation2], 48
        %v2078 = vld [vmem:[%s2077] sm:$0xff]
        %v2079 = vld [vmem:[%s2077 + $0x8] sm:$0xff]
        %v2080 = vld [vmem:[%s2077 + $0x18] sm:$0xff]
        %v2081 = vld [vmem:[%s2077 + $0x20] sm:$0xff]
        %v2082 = vld [vmem:[%s2077 + $0x30] sm:$0xff]
        %v2083 = vld [vmem:[%s2077 + $0x38] sm:$0xff]
        %v2084 = vld [vmem:[%s2077 + $0x48] sm:$0xff]
        %v2085 = vld [vmem:[%s2077 + $0x50] sm:$0xff]
        %v2086 = vld [vmem:[%s2077 + $0x1b0] sm:$0xff]
        %v2087 = vld [vmem:[%s2077 + $0x1b8] sm:$0xff]
        %v2088 = vld [vmem:[%s2077 + $0x1c8] sm:$0xff]
        %v2089 = vld [vmem:[%s2077 + $0x1d0] sm:$0xff]
        %v2090 = vld [vmem:[%s2077 + $0x1e0] sm:$0xff]
        %v2091 = vld [vmem:[%s2077 + $0x1e8] sm:$0xff]
        %v2092 = vld [vmem:[%s2077 + $0x1f8] sm:$0xff]
        %v2093 = vld [vmem:[%s2077 + $0x200] sm:$0xff]
        %v2094 = vld [vmem:[%s3 + $0x6] sm:$0x1]
        %v2095 = vlaneseq
        %v2096 = vshrl.u32 %v2095, 7
        %v2097 = vsub.s32 0, %v2096
        %v2098 = vrot.slane %v2094, %v2097
        %v2099 = vmul.f32 %v2078, %v2098
        %v2100 = vmul.f32 %v2079, %v2098
        %v2101 = vmul.f32 %v2080, %v2098
        %v2102 = vmul.f32 %v2081, %v2098
        %v2103 = vmul.f32 %v2082, %v2098
        %v2104 = vmul.f32 %v2083, %v2098
        %v2105 = vmul.f32 %v2084, %v2098
        %v2106 = vmul.f32 %v2085, %v2098
        %v2107 = vmul.f32 %v2086, %v2098
        %v2108 = vmul.f32 %v2087, %v2098
        %v2109 = vmul.f32 %v2088, %v2098
        %v2110 = vmul.f32 %v2089, %v2098
        %v2111 = vmul.f32 %v2090, %v2098
        %v2112 = vmul.f32 %v2091, %v2098
        %v2113 = vmul.f32 %v2092, %v2098
        %v2114 = vmul.f32 %v2093, %v2098
        %v2115 = vadd.f32 %v2061, %v2099
        %v2116 = vadd.f32 %v2062, %v2100
        %v2117 = vadd.f32 %v2063, %v2101
        %v2118 = vadd.f32 %v2064, %v2102
        %v2119 = vadd.f32 %v2065, %v2103
        %v2120 = vadd.f32 %v2066, %v2104
        %v2121 = vadd.f32 %v2067, %v2105
        %v2122 = vadd.f32 %v2068, %v2106
        %v2123 = vadd.f32 %v2069, %v2107
        %v2124 = vadd.f32 %v2070, %v2108
        %v2125 = vadd.f32 %v2071, %v2109
        %v2126 = vadd.f32 %v2072, %v2110
        %v2127 = vadd.f32 %v2073, %v2111
        %v2128 = vadd.f32 %v2074, %v2112
        %v2129 = vadd.f32 %v2075, %v2113
        %v2130 = vadd.f32 %v2076, %v2114
        %v2131 = vld [vmem:[%s2077 + $0x1] sm:$0xff]
        %v2132 = vld [vmem:[%s2077 + $0x9] sm:$0xff]
        %v2133 = vld [vmem:[%s2077 + $0x19] sm:$0xff]
        %v2134 = vld [vmem:[%s2077 + $0x21] sm:$0xff]
        %v2135 = vld [vmem:[%s2077 + $0x31] sm:$0xff]
        %v2136 = vld [vmem:[%s2077 + $0x39] sm:$0xff]
        %v2137 = vld [vmem:[%s2077 + $0x49] sm:$0xff]
        %v2138 = vld [vmem:[%s2077 + $0x51] sm:$0xff]
        %v2139 = vld [vmem:[%s2077 + $0x1b1] sm:$0xff]
        %v2140 = vld [vmem:[%s2077 + $0x1b9] sm:$0xff]
        %v2141 = vld [vmem:[%s2077 + $0x1c9] sm:$0xff]
        %v2142 = vld [vmem:[%s2077 + $0x1d1] sm:$0xff]
        %v2143 = vld [vmem:[%s2077 + $0x1e1] sm:$0xff]
        %v2144 = vld [vmem:[%s2077 + $0x1e9] sm:$0xff]
        %v2145 = vld [vmem:[%s2077 + $0x1f9] sm:$0xff]
        %v2146 = vld [vmem:[%s2077 + $0x201] sm:$0xff]
        %v2147 = vld [vmem:[%s3 + $0x7] sm:$0x1]
        %v2148 = vlaneseq
        %v2149 = vshrl.u32 %v2148, 7
        %v2150 = vsub.s32 0, %v2149
        %v2151 = vrot.slane %v2147, %v2150
        %v2152 = vmul.f32 %v2131, %v2151
        %v2153 = vmul.f32 %v2132, %v2151
        %v2154 = vmul.f32 %v2133, %v2151
        %v2155 = vmul.f32 %v2134, %v2151
        %v2156 = vmul.f32 %v2135, %v2151
        %v2157 = vmul.f32 %v2136, %v2151
        %v2158 = vmul.f32 %v2137, %v2151
        %v2159 = vmul.f32 %v2138, %v2151
        %v2160 = vmul.f32 %v2139, %v2151
        %v2161 = vmul.f32 %v2140, %v2151
        %v2162 = vmul.f32 %v2141, %v2151
        %v2163 = vmul.f32 %v2142, %v2151
        %v2164 = vmul.f32 %v2143, %v2151
        %v2165 = vmul.f32 %v2144, %v2151
        %v2166 = vmul.f32 %v2145, %v2151
        %v2167 = vmul.f32 %v2146, %v2151
        %v2168 = vadd.f32 %v2115, %v2152
        %v2169 = vadd.f32 %v2116, %v2153
        %v2170 = vadd.f32 %v2117, %v2154
        %v2171 = vadd.f32 %v2118, %v2155
        %v2172 = vadd.f32 %v2119, %v2156
        %v2173 = vadd.f32 %v2120, %v2157
        %v2174 = vadd.f32 %v2121, %v2158
        %v2175 = vadd.f32 %v2122, %v2159
        %v2176 = vadd.f32 %v2123, %v2160
        %v2177 = vadd.f32 %v2124, %v2161
        %v2178 = vadd.f32 %v2125, %v2162
        %v2179 = vadd.f32 %v2126, %v2163
        %v2180 = vadd.f32 %v2127, %v2164
        %v2181 = vadd.f32 %v2128, %v2165
        %v2182 = vadd.f32 %v2129, %v2166
        %v2183 = vadd.f32 %v2130, %v2167
        %v2184 = vld [vmem:[%s2077 + $0x2] sm:$0xff]
        %v2185 = vld [vmem:[%s2077 + $0xa] sm:$0xff]
        %v2186 = vld [vmem:[%s2077 + $0x1a] sm:$0xff]
        %v2187 = vld [vmem:[%s2077 + $0x22] sm:$0xff]
        %v2188 = vld [vmem:[%s2077 + $0x32] sm:$0xff]
        %v2189 = vld [vmem:[%s2077 + $0x3a] sm:$0xff]
        %v2190 = vld [vmem:[%s2077 + $0x4a] sm:$0xff]
        %v2191 = vld [vmem:[%s2077 + $0x52] sm:$0xff]
        %v2192 = vld [vmem:[%s2077 + $0x1b2] sm:$0xff]
        %v2193 = vld [vmem:[%s2077 + $0x1ba] sm:$0xff]
        %v2194 = vld [vmem:[%s2077 + $0x1ca] sm:$0xff]
        %v2195 = vld [vmem:[%s2077 + $0x1d2] sm:$0xff]
        %v2196 = vld [vmem:[%s2077 + $0x1e2] sm:$0xff]
        %v2197 = vld [vmem:[%s2077 + $0x1ea] sm:$0xff]
        %v2198 = vld [vmem:[%s2077 + $0x1fa] sm:$0xff]
        %v2199 = vld [vmem:[%s2077 + $0x202] sm:$0xff]
        %v2200 = vld [vmem:[%s3 + $0x8] sm:$0x1]
        %v2201 = vlaneseq
        %v2202 = vshrl.u32 %v2201, 7
        %v2203 = vsub.s32 0, %v2202
        %v2204 = vrot.slane %v2200, %v2203
        %v2205 = vmul.f32 %v2184, %v2204
        %v2206 = vmul.f32 %v2185, %v2204
        %v2207 = vmul.f32 %v2186, %v2204
        %v2208 = vmul.f32 %v2187, %v2204
        %v2209 = vmul.f32 %v2188, %v2204
        %v2210 = vmul.f32 %v2189, %v2204
        %v2211 = vmul.f32 %v2190, %v2204
        %v2212 = vmul.f32 %v2191, %v2204
        %v2213 = vmul.f32 %v2192, %v2204
        %v2214 = vmul.f32 %v2193, %v2204
        %v2215 = vmul.f32 %v2194, %v2204
        %v2216 = vmul.f32 %v2195, %v2204
        %v2217 = vmul.f32 %v2196, %v2204
        %v2218 = vmul.f32 %v2197, %v2204
        %v2219 = vmul.f32 %v2198, %v2204
        %v2220 = vmul.f32 %v2199, %v2204
        %v2221 = vadd.f32 %v2168, %v2205
        %v2222 = vadd.f32 %v2169, %v2206
        %v2223 = vadd.f32 %v2170, %v2207
        %v2224 = vadd.f32 %v2171, %v2208
        %v2225 = vadd.f32 %v2172, %v2209
        %v2226 = vadd.f32 %v2173, %v2210
        %v2227 = vadd.f32 %v2174, %v2211
        %v2228 = vadd.f32 %v2175, %v2212
        %v2229 = vadd.f32 %v2176, %v2213
        %v2230 = vadd.f32 %v2177, %v2214
        %v2231 = vadd.f32 %v2178, %v2215
        %v2232 = vadd.f32 %v2179, %v2216
        %v2233 = vadd.f32 %v2180, %v2217
        %v2234 = vadd.f32 %v2181, %v2218
        %v2235 = vadd.f32 %v2182, %v2219
        %v2236 = vadd.f32 %v2183, %v2220
        %2237 = vst.msk [vmem:[#allocation3] sm:$0xff] %vm408, %v2221
        %2238 = vst.msk [vmem:[#allocation3 + $0x8] sm:$0xff] %vm408, %v2222
        %2239 = vst.msk [vmem:[#allocation3 + $0x10] sm:$0xff] %vm408, %v2223
        %2240 = vst.msk [vmem:[#allocation3 + $0x18] sm:$0xff] %vm408, %v2224
        %2241 = vst.msk [vmem:[#allocation3 + $0x20] sm:$0xff] %vm408, %v2225
        %2242 = vst.msk [vmem:[#allocation3 + $0x28] sm:$0xff] %vm408, %v2226
        %2243 = vst.msk [vmem:[#allocation3 + $0x30] sm:$0xff] %vm408, %v2227
        %2244 = vst.msk [vmem:[#allocation3 + $0x38] sm:$0xff] %vm408, %v2228
        %2245 = vst.msk [vmem:[#allocation3 + $0x100] sm:$0xff] %vm408, %v2229
        %2246 = vst.msk [vmem:[#allocation3 + $0x108] sm:$0xff] %vm408, %v2230
        %2247 = vst.msk [vmem:[#allocation3 + $0x110] sm:$0xff] %vm408, %v2231
        %2248 = vst.msk [vmem:[#allocation3 + $0x118] sm:$0xff] %vm408, %v2232
        %2249 = vst.msk [vmem:[#allocation3 + $0x120] sm:$0xff] %vm408, %v2233
        %2250 = vst.msk [vmem:[#allocation3 + $0x128] sm:$0xff] %vm408, %v2234
        %2251 = vst.msk [vmem:[#allocation3 + $0x130] sm:$0xff] %vm408, %v2235
        %2252 = vst.msk [vmem:[#allocation3 + $0x138] sm:$0xff] %vm408, %v2236
        %v2253 = vsel %vm408, %v2221, 0.0
        %v2254 = vsel %vm408, %v2223, 0.0
        %v2255 = vadd.f32 %v2253, %v2254
        %v2256 = vsel %vm408, %v2225, 0.0
        %v2257 = vadd.f32 %v2255, %v2256
        %v2258 = vsel %vm408, %v2227, 0.0
        %v2259 = vadd.f32 %v2257, %v2258
        %v2260 = vsel %vm408, %v2222, 0.0
        %v2261 = vsel %vm408, %v2224, 0.0
        %v2262 = vadd.f32 %v2260, %v2261
        %v2263 = vsel %vm408, %v2226, 0.0
        %v2264 = vadd.f32 %v2262, %v2263
        %v2265 = vsel %vm408, %v2228, 0.0
        %v2266 = vadd.f32 %v2264, %v2265
        %v2267 = vsel %vm408, %v2229, 0.0
        %v2268 = vsel %vm408, %v2231, 0.0
        %v2269 = vadd.f32 %v2267, %v2268
        %v2270 = vsel %vm408, %v2233, 0.0
        %v2271 = vadd.f32 %v2269, %v2270
        %v2272 = vsel %vm408, %v2235, 0.0
        %v2273 = vadd.f32 %v2271, %v2272
        %v2274 = vsel %vm408, %v2230, 0.0
        %v2275 = vsel %vm408, %v2232, 0.0
        %v2276 = vadd.f32 %v2274, %v2275
        %v2277 = vsel %vm408, %v2234, 0.0
        %v2278 = vadd.f32 %v2276, %v2277
        %v2279 = vsel %vm408, %v2236, 0.0
        %v2280 = vadd.f32 %v2278, %v2279
        %v2281 = vsel %vm408, %v2259, 0.0
        %v2282 = vsel %vm408, %v2266, 0.0
        %v2283 = vadd.f32 %v2281, %v2282
        %v2284 = vrot.slane %v2283, 4
        %v2285 = vadd.f32 %v2283, %v2284
        %v2286 = vrot.slane %v2285, 2
        %v2287 = vadd.f32 %v2285, %v2286
        %v2288 = vrot.slane %v2287, 1
        %v2289 = vadd.f32 %v2287, %v2288
        %v2290 = vsel %vm408, %v2273, 0.0
        %v2291 = vsel %vm408, %v2280, 0.0
        %v2292 = vadd.f32 %v2290, %v2291
        %v2293 = vrot.slane %v2292, 4
        %v2294 = vadd.f32 %v2292, %v2293
        %v2295 = vrot.slane %v2294, 2
        %v2296 = vadd.f32 %v2294, %v2295
        %v2297 = vrot.slane %v2296, 1
        %v2298 = vadd.f32 %v2296, %v2297
        %v2299 = vadd.f32 %v2289, 0.0
        %v2300 = vadd.f32 %v2298, 0.0
        %v2301 = vld [vmem:[%s4] sm:$0x1]
        %v2303 = vlaneseq
        %v2304 = vshrl.u32 %v2303, 7
        %v2305 = vsub.s32 0, %v2304
        %v2306 = vrot.slane %v2301, %v2305
        %s2308 = scalar_lea.vmem [#allocation2], 96
        %v2309 = vld [vmem:[%s2308] sm:$0xff]
        %v2310 = vld [vmem:[%s2308 + $0x8] sm:$0xff]
        %v2311 = vld [vmem:[%s2308 + $0x18] sm:$0xff]
        %v2312 = vld [vmem:[%s2308 + $0x20] sm:$0xff]
        %v2313 = vld [vmem:[%s2308 + $0x30] sm:$0xff]
        %v2314 = vld [vmem:[%s2308 + $0x38] sm:$0xff]
        %v2315 = vld [vmem:[%s2308 + $0x48] sm:$0xff]
        %v2316 = vld [vmem:[%s2308 + $0x50] sm:$0xff]
        %v2317 = vld [vmem:[%s2308 + $0x1b0] sm:$0xff]
        %v2318 = vld [vmem:[%s2308 + $0x1b8] sm:$0xff]
        %v2319 = vld [vmem:[%s2308 + $0x1c8] sm:$0xff]
        %v2320 = vld [vmem:[%s2308 + $0x1d0] sm:$0xff]
        %v2321 = vld [vmem:[%s2308 + $0x1e0] sm:$0xff]
        %v2322 = vld [vmem:[%s2308 + $0x1e8] sm:$0xff]
        %v2323 = vld [vmem:[%s2308 + $0x1f8] sm:$0xff]
        %v2324 = vld [vmem:[%s2308 + $0x200] sm:$0xff]
        %v2325 = vld [vmem:[%s3] sm:$0x1]
        %v2326 = vlaneseq
        %v2327 = vshrl.u32 %v2326, 7
        %v2328 = vsub.s32 0, %v2327
        %v2329 = vrot.slane %v2325, %v2328
        %v2330 = vmul.f32 %v2309, %v2329
        %v2331 = vmul.f32 %v2310, %v2329
        %v2332 = vmul.f32 %v2311, %v2329
        %v2333 = vmul.f32 %v2312, %v2329
        %v2334 = vmul.f32 %v2313, %v2329
        %v2335 = vmul.f32 %v2314, %v2329
        %v2336 = vmul.f32 %v2315, %v2329
        %v2337 = vmul.f32 %v2316, %v2329
        %v2338 = vmul.f32 %v2317, %v2329
        %v2339 = vmul.f32 %v2318, %v2329
        %v2340 = vmul.f32 %v2319, %v2329
        %v2341 = vmul.f32 %v2320, %v2329
        %v2342 = vmul.f32 %v2321, %v2329
        %v2343 = vmul.f32 %v2322, %v2329
        %v2344 = vmul.f32 %v2323, %v2329
        %v2345 = vmul.f32 %v2324, %v2329
        %v2346 = vadd.f32 %v2306, %v2330
        %v2347 = vadd.f32 %v2306, %v2331
        %v2348 = vadd.f32 %v2306, %v2332
        %v2349 = vadd.f32 %v2306, %v2333
        %v2350 = vadd.f32 %v2306, %v2334
        %v2351 = vadd.f32 %v2306, %v2335
        %v2352 = vadd.f32 %v2306, %v2336
        %v2353 = vadd.f32 %v2306, %v2337
        %v2354 = vadd.f32 %v2306, %v2338
        %v2355 = vadd.f32 %v2306, %v2339
        %v2356 = vadd.f32 %v2306, %v2340
        %v2357 = vadd.f32 %v2306, %v2341
        %v2358 = vadd.f32 %v2306, %v2342
        %v2359 = vadd.f32 %v2306, %v2343
        %v2360 = vadd.f32 %v2306, %v2344
        %v2361 = vadd.f32 %v2306, %v2345
        %v2362 = vld [vmem:[%s2308 + $0x1] sm:$0xff]
        %v2363 = vld [vmem:[%s2308 + $0x9] sm:$0xff]
        %v2364 = vld [vmem:[%s2308 + $0x19] sm:$0xff]
        %v2365 = vld [vmem:[%s2308 + $0x21] sm:$0xff]
        %v2366 = vld [vmem:[%s2308 + $0x31] sm:$0xff]
        %v2367 = vld [vmem:[%s2308 + $0x39] sm:$0xff]
        %v2368 = vld [vmem:[%s2308 + $0x49] sm:$0xff]
        %v2369 = vld [vmem:[%s2308 + $0x51] sm:$0xff]
        %v2370 = vld [vmem:[%s2308 + $0x1b1] sm:$0xff]
        %v2371 = vld [vmem:[%s2308 + $0x1b9] sm:$0xff]
        %v2372 = vld [vmem:[%s2308 + $0x1c9] sm:$0xff]
        %v2373 = vld [vmem:[%s2308 + $0x1d1] sm:$0xff]
        %v2374 = vld [vmem:[%s2308 + $0x1e1] sm:$0xff]
        %v2375 = vld [vmem:[%s2308 + $0x1e9] sm:$0xff]
        %v2376 = vld [vmem:[%s2308 + $0x1f9] sm:$0xff]
        %v2377 = vld [vmem:[%s2308 + $0x201] sm:$0xff]
        %v2378 = vld [vmem:[%s3 + $0x1] sm:$0x1]
        %v2379 = vlaneseq
        %v2380 = vshrl.u32 %v2379, 7
        %v2381 = vsub.s32 0, %v2380
        %v2382 = vrot.slane %v2378, %v2381
        %v2383 = vmul.f32 %v2362, %v2382
        %v2384 = vmul.f32 %v2363, %v2382
        %v2385 = vmul.f32 %v2364, %v2382
        %v2386 = vmul.f32 %v2365, %v2382
        %v2387 = vmul.f32 %v2366, %v2382
        %v2388 = vmul.f32 %v2367, %v2382
        %v2389 = vmul.f32 %v2368, %v2382
        %v2390 = vmul.f32 %v2369, %v2382
        %v2391 = vmul.f32 %v2370, %v2382
        %v2392 = vmul.f32 %v2371, %v2382
        %v2393 = vmul.f32 %v2372, %v2382
        %v2394 = vmul.f32 %v2373, %v2382
        %v2395 = vmul.f32 %v2374, %v2382
        %v2396 = vmul.f32 %v2375, %v2382
        %v2397 = vmul.f32 %v2376, %v2382
        %v2398 = vmul.f32 %v2377, %v2382
        %v2399 = vadd.f32 %v2346, %v2383
        %v2400 = vadd.f32 %v2347, %v2384
        %v2401 = vadd.f32 %v2348, %v2385
        %v2402 = vadd.f32 %v2349, %v2386
        %v2403 = vadd.f32 %v2350, %v2387
        %v2404 = vadd.f32 %v2351, %v2388
        %v2405 = vadd.f32 %v2352, %v2389
        %v2406 = vadd.f32 %v2353, %v2390
        %v2407 = vadd.f32 %v2354, %v2391
        %v2408 = vadd.f32 %v2355, %v2392
        %v2409 = vadd.f32 %v2356, %v2393
        %v2410 = vadd.f32 %v2357, %v2394
        %v2411 = vadd.f32 %v2358, %v2395
        %v2412 = vadd.f32 %v2359, %v2396
        %v2413 = vadd.f32 %v2360, %v2397
        %v2414 = vadd.f32 %v2361, %v2398
        %v2415 = vld [vmem:[%s2308 + $0x2] sm:$0xff]
        %v2416 = vld [vmem:[%s2308 + $0xa] sm:$0xff]
        %v2417 = vld [vmem:[%s2308 + $0x1a] sm:$0xff]
        %v2418 = vld [vmem:[%s2308 + $0x22] sm:$0xff]
        %v2419 = vld [vmem:[%s2308 + $0x32] sm:$0xff]
        %v2420 = vld [vmem:[%s2308 + $0x3a] sm:$0xff]
        %v2421 = vld [vmem:[%s2308 + $0x4a] sm:$0xff]
        %v2422 = vld [vmem:[%s2308 + $0x52] sm:$0xff]
        %v2423 = vld [vmem:[%s2308 + $0x1b2] sm:$0xff]
        %v2424 = vld [vmem:[%s2308 + $0x1ba] sm:$0xff]
        %v2425 = vld [vmem:[%s2308 + $0x1ca] sm:$0xff]
        %v2426 = vld [vmem:[%s2308 + $0x1d2] sm:$0xff]
        %v2427 = vld [vmem:[%s2308 + $0x1e2] sm:$0xff]
        %v2428 = vld [vmem:[%s2308 + $0x1ea] sm:$0xff]
        %v2429 = vld [vmem:[%s2308 + $0x1fa] sm:$0xff]
        %v2430 = vld [vmem:[%s2308 + $0x202] sm:$0xff]
        %v2431 = vld [vmem:[%s3 + $0x2] sm:$0x1]
        %v2432 = vlaneseq
        %v2433 = vshrl.u32 %v2432, 7
        %v2434 = vsub.s32 0, %v2433
        %v2435 = vrot.slane %v2431, %v2434
        %v2436 = vmul.f32 %v2415, %v2435
        %v2437 = vmul.f32 %v2416, %v2435
        %v2438 = vmul.f32 %v2417, %v2435
        %v2439 = vmul.f32 %v2418, %v2435
        %v2440 = vmul.f32 %v2419, %v2435
        %v2441 = vmul.f32 %v2420, %v2435
        %v2442 = vmul.f32 %v2421, %v2435
        %v2443 = vmul.f32 %v2422, %v2435
        %v2444 = vmul.f32 %v2423, %v2435
        %v2445 = vmul.f32 %v2424, %v2435
        %v2446 = vmul.f32 %v2425, %v2435
        %v2447 = vmul.f32 %v2426, %v2435
        %v2448 = vmul.f32 %v2427, %v2435
        %v2449 = vmul.f32 %v2428, %v2435
        %v2450 = vmul.f32 %v2429, %v2435
        %v2451 = vmul.f32 %v2430, %v2435
        %v2452 = vadd.f32 %v2399, %v2436
        %v2453 = vadd.f32 %v2400, %v2437
        %v2454 = vadd.f32 %v2401, %v2438
        %v2455 = vadd.f32 %v2402, %v2439
        %v2456 = vadd.f32 %v2403, %v2440
        %v2457 = vadd.f32 %v2404, %v2441
        %v2458 = vadd.f32 %v2405, %v2442
        %v2459 = vadd.f32 %v2406, %v2443
        %v2460 = vadd.f32 %v2407, %v2444
        %v2461 = vadd.f32 %v2408, %v2445
        %v2462 = vadd.f32 %v2409, %v2446
        %v2463 = vadd.f32 %v2410, %v2447
        %v2464 = vadd.f32 %v2411, %v2448
        %v2465 = vadd.f32 %v2412, %v2449
        %v2466 = vadd.f32 %v2413, %v2450
        %v2467 = vadd.f32 %v2414, %v2451
        %v2468 = vld [vmem:[%s1103] sm:$0xff]
        %v2469 = vld [vmem:[%s1103 + $0x8] sm:$0xff]
        %v2470 = vld [vmem:[%s1103 + $0x18] sm:$0xff]
        %v2471 = vld [vmem:[%s1103 + $0x20] sm:$0xff]
        %v2472 = vld [vmem:[%s1103 + $0x30] sm:$0xff]
        %v2473 = vld [vmem:[%s1103 + $0x38] sm:$0xff]
        %v2474 = vld [vmem:[%s1103 + $0x48] sm:$0xff]
        %v2475 = vld [vmem:[%s1103 + $0x50] sm:$0xff]
        %v2476 = vld [vmem:[%s1103 + $0x1b0] sm:$0xff]
        %v2477 = vld [vmem:[%s1103 + $0x1b8] sm:$0xff]
        %v2478 = vld [vmem:[%s1103 + $0x1c8] sm:$0xff]
        %v2479 = vld [vmem:[%s1103 + $0x1d0] sm:$0xff]
        %v2480 = vld [vmem:[%s1103 + $0x1e0] sm:$0xff]
        %v2481 = vld [vmem:[%s1103 + $0x1e8] sm:$0xff]
        %v2482 = vld [vmem:[%s1103 + $0x1f8] sm:$0xff]
        %v2483 = vld [vmem:[%s1103 + $0x200] sm:$0xff]
        %v2484 = vld [vmem:[%s3 + $0x3] sm:$0x1]
        %v2485 = vlaneseq
        %v2486 = vshrl.u32 %v2485, 7
        %v2487 = vsub.s32 0, %v2486
        %v2488 = vrot.slane %v2484, %v2487
        %v2489 = vmul.f32 %v2468, %v2488
        %v2490 = vmul.f32 %v2469, %v2488
        %v2491 = vmul.f32 %v2470, %v2488
        %v2492 = vmul.f32 %v2471, %v2488
        %v2493 = vmul.f32 %v2472, %v2488
        %v2494 = vmul.f32 %v2473, %v2488
        %v2495 = vmul.f32 %v2474, %v2488
        %v2496 = vmul.f32 %v2475, %v2488
        %v2497 = vmul.f32 %v2476, %v2488
        %v2498 = vmul.f32 %v2477, %v2488
        %v2499 = vmul.f32 %v2478, %v2488
        %v2500 = vmul.f32 %v2479, %v2488
        %v2501 = vmul.f32 %v2480, %v2488
        %v2502 = vmul.f32 %v2481, %v2488
        %v2503 = vmul.f32 %v2482, %v2488
        %v2504 = vmul.f32 %v2483, %v2488
        %v2505 = vadd.f32 %v2452, %v2489
        %v2506 = vadd.f32 %v2453, %v2490
        %v2507 = vadd.f32 %v2454, %v2491
        %v2508 = vadd.f32 %v2455, %v2492
        %v2509 = vadd.f32 %v2456, %v2493
        %v2510 = vadd.f32 %v2457, %v2494
        %v2511 = vadd.f32 %v2458, %v2495
        %v2512 = vadd.f32 %v2459, %v2496
        %v2513 = vadd.f32 %v2460, %v2497
        %v2514 = vadd.f32 %v2461, %v2498
        %v2515 = vadd.f32 %v2462, %v2499
        %v2516 = vadd.f32 %v2463, %v2500
        %v2517 = vadd.f32 %v2464, %v2501
        %v2518 = vadd.f32 %v2465, %v2502
        %v2519 = vadd.f32 %v2466, %v2503
        %v2520 = vadd.f32 %v2467, %v2504
        %v2521 = vld [vmem:[%s1103 + $0x1] sm:$0xff]
        %v2522 = vld [vmem:[%s1103 + $0x9] sm:$0xff]
        %v2523 = vld [vmem:[%s1103 + $0x19] sm:$0xff]
        %v2524 = vld [vmem:[%s1103 + $0x21] sm:$0xff]
        %v2525 = vld [vmem:[%s1103 + $0x31] sm:$0xff]
        %v2526 = vld [vmem:[%s1103 + $0x39] sm:$0xff]
        %v2527 = vld [vmem:[%s1103 + $0x49] sm:$0xff]
        %v2528 = vld [vmem:[%s1103 + $0x51] sm:$0xff]
        %v2529 = vld [vmem:[%s1103 + $0x1b1] sm:$0xff]
        %v2530 = vld [vmem:[%s1103 + $0x1b9] sm:$0xff]
        %v2531 = vld [vmem:[%s1103 + $0x1c9] sm:$0xff]
        %v2532 = vld [vmem:[%s1103 + $0x1d1] sm:$0xff]
        %v2533 = vld [vmem:[%s1103 + $0x1e1] sm:$0xff]
        %v2534 = vld [vmem:[%s1103 + $0x1e9] sm:$0xff]
        %v2535 = vld [vmem:[%s1103 + $0x1f9] sm:$0xff]
        %v2536 = vld [vmem:[%s1103 + $0x201] sm:$0xff]
        %v2537 = vld [vmem:[%s3 + $0x4] sm:$0x1]
        %v2538 = vlaneseq
        %v2539 = vshrl.u32 %v2538, 7
        %v2540 = vsub.s32 0, %v2539
        %v2541 = vrot.slane %v2537, %v2540
        %v2542 = vmul.f32 %v2521, %v2541
        %v2543 = vmul.f32 %v2522, %v2541
        %v2544 = vmul.f32 %v2523, %v2541
        %v2545 = vmul.f32 %v2524, %v2541
        %v2546 = vmul.f32 %v2525, %v2541
        %v2547 = vmul.f32 %v2526, %v2541
        %v2548 = vmul.f32 %v2527, %v2541
        %v2549 = vmul.f32 %v2528, %v2541
        %v2550 = vmul.f32 %v2529, %v2541
        %v2551 = vmul.f32 %v2530, %v2541
        %v2552 = vmul.f32 %v2531, %v2541
        %v2553 = vmul.f32 %v2532, %v2541
        %v2554 = vmul.f32 %v2533, %v2541
        %v2555 = vmul.f32 %v2534, %v2541
        %v2556 = vmul.f32 %v2535, %v2541
        %v2557 = vmul.f32 %v2536, %v2541
        %v2558 = vadd.f32 %v2505, %v2542
        %v2559 = vadd.f32 %v2506, %v2543
        %v2560 = vadd.f32 %v2507, %v2544
        %v2561 = vadd.f32 %v2508, %v2545
        %v2562 = vadd.f32 %v2509, %v2546
        %v2563 = vadd.f32 %v2510, %v2547
        %v2564 = vadd.f32 %v2511, %v2548
        %v2565 = vadd.f32 %v2512, %v2549
        %v2566 = vadd.f32 %v2513, %v2550
        %v2567 = vadd.f32 %v2514, %v2551
        %v2568 = vadd.f32 %v2515, %v2552
        %v2569 = vadd.f32 %v2516, %v2553
        %v2570 = vadd.f32 %v2517, %v2554
        %v2571 = vadd.f32 %v2518, %v2555
        %v2572 = vadd.f32 %v2519, %v2556
        %v2573 = vadd.f32 %v2520, %v2557
        %v2574 = vld [vmem:[%s1103 + $0x2] sm:$0xff]
        %v2575 = vld [vmem:[%s1103 + $0xa] sm:$0xff]
        %v2576 = vld [vmem:[%s1103 + $0x1a] sm:$0xff]
        %v2577 = vld [vmem:[%s1103 + $0x22] sm:$0xff]
        %v2578 = vld [vmem:[%s1103 + $0x32] sm:$0xff]
        %v2579 = vld [vmem:[%s1103 + $0x3a] sm:$0xff]
        %v2580 = vld [vmem:[%s1103 + $0x4a] sm:$0xff]
        %v2581 = vld [vmem:[%s1103 + $0x52] sm:$0xff]
        %v2582 = vld [vmem:[%s1103 + $0x1b2] sm:$0xff]
        %v2583 = vld [vmem:[%s1103 + $0x1ba] sm:$0xff]
        %v2584 = vld [vmem:[%s1103 + $0x1ca] sm:$0xff]
        %v2585 = vld [vmem:[%s1103 + $0x1d2] sm:$0xff]
        %v2586 = vld [vmem:[%s1103 + $0x1e2] sm:$0xff]
        %v2587 = vld [vmem:[%s1103 + $0x1ea] sm:$0xff]
        %v2588 = vld [vmem:[%s1103 + $0x1fa] sm:$0xff]
        %v2589 = vld [vmem:[%s1103 + $0x202] sm:$0xff]
        %v2590 = vld [vmem:[%s3 + $0x5] sm:$0x1]
        %v2591 = vlaneseq
        %v2592 = vshrl.u32 %v2591, 7
        %v2593 = vsub.s32 0, %v2592
        %v2594 = vrot.slane %v2590, %v2593
        %v2595 = vmul.f32 %v2574, %v2594
        %v2596 = vmul.f32 %v2575, %v2594
        %v2597 = vmul.f32 %v2576, %v2594
        %v2598 = vmul.f32 %v2577, %v2594
        %v2599 = vmul.f32 %v2578, %v2594
        %v2600 = vmul.f32 %v2579, %v2594
        %v2601 = vmul.f32 %v2580, %v2594
        %v2602 = vmul.f32 %v2581, %v2594
        %v2603 = vmul.f32 %v2582, %v2594
        %v2604 = vmul.f32 %v2583, %v2594
        %v2605 = vmul.f32 %v2584, %v2594
        %v2606 = vmul.f32 %v2585, %v2594
        %v2607 = vmul.f32 %v2586, %v2594
        %v2608 = vmul.f32 %v2587, %v2594
        %v2609 = vmul.f32 %v2588, %v2594
        %v2610 = vmul.f32 %v2589, %v2594
        %v2611 = vadd.f32 %v2558, %v2595
        %v2612 = vadd.f32 %v2559, %v2596
        %v2613 = vadd.f32 %v2560, %v2597
        %v2614 = vadd.f32 %v2561, %v2598
        %v2615 = vadd.f32 %v2562, %v2599
        %v2616 = vadd.f32 %v2563, %v2600
        %v2617 = vadd.f32 %v2564, %v2601
        %v2618 = vadd.f32 %v2565, %v2602
        %v2619 = vadd.f32 %v2566, %v2603
        %v2620 = vadd.f32 %v2567, %v2604
        %v2621 = vadd.f32 %v2568, %v2605
        %v2622 = vadd.f32 %v2569, %v2606
        %v2623 = vadd.f32 %v2570, %v2607
        %v2624 = vadd.f32 %v2571, %v2608
        %v2625 = vadd.f32 %v2572, %v2609
        %v2626 = vadd.f32 %v2573, %v2610
        %s2627 = scalar_lea.vmem [#allocation2], 144
        %v2628 = vld [vmem:[%s2627] sm:$0xff]
        %v2629 = vld [vmem:[%s2627 + $0x8] sm:$0xff]
        %v2630 = vld [vmem:[%s2627 + $0x18] sm:$0xff]
        %v2631 = vld [vmem:[%s2627 + $0x20] sm:$0xff]
        %v2632 = vld [vmem:[%s2627 + $0x30] sm:$0xff]
        %v2633 = vld [vmem:[%s2627 + $0x38] sm:$0xff]
        %v2634 = vld [vmem:[%s2627 + $0x48] sm:$0xff]
        %v2635 = vld [vmem:[%s2627 + $0x50] sm:$0xff]
        %v2636 = vld [vmem:[%s2627 + $0x1b0] sm:$0xff]
        %v2637 = vld [vmem:[%s2627 + $0x1b8] sm:$0xff]
        %v2638 = vld [vmem:[%s2627 + $0x1c8] sm:$0xff]
        %v2639 = vld [vmem:[%s2627 + $0x1d0] sm:$0xff]
        %v2640 = vld [vmem:[%s2627 + $0x1e0] sm:$0xff]
        %v2641 = vld [vmem:[%s2627 + $0x1e8] sm:$0xff]
        %v2642 = vld [vmem:[%s2627 + $0x1f8] sm:$0xff]
        %v2643 = vld [vmem:[%s2627 + $0x200] sm:$0xff]
        %v2644 = vld [vmem:[%s3 + $0x6] sm:$0x1]
        %v2645 = vlaneseq
        %v2646 = vshrl.u32 %v2645, 7
        %v2647 = vsub.s32 0, %v2646
        %v2648 = vrot.slane %v2644, %v2647
        %v2649 = vmul.f32 %v2628, %v2648
        %v2650 = vmul.f32 %v2629, %v2648
        %v2651 = vmul.f32 %v2630, %v2648
        %v2652 = vmul.f32 %v2631, %v2648
        %v2653 = vmul.f32 %v2632, %v2648
        %v2654 = vmul.f32 %v2633, %v2648
        %v2655 = vmul.f32 %v2634, %v2648
        %v2656 = vmul.f32 %v2635, %v2648
        %v2657 = vmul.f32 %v2636, %v2648
        %v2658 = vmul.f32 %v2637, %v2648
        %v2659 = vmul.f32 %v2638, %v2648
        %v2660 = vmul.f32 %v2639, %v2648
        %v2661 = vmul.f32 %v2640, %v2648
        %v2662 = vmul.f32 %v2641, %v2648
        %v2663 = vmul.f32 %v2642, %v2648
        %v2664 = vmul.f32 %v2643, %v2648
        %v2665 = vadd.f32 %v2611, %v2649
        %v2666 = vadd.f32 %v2612, %v2650
        %v2667 = vadd.f32 %v2613, %v2651
        %v2668 = vadd.f32 %v2614, %v2652
        %v2669 = vadd.f32 %v2615, %v2653
        %v2670 = vadd.f32 %v2616, %v2654
        %v2671 = vadd.f32 %v2617, %v2655
        %v2672 = vadd.f32 %v2618, %v2656
        %v2673 = vadd.f32 %v2619, %v2657
        %v2674 = vadd.f32 %v2620, %v2658
        %v2675 = vadd.f32 %v2621, %v2659
        %v2676 = vadd.f32 %v2622, %v2660
        %v2677 = vadd.f32 %v2623, %v2661
        %v2678 = vadd.f32 %v2624, %v2662
        %v2679 = vadd.f32 %v2625, %v2663
        %v2680 = vadd.f32 %v2626, %v2664
        %v2681 = vld [vmem:[%s2627 + $0x1] sm:$0xff]
        %v2682 = vld [vmem:[%s2627 + $0x9] sm:$0xff]
        %v2683 = vld [vmem:[%s2627 + $0x19] sm:$0xff]
        %v2684 = vld [vmem:[%s2627 + $0x21] sm:$0xff]
        %v2685 = vld [vmem:[%s2627 + $0x31] sm:$0xff]
        %v2686 = vld [vmem:[%s2627 + $0x39] sm:$0xff]
        %v2687 = vld [vmem:[%s2627 + $0x49] sm:$0xff]
        %v2688 = vld [vmem:[%s2627 + $0x51] sm:$0xff]
        %v2689 = vld [vmem:[%s2627 + $0x1b1] sm:$0xff]
        %v2690 = vld [vmem:[%s2627 + $0x1b9] sm:$0xff]
        %v2691 = vld [vmem:[%s2627 + $0x1c9] sm:$0xff]
        %v2692 = vld [vmem:[%s2627 + $0x1d1] sm:$0xff]
        %v2693 = vld [vmem:[%s2627 + $0x1e1] sm:$0xff]
        %v2694 = vld [vmem:[%s2627 + $0x1e9] sm:$0xff]
        %v2695 = vld [vmem:[%s2627 + $0x1f9] sm:$0xff]
        %v2696 = vld [vmem:[%s2627 + $0x201] sm:$0xff]
        %v2697 = vld [vmem:[%s3 + $0x7] sm:$0x1]
        %v2698 = vlaneseq
        %v2699 = vshrl.u32 %v2698, 7
        %v2700 = vsub.s32 0, %v2699
        %v2701 = vrot.slane %v2697, %v2700
        %v2702 = vmul.f32 %v2681, %v2701
        %v2703 = vmul.f32 %v2682, %v2701
        %v2704 = vmul.f32 %v2683, %v2701
        %v2705 = vmul.f32 %v2684, %v2701
        %v2706 = vmul.f32 %v2685, %v2701
        %v2707 = vmul.f32 %v2686, %v2701
        %v2708 = vmul.f32 %v2687, %v2701
        %v2709 = vmul.f32 %v2688, %v2701
        %v2710 = vmul.f32 %v2689, %v2701
        %v2711 = vmul.f32 %v2690, %v2701
        %v2712 = vmul.f32 %v2691, %v2701
        %v2713 = vmul.f32 %v2692, %v2701
        %v2714 = vmul.f32 %v2693, %v2701
        %v2715 = vmul.f32 %v2694, %v2701
        %v2716 = vmul.f32 %v2695, %v2701
        %v2717 = vmul.f32 %v2696, %v2701
        %v2718 = vadd.f32 %v2665, %v2702
        %v2719 = vadd.f32 %v2666, %v2703
        %v2720 = vadd.f32 %v2667, %v2704
        %v2721 = vadd.f32 %v2668, %v2705
        %v2722 = vadd.f32 %v2669, %v2706
        %v2723 = vadd.f32 %v2670, %v2707
        %v2724 = vadd.f32 %v2671, %v2708
        %v2725 = vadd.f32 %v2672, %v2709
        %v2726 = vadd.f32 %v2673, %v2710
        %v2727 = vadd.f32 %v2674, %v2711
        %v2728 = vadd.f32 %v2675, %v2712
        %v2729 = vadd.f32 %v2676, %v2713
        %v2730 = vadd.f32 %v2677, %v2714
        %v2731 = vadd.f32 %v2678, %v2715
        %v2732 = vadd.f32 %v2679, %v2716
        %v2733 = vadd.f32 %v2680, %v2717
        %v2734 = vld [vmem:[%s2627 + $0x2] sm:$0xff]
        %v2735 = vld [vmem:[%s2627 + $0xa] sm:$0xff]
        %v2736 = vld [vmem:[%s2627 + $0x1a] sm:$0xff]
        %v2737 = vld [vmem:[%s2627 + $0x22] sm:$0xff]
        %v2738 = vld [vmem:[%s2627 + $0x32] sm:$0xff]
        %v2739 = vld [vmem:[%s2627 + $0x3a] sm:$0xff]
        %v2740 = vld [vmem:[%s2627 + $0x4a] sm:$0xff]
        %v2741 = vld [vmem:[%s2627 + $0x52] sm:$0xff]
        %v2742 = vld [vmem:[%s2627 + $0x1b2] sm:$0xff]
        %v2743 = vld [vmem:[%s2627 + $0x1ba] sm:$0xff]
        %v2744 = vld [vmem:[%s2627 + $0x1ca] sm:$0xff]
        %v2745 = vld [vmem:[%s2627 + $0x1d2] sm:$0xff]
        %v2746 = vld [vmem:[%s2627 + $0x1e2] sm:$0xff]
        %v2747 = vld [vmem:[%s2627 + $0x1ea] sm:$0xff]
        %v2748 = vld [vmem:[%s2627 + $0x1fa] sm:$0xff]
        %v2749 = vld [vmem:[%s2627 + $0x202] sm:$0xff]
        %v2750 = vld [vmem:[%s3 + $0x8] sm:$0x1]
        %v2751 = vlaneseq
        %v2752 = vshrl.u32 %v2751, 7
        %v2753 = vsub.s32 0, %v2752
        %v2754 = vrot.slane %v2750, %v2753
        %v2755 = vmul.f32 %v2734, %v2754
        %v2756 = vmul.f32 %v2735, %v2754
        %v2757 = vmul.f32 %v2736, %v2754
        %v2758 = vmul.f32 %v2737, %v2754
        %v2759 = vmul.f32 %v2738, %v2754
        %v2760 = vmul.f32 %v2739, %v2754
        %v2761 = vmul.f32 %v2740, %v2754
        %v2762 = vmul.f32 %v2741, %v2754
        %v2763 = vmul.f32 %v2742, %v2754
        %v2764 = vmul.f32 %v2743, %v2754
        %v2765 = vmul.f32 %v2744, %v2754
        %v2766 = vmul.f32 %v2745, %v2754
        %v2767 = vmul.f32 %v2746, %v2754
        %v2768 = vmul.f32 %v2747, %v2754
        %v2769 = vmul.f32 %v2748, %v2754
        %v2770 = vmul.f32 %v2749, %v2754
        %v2771 = vadd.f32 %v2718, %v2755
        %v2772 = vadd.f32 %v2719, %v2756
        %v2773 = vadd.f32 %v2720, %v2757
        %v2774 = vadd.f32 %v2721, %v2758
        %v2775 = vadd.f32 %v2722, %v2759
        %v2776 = vadd.f32 %v2723, %v2760
        %v2777 = vadd.f32 %v2724, %v2761
        %v2778 = vadd.f32 %v2725, %v2762
        %v2779 = vadd.f32 %v2726, %v2763
        %v2780 = vadd.f32 %v2727, %v2764
        %v2781 = vadd.f32 %v2728, %v2765
        %v2782 = vadd.f32 %v2729, %v2766
        %v2783 = vadd.f32 %v2730, %v2767
        %v2784 = vadd.f32 %v2731, %v2768
        %v2785 = vadd.f32 %v2732, %v2769
        %v2786 = vadd.f32 %v2733, %v2770
        %s2787 = scalar_lea.vmem [#allocation3], 64
        %2788 = vst.msk [vmem:[%s2787] sm:$0xff] %vm408, %v2771
        %2789 = vst.msk [vmem:[%s2787 + $0x8] sm:$0xff] %vm408, %v2772
        %2790 = vst.msk [vmem:[%s2787 + $0x10] sm:$0xff] %vm408, %v2773
        %2791 = vst.msk [vmem:[%s2787 + $0x18] sm:$0xff] %vm408, %v2774
        %2792 = vst.msk [vmem:[%s2787 + $0x20] sm:$0xff] %vm408, %v2775
        %2793 = vst.msk [vmem:[%s2787 + $0x28] sm:$0xff] %vm408, %v2776
        %2794 = vst.msk [vmem:[%s2787 + $0x30] sm:$0xff] %vm408, %v2777
        %2795 = vst.msk [vmem:[%s2787 + $0x38] sm:$0xff] %vm408, %v2778
        %2796 = vst.msk [vmem:[%s2787 + $0x100] sm:$0xff] %vm408, %v2779
        %2797 = vst.msk [vmem:[%s2787 + $0x108] sm:$0xff] %vm408, %v2780
        %2798 = vst.msk [vmem:[%s2787 + $0x110] sm:$0xff] %vm408, %v2781
        %2799 = vst.msk [vmem:[%s2787 + $0x118] sm:$0xff] %vm408, %v2782
        %2800 = vst.msk [vmem:[%s2787 + $0x120] sm:$0xff] %vm408, %v2783
        %2801 = vst.msk [vmem:[%s2787 + $0x128] sm:$0xff] %vm408, %v2784
        %2802 = vst.msk [vmem:[%s2787 + $0x130] sm:$0xff] %vm408, %v2785
        %2803 = vst.msk [vmem:[%s2787 + $0x138] sm:$0xff] %vm408, %v2786
        %v2804 = vsel %vm408, %v2771, 0.0
        %v2805 = vsel %vm408, %v2773, 0.0
        %v2806 = vadd.f32 %v2804, %v2805
        %v2807 = vsel %vm408, %v2775, 0.0
        %v2808 = vadd.f32 %v2806, %v2807
        %v2809 = vsel %vm408, %v2777, 0.0
        %v2810 = vadd.f32 %v2808, %v2809
        %v2811 = vsel %vm408, %v2772, 0.0
        %v2812 = vsel %vm408, %v2774, 0.0
        %v2813 = vadd.f32 %v2811, %v2812
        %v2814 = vsel %vm408, %v2776, 0.0
        %v2815 = vadd.f32 %v2813, %v2814
        %v2816 = vsel %vm408, %v2778, 0.0
        %v2817 = vadd.f32 %v2815, %v2816
        %v2818 = vsel %vm408, %v2779, 0.0
        %v2819 = vsel %vm408, %v2781, 0.0
        %v2820 = vadd.f32 %v2818, %v2819
        %v2821 = vsel %vm408, %v2783, 0.0
        %v2822 = vadd.f32 %v2820, %v2821
        %v2823 = vsel %vm408, %v2785, 0.0
        %v2824 = vadd.f32 %v2822, %v2823
        %v2825 = vsel %vm408, %v2780, 0.0
        %v2826 = vsel %vm408, %v2782, 0.0
        %v2827 = vadd.f32 %v2825, %v2826
        %v2828 = vsel %vm408, %v2784, 0.0
        %v2829 = vadd.f32 %v2827, %v2828
        %v2830 = vsel %vm408, %v2786, 0.0
        %v2831 = vadd.f32 %v2829, %v2830
        %v2832 = vsel %vm408, %v2810, 0.0
        %v2833 = vsel %vm408, %v2817, 0.0
        %v2834 = vadd.f32 %v2832, %v2833
        %v2835 = vrot.slane %v2834, 4
        %v2836 = vadd.f32 %v2834, %v2835
        %v2837 = vrot.slane %v2836, 2
        %v2838 = vadd.f32 %v2836, %v2837
        %v2839 = vrot.slane %v2838, 1
        %v2840 = vadd.f32 %v2838, %v2839
        %v2841 = vsel %vm408, %v2824, 0.0
        %v2842 = vsel %vm408, %v2831, 0.0
        %v2843 = vadd.f32 %v2841, %v2842
        %v2844 = vrot.slane %v2843, 4
        %v2845 = vadd.f32 %v2843, %v2844
        %v2846 = vrot.slane %v2845, 2
        %v2847 = vadd.f32 %v2845, %v2846
        %v2848 = vrot.slane %v2847, 1
        %v2849 = vadd.f32 %v2847, %v2848
        %v2850 = vadd.f32 %v2299, %v2840
        %v2851 = vadd.f32 %v2300, %v2849
        %v2852 = vld [vmem:[%s4] sm:$0x1]
        %v2854 = vlaneseq
        %v2855 = vshrl.u32 %v2854, 7
        %v2856 = vsub.s32 0, %v2855
        %v2857 = vrot.slane %v2852, %v2856
        %s2859 = scalar_lea.vmem [#allocation2], 192
        %v2860 = vld [vmem:[%s2859] sm:$0xff]
        %v2861 = vld [vmem:[%s2859 + $0x8] sm:$0xff]
        %v2862 = vld [vmem:[%s2859 + $0x18] sm:$0xff]
        %v2863 = vld [vmem:[%s2859 + $0x20] sm:$0xff]
        %v2864 = vld [vmem:[%s2859 + $0x30] sm:$0xff]
        %v2865 = vld [vmem:[%s2859 + $0x38] sm:$0xff]
        %v2866 = vld [vmem:[%s2859 + $0x48] sm:$0xff]
        %v2867 = vld [vmem:[%s2859 + $0x50] sm:$0xff]
        %v2868 = vld [vmem:[%s2859 + $0x1b0] sm:$0xff]
        %v2869 = vld [vmem:[%s2859 + $0x1b8] sm:$0xff]
        %v2870 = vld [vmem:[%s2859 + $0x1c8] sm:$0xff]
        %v2871 = vld [vmem:[%s2859 + $0x1d0] sm:$0xff]
        %v2872 = vld [vmem:[%s2859 + $0x1e0] sm:$0xff]
        %v2873 = vld [vmem:[%s2859 + $0x1e8] sm:$0xff]
        %v2874 = vld [vmem:[%s2859 + $0x1f8] sm:$0xff]
        %v2875 = vld [vmem:[%s2859 + $0x200] sm:$0xff]
        %v2876 = vld [vmem:[%s3] sm:$0x1]
        %v2877 = vlaneseq
        %v2878 = vshrl.u32 %v2877, 7
        %v2879 = vsub.s32 0, %v2878
        %v2880 = vrot.slane %v2876, %v2879
        %v2881 = vmul.f32 %v2860, %v2880
        %v2882 = vmul.f32 %v2861, %v2880
        %v2883 = vmul.f32 %v2862, %v2880
        %v2884 = vmul.f32 %v2863, %v2880
        %v2885 = vmul.f32 %v2864, %v2880
        %v2886 = vmul.f32 %v2865, %v2880
        %v2887 = vmul.f32 %v2866, %v2880
        %v2888 = vmul.f32 %v2867, %v2880
        %v2889 = vmul.f32 %v2868, %v2880
        %v2890 = vmul.f32 %v2869, %v2880
        %v2891 = vmul.f32 %v2870, %v2880
        %v2892 = vmul.f32 %v2871, %v2880
        %v2893 = vmul.f32 %v2872, %v2880
        %v2894 = vmul.f32 %v2873, %v2880
        %v2895 = vmul.f32 %v2874, %v2880
        %v2896 = vmul.f32 %v2875, %v2880
        %v2897 = vadd.f32 %v2857, %v2881
        %v2898 = vadd.f32 %v2857, %v2882
        %v2899 = vadd.f32 %v2857, %v2883
        %v2900 = vadd.f32 %v2857, %v2884
        %v2901 = vadd.f32 %v2857, %v2885
        %v2902 = vadd.f32 %v2857, %v2886
        %v2903 = vadd.f32 %v2857, %v2887
        %v2904 = vadd.f32 %v2857, %v2888
        %v2905 = vadd.f32 %v2857, %v2889
        %v2906 = vadd.f32 %v2857, %v2890
        %v2907 = vadd.f32 %v2857, %v2891
        %v2908 = vadd.f32 %v2857, %v2892
        %v2909 = vadd.f32 %v2857, %v2893
        %v2910 = vadd.f32 %v2857, %v2894
        %v2911 = vadd.f32 %v2857, %v2895
        %v2912 = vadd.f32 %v2857, %v2896
        %v2913 = vld [vmem:[%s2859 + $0x1] sm:$0xff]
        %v2914 = vld [vmem:[%s2859 + $0x9] sm:$0xff]
        %v2915 = vld [vmem:[%s2859 + $0x19] sm:$0xff]
        %v2916 = vld [vmem:[%s2859 + $0x21] sm:$0xff]
        %v2917 = vld [vmem:[%s2859 + $0x31] sm:$0xff]
        %v2918 = vld [vmem:[%s2859 + $0x39] sm:$0xff]
        %v2919 = vld [vmem:[%s2859 + $0x49] sm:$0xff]
        %v2920 = vld [vmem:[%s2859 + $0x51] sm:$0xff]
        %v2921 = vld [vmem:[%s2859 + $0x1b1] sm:$0xff]
        %v2922 = vld [vmem:[%s2859 + $0x1b9] sm:$0xff]
        %v2923 = vld [vmem:[%s2859 + $0x1c9] sm:$0xff]
        %v2924 = vld [vmem:[%s2859 + $0x1d1] sm:$0xff]
        %v2925 = vld [vmem:[%s2859 + $0x1e1] sm:$0xff]
        %v2926 = vld [vmem:[%s2859 + $0x1e9] sm:$0xff]
        %v2927 = vld [vmem:[%s2859 + $0x1f9] sm:$0xff]
        %v2928 = vld [vmem:[%s2859 + $0x201] sm:$0xff]
        %v2929 = vld [vmem:[%s3 + $0x1] sm:$0x1]
        %v2930 = vlaneseq
        %v2931 = vshrl.u32 %v2930, 7
        %v2932 = vsub.s32 0, %v2931
        %v2933 = vrot.slane %v2929, %v2932
        %v2934 = vmul.f32 %v2913, %v2933
        %v2935 = vmul.f32 %v2914, %v2933
        %v2936 = vmul.f32 %v2915, %v2933
        %v2937 = vmul.f32 %v2916, %v2933
        %v2938 = vmul.f32 %v2917, %v2933
        %v2939 = vmul.f32 %v2918, %v2933
        %v2940 = vmul.f32 %v2919, %v2933
        %v2941 = vmul.f32 %v2920, %v2933
        %v2942 = vmul.f32 %v2921, %v2933
        %v2943 = vmul.f32 %v2922, %v2933
        %v2944 = vmul.f32 %v2923, %v2933
        %v2945 = vmul.f32 %v2924, %v2933
        %v2946 = vmul.f32 %v2925, %v2933
        %v2947 = vmul.f32 %v2926, %v2933
        %v2948 = vmul.f32 %v2927, %v2933
        %v2949 = vmul.f32 %v2928, %v2933
        %v2950 = vadd.f32 %v2897, %v2934
        %v2951 = vadd.f32 %v2898, %v2935
        %v2952 = vadd.f32 %v2899, %v2936
        %v2953 = vadd.f32 %v2900, %v2937
        %v2954 = vadd.f32 %v2901, %v2938
        %v2955 = vadd.f32 %v2902, %v2939
        %v2956 = vadd.f32 %v2903, %v2940
        %v2957 = vadd.f32 %v2904, %v2941
        %v2958 = vadd.f32 %v2905, %v2942
        %v2959 = vadd.f32 %v2906, %v2943
        %v2960 = vadd.f32 %v2907, %v2944
        %v2961 = vadd.f32 %v2908, %v2945
        %v2962 = vadd.f32 %v2909, %v2946
        %v2963 = vadd.f32 %v2910, %v2947
        %v2964 = vadd.f32 %v2911, %v2948
        %v2965 = vadd.f32 %v2912, %v2949
        %v2966 = vld [vmem:[%s2859 + $0x2] sm:$0xff]
        %v2967 = vld [vmem:[%s2859 + $0xa] sm:$0xff]
        %v2968 = vld [vmem:[%s2859 + $0x1a] sm:$0xff]
        %v2969 = vld [vmem:[%s2859 + $0x22] sm:$0xff]
        %v2970 = vld [vmem:[%s2859 + $0x32] sm:$0xff]
        %v2971 = vld [vmem:[%s2859 + $0x3a] sm:$0xff]
        %v2972 = vld [vmem:[%s2859 + $0x4a] sm:$0xff]
        %v2973 = vld [vmem:[%s2859 + $0x52] sm:$0xff]
        %v2974 = vld [vmem:[%s2859 + $0x1b2] sm:$0xff]
        %v2975 = vld [vmem:[%s2859 + $0x1ba] sm:$0xff]
        %v2976 = vld [vmem:[%s2859 + $0x1ca] sm:$0xff]
        %v2977 = vld [vmem:[%s2859 + $0x1d2] sm:$0xff]
        %v2978 = vld [vmem:[%s2859 + $0x1e2] sm:$0xff]
        %v2979 = vld [vmem:[%s2859 + $0x1ea] sm:$0xff]
        %v2980 = vld [vmem:[%s2859 + $0x1fa] sm:$0xff]
        %v2981 = vld [vmem:[%s2859 + $0x202] sm:$0xff]
        %v2982 = vld [vmem:[%s3 + $0x2] sm:$0x1]
        %v2983 = vlaneseq
        %v2984 = vshrl.u32 %v2983, 7
        %v2985 = vsub.s32 0, %v2984
        %v2986 = vrot.slane %v2982, %v2985
        %v2987 = vmul.f32 %v2966, %v2986
        %v2988 = vmul.f32 %v2967, %v2986
        %v2989 = vmul.f32 %v2968, %v2986
        %v2990 = vmul.f32 %v2969, %v2986
        %v2991 = vmul.f32 %v2970, %v2986
        %v2992 = vmul.f32 %v2971, %v2986
        %v2993 = vmul.f32 %v2972, %v2986
        %v2994 = vmul.f32 %v2973, %v2986
        %v2995 = vmul.f32 %v2974, %v2986
        %v2996 = vmul.f32 %v2975, %v2986
        %v2997 = vmul.f32 %v2976, %v2986
        %v2998 = vmul.f32 %v2977, %v2986
        %v2999 = vmul.f32 %v2978, %v2986
        %v3000 = vmul.f32 %v2979, %v2986
        %v3001 = vmul.f32 %v2980, %v2986
        %v3002 = vmul.f32 %v2981, %v2986
        %v3003 = vadd.f32 %v2950, %v2987
        %v3004 = vadd.f32 %v2951, %v2988
        %v3005 = vadd.f32 %v2952, %v2989
        %v3006 = vadd.f32 %v2953, %v2990
        %v3007 = vadd.f32 %v2954, %v2991
        %v3008 = vadd.f32 %v2955, %v2992
        %v3009 = vadd.f32 %v2956, %v2993
        %v3010 = vadd.f32 %v2957, %v2994
        %v3011 = vadd.f32 %v2958, %v2995
        %v3012 = vadd.f32 %v2959, %v2996
        %v3013 = vadd.f32 %v2960, %v2997
        %v3014 = vadd.f32 %v2961, %v2998
        %v3015 = vadd.f32 %v2962, %v2999
        %v3016 = vadd.f32 %v2963, %v3000
        %v3017 = vadd.f32 %v2964, %v3001
        %v3018 = vadd.f32 %v2965, %v3002
        %v3019 = vld [vmem:[%s1419] sm:$0xff]
        %v3020 = vld [vmem:[%s1419 + $0x8] sm:$0xff]
        %v3021 = vld [vmem:[%s1419 + $0x18] sm:$0xff]
        %v3022 = vld [vmem:[%s1419 + $0x20] sm:$0xff]
        %v3023 = vld [vmem:[%s1419 + $0x30] sm:$0xff]
        %v3024 = vld [vmem:[%s1419 + $0x38] sm:$0xff]
        %v3025 = vld [vmem:[%s1419 + $0x48] sm:$0xff]
        %v3026 = vld [vmem:[%s1419 + $0x50] sm:$0xff]
        %v3027 = vld [vmem:[%s1419 + $0x1b0] sm:$0xff]
        %v3028 = vld [vmem:[%s1419 + $0x1b8] sm:$0xff]
        %v3029 = vld [vmem:[%s1419 + $0x1c8] sm:$0xff]
        %v3030 = vld [vmem:[%s1419 + $0x1d0] sm:$0xff]
        %v3031 = vld [vmem:[%s1419 + $0x1e0] sm:$0xff]
        %v3032 = vld [vmem:[%s1419 + $0x1e8] sm:$0xff]
        %v3033 = vld [vmem:[%s1419 + $0x1f8] sm:$0xff]
        %v3034 = vld [vmem:[%s1419 + $0x200] sm:$0xff]
        %v3035 = vld [vmem:[%s3 + $0x3] sm:$0x1]
        %v3036 = vlaneseq
        %v3037 = vshrl.u32 %v3036, 7
        %v3038 = vsub.s32 0, %v3037
        %v3039 = vrot.slane %v3035, %v3038
        %v3040 = vmul.f32 %v3019, %v3039
        %v3041 = vmul.f32 %v3020, %v3039
        %v3042 = vmul.f32 %v3021, %v3039
        %v3043 = vmul.f32 %v3022, %v3039
        %v3044 = vmul.f32 %v3023, %v3039
        %v3045 = vmul.f32 %v3024, %v3039
        %v3046 = vmul.f32 %v3025, %v3039
        %v3047 = vmul.f32 %v3026, %v3039
        %v3048 = vmul.f32 %v3027, %v3039
        %v3049 = vmul.f32 %v3028, %v3039
        %v3050 = vmul.f32 %v3029, %v3039
        %v3051 = vmul.f32 %v3030, %v3039
        %v3052 = vmul.f32 %v3031, %v3039
        %v3053 = vmul.f32 %v3032, %v3039
        %v3054 = vmul.f32 %v3033, %v3039
        %v3055 = vmul.f32 %v3034, %v3039
        %v3056 = vadd.f32 %v3003, %v3040
        %v3057 = vadd.f32 %v3004, %v3041
        %v3058 = vadd.f32 %v3005, %v3042
        %v3059 = vadd.f32 %v3006, %v3043
        %v3060 = vadd.f32 %v3007, %v3044
        %v3061 = vadd.f32 %v3008, %v3045
        %v3062 = vadd.f32 %v3009, %v3046
        %v3063 = vadd.f32 %v3010, %v3047
        %v3064 = vadd.f32 %v3011, %v3048
        %v3065 = vadd.f32 %v3012, %v3049
        %v3066 = vadd.f32 %v3013, %v3050
        %v3067 = vadd.f32 %v3014, %v3051
        %v3068 = vadd.f32 %v3015, %v3052
        %v3069 = vadd.f32 %v3016, %v3053
        %v3070 = vadd.f32 %v3017, %v3054
        %v3071 = vadd.f32 %v3018, %v3055
        %v3072 = vld [vmem:[%s1419 + $0x1] sm:$0xff]
        %v3073 = vld [vmem:[%s1419 + $0x9] sm:$0xff]
        %v3074 = vld [vmem:[%s1419 + $0x19] sm:$0xff]
        %v3075 = vld [vmem:[%s1419 + $0x21] sm:$0xff]
        %v3076 = vld [vmem:[%s1419 + $0x31] sm:$0xff]
        %v3077 = vld [vmem:[%s1419 + $0x39] sm:$0xff]
        %v3078 = vld [vmem:[%s1419 + $0x49] sm:$0xff]
        %v3079 = vld [vmem:[%s1419 + $0x51] sm:$0xff]
        %v3080 = vld [vmem:[%s1419 + $0x1b1] sm:$0xff]
        %v3081 = vld [vmem:[%s1419 + $0x1b9] sm:$0xff]
        %v3082 = vld [vmem:[%s1419 + $0x1c9] sm:$0xff]
        %v3083 = vld [vmem:[%s1419 + $0x1d1] sm:$0xff]
        %v3084 = vld [vmem:[%s1419 + $0x1e1] sm:$0xff]
        %v3085 = vld [vmem:[%s1419 + $0x1e9] sm:$0xff]
        %v3086 = vld [vmem:[%s1419 + $0x1f9] sm:$0xff]
        %v3087 = vld [vmem:[%s1419 + $0x201] sm:$0xff]
        %v3088 = vld [vmem:[%s3 + $0x4] sm:$0x1]
        %v3089 = vlaneseq
        %v3090 = vshrl.u32 %v3089, 7
        %v3091 = vsub.s32 0, %v3090
        %v3092 = vrot.slane %v3088, %v3091
        %v3093 = vmul.f32 %v3072, %v3092
        %v3094 = vmul.f32 %v3073, %v3092
        %v3095 = vmul.f32 %v3074, %v3092
        %v3096 = vmul.f32 %v3075, %v3092
        %v3097 = vmul.f32 %v3076, %v3092
        %v3098 = vmul.f32 %v3077, %v3092
        %v3099 = vmul.f32 %v3078, %v3092
        %v3100 = vmul.f32 %v3079, %v3092
        %v3101 = vmul.f32 %v3080, %v3092
        %v3102 = vmul.f32 %v3081, %v3092
        %v3103 = vmul.f32 %v3082, %v3092
        %v3104 = vmul.f32 %v3083, %v3092
        %v3105 = vmul.f32 %v3084, %v3092
        %v3106 = vmul.f32 %v3085, %v3092
        %v3107 = vmul.f32 %v3086, %v3092
        %v3108 = vmul.f32 %v3087, %v3092
        %v3109 = vadd.f32 %v3056, %v3093
        %v3110 = vadd.f32 %v3057, %v3094
        %v3111 = vadd.f32 %v3058, %v3095
        %v3112 = vadd.f32 %v3059, %v3096
        %v3113 = vadd.f32 %v3060, %v3097
        %v3114 = vadd.f32 %v3061, %v3098
        %v3115 = vadd.f32 %v3062, %v3099
        %v3116 = vadd.f32 %v3063, %v3100
        %v3117 = vadd.f32 %v3064, %v3101
        %v3118 = vadd.f32 %v3065, %v3102
        %v3119 = vadd.f32 %v3066, %v3103
        %v3120 = vadd.f32 %v3067, %v3104
        %v3121 = vadd.f32 %v3068, %v3105
        %v3122 = vadd.f32 %v3069, %v3106
        %v3123 = vadd.f32 %v3070, %v3107
        %v3124 = vadd.f32 %v3071, %v3108
        %v3125 = vld [vmem:[%s1419 + $0x2] sm:$0xff]
        %v3126 = vld [vmem:[%s1419 + $0xa] sm:$0xff]
        %v3127 = vld [vmem:[%s1419 + $0x1a] sm:$0xff]
        %v3128 = vld [vmem:[%s1419 + $0x22] sm:$0xff]
        %v3129 = vld [vmem:[%s1419 + $0x32] sm:$0xff]
        %v3130 = vld [vmem:[%s1419 + $0x3a] sm:$0xff]
        %v3131 = vld [vmem:[%s1419 + $0x4a] sm:$0xff]
        %v3132 = vld [vmem:[%s1419 + $0x52] sm:$0xff]
        %v3133 = vld [vmem:[%s1419 + $0x1b2] sm:$0xff]
        %v3134 = vld [vmem:[%s1419 + $0x1ba] sm:$0xff]
        %v3135 = vld [vmem:[%s1419 + $0x1ca] sm:$0xff]
        %v3136 = vld [vmem:[%s1419 + $0x1d2] sm:$0xff]
        %v3137 = vld [vmem:[%s1419 + $0x1e2] sm:$0xff]
        %v3138 = vld [vmem:[%s1419 + $0x1ea] sm:$0xff]
        %v3139 = vld [vmem:[%s1419 + $0x1fa] sm:$0xff]
        %v3140 = vld [vmem:[%s1419 + $0x202] sm:$0xff]
        %v3141 = vld [vmem:[%s3 + $0x5] sm:$0x1]
        %v3142 = vlaneseq
        %v3143 = vshrl.u32 %v3142, 7
        %v3144 = vsub.s32 0, %v3143
        %v3145 = vrot.slane %v3141, %v3144
        %v3146 = vmul.f32 %v3125, %v3145
        %v3147 = vmul.f32 %v3126, %v3145
        %v3148 = vmul.f32 %v3127, %v3145
        %v3149 = vmul.f32 %v3128, %v3145
        %v3150 = vmul.f32 %v3129, %v3145
        %v3151 = vmul.f32 %v3130, %v3145
        %v3152 = vmul.f32 %v3131, %v3145
        %v3153 = vmul.f32 %v3132, %v3145
        %v3154 = vmul.f32 %v3133, %v3145
        %v3155 = vmul.f32 %v3134, %v3145
        %v3156 = vmul.f32 %v3135, %v3145
        %v3157 = vmul.f32 %v3136, %v3145
        %v3158 = vmul.f32 %v3137, %v3145
        %v3159 = vmul.f32 %v3138, %v3145
        %v3160 = vmul.f32 %v3139, %v3145
        %v3161 = vmul.f32 %v3140, %v3145
        %v3162 = vadd.f32 %v3109, %v3146
        %v3163 = vadd.f32 %v3110, %v3147
        %v3164 = vadd.f32 %v3111, %v3148
        %v3165 = vadd.f32 %v3112, %v3149
        %v3166 = vadd.f32 %v3113, %v3150
        %v3167 = vadd.f32 %v3114, %v3151
        %v3168 = vadd.f32 %v3115, %v3152
        %v3169 = vadd.f32 %v3116, %v3153
        %v3170 = vadd.f32 %v3117, %v3154
        %v3171 = vadd.f32 %v3118, %v3155
        %v3172 = vadd.f32 %v3119, %v3156
        %v3173 = vadd.f32 %v3120, %v3157
        %v3174 = vadd.f32 %v3121, %v3158
        %v3175 = vadd.f32 %v3122, %v3159
        %v3176 = vadd.f32 %v3123, %v3160
        %v3177 = vadd.f32 %v3124, %v3161
        %s3178 = scalar_lea.vmem [#allocation2], 240
        %v3179 = vld [vmem:[%s3178] sm:$0xff]
        %v3180 = vld [vmem:[%s3178 + $0x8] sm:$0xff]
        %v3181 = vld [vmem:[%s3178 + $0x18] sm:$0xff]
        %v3182 = vld [vmem:[%s3178 + $0x20] sm:$0xff]
        %v3183 = vld [vmem:[%s3178 + $0x30] sm:$0xff]
        %v3184 = vld [vmem:[%s3178 + $0x38] sm:$0xff]
        %v3185 = vld [vmem:[%s3178 + $0x48] sm:$0xff]
        %v3186 = vld [vmem:[%s3178 + $0x50] sm:$0xff]
        %v3187 = vld [vmem:[%s3178 + $0x1b0] sm:$0xff]
        %v3188 = vld [vmem:[%s3178 + $0x1b8] sm:$0xff]
        %v3189 = vld [vmem:[%s3178 + $0x1c8] sm:$0xff]
        %v3190 = vld [vmem:[%s3178 + $0x1d0] sm:$0xff]
        %v3191 = vld [vmem:[%s3178 + $0x1e0] sm:$0xff]
        %v3192 = vld [vmem:[%s3178 + $0x1e8] sm:$0xff]
        %v3193 = vld [vmem:[%s3178 + $0x1f8] sm:$0xff]
        %v3194 = vld [vmem:[%s3178 + $0x200] sm:$0xff]
        %v3195 = vld [vmem:[%s3 + $0x6] sm:$0x1]
        %v3196 = vlaneseq
        %v3197 = vshrl.u32 %v3196, 7
        %v3198 = vsub.s32 0, %v3197
        %v3199 = vrot.slane %v3195, %v3198
        %v3200 = vmul.f32 %v3179, %v3199
        %v3201 = vmul.f32 %v3180, %v3199
        %v3202 = vmul.f32 %v3181, %v3199
        %v3203 = vmul.f32 %v3182, %v3199
        %v3204 = vmul.f32 %v3183, %v3199
        %v3205 = vmul.f32 %v3184, %v3199
        %v3206 = vmul.f32 %v3185, %v3199
        %v3207 = vmul.f32 %v3186, %v3199
        %v3208 = vmul.f32 %v3187, %v3199
        %v3209 = vmul.f32 %v3188, %v3199
        %v3210 = vmul.f32 %v3189, %v3199
        %v3211 = vmul.f32 %v3190, %v3199
        %v3212 = vmul.f32 %v3191, %v3199
        %v3213 = vmul.f32 %v3192, %v3199
        %v3214 = vmul.f32 %v3193, %v3199
        %v3215 = vmul.f32 %v3194, %v3199
        %v3216 = vadd.f32 %v3162, %v3200
        %v3217 = vadd.f32 %v3163, %v3201
        %v3218 = vadd.f32 %v3164, %v3202
        %v3219 = vadd.f32 %v3165, %v3203
        %v3220 = vadd.f32 %v3166, %v3204
        %v3221 = vadd.f32 %v3167, %v3205
        %v3222 = vadd.f32 %v3168, %v3206
        %v3223 = vadd.f32 %v3169, %v3207
        %v3224 = vadd.f32 %v3170, %v3208
        %v3225 = vadd.f32 %v3171, %v3209
        %v3226 = vadd.f32 %v3172, %v3210
        %v3227 = vadd.f32 %v3173, %v3211
        %v3228 = vadd.f32 %v3174, %v3212
        %v3229 = vadd.f32 %v3175, %v3213
        %v3230 = vadd.f32 %v3176, %v3214
        %v3231 = vadd.f32 %v3177, %v3215
        %v3232 = vld [vmem:[%s3178 + $0x1] sm:$0xff]
        %v3233 = vld [vmem:[%s3178 + $0x9] sm:$0xff]
        %v3234 = vld [vmem:[%s3178 + $0x19] sm:$0xff]
        %v3235 = vld [vmem:[%s3178 + $0x21] sm:$0xff]
        %v3236 = vld [vmem:[%s3178 + $0x31] sm:$0xff]
        %v3237 = vld [vmem:[%s3178 + $0x39] sm:$0xff]
        %v3238 = vld [vmem:[%s3178 + $0x49] sm:$0xff]
        %v3239 = vld [vmem:[%s3178 + $0x51] sm:$0xff]
        %v3240 = vld [vmem:[%s3178 + $0x1b1] sm:$0xff]
        %v3241 = vld [vmem:[%s3178 + $0x1b9] sm:$0xff]
        %v3242 = vld [vmem:[%s3178 + $0x1c9] sm:$0xff]
        %v3243 = vld [vmem:[%s3178 + $0x1d1] sm:$0xff]
        %v3244 = vld [vmem:[%s3178 + $0x1e1] sm:$0xff]
        %v3245 = vld [vmem:[%s3178 + $0x1e9] sm:$0xff]
        %v3246 = vld [vmem:[%s3178 + $0x1f9] sm:$0xff]
        %v3247 = vld [vmem:[%s3178 + $0x201] sm:$0xff]
        %v3248 = vld [vmem:[%s3 + $0x7] sm:$0x1]
        %v3249 = vlaneseq
        %v3250 = vshrl.u32 %v3249, 7
        %v3251 = vsub.s32 0, %v3250
        %v3252 = vrot.slane %v3248, %v3251
        %v3253 = vmul.f32 %v3232, %v3252
        %v3254 = vmul.f32 %v3233, %v3252
        %v3255 = vmul.f32 %v3234, %v3252
        %v3256 = vmul.f32 %v3235, %v3252
        %v3257 = vmul.f32 %v3236, %v3252
        %v3258 = vmul.f32 %v3237, %v3252
        %v3259 = vmul.f32 %v3238, %v3252
        %v3260 = vmul.f32 %v3239, %v3252
        %v3261 = vmul.f32 %v3240, %v3252
        %v3262 = vmul.f32 %v3241, %v3252
        %v3263 = vmul.f32 %v3242, %v3252
        %v3264 = vmul.f32 %v3243, %v3252
        %v3265 = vmul.f32 %v3244, %v3252
        %v3266 = vmul.f32 %v3245, %v3252
        %v3267 = vmul.f32 %v3246, %v3252
        %v3268 = vmul.f32 %v3247, %v3252
        %v3269 = vadd.f32 %v3216, %v3253
        %v3270 = vadd.f32 %v3217, %v3254
        %v3271 = vadd.f32 %v3218, %v3255
        %v3272 = vadd.f32 %v3219, %v3256
        %v3273 = vadd.f32 %v3220, %v3257
        %v3274 = vadd.f32 %v3221, %v3258
        %v3275 = vadd.f32 %v3222, %v3259
        %v3276 = vadd.f32 %v3223, %v3260
        %v3277 = vadd.f32 %v3224, %v3261
        %v3278 = vadd.f32 %v3225, %v3262
        %v3279 = vadd.f32 %v3226, %v3263
        %v3280 = vadd.f32 %v3227, %v3264
        %v3281 = vadd.f32 %v3228, %v3265
        %v3282 = vadd.f32 %v3229, %v3266
        %v3283 = vadd.f32 %v3230, %v3267
        %v3284 = vadd.f32 %v3231, %v3268
        %v3285 = vld [vmem:[%s3178 + $0x2] sm:$0xff]
        %v3286 = vld [vmem:[%s3178 + $0xa] sm:$0xff]
        %v3287 = vld [vmem:[%s3178 + $0x1a] sm:$0xff]
        %v3288 = vld [vmem:[%s3178 + $0x22] sm:$0xff]
        %v3289 = vld [vmem:[%s3178 + $0x32] sm:$0xff]
        %v3290 = vld [vmem:[%s3178 + $0x3a] sm:$0xff]
        %v3291 = vld [vmem:[%s3178 + $0x4a] sm:$0xff]
        %v3292 = vld [vmem:[%s3178 + $0x52] sm:$0xff]
        %v3293 = vld [vmem:[%s3178 + $0x1b2] sm:$0xff]
        %v3294 = vld [vmem:[%s3178 + $0x1ba] sm:$0xff]
        %v3295 = vld [vmem:[%s3178 + $0x1ca] sm:$0xff]
        %v3296 = vld [vmem:[%s3178 + $0x1d2] sm:$0xff]
        %v3297 = vld [vmem:[%s3178 + $0x1e2] sm:$0xff]
        %v3298 = vld [vmem:[%s3178 + $0x1ea] sm:$0xff]
        %v3299 = vld [vmem:[%s3178 + $0x1fa] sm:$0xff]
        %v3300 = vld [vmem:[%s3178 + $0x202] sm:$0xff]
        %v3301 = vld [vmem:[%s3 + $0x8] sm:$0x1]
        %v3302 = vlaneseq
        %v3303 = vshrl.u32 %v3302, 7
        %v3304 = vsub.s32 0, %v3303
        %v3305 = vrot.slane %v3301, %v3304
        %v3306 = vmul.f32 %v3285, %v3305
        %v3307 = vmul.f32 %v3286, %v3305
        %v3308 = vmul.f32 %v3287, %v3305
        %v3309 = vmul.f32 %v3288, %v3305
        %v3310 = vmul.f32 %v3289, %v3305
        %v3311 = vmul.f32 %v3290, %v3305
        %v3312 = vmul.f32 %v3291, %v3305
        %v3313 = vmul.f32 %v3292, %v3305
        %v3314 = vmul.f32 %v3293, %v3305
        %v3315 = vmul.f32 %v3294, %v3305
        %v3316 = vmul.f32 %v3295, %v3305
        %v3317 = vmul.f32 %v3296, %v3305
        %v3318 = vmul.f32 %v3297, %v3305
        %v3319 = vmul.f32 %v3298, %v3305
        %v3320 = vmul.f32 %v3299, %v3305
        %v3321 = vmul.f32 %v3300, %v3305
        %v3322 = vadd.f32 %v3269, %v3306
        %v3323 = vadd.f32 %v3270, %v3307
        %v3324 = vadd.f32 %v3271, %v3308
        %v3325 = vadd.f32 %v3272, %v3309
        %v3326 = vadd.f32 %v3273, %v3310
        %v3327 = vadd.f32 %v3274, %v3311
        %v3328 = vadd.f32 %v3275, %v3312
        %v3329 = vadd.f32 %v3276, %v3313
        %v3330 = vadd.f32 %v3277, %v3314
        %v3331 = vadd.f32 %v3278, %v3315
        %v3332 = vadd.f32 %v3279, %v3316
        %v3333 = vadd.f32 %v3280, %v3317
        %v3334 = vadd.f32 %v3281, %v3318
        %v3335 = vadd.f32 %v3282, %v3319
        %v3336 = vadd.f32 %v3283, %v3320
        %v3337 = vadd.f32 %v3284, %v3321
        %s3338 = scalar_lea.vmem [#allocation3], 128
        %3339 = vst.msk [vmem:[%s3338] sm:$0xff] %vm408, %v3322
        %3340 = vst.msk [vmem:[%s3338 + $0x8] sm:$0xff] %vm408, %v3323
        %3341 = vst.msk [vmem:[%s3338 + $0x10] sm:$0xff] %vm408, %v3324
        %3342 = vst.msk [vmem:[%s3338 + $0x18] sm:$0xff] %vm408, %v3325
        %3343 = vst.msk [vmem:[%s3338 + $0x20] sm:$0xff] %vm408, %v3326
        %3344 = vst.msk [vmem:[%s3338 + $0x28] sm:$0xff] %vm408, %v3327
        %3345 = vst.msk [vmem:[%s3338 + $0x30] sm:$0xff] %vm408, %v3328
        %3346 = vst.msk [vmem:[%s3338 + $0x38] sm:$0xff] %vm408, %v3329
        %3347 = vst.msk [vmem:[%s3338 + $0x100] sm:$0xff] %vm408, %v3330
        %3348 = vst.msk [vmem:[%s3338 + $0x108] sm:$0xff] %vm408, %v3331
        %3349 = vst.msk [vmem:[%s3338 + $0x110] sm:$0xff] %vm408, %v3332
        %3350 = vst.msk [vmem:[%s3338 + $0x118] sm:$0xff] %vm408, %v3333
        %3351 = vst.msk [vmem:[%s3338 + $0x120] sm:$0xff] %vm408, %v3334
        %3352 = vst.msk [vmem:[%s3338 + $0x128] sm:$0xff] %vm408, %v3335
        %3353 = vst.msk [vmem:[%s3338 + $0x130] sm:$0xff] %vm408, %v3336
        %3354 = vst.msk [vmem:[%s3338 + $0x138] sm:$0xff] %vm408, %v3337
        %v3355 = vsel %vm408, %v3322, 0.0
        %v3356 = vsel %vm408, %v3324, 0.0
        %v3357 = vadd.f32 %v3355, %v3356
        %v3358 = vsel %vm408, %v3326, 0.0
        %v3359 = vadd.f32 %v3357, %v3358
        %v3360 = vsel %vm408, %v3328, 0.0
        %v3361 = vadd.f32 %v3359, %v3360
        %v3362 = vsel %vm408, %v3323, 0.0
        %v3363 = vsel %vm408, %v3325, 0.0
        %v3364 = vadd.f32 %v3362, %v3363
        %v3365 = vsel %vm408, %v3327, 0.0
        %v3366 = vadd.f32 %v3364, %v3365
        %v3367 = vsel %vm408, %v3329, 0.0
        %v3368 = vadd.f32 %v3366, %v3367
        %v3369 = vsel %vm408, %v3330, 0.0
        %v3370 = vsel %vm408, %v3332, 0.0
        %v3371 = vadd.f32 %v3369, %v3370
        %v3372 = vsel %vm408, %v3334, 0.0
        %v3373 = vadd.f32 %v3371, %v3372
        %v3374 = vsel %vm408, %v3336, 0.0
        %v3375 = vadd.f32 %v3373, %v3374
        %v3376 = vsel %vm408, %v3331, 0.0
        %v3377 = vsel %vm408, %v3333, 0.0
        %v3378 = vadd.f32 %v3376, %v3377
        %v3379 = vsel %vm408, %v3335, 0.0
        %v3380 = vadd.f32 %v3378, %v3379
        %v3381 = vsel %vm408, %v3337, 0.0
        %v3382 = vadd.f32 %v3380, %v3381
        %v3383 = vsel %vm408, %v3361, 0.0
        %v3384 = vsel %vm408, %v3368, 0.0
        %v3385 = vadd.f32 %v3383, %v3384
        %v3386 = vrot.slane %v3385, 4
        %v3387 = vadd.f32 %v3385, %v3386
        %v3388 = vrot.slane %v3387, 2
        %v3389 = vadd.f32 %v3387, %v3388
        %v3390 = vrot.slane %v3389, 1
        %v3391 = vadd.f32 %v3389, %v3390
        %v3392 = vsel %vm408, %v3375, 0.0
        %v3393 = vsel %vm408, %v3382, 0.0
        %v3394 = vadd.f32 %v3392, %v3393
        %v3395 = vrot.slane %v3394, 4
        %v3396 = vadd.f32 %v3394, %v3395
        %v3397 = vrot.slane %v3396, 2
        %v3398 = vadd.f32 %v3396, %v3397
        %v3399 = vrot.slane %v3398, 1
        %v3400 = vadd.f32 %v3398, %v3399
        %v3401 = vadd.f32 %v2850, %v3391
        %v3402 = vadd.f32 %v2851, %v3400
        %v3403 = vld [vmem:[%s4] sm:$0x1]
        %v3405 = vlaneseq
        %v3406 = vshrl.u32 %v3405, 7
        %v3407 = vsub.s32 0, %v3406
        %v3408 = vrot.slane %v3403, %v3407
        %s3410 = scalar_lea.vmem [#allocation2], 288
        %v3411 = vld [vmem:[%s3410] sm:$0xff]
        %v3412 = vld [vmem:[%s3410 + $0x8] sm:$0xff]
        %v3413 = vld [vmem:[%s3410 + $0x18] sm:$0xff]
        %v3414 = vld [vmem:[%s3410 + $0x20] sm:$0xff]
        %v3415 = vld [vmem:[%s3410 + $0x30] sm:$0xff]
        %v3416 = vld [vmem:[%s3410 + $0x38] sm:$0xff]
        %v3417 = vld [vmem:[%s3410 + $0x48] sm:$0xff]
        %v3418 = vld [vmem:[%s3410 + $0x50] sm:$0xff]
        %v3419 = vld [vmem:[%s3410 + $0x1b0] sm:$0xff]
        %v3420 = vld [vmem:[%s3410 + $0x1b8] sm:$0xff]
        %v3421 = vld [vmem:[%s3410 + $0x1c8] sm:$0xff]
        %v3422 = vld [vmem:[%s3410 + $0x1d0] sm:$0xff]
        %v3423 = vld [vmem:[%s3410 + $0x1e0] sm:$0xff]
        %v3424 = vld [vmem:[%s3410 + $0x1e8] sm:$0xff]
        %v3425 = vld [vmem:[%s3410 + $0x1f8] sm:$0xff]
        %v3426 = vld [vmem:[%s3410 + $0x200] sm:$0xff]
        %v3427 = vld [vmem:[%s3] sm:$0x1]
        %v3428 = vlaneseq
        %v3429 = vshrl.u32 %v3428, 7
        %v3430 = vsub.s32 0, %v3429
        %v3431 = vrot.slane %v3427, %v3430
        %v3432 = vmul.f32 %v3411, %v3431
        %v3433 = vmul.f32 %v3412, %v3431
        %v3434 = vmul.f32 %v3413, %v3431
        %v3435 = vmul.f32 %v3414, %v3431
        %v3436 = vmul.f32 %v3415, %v3431
        %v3437 = vmul.f32 %v3416, %v3431
        %v3438 = vmul.f32 %v3417, %v3431
        %v3439 = vmul.f32 %v3418, %v3431
        %v3440 = vmul.f32 %v3419, %v3431
        %v3441 = vmul.f32 %v3420, %v3431
        %v3442 = vmul.f32 %v3421, %v3431
        %v3443 = vmul.f32 %v3422, %v3431
        %v3444 = vmul.f32 %v3423, %v3431
        %v3445 = vmul.f32 %v3424, %v3431
        %v3446 = vmul.f32 %v3425, %v3431
        %v3447 = vmul.f32 %v3426, %v3431
        %v3448 = vadd.f32 %v3408, %v3432
        %v3449 = vadd.f32 %v3408, %v3433
        %v3450 = vadd.f32 %v3408, %v3434
        %v3451 = vadd.f32 %v3408, %v3435
        %v3452 = vadd.f32 %v3408, %v3436
        %v3453 = vadd.f32 %v3408, %v3437
        %v3454 = vadd.f32 %v3408, %v3438
        %v3455 = vadd.f32 %v3408, %v3439
        %v3456 = vadd.f32 %v3408, %v3440
        %v3457 = vadd.f32 %v3408, %v3441
        %v3458 = vadd.f32 %v3408, %v3442
        %v3459 = vadd.f32 %v3408, %v3443
        %v3460 = vadd.f32 %v3408, %v3444
        %v3461 = vadd.f32 %v3408, %v3445
        %v3462 = vadd.f32 %v3408, %v3446
        %v3463 = vadd.f32 %v3408, %v3447
        %v3464 = vld [vmem:[%s3410 + $0x1] sm:$0xff]
        %v3465 = vld [vmem:[%s3410 + $0x9] sm:$0xff]
        %v3466 = vld [vmem:[%s3410 + $0x19] sm:$0xff]
        %v3467 = vld [vmem:[%s3410 + $0x21] sm:$0xff]
        %v3468 = vld [vmem:[%s3410 + $0x31] sm:$0xff]
        %v3469 = vld [vmem:[%s3410 + $0x39] sm:$0xff]
        %v3470 = vld [vmem:[%s3410 + $0x49] sm:$0xff]
        %v3471 = vld [vmem:[%s3410 + $0x51] sm:$0xff]
        %v3472 = vld [vmem:[%s3410 + $0x1b1] sm:$0xff]
        %v3473 = vld [vmem:[%s3410 + $0x1b9] sm:$0xff]
        %v3474 = vld [vmem:[%s3410 + $0x1c9] sm:$0xff]
        %v3475 = vld [vmem:[%s3410 + $0x1d1] sm:$0xff]
        %v3476 = vld [vmem:[%s3410 + $0x1e1] sm:$0xff]
        %v3477 = vld [vmem:[%s3410 + $0x1e9] sm:$0xff]
        %v3478 = vld [vmem:[%s3410 + $0x1f9] sm:$0xff]
        %v3479 = vld [vmem:[%s3410 + $0x201] sm:$0xff]
        %v3480 = vld [vmem:[%s3 + $0x1] sm:$0x1]
        %v3481 = vlaneseq
        %v3482 = vshrl.u32 %v3481, 7
        %v3483 = vsub.s32 0, %v3482
        %v3484 = vrot.slane %v3480, %v3483
        %v3485 = vmul.f32 %v3464, %v3484
        %v3486 = vmul.f32 %v3465, %v3484
        %v3487 = vmul.f32 %v3466, %v3484
        %v3488 = vmul.f32 %v3467, %v3484
        %v3489 = vmul.f32 %v3468, %v3484
        %v3490 = vmul.f32 %v3469, %v3484
        %v3491 = vmul.f32 %v3470, %v3484
        %v3492 = vmul.f32 %v3471, %v3484
        %v3493 = vmul.f32 %v3472, %v3484
        %v3494 = vmul.f32 %v3473, %v3484
        %v3495 = vmul.f32 %v3474, %v3484
        %v3496 = vmul.f32 %v3475, %v3484
        %v3497 = vmul.f32 %v3476, %v3484
        %v3498 = vmul.f32 %v3477, %v3484
        %v3499 = vmul.f32 %v3478, %v3484
        %v3500 = vmul.f32 %v3479, %v3484
        %v3501 = vadd.f32 %v3448, %v3485
        %v3502 = vadd.f32 %v3449, %v3486
        %v3503 = vadd.f32 %v3450, %v3487
        %v3504 = vadd.f32 %v3451, %v3488
        %v3505 = vadd.f32 %v3452, %v3489
        %v3506 = vadd.f32 %v3453, %v3490
        %v3507 = vadd.f32 %v3454, %v3491
        %v3508 = vadd.f32 %v3455, %v3492
        %v3509 = vadd.f32 %v3456, %v3493
        %v3510 = vadd.f32 %v3457, %v3494
        %v3511 = vadd.f32 %v3458, %v3495
        %v3512 = vadd.f32 %v3459, %v3496
        %v3513 = vadd.f32 %v3460, %v3497
        %v3514 = vadd.f32 %v3461, %v3498
        %v3515 = vadd.f32 %v3462, %v3499
        %v3516 = vadd.f32 %v3463, %v3500
        %v3517 = vld [vmem:[%s3410 + $0x2] sm:$0xff]
        %v3518 = vld [vmem:[%s3410 + $0xa] sm:$0xff]
        %v3519 = vld [vmem:[%s3410 + $0x1a] sm:$0xff]
        %v3520 = vld [vmem:[%s3410 + $0x22] sm:$0xff]
        %v3521 = vld [vmem:[%s3410 + $0x32] sm:$0xff]
        %v3522 = vld [vmem:[%s3410 + $0x3a] sm:$0xff]
        %v3523 = vld [vmem:[%s3410 + $0x4a] sm:$0xff]
        %v3524 = vld [vmem:[%s3410 + $0x52] sm:$0xff]
        %v3525 = vld [vmem:[%s3410 + $0x1b2] sm:$0xff]
        %v3526 = vld [vmem:[%s3410 + $0x1ba] sm:$0xff]
        %v3527 = vld [vmem:[%s3410 + $0x1ca] sm:$0xff]
        %v3528 = vld [vmem:[%s3410 + $0x1d2] sm:$0xff]
        %v3529 = vld [vmem:[%s3410 + $0x1e2] sm:$0xff]
        %v3530 = vld [vmem:[%s3410 + $0x1ea] sm:$0xff]
        %v3531 = vld [vmem:[%s3410 + $0x1fa] sm:$0xff]
        %v3532 = vld [vmem:[%s3410 + $0x202] sm:$0xff]
        %v3533 = vld [vmem:[%s3 + $0x2] sm:$0x1]
        %v3534 = vlaneseq
        %v3535 = vshrl.u32 %v3534, 7
        %v3536 = vsub.s32 0, %v3535
        %v3537 = vrot.slane %v3533, %v3536
        %v3538 = vmul.f32 %v3517, %v3537
        %v3539 = vmul.f32 %v3518, %v3537
        %v3540 = vmul.f32 %v3519, %v3537
        %v3541 = vmul.f32 %v3520, %v3537
        %v3542 = vmul.f32 %v3521, %v3537
        %v3543 = vmul.f32 %v3522, %v3537
        %v3544 = vmul.f32 %v3523, %v3537
        %v3545 = vmul.f32 %v3524, %v3537
        %v3546 = vmul.f32 %v3525, %v3537
        %v3547 = vmul.f32 %v3526, %v3537
        %v3548 = vmul.f32 %v3527, %v3537
        %v3549 = vmul.f32 %v3528, %v3537
        %v3550 = vmul.f32 %v3529, %v3537
        %v3551 = vmul.f32 %v3530, %v3537
        %v3552 = vmul.f32 %v3531, %v3537
        %v3553 = vmul.f32 %v3532, %v3537
        %v3554 = vadd.f32 %v3501, %v3538
        %v3555 = vadd.f32 %v3502, %v3539
        %v3556 = vadd.f32 %v3503, %v3540
        %v3557 = vadd.f32 %v3504, %v3541
        %v3558 = vadd.f32 %v3505, %v3542
        %v3559 = vadd.f32 %v3506, %v3543
        %v3560 = vadd.f32 %v3507, %v3544
        %v3561 = vadd.f32 %v3508, %v3545
        %v3562 = vadd.f32 %v3509, %v3546
        %v3563 = vadd.f32 %v3510, %v3547
        %v3564 = vadd.f32 %v3511, %v3548
        %v3565 = vadd.f32 %v3512, %v3549
        %v3566 = vadd.f32 %v3513, %v3550
        %v3567 = vadd.f32 %v3514, %v3551
        %v3568 = vadd.f32 %v3515, %v3552
        %v3569 = vadd.f32 %v3516, %v3553
        %v3570 = vld [vmem:[%s1735] sm:$0xff]
        %v3571 = vld [vmem:[%s1735 + $0x8] sm:$0xff]
        %v3572 = vld [vmem:[%s1735 + $0x18] sm:$0xff]
        %v3573 = vld [vmem:[%s1735 + $0x20] sm:$0xff]
        %v3574 = vld [vmem:[%s1735 + $0x30] sm:$0xff]
        %v3575 = vld [vmem:[%s1735 + $0x38] sm:$0xff]
        %v3576 = vld [vmem:[%s1735 + $0x48] sm:$0xff]
        %v3577 = vld [vmem:[%s1735 + $0x50] sm:$0xff]
        %v3578 = vld [vmem:[%s1735 + $0x1b0] sm:$0xff]
        %v3579 = vld [vmem:[%s1735 + $0x1b8] sm:$0xff]
        %v3580 = vld [vmem:[%s1735 + $0x1c8] sm:$0xff]
        %v3581 = vld [vmem:[%s1735 + $0x1d0] sm:$0xff]
        %v3582 = vld [vmem:[%s1735 + $0x1e0] sm:$0xff]
        %v3583 = vld [vmem:[%s1735 + $0x1e8] sm:$0xff]
        %v3584 = vld [vmem:[%s1735 + $0x1f8] sm:$0xff]
        %v3585 = vld [vmem:[%s1735 + $0x200] sm:$0xff]
        %v3586 = vld [vmem:[%s3 + $0x3] sm:$0x1]
        %v3587 = vlaneseq
        %v3588 = vshrl.u32 %v3587, 7
        %v3589 = vsub.s32 0, %v3588
        %v3590 = vrot.slane %v3586, %v3589
        %v3591 = vmul.f32 %v3570, %v3590
        %v3592 = vmul.f32 %v3571, %v3590
        %v3593 = vmul.f32 %v3572, %v3590
        %v3594 = vmul.f32 %v3573, %v3590
        %v3595 = vmul.f32 %v3574, %v3590
        %v3596 = vmul.f32 %v3575, %v3590
        %v3597 = vmul.f32 %v3576, %v3590
        %v3598 = vmul.f32 %v3577, %v3590
        %v3599 = vmul.f32 %v3578, %v3590
        %v3600 = vmul.f32 %v3579, %v3590
        %v3601 = vmul.f32 %v3580, %v3590
        %v3602 = vmul.f32 %v3581, %v3590
        %v3603 = vmul.f32 %v3582, %v3590
        %v3604 = vmul.f32 %v3583, %v3590
        %v3605 = vmul.f32 %v3584, %v3590
        %v3606 = vmul.f32 %v3585, %v3590
        %v3607 = vadd.f32 %v3554, %v3591
        %v3608 = vadd.f32 %v3555, %v3592
        %v3609 = vadd.f32 %v3556, %v3593
        %v3610 = vadd.f32 %v3557, %v3594
        %v3611 = vadd.f32 %v3558, %v3595
        %v3612 = vadd.f32 %v3559, %v3596
        %v3613 = vadd.f32 %v3560, %v3597
        %v3614 = vadd.f32 %v3561, %v3598
        %v3615 = vadd.f32 %v3562, %v3599
        %v3616 = vadd.f32 %v3563, %v3600
        %v3617 = vadd.f32 %v3564, %v3601
        %v3618 = vadd.f32 %v3565, %v3602
        %v3619 = vadd.f32 %v3566, %v3603
        %v3620 = vadd.f32 %v3567, %v3604
        %v3621 = vadd.f32 %v3568, %v3605
        %v3622 = vadd.f32 %v3569, %v3606
        %v3623 = vld [vmem:[%s1735 + $0x1] sm:$0xff]
        %v3624 = vld [vmem:[%s1735 + $0x9] sm:$0xff]
        %v3625 = vld [vmem:[%s1735 + $0x19] sm:$0xff]
        %v3626 = vld [vmem:[%s1735 + $0x21] sm:$0xff]
        %v3627 = vld [vmem:[%s1735 + $0x31] sm:$0xff]
        %v3628 = vld [vmem:[%s1735 + $0x39] sm:$0xff]
        %v3629 = vld [vmem:[%s1735 + $0x49] sm:$0xff]
        %v3630 = vld [vmem:[%s1735 + $0x51] sm:$0xff]
        %v3631 = vld [vmem:[%s1735 + $0x1b1] sm:$0xff]
        %v3632 = vld [vmem:[%s1735 + $0x1b9] sm:$0xff]
        %v3633 = vld [vmem:[%s1735 + $0x1c9] sm:$0xff]
        %v3634 = vld [vmem:[%s1735 + $0x1d1] sm:$0xff]
        %v3635 = vld [vmem:[%s1735 + $0x1e1] sm:$0xff]
        %v3636 = vld [vmem:[%s1735 + $0x1e9] sm:$0xff]
        %v3637 = vld [vmem:[%s1735 + $0x1f9] sm:$0xff]
        %v3638 = vld [vmem:[%s1735 + $0x201] sm:$0xff]
        %v3639 = vld [vmem:[%s3 + $0x4] sm:$0x1]
        %v3640 = vlaneseq
        %v3641 = vshrl.u32 %v3640, 7
        %v3642 = vsub.s32 0, %v3641
        %v3643 = vrot.slane %v3639, %v3642
        %v3644 = vmul.f32 %v3623, %v3643
        %v3645 = vmul.f32 %v3624, %v3643
        %v3646 = vmul.f32 %v3625, %v3643
        %v3647 = vmul.f32 %v3626, %v3643
        %v3648 = vmul.f32 %v3627, %v3643
        %v3649 = vmul.f32 %v3628, %v3643
        %v3650 = vmul.f32 %v3629, %v3643
        %v3651 = vmul.f32 %v3630, %v3643
        %v3652 = vmul.f32 %v3631, %v3643
        %v3653 = vmul.f32 %v3632, %v3643
        %v3654 = vmul.f32 %v3633, %v3643
        %v3655 = vmul.f32 %v3634, %v3643
        %v3656 = vmul.f32 %v3635, %v3643
        %v3657 = vmul.f32 %v3636, %v3643
        %v3658 = vmul.f32 %v3637, %v3643
        %v3659 = vmul.f32 %v3638, %v3643
        %v3660 = vadd.f32 %v3607, %v3644
        %v3661 = vadd.f32 %v3608, %v3645
        %v3662 = vadd.f32 %v3609, %v3646
        %v3663 = vadd.f32 %v3610, %v3647
        %v3664 = vadd.f32 %v3611, %v3648
        %v3665 = vadd.f32 %v3612, %v3649
        %v3666 = vadd.f32 %v3613, %v3650
        %v3667 = vadd.f32 %v3614, %v3651
        %v3668 = vadd.f32 %v3615, %v3652
        %v3669 = vadd.f32 %v3616, %v3653
        %v3670 = vadd.f32 %v3617, %v3654
        %v3671 = vadd.f32 %v3618, %v3655
        %v3672 = vadd.f32 %v3619, %v3656
        %v3673 = vadd.f32 %v3620, %v3657
        %v3674 = vadd.f32 %v3621, %v3658
        %v3675 = vadd.f32 %v3622, %v3659
        %v3676 = vld [vmem:[%s1735 + $0x2] sm:$0xff]
        %v3677 = vld [vmem:[%s1735 + $0xa] sm:$0xff]
        %v3678 = vld [vmem:[%s1735 + $0x1a] sm:$0xff]
        %v3679 = vld [vmem:[%s1735 + $0x22] sm:$0xff]
        %v3680 = vld [vmem:[%s1735 + $0x32] sm:$0xff]
        %v3681 = vld [vmem:[%s1735 + $0x3a] sm:$0xff]
        %v3682 = vld [vmem:[%s1735 + $0x4a] sm:$0xff]
        %v3683 = vld [vmem:[%s1735 + $0x52] sm:$0xff]
        %v3684 = vld [vmem:[%s1735 + $0x1b2] sm:$0xff]
        %v3685 = vld [vmem:[%s1735 + $0x1ba] sm:$0xff]
        %v3686 = vld [vmem:[%s1735 + $0x1ca] sm:$0xff]
        %v3687 = vld [vmem:[%s1735 + $0x1d2] sm:$0xff]
        %v3688 = vld [vmem:[%s1735 + $0x1e2] sm:$0xff]
        %v3689 = vld [vmem:[%s1735 + $0x1ea] sm:$0xff]
        %v3690 = vld [vmem:[%s1735 + $0x1fa] sm:$0xff]
        %v3691 = vld [vmem:[%s1735 + $0x202] sm:$0xff]
        %v3692 = vld [vmem:[%s3 + $0x5] sm:$0x1]
        %v3693 = vlaneseq
        %v3694 = vshrl.u32 %v3693, 7
        %v3695 = vsub.s32 0, %v3694
        %v3696 = vrot.slane %v3692, %v3695
        %v3697 = vmul.f32 %v3676, %v3696
        %v3698 = vmul.f32 %v3677, %v3696
        %v3699 = vmul.f32 %v3678, %v3696
        %v3700 = vmul.f32 %v3679, %v3696
        %v3701 = vmul.f32 %v3680, %v3696
        %v3702 = vmul.f32 %v3681, %v3696
        %v3703 = vmul.f32 %v3682, %v3696
        %v3704 = vmul.f32 %v3683, %v3696
        %v3705 = vmul.f32 %v3684, %v3696
        %v3706 = vmul.f32 %v3685, %v3696
        %v3707 = vmul.f32 %v3686, %v3696
        %v3708 = vmul.f32 %v3687, %v3696
        %v3709 = vmul.f32 %v3688, %v3696
        %v3710 = vmul.f32 %v3689, %v3696
        %v3711 = vmul.f32 %v3690, %v3696
        %v3712 = vmul.f32 %v3691, %v3696
        %v3713 = vadd.f32 %v3660, %v3697
        %v3714 = vadd.f32 %v3661, %v3698
        %v3715 = vadd.f32 %v3662, %v3699
        %v3716 = vadd.f32 %v3663, %v3700
        %v3717 = vadd.f32 %v3664, %v3701
        %v3718 = vadd.f32 %v3665, %v3702
        %v3719 = vadd.f32 %v3666, %v3703
        %v3720 = vadd.f32 %v3667, %v3704
        %v3721 = vadd.f32 %v3668, %v3705
        %v3722 = vadd.f32 %v3669, %v3706
        %v3723 = vadd.f32 %v3670, %v3707
        %v3724 = vadd.f32 %v3671, %v3708
        %v3725 = vadd.f32 %v3672, %v3709
        %v3726 = vadd.f32 %v3673, %v3710
        %v3727 = vadd.f32 %v3674, %v3711
        %v3728 = vadd.f32 %v3675, %v3712
        %s3729 = scalar_lea.vmem [#allocation2], 336
        %v3730 = vld [vmem:[%s3729] sm:$0xff]
        %v3731 = vld [vmem:[%s3729 + $0x8] sm:$0xff]
        %v3732 = vld [vmem:[%s3729 + $0x18] sm:$0xff]
        %v3733 = vld [vmem:[%s3729 + $0x20] sm:$0xff]
        %v3734 = vld [vmem:[%s3729 + $0x30] sm:$0xff]
        %v3735 = vld [vmem:[%s3729 + $0x38] sm:$0xff]
        %v3736 = vld [vmem:[%s3729 + $0x48] sm:$0xff]
        %v3737 = vld [vmem:[%s3729 + $0x50] sm:$0xff]
        %v3738 = vld [vmem:[%s3729 + $0x1b0] sm:$0xff]
        %v3739 = vld [vmem:[%s3729 + $0x1b8] sm:$0xff]
        %v3740 = vld [vmem:[%s3729 + $0x1c8] sm:$0xff]
        %v3741 = vld [vmem:[%s3729 + $0x1d0] sm:$0xff]
        %v3742 = vld [vmem:[%s3729 + $0x1e0] sm:$0xff]
        %v3743 = vld [vmem:[%s3729 + $0x1e8] sm:$0xff]
        %v3744 = vld [vmem:[%s3729 + $0x1f8] sm:$0xff]
        %v3745 = vld [vmem:[%s3729 + $0x200] sm:$0xff]
        %v3746 = vld [vmem:[%s3 + $0x6] sm:$0x1]
        %v3747 = vlaneseq
        %v3748 = vshrl.u32 %v3747, 7
        %v3749 = vsub.s32 0, %v3748
        %v3750 = vrot.slane %v3746, %v3749
        %v3751 = vmul.f32 %v3730, %v3750
        %v3752 = vmul.f32 %v3731, %v3750
        %v3753 = vmul.f32 %v3732, %v3750
        %v3754 = vmul.f32 %v3733, %v3750
        %v3755 = vmul.f32 %v3734, %v3750
        %v3756 = vmul.f32 %v3735, %v3750
        %v3757 = vmul.f32 %v3736, %v3750
        %v3758 = vmul.f32 %v3737, %v3750
        %v3759 = vmul.f32 %v3738, %v3750
        %v3760 = vmul.f32 %v3739, %v3750
        %v3761 = vmul.f32 %v3740, %v3750
        %v3762 = vmul.f32 %v3741, %v3750
        %v3763 = vmul.f32 %v3742, %v3750
        %v3764 = vmul.f32 %v3743, %v3750
        %v3765 = vmul.f32 %v3744, %v3750
        %v3766 = vmul.f32 %v3745, %v3750
        %v3767 = vadd.f32 %v3713, %v3751
        %v3768 = vadd.f32 %v3714, %v3752
        %v3769 = vadd.f32 %v3715, %v3753
        %v3770 = vadd.f32 %v3716, %v3754
        %v3771 = vadd.f32 %v3717, %v3755
        %v3772 = vadd.f32 %v3718, %v3756
        %v3773 = vadd.f32 %v3719, %v3757
        %v3774 = vadd.f32 %v3720, %v3758
        %v3775 = vadd.f32 %v3721, %v3759
        %v3776 = vadd.f32 %v3722, %v3760
        %v3777 = vadd.f32 %v3723, %v3761
        %v3778 = vadd.f32 %v3724, %v3762
        %v3779 = vadd.f32 %v3725, %v3763
        %v3780 = vadd.f32 %v3726, %v3764
        %v3781 = vadd.f32 %v3727, %v3765
        %v3782 = vadd.f32 %v3728, %v3766
        %v3783 = vld [vmem:[%s3729 + $0x1] sm:$0xff]
        %v3784 = vld [vmem:[%s3729 + $0x9] sm:$0xff]
        %v3785 = vld [vmem:[%s3729 + $0x19] sm:$0xff]
        %v3786 = vld [vmem:[%s3729 + $0x21] sm:$0xff]
        %v3787 = vld [vmem:[%s3729 + $0x31] sm:$0xff]
        %v3788 = vld [vmem:[%s3729 + $0x39] sm:$0xff]
        %v3789 = vld [vmem:[%s3729 + $0x49] sm:$0xff]
        %v3790 = vld [vmem:[%s3729 + $0x51] sm:$0xff]
        %v3791 = vld [vmem:[%s3729 + $0x1b1] sm:$0xff]
        %v3792 = vld [vmem:[%s3729 + $0x1b9] sm:$0xff]
        %v3793 = vld [vmem:[%s3729 + $0x1c9] sm:$0xff]
        %v3794 = vld [vmem:[%s3729 + $0x1d1] sm:$0xff]
        %v3795 = vld [vmem:[%s3729 + $0x1e1] sm:$0xff]
        %v3796 = vld [vmem:[%s3729 + $0x1e9] sm:$0xff]
        %v3797 = vld [vmem:[%s3729 + $0x1f9] sm:$0xff]
        %v3798 = vld [vmem:[%s3729 + $0x201] sm:$0xff]
        %v3799 = vld [vmem:[%s3 + $0x7] sm:$0x1]
        %v3800 = vlaneseq
        %v3801 = vshrl.u32 %v3800, 7
        %v3802 = vsub.s32 0, %v3801
        %v3803 = vrot.slane %v3799, %v3802
        %v3804 = vmul.f32 %v3783, %v3803
        %v3805 = vmul.f32 %v3784, %v3803
        %v3806 = vmul.f32 %v3785, %v3803
        %v3807 = vmul.f32 %v3786, %v3803
        %v3808 = vmul.f32 %v3787, %v3803
        %v3809 = vmul.f32 %v3788, %v3803
        %v3810 = vmul.f32 %v3789, %v3803
        %v3811 = vmul.f32 %v3790, %v3803
        %v3812 = vmul.f32 %v3791, %v3803
        %v3813 = vmul.f32 %v3792, %v3803
        %v3814 = vmul.f32 %v3793, %v3803
        %v3815 = vmul.f32 %v3794, %v3803
        %v3816 = vmul.f32 %v3795, %v3803
        %v3817 = vmul.f32 %v3796, %v3803
        %v3818 = vmul.f32 %v3797, %v3803
        %v3819 = vmul.f32 %v3798, %v3803
        %v3820 = vadd.f32 %v3767, %v3804
        %v3821 = vadd.f32 %v3768, %v3805
        %v3822 = vadd.f32 %v3769, %v3806
        %v3823 = vadd.f32 %v3770, %v3807
        %v3824 = vadd.f32 %v3771, %v3808
        %v3825 = vadd.f32 %v3772, %v3809
        %v3826 = vadd.f32 %v3773, %v3810
        %v3827 = vadd.f32 %v3774, %v3811
        %v3828 = vadd.f32 %v3775, %v3812
        %v3829 = vadd.f32 %v3776, %v3813
        %v3830 = vadd.f32 %v3777, %v3814
        %v3831 = vadd.f32 %v3778, %v3815
        %v3832 = vadd.f32 %v3779, %v3816
        %v3833 = vadd.f32 %v3780, %v3817
        %v3834 = vadd.f32 %v3781, %v3818
        %v3835 = vadd.f32 %v3782, %v3819
        %v3836 = vld [vmem:[%s3729 + $0x2] sm:$0xff]
        %v3837 = vld [vmem:[%s3729 + $0xa] sm:$0xff]
        %v3838 = vld [vmem:[%s3729 + $0x1a] sm:$0xff]
        %v3839 = vld [vmem:[%s3729 + $0x22] sm:$0xff]
        %v3840 = vld [vmem:[%s3729 + $0x32] sm:$0xff]
        %v3841 = vld [vmem:[%s3729 + $0x3a] sm:$0xff]
        %v3842 = vld [vmem:[%s3729 + $0x4a] sm:$0xff]
        %v3843 = vld [vmem:[%s3729 + $0x52] sm:$0xff]
        %v3844 = vld [vmem:[%s3729 + $0x1b2] sm:$0xff]
        %v3845 = vld [vmem:[%s3729 + $0x1ba] sm:$0xff]
        %v3846 = vld [vmem:[%s3729 + $0x1ca] sm:$0xff]
        %v3847 = vld [vmem:[%s3729 + $0x1d2] sm:$0xff]
        %v3848 = vld [vmem:[%s3729 + $0x1e2] sm:$0xff]
        %v3849 = vld [vmem:[%s3729 + $0x1ea] sm:$0xff]
        %v3850 = vld [vmem:[%s3729 + $0x1fa] sm:$0xff]
        %v3851 = vld [vmem:[%s3729 + $0x202] sm:$0xff]
        %v3852 = vld [vmem:[%s3 + $0x8] sm:$0x1]
        %v3853 = vlaneseq
        %v3854 = vshrl.u32 %v3853, 7
        %v3855 = vsub.s32 0, %v3854
        %v3856 = vrot.slane %v3852, %v3855
        %v3857 = vmul.f32 %v3836, %v3856
        %v3858 = vmul.f32 %v3837, %v3856
        %v3859 = vmul.f32 %v3838, %v3856
        %v3860 = vmul.f32 %v3839, %v3856
        %v3861 = vmul.f32 %v3840, %v3856
        %v3862 = vmul.f32 %v3841, %v3856
        %v3863 = vmul.f32 %v3842, %v3856
        %v3864 = vmul.f32 %v3843, %v3856
        %v3865 = vmul.f32 %v3844, %v3856
        %v3866 = vmul.f32 %v3845, %v3856
        %v3867 = vmul.f32 %v3846, %v3856
        %v3868 = vmul.f32 %v3847, %v3856
        %v3869 = vmul.f32 %v3848, %v3856
        %v3870 = vmul.f32 %v3849, %v3856
        %v3871 = vmul.f32 %v3850, %v3856
        %v3872 = vmul.f32 %v3851, %v3856
        %v3873 = vadd.f32 %v3820, %v3857
        %v3874 = vadd.f32 %v3821, %v3858
        %v3875 = vadd.f32 %v3822, %v3859
        %v3876 = vadd.f32 %v3823, %v3860
        %v3877 = vadd.f32 %v3824, %v3861
        %v3878 = vadd.f32 %v3825, %v3862
        %v3879 = vadd.f32 %v3826, %v3863
        %v3880 = vadd.f32 %v3827, %v3864
        %v3881 = vadd.f32 %v3828, %v3865
        %v3882 = vadd.f32 %v3829, %v3866
        %v3883 = vadd.f32 %v3830, %v3867
        %v3884 = vadd.f32 %v3831, %v3868
        %v3885 = vadd.f32 %v3832, %v3869
        %v3886 = vadd.f32 %v3833, %v3870
        %v3887 = vadd.f32 %v3834, %v3871
        %v3888 = vadd.f32 %v3835, %v3872
        %s3889 = scalar_lea.vmem [#allocation3], 192
        %3890 = vst.msk [vmem:[%s3889] sm:$0xff] %vm408, %v3873
        %3891 = vst.msk [vmem:[%s3889 + $0x8] sm:$0xff] %vm408, %v3874
        %3892 = vst.msk [vmem:[%s3889 + $0x10] sm:$0xff] %vm408, %v3875
        %3893 = vst.msk [vmem:[%s3889 + $0x18] sm:$0xff] %vm408, %v3876
        %3894 = vst.msk [vmem:[%s3889 + $0x20] sm:$0xff] %vm408, %v3877
        %3895 = vst.msk [vmem:[%s3889 + $0x28] sm:$0xff] %vm408, %v3878
        %3896 = vst.msk [vmem:[%s3889 + $0x30] sm:$0xff] %vm408, %v3879
        %3897 = vst.msk [vmem:[%s3889 + $0x38] sm:$0xff] %vm408, %v3880
        %3898 = vst.msk [vmem:[%s3889 + $0x100] sm:$0xff] %vm408, %v3881
        %3899 = vst.msk [vmem:[%s3889 + $0x108] sm:$0xff] %vm408, %v3882
        %3900 = vst.msk [vmem:[%s3889 + $0x110] sm:$0xff] %vm408, %v3883
        %3901 = vst.msk [vmem:[%s3889 + $0x118] sm:$0xff] %vm408, %v3884
        %3902 = vst.msk [vmem:[%s3889 + $0x120] sm:$0xff] %vm408, %v3885
        %3903 = vst.msk [vmem:[%s3889 + $0x128] sm:$0xff] %vm408, %v3886
        %3904 = vst.msk [vmem:[%s3889 + $0x130] sm:$0xff] %vm408, %v3887
        %3905 = vst.msk [vmem:[%s3889 + $0x138] sm:$0xff] %vm408, %v3888
        %v3906 = vsel %vm408, %v3873, 0.0
        %v3907 = vsel %vm408, %v3875, 0.0
        %v3908 = vadd.f32 %v3906, %v3907
        %v3909 = vsel %vm408, %v3877, 0.0
        %v3910 = vadd.f32 %v3908, %v3909
        %v3911 = vsel %vm408, %v3879, 0.0
        %v3912 = vadd.f32 %v3910, %v3911
        %v3913 = vsel %vm408, %v3874, 0.0
        %v3914 = vsel %vm408, %v3876, 0.0
        %v3915 = vadd.f32 %v3913, %v3914
        %v3916 = vsel %vm408, %v3878, 0.0
        %v3917 = vadd.f32 %v3915, %v3916
        %v3918 = vsel %vm408, %v3880, 0.0
        %v3919 = vadd.f32 %v3917, %v3918
        %v3920 = vsel %vm408, %v3881, 0.0
        %v3921 = vsel %vm408, %v3883, 0.0
        %v3922 = vadd.f32 %v3920, %v3921
        %v3923 = vsel %vm408, %v3885, 0.0
        %v3924 = vadd.f32 %v3922, %v3923
        %v3925 = vsel %vm408, %v3887, 0.0
        %v3926 = vadd.f32 %v3924, %v3925
        %v3927 = vsel %vm408, %v3882, 0.0
        %v3928 = vsel %vm408, %v3884, 0.0
        %v3929 = vadd.f32 %v3927, %v3928
        %v3930 = vsel %vm408, %v3886, 0.0
        %v3931 = vadd.f32 %v3929, %v3930
        %v3932 = vsel %vm408, %v3888, 0.0
        %v3933 = vadd.f32 %v3931, %v3932
        %v3934 = vsel %vm408, %v3912, 0.0
        %v3935 = vsel %vm408, %v3919, 0.0
        %v3936 = vadd.f32 %v3934, %v3935
        %v3937 = vrot.slane %v3936, 4
        %v3938 = vadd.f32 %v3936, %v3937
        %v3939 = vrot.slane %v3938, 2
        %v3940 = vadd.f32 %v3938, %v3939
        %v3941 = vrot.slane %v3940, 1
        %v3942 = vadd.f32 %v3940, %v3941
        %v3943 = vsel %vm408, %v3926, 0.0
        %v3944 = vsel %vm408, %v3933, 0.0
        %v3945 = vadd.f32 %v3943, %v3944
        %v3946 = vrot.slane %v3945, 4
        %v3947 = vadd.f32 %v3945, %v3946
        %v3948 = vrot.slane %v3947, 2
        %v3949 = vadd.f32 %v3947, %v3948
        %v3950 = vrot.slane %v3949, 1
        %v3951 = vadd.f32 %v3949, %v3950
        %v3952 = vadd.f32 %v3401, %v3942
        %v3953 = vadd.f32 %v3402, %v3951
        %v3954 = vmul.f32 %v3952, 0.00390625
        %v3955 = vmul.f32 %v3953, 0.00390625
        %v3956 = vld [vmem:[%s5] sm:$0xff]
        %v3957 = vld [vmem:[%s5 + $0x8] sm:$0xff]
        %v3958 = vld [vmem:[%s5 + $0x10] sm:$0xff]
        %v3959 = vld [vmem:[%s5 + $0x18] sm:$0xff]
        %v3960 = vld [vmem:[%s5 + $0x20] sm:$0xff]
        %v3961 = vld [vmem:[%s5 + $0x28] sm:$0xff]
        %v3962 = vld [vmem:[%s5 + $0x30] sm:$0xff]
        %v3963 = vld [vmem:[%s5 + $0x38] sm:$0xff]
        %v3964 = vld [vmem:[%s6] sm:$0x1]
        %v3966 = vlaneseq
        %v3967 = vshrl.u32 %v3966, 7
        %v3968 = vsub.s32 0, %v3967
        %v3969 = vrot.slane %v3964, %v3968
        %vm3973 = vcmask 1041409
        %v3974 = vsel %vm3973, %v3955, %v3954
        %v3975 = vsel %vm408, %v3974, 0
        %3977 = vmatprep.subr.mxu0 0.0
        %3978 = vmatpush1.msra.mxu0 %v3956
        %3979 = vmatprep.subr.mxu0 0.0
        %3980 = vmatpush1.msra.mxu0 %v3957
        %3981 = vmatprep.subr.mxu0 0.0
        %3982 = vmatpush1.msra.mxu0 %v3958
        %3983 = vmatprep.subr.mxu0 0.0
        %3984 = vmatpush1.msra.mxu0 %v3959
        %3985 = vmatprep.subr.mxu0 0.0
        %3986 = vmatpush1.msra.mxu0 %v3960
        %3987 = vmatprep.subr.mxu0 0.0
        %3988 = vmatpush1.msra.mxu0 %v3961
        %3989 = vmatprep.subr.mxu0 0.0
        %3990 = vmatpush1.msra.mxu0 %v3962
        %3991 = vmatprep.subr.mxu0 0.0
        %3992 = vmatpush1.msra.mxu0 %v3963
        %3993 = vmatprep.subr.mxu0 0.0
        %3994 = vmatpush1.msra.mxu0 0.0
        %3995 = vmatprep.subr.mxu0 0.0
        %3996 = vmatpush1.msra.mxu0 0.0
        %3997 = vmatprep.subr.mxu0 0.0
        %3998 = vmatpush1.msra.mxu0 0.0
        %3999 = vmatprep.subr.mxu0 0.0
        %4000 = vmatpush1.msra.mxu0 0.0
        %4001 = vmatprep.subr.mxu0 0.0
        %4002 = vmatpush1.msra.mxu0 0.0
        %4003 = vmatprep.subr.mxu0 0.0
        %4004 = vmatpush1.msra.mxu0 0.0
        %4005 = vmatprep.subr.mxu0 0.0
        %4006 = vmatpush1.msra.mxu0 0.0
        %4007 = vmatprep.subr.mxu0 0.0
        %4008 = vmatpush1.msra.mxu0 0.0
        %4009 = vmatprep.subr.mxu0 0.0
        %4010 = vmatpush1.msra.mxu0 0.0
        %4011 = vmatprep.subr.mxu0 0.0
        %4012 = vmatpush1.msra.mxu0 0.0
        %4013 = vmatprep.subr.mxu0 0.0
        %4014 = vmatpush1.msra.mxu0 0.0
        %4015 = vmatprep.subr.mxu0 0.0
        %4016 = vmatpush1.msra.mxu0 0.0
        %4017 = vmatprep.subr.mxu0 0.0
        %4018 = vmatpush1.msra.mxu0 0.0
        %4019 = vmatprep.subr.mxu0 0.0
        %4020 = vmatpush1.msra.mxu0 0.0
        %4021 = vmatprep.subr.mxu0 0.0
        %4022 = vmatpush1.msra.mxu0 0.0
        %4023 = vmatprep.subr.mxu0 0.0
        %4024 = vmatpush1.msra.mxu0 0.0
        %4025 = vmatprep.subr.mxu0 0.0
        %4026 = vmatpush1.msra.mxu0 0.0
        %4027 = vmatprep.subr.mxu0 0.0
        %4028 = vmatpush1.msra.mxu0 0.0
        %4029 = vmatprep.subr.mxu0 0.0
        %4030 = vmatpush1.msra.mxu0 0.0
        %4031 = vmatprep.subr.mxu0 0.0
        %4032 = vmatpush1.msra.mxu0 0.0
        %4033 = vmatprep.subr.mxu0 0.0
        %4034 = vmatpush1.msra.mxu0 0.0
        %4035 = vmatprep.subr.mxu0 0.0
        %4036 = vmatpush1.msra.mxu0 0.0
        %4037 = vmatprep.subr.mxu0 0.0
        %4038 = vmatpush1.msra.mxu0 0.0
        %4039 = vmatprep.subr.mxu0 0.0
        %4040 = vmatpush1.msra.mxu0 0.0
        %4041 = vmatprep.mubr.f32.mxu0 0.0
        %4042 = vmatmul.mubr.f32.gmra.mrb[0].mxu0 %v3975
        %v4043 = vpop.f32.mrb[0].mxu0
        %v4044 = vadd.f32 %v3969, %v4043
        %v4045 = vpop.f32.mrb[0].mxu0
        %4046 = vdwg.mxu0
        %v4047 = vmax.f32 %v4044, 0.0
        %v4048 = vld [vmem:[%s7] sm:$0xff]
        %v4049 = vld [vmem:[%s8] sm:$0x1]
        %v4051 = vlaneseq
        %v4052 = vshrl.u32 %v4051, 7
        %v4053 = vsub.s32 0, %v4052
        %v4054 = vrot.slane %v4049, %v4053
        %vm4056 = vcmask 64512
        %v4058 = vsel %vm4056, %v4047, 0
        %4060 = vmatprep.subr.mxu0 0.0
        %4061 = vmatpush1.msra.mxu0 %v4048
        %4062 = vmatprep.subr.mxu0 0.0
        %4063 = vmatpush1.msra.mxu0 0.0
        %4064 = vmatprep.subr.mxu0 0.0
        %4065 = vmatpush1.msra.mxu0 0.0
        %4066 = vmatprep.subr.mxu0 0.0
        %4067 = vmatpush1.msra.mxu0 0.0
        %4068 = vmatprep.subr.mxu0 0.0
        %4069 = vmatpush1.msra.mxu0 0.0
        %4070 = vmatprep.subr.mxu0 0.0
        %4071 = vmatpush1.msra.mxu0 0.0
        %4072 = vmatprep.subr.mxu0 0.0
        %4073 = vmatpush1.msra.mxu0 0.0
        %4074 = vmatprep.subr.mxu0 0.0
        %4075 = vmatpush1.msra.mxu0 0.0
        %4076 = vmatprep.subr.mxu0 0.0
        %4077 = vmatpush1.msra.mxu0 0.0
        %4078 = vmatprep.subr.mxu0 0.0
        %4079 = vmatpush1.msra.mxu0 0.0
        %4080 = vmatprep.subr.mxu0 0.0
        %4081 = vmatpush1.msra.mxu0 0.0
        %4082 = vmatprep.subr.mxu0 0.0
        %4083 = vmatpush1.msra.mxu0 0.0
        %4084 = vmatprep.subr.mxu0 0.0
        %4085 = vmatpush1.msra.mxu0 0.0
        %4086 = vmatprep.subr.mxu0 0.0
        %4087 = vmatpush1.msra.mxu0 0.0
        %4088 = vmatprep.subr.mxu0 0.0
        %4089 = vmatpush1.msra.mxu0 0.0
        %4090 = vmatprep.subr.mxu0 0.0
        %4091 = vmatpush1.msra.mxu0 0.0
        %4092 = vmatprep.subr.mxu0 0.0
        %4093 = vmatpush1.msra.mxu0 0.0
        %4094 = vmatprep.subr.mxu0 0.0
        %4095 = vmatpush1.msra.mxu0 0.0
        %4096 = vmatprep.subr.mxu0 0.0
        %4097 = vmatpush1.msra.mxu0 0.0
        %4098 = vmatprep.subr.mxu0 0.0
        %4099 = vmatpush1.msra.mxu0 0.0
        %4100 = vmatprep.subr.mxu0 0.0
        %4101 = vmatpush1.msra.mxu0 0.0
        %4102 = vmatprep.subr.mxu0 0.0
        %4103 = vmatpush1.msra.mxu0 0.0
        %4104 = vmatprep.subr.mxu0 0.0
        %4105 = vmatpush1.msra.mxu0 0.0
        %4106 = vmatprep.subr.mxu0 0.0
        %4107 = vmatpush1.msra.mxu0 0.0
        %4108 = vmatprep.subr.mxu0 0.0
        %4109 = vmatpush1.msra.mxu0 0.0
        %4110 = vmatprep.subr.mxu0 0.0
        %4111 = vmatpush1.msra.mxu0 0.0
        %4112 = vmatprep.subr.mxu0 0.0
        %4113 = vmatpush1.msra.mxu0 0.0
        %4114 = vmatprep.subr.mxu0 0.0
        %4115 = vmatpush1.msra.mxu0 0.0
        %4116 = vmatprep.subr.mxu0 0.0
        %4117 = vmatpush1.msra.mxu0 0.0
        %4118 = vmatprep.subr.mxu0 0.0
        %4119 = vmatpush1.msra.mxu0 0.0
        %4120 = vmatprep.subr.mxu0 0.0
        %4121 = vmatpush1.msra.mxu0 0.0
        %4122 = vmatprep.subr.mxu0 0.0
        %4123 = vmatpush1.msra.mxu0 0.0
        %4124 = vmatprep.mubr.f32.mxu0 0.0
        %4125 = vmatmul.mubr.f32.gmra.mrb[0].mxu0 %v4058
        %v4126 = vpop.f32.mrb[0].mxu0
        %v4127 = vadd.f32 %v4054, %v4126
        %v4128 = vpop.f32.mrb[0].mxu0
        %4129 = vdwg.mxu0
        %v4130 = vadd.f32 %v4127, 3.0
        %v4131 = vmax.f32 %v4130, 0.0
        %v4132 = vmin.f32 %v4131, 6.0
        %v4133 = vmul.f32 %v4132, 0.16666667
        %v4134 = vld [vmem:[#allocation3] sm:$0xff]
        %v4135 = vld [vmem:[#allocation3 + $0x8] sm:$0xff]
        %v4136 = vld [vmem:[#allocation3 + $0x10] sm:$0xff]
        %v4137 = vld [vmem:[#allocation3 + $0x18] sm:$0xff]
        %v4138 = vld [vmem:[#allocation3 + $0x20] sm:$0xff]
        %v4139 = vld [vmem:[#allocation3 + $0x28] sm:$0xff]
        %v4140 = vld [vmem:[#allocation3 + $0x30] sm:$0xff]
        %v4141 = vld [vmem:[#allocation3 + $0x38] sm:$0xff]
        %v4142 = vld [vmem:[#allocation3 + $0x100] sm:$0xff]
        %v4143 = vld [vmem:[#allocation3 + $0x108] sm:$0xff]
        %v4144 = vld [vmem:[#allocation3 + $0x110] sm:$0xff]
        %v4145 = vld [vmem:[#allocation3 + $0x118] sm:$0xff]
        %v4146 = vld [vmem:[#allocation3 + $0x120] sm:$0xff]
        %v4147 = vld [vmem:[#allocation3 + $0x128] sm:$0xff]
        %v4148 = vld [vmem:[#allocation3 + $0x130] sm:$0xff]
        %v4149 = vld [vmem:[#allocation3 + $0x138] sm:$0xff]
        %v4152 = vunpack.c.l.s4 1966171168
        %v4153 = vunpack.c.0.s8 %v4152
        %v4154 = vlaneseq
        %v4155 = vshrl.u32 %v4154, 7
        %v4156 = vsub.s32 %v4153, %v4155
        %v4157 = vrot.slane %v4133, %v4156
        %v4158 = vcombine.high %v4157, %v4157
        %v4160 = vunpack.c.l.s4 1966171168
        %v4161 = vunpack.c.0.s8 %v4160
        %v4162 = vlaneseq
        %v4163 = vshrl.u32 %v4162, 7
        %v4164 = vsub.s32 %v4161, %v4163
        %v4165 = vrot.slane %v4157, %v4164
        %v4167 = vunpack.c.l.s4 1966171168
        %v4168 = vunpack.c.0.s8 %v4167
        %v4169 = vlaneseq
        %v4170 = vshrl.u32 %v4169, 7
        %v4171 = vsub.s32 %v4168, %v4170
        %v4172 = vrot.slane %v4158, %v4171
        %v4173 = vlaneseq
        %v4174 = vshrl.u32 %v4173, 7
        %v4175 = vsub.s32 0, %v4174
        %v4176 = vrot.slane %v4165, %v4175
        %v4177 = vlaneseq
        %v4178 = vshrl.u32 %v4177, 7
        %v4179 = vsub.s32 0, %v4178
        %v4180 = vrot.slane %v4172, %v4179
        %v4183 = vmul.f32 %v4134, %v4176
        %v4184 = vmul.f32 %v4135, %v4176
        %v4185 = vmul.f32 %v4136, %v4176
        %v4186 = vmul.f32 %v4137, %v4176
        %v4187 = vmul.f32 %v4138, %v4176
        %v4188 = vmul.f32 %v4139, %v4176
        %v4189 = vmul.f32 %v4140, %v4176
        %v4190 = vmul.f32 %v4141, %v4176
        %v4191 = vmul.f32 %v4142, %v4180
        %v4192 = vmul.f32 %v4143, %v4180
        %v4193 = vmul.f32 %v4144, %v4180
        %v4194 = vmul.f32 %v4145, %v4180
        %v4195 = vmul.f32 %v4146, %v4180
        %v4196 = vmul.f32 %v4147, %v4180
        %v4197 = vmul.f32 %v4148, %v4180
        %v4198 = vmul.f32 %v4149, %v4180
        %v4199 = vadd.f32 %v4183, 3.0
        %v4200 = vadd.f32 %v4184, 3.0
        %v4201 = vadd.f32 %v4185, 3.0
        %v4202 = vadd.f32 %v4186, 3.0
        %v4203 = vadd.f32 %v4187, 3.0
        %v4204 = vadd.f32 %v4188, 3.0
        %v4205 = vadd.f32 %v4189, 3.0
        %v4206 = vadd.f32 %v4190, 3.0
        %v4207 = vadd.f32 %v4191, 3.0
        %v4208 = vadd.f32 %v4192, 3.0
        %v4209 = vadd.f32 %v4193, 3.0
        %v4210 = vadd.f32 %v4194, 3.0
        %v4211 = vadd.f32 %v4195, 3.0
        %v4212 = vadd.f32 %v4196, 3.0
        %v4213 = vadd.f32 %v4197, 3.0
        %v4214 = vadd.f32 %v4198, 3.0
        %v4215 = vmax.f32 %v4199, 0.0
        %v4216 = vmax.f32 %v4200, 0.0
        %v4217 = vmax.f32 %v4201, 0.0
        %v4218 = vmax.f32 %v4202, 0.0
        %v4219 = vmax.f32 %v4203, 0.0
        %v4220 = vmax.f32 %v4204, 0.0
        %v4221 = vmax.f32 %v4205, 0.0
        %v4222 = vmax.f32 %v4206, 0.0
        %v4223 = vmax.f32 %v4207, 0.0
        %v4224 = vmax.f32 %v4208, 0.0
        %v4225 = vmax.f32 %v4209, 0.0
        %v4226 = vmax.f32 %v4210, 0.0
        %v4227 = vmax.f32 %v4211, 0.0
        %v4228 = vmax.f32 %v4212, 0.0
        %v4229 = vmax.f32 %v4213, 0.0
        %v4230 = vmax.f32 %v4214, 0.0
        %v4231 = vmin.f32 %v4215, 6.0
        %v4232 = vmin.f32 %v4216, 6.0
        %v4233 = vmin.f32 %v4217, 6.0
        %v4234 = vmin.f32 %v4218, 6.0
        %v4235 = vmin.f32 %v4219, 6.0
        %v4236 = vmin.f32 %v4220, 6.0
        %v4237 = vmin.f32 %v4221, 6.0
        %v4238 = vmin.f32 %v4222, 6.0
        %v4239 = vmin.f32 %v4223, 6.0
        %v4240 = vmin.f32 %v4224, 6.0
        %v4241 = vmin.f32 %v4225, 6.0
        %v4242 = vmin.f32 %v4226, 6.0
        %v4243 = vmin.f32 %v4227, 6.0
        %v4244 = vmin.f32 %v4228, 6.0
        %v4245 = vmin.f32 %v4229, 6.0
        %v4246 = vmin.f32 %v4230, 6.0
        %v4247 = vmul.f32 %v4231, 0.16666667
        %v4248 = vmul.f32 %v4232, 0.16666667
        %v4249 = vmul.f32 %v4233, 0.16666667
        %v4250 = vmul.f32 %v4234, 0.16666667
        %v4251 = vmul.f32 %v4235, 0.16666667
        %v4252 = vmul.f32 %v4236, 0.16666667
        %v4253 = vmul.f32 %v4237, 0.16666667
        %v4254 = vmul.f32 %v4238, 0.16666667
        %v4255 = vmul.f32 %v4239, 0.16666667
        %v4256 = vmul.f32 %v4240, 0.16666667
        %v4257 = vmul.f32 %v4241, 0.16666667
        %v4258 = vmul.f32 %v4242, 0.16666667
        %v4259 = vmul.f32 %v4243, 0.16666667
        %v4260 = vmul.f32 %v4244, 0.16666667
        %v4261 = vmul.f32 %v4245, 0.16666667
        %v4262 = vmul.f32 %v4246, 0.16666667
        %v4263 = vmul.f32 %v4183, %v4247
        %v4264 = vmul.f32 %v4184, %v4248
        %v4265 = vmul.f32 %v4185, %v4249
        %v4266 = vmul.f32 %v4186, %v4250
        %v4267 = vmul.f32 %v4187, %v4251
        %v4268 = vmul.f32 %v4188, %v4252
        %v4269 = vmul.f32 %v4189, %v4253
        %v4270 = vmul.f32 %v4190, %v4254
        %v4271 = vmul.f32 %v4191, %v4255
        %v4272 = vmul.f32 %v4192, %v4256
        %v4273 = vmul.f32 %v4193, %v4257
        %v4274 = vmul.f32 %v4194, %v4258
        %v4275 = vmul.f32 %v4195, %v4259
        %v4276 = vmul.f32 %v4196, %v4260
        %v4277 = vmul.f32 %v4197, %v4261
        %v4278 = vmul.f32 %v4198, %v4262
        %v4279 = vld [vmem:[%s9] sm:$0xff]
        %v4280 = vld [vmem:[%s9 + $0x8] sm:$0xff]
        %v4281 = vld [vmem:[%s9 + $0x10] sm:$0xff]
        %v4282 = vld [vmem:[%s9 + $0x18] sm:$0xff]
        %v4283 = vld [vmem:[%s9 + $0x20] sm:$0xff]
        %v4284 = vld [vmem:[%s9 + $0x28] sm:$0xff]
        %v4285 = vld [vmem:[%s9 + $0x30] sm:$0xff]
        %v4286 = vld [vmem:[%s9 + $0x38] sm:$0xff]
        %v4287 = vld [vmem:[%s10] sm:$0x1]
        %v4289 = vlaneseq
        %v4290 = vshrl.u32 %v4289, 7
        %v4291 = vsub.s32 0, %v4290
        %v4292 = vrot.slane %v4287, %v4291
        %v4295 = vsel %vm408, %v4263, 0
        %v4298 = vsel %vm408, %v4264, 0
        %v4301 = vsel %vm408, %v4265, 0
        %v4304 = vsel %vm408, %v4266, 0
        %v4307 = vsel %vm408, %v4267, 0
        %v4310 = vsel %vm408, %v4268, 0
        %v4313 = vsel %vm408, %v4269, 0
        %v4316 = vsel %vm408, %v4270, 0
        %v4319 = vsel %vm408, %v4271, 0
        %v4322 = vsel %vm408, %v4272, 0
        %v4325 = vsel %vm408, %v4273, 0
        %v4328 = vsel %vm408, %v4274, 0
        %v4331 = vsel %vm408, %v4275, 0
        %v4334 = vsel %vm408, %v4276, 0
        %v4337 = vsel %vm408, %v4277, 0
        %v4340 = vsel %vm408, %v4278, 0
        %4342 = vmatprep.subr.mxu0 0.0
        %4343 = vmatpush1.msra.mxu0 %v4279
        %4344 = vmatprep.subr.mxu0 0.0
        %4345 = vmatpush1.msra.mxu0 %v4280
        %4346 = vmatprep.subr.mxu0 0.0
        %4347 = vmatpush1.msra.mxu0 %v4281
        %4348 = vmatprep.subr.mxu0 0.0
        %4349 = vmatpush1.msra.mxu0 %v4282
        %4350 = vmatprep.subr.mxu0 0.0
        %4351 = vmatpush1.msra.mxu0 %v4283
        %4352 = vmatprep.subr.mxu0 0.0
        %4353 = vmatpush1.msra.mxu0 %v4284
        %4354 = vmatprep.subr.mxu0 0.0
        %4355 = vmatpush1.msra.mxu0 %v4285
        %4356 = vmatprep.subr.mxu0 0.0
        %4357 = vmatpush1.msra.mxu0 %v4286
        %4358 = vmatprep.subr.mxu0 0.0
        %4359 = vmatpush1.msra.mxu0 0.0
        %4360 = vmatprep.subr.mxu0 0.0
        %4361 = vmatpush1.msra.mxu0 0.0
        %4362 = vmatprep.subr.mxu0 0.0
        %4363 = vmatpush1.msra.mxu0 0.0
        %4364 = vmatprep.subr.mxu0 0.0
        %4365 = vmatpush1.msra.mxu0 0.0
        %4366 = vmatprep.subr.mxu0 0.0
        %4367 = vmatpush1.msra.mxu0 0.0
        %4368 = vmatprep.subr.mxu0 0.0
        %4369 = vmatpush1.msra.mxu0 0.0
        %4370 = vmatprep.subr.mxu0 0.0
        %4371 = vmatpush1.msra.mxu0 0.0
        %4372 = vmatprep.subr.mxu0 0.0
        %4373 = vmatpush1.msra.mxu0 0.0
        %4374 = vmatprep.subr.mxu0 0.0
        %4375 = vmatpush1.msra.mxu0 0.0
        %4376 = vmatprep.subr.mxu0 0.0
        %4377 = vmatpush1.msra.mxu0 0.0
        %4378 = vmatprep.subr.mxu0 0.0
        %4379 = vmatpush1.msra.mxu0 0.0
        %4380 = vmatprep.subr.mxu0 0.0
        %4381 = vmatpush1.msra.mxu0 0.0
        %4382 = vmatprep.subr.mxu0 0.0
        %4383 = vmatpush1.msra.mxu0 0.0
        %4384 = vmatprep.subr.mxu0 0.0
        %4385 = vmatpush1.msra.mxu0 0.0
        %4386 = vmatprep.subr.mxu0 0.0
        %4387 = vmatpush1.msra.mxu0 0.0
        %4388 = vmatprep.subr.mxu0 0.0
        %4389 = vmatpush1.msra.mxu0 0.0
        %4390 = vmatprep.subr.mxu0 0.0
        %4391 = vmatpush1.msra.mxu0 0.0
        %4392 = vmatprep.subr.mxu0 0.0
        %4393 = vmatpush1.msra.mxu0 0.0
        %4394 = vmatprep.subr.mxu0 0.0
        %4395 = vmatpush1.msra.mxu0 0.0
        %4396 = vmatprep.subr.mxu0 0.0
        %4397 = vmatpush1.msra.mxu0 0.0
        %4398 = vmatprep.subr.mxu0 0.0
        %4399 = vmatpush1.msra.mxu0 0.0
        %4400 = vmatprep.subr.mxu0 0.0
        %4401 = vmatpush1.msra.mxu0 0.0
        %4402 = vmatprep.subr.mxu0 0.0
        %4403 = vmatpush1.msra.mxu0 0.0
        %4404 = vmatprep.subr.mxu0 0.0
        %4405 = vmatpush1.msra.mxu0 0.0
        %4406 = vmatprep.mubr.f32.mxu0 0.0
        %4407 = vmatmul.mubr.f32.gmra.mrb[0].mxu0 %v4295
        %v4408 = vpop.f32.mrb[0].mxu0
        %v4409 = vadd.f32 %v4292, %v4408
        %v4410 = vpop.f32.mrb[0].mxu0
        %4411 = vmatprep.mubr.f32.mxu0 0.0
        %4412 = vmatmul.mubr.f32.gmra.mrb[0].mxu0 %v4298
        %v4413 = vpop.f32.mrb[0].mxu0
        %v4414 = vadd.f32 %v4292, %v4413
        %v4415 = vpop.f32.mrb[0].mxu0
        %4416 = vmatprep.mubr.f32.mxu0 0.0
        %4417 = vmatmul.mubr.f32.gmra.mrb[0].mxu0 %v4301
        %v4418 = vpop.f32.mrb[0].mxu0
        %v4419 = vadd.f32 %v4292, %v4418
        %v4420 = vpop.f32.mrb[0].mxu0
        %4421 = vmatprep.mubr.f32.mxu0 0.0
        %4422 = vmatmul.mubr.f32.gmra.mrb[0].mxu0 %v4304
        %v4423 = vpop.f32.mrb[0].mxu0
        %v4424 = vadd.f32 %v4292, %v4423
        %v4425 = vpop.f32.mrb[0].mxu0
        %4426 = vmatprep.mubr.f32.mxu0 0.0
        %4427 = vmatmul.mubr.f32.gmra.mrb[0].mxu0 %v4307
        %v4428 = vpop.f32.mrb[0].mxu0
        %v4429 = vadd.f32 %v4292, %v4428
        %v4430 = vpop.f32.mrb[0].mxu0
        %4431 = vmatprep.mubr.f32.mxu0 0.0
        %4432 = vmatmul.mubr.f32.gmra.mrb[0].mxu0 %v4310
        %v4433 = vpop.f32.mrb[0].mxu0
        %v4434 = vadd.f32 %v4292, %v4433
        %v4435 = vpop.f32.mrb[0].mxu0
        %4436 = vmatprep.mubr.f32.mxu0 0.0
        %4437 = vmatmul.mubr.f32.gmra.mrb[0].mxu0 %v4313
        %v4438 = vpop.f32.mrb[0].mxu0
        %v4439 = vadd.f32 %v4292, %v4438
        %v4440 = vpop.f32.mrb[0].mxu0
        %4441 = vmatprep.mubr.f32.mxu0 0.0
        %4442 = vmatmul.mubr.f32.gmra.mrb[0].mxu0 %v4316
        %v4443 = vpop.f32.mrb[0].mxu0
        %v4444 = vadd.f32 %v4292, %v4443
        %v4445 = vpop.f32.mrb[0].mxu0
        %4446 = vmatprep.mubr.f32.mxu0 0.0
        %4447 = vmatmul.mubr.f32.gmra.mrb[0].mxu0 %v4319
        %v4448 = vpop.f32.mrb[0].mxu0
        %v4449 = vadd.f32 %v4292, %v4448
        %v4450 = vpop.f32.mrb[0].mxu0
        %4451 = vmatprep.mubr.f32.mxu0 0.0
        %4452 = vmatmul.mubr.f32.gmra.mrb[0].mxu0 %v4322
        %v4453 = vpop.f32.mrb[0].mxu0
        %v4454 = vadd.f32 %v4292, %v4453
        %v4455 = vpop.f32.mrb[0].mxu0
        %4456 = vmatprep.mubr.f32.mxu0 0.0
        %4457 = vmatmul.mubr.f32.gmra.mrb[0].mxu0 %v4325
        %v4458 = vpop.f32.mrb[0].mxu0
        %v4459 = vadd.f32 %v4292, %v4458
        %v4460 = vpop.f32.mrb[0].mxu0
        %4461 = vmatprep.mubr.f32.mxu0 0.0
        %4462 = vmatmul.mubr.f32.gmra.mrb[0].mxu0 %v4328
        %v4463 = vpop.f32.mrb[0].mxu0
        %v4464 = vadd.f32 %v4292, %v4463
        %v4465 = vpop.f32.mrb[0].mxu0
        %4466 = vmatprep.mubr.f32.mxu0 0.0
        %4467 = vmatmul.mubr.f32.gmra.mrb[0].mxu0 %v4331
        %v4468 = vpop.f32.mrb[0].mxu0
        %v4469 = vadd.f32 %v4292, %v4468
        %v4470 = vpop.f32.mrb[0].mxu0
        %4471 = vmatprep.mubr.f32.mxu0 0.0
        %4472 = vmatmul.mubr.f32.gmra.mrb[0].mxu0 %v4334
        %v4473 = vpop.f32.mrb[0].mxu0
        %v4474 = vadd.f32 %v4292, %v4473
        %v4475 = vpop.f32.mrb[0].mxu0
        %4476 = vmatprep.mubr.f32.mxu0 0.0
        %4477 = vmatmul.mubr.f32.gmra.mrb[0].mxu0 %v4337
        %v4478 = vpop.f32.mrb[0].mxu0
        %v4479 = vadd.f32 %v4292, %v4478
        %v4480 = vpop.f32.mrb[0].mxu0
        %4481 = vmatprep.mubr.f32.mxu0 0.0
        %4482 = vmatmul.mubr.f32.gmra.mrb[0].mxu0 %v4340
        %v4483 = vpop.f32.mrb[0].mxu0
        %v4484 = vadd.f32 %v4292, %v4483
        %v4485 = vpop.f32.mrb[0].mxu0
        %4486 = vdwg.mxu0
        %v4487 = vld [vmem:[%s367] sm:$0xff]
        %v4488 = vld [vmem:[%s367 + $0x8] sm:$0xff]
        %v4489 = vld [vmem:[%s367 + $0x10] sm:$0xff]
        %v4490 = vld [vmem:[%s367 + $0x18] sm:$0xff]
        %v4491 = vld [vmem:[%s367 + $0x20] sm:$0xff]
        %v4492 = vld [vmem:[%s367 + $0x28] sm:$0xff]
        %v4493 = vld [vmem:[%s367 + $0x30] sm:$0xff]
        %v4494 = vld [vmem:[%s367 + $0x38] sm:$0xff]
        %v4495 = vld [vmem:[%s367 + $0x100] sm:$0xff]
        %v4496 = vld [vmem:[%s367 + $0x108] sm:$0xff]
        %v4497 = vld [vmem:[%s367 + $0x110] sm:$0xff]
        %v4498 = vld [vmem:[%s367 + $0x118] sm:$0xff]
        %v4499 = vld [vmem:[%s367 + $0x120] sm:$0xff]
        %v4500 = vld [vmem:[%s367 + $0x128] sm:$0xff]
        %v4501 = vld [vmem:[%s367 + $0x130] sm:$0xff]
        %v4502 = vld [vmem:[%s367 + $0x138] sm:$0xff]
        %v4503 = vadd.f32 %v4409, %v4487
        %v4504 = vadd.f32 %v4414, %v4488
        %v4505 = vadd.f32 %v4419, %v4489
        %v4506 = vadd.f32 %v4424, %v4490
        %v4507 = vadd.f32 %v4429, %v4491
        %v4508 = vadd.f32 %v4434, %v4492
        %v4509 = vadd.f32 %v4439, %v4493
        %v4510 = vadd.f32 %v4444, %v4494
        %v4511 = vadd.f32 %v4449, %v4495
        %v4512 = vadd.f32 %v4454, %v4496
        %v4513 = vadd.f32 %v4459, %v4497
        %v4514 = vadd.f32 %v4464, %v4498
        %v4515 = vadd.f32 %v4469, %v4499
        %v4516 = vadd.f32 %v4474, %v4500
        %v4517 = vadd.f32 %v4479, %v4501
        %v4518 = vadd.f32 %v4484, %v4502
        %4519 = vst.msk [vmem:[%s405] sm:$0xff] %vm514, %v4503
        %4520 = vst.msk [vmem:[%s405 + $0x8] sm:$0xff] %vm514, %v4504
        %4521 = vst.msk [vmem:[%s405 + $0x10] sm:$0xff] %vm514, %v4505
        %4522 = vst.msk [vmem:[%s405 + $0x18] sm:$0xff] %vm514, %v4506
        %4523 = vst.msk [vmem:[%s405 + $0x20] sm:$0xff] %vm514, %v4507
        %4524 = vst.msk [vmem:[%s405 + $0x28] sm:$0xff] %vm514, %v4508
        %4525 = vst.msk [vmem:[%s405 + $0x30] sm:$0xff] %vm514, %v4509
        %4526 = vst.msk [vmem:[%s405 + $0x38] sm:$0xff] %vm514, %v4510
        %4527 = vst.msk [vmem:[%s405 + $0x100] sm:$0xff] %vm514, %v4511
        %4528 = vst.msk [vmem:[%s405 + $0x108] sm:$0xff] %vm514, %v4512
        %4529 = vst.msk [vmem:[%s405 + $0x110] sm:$0xff] %vm514, %v4513
        %4530 = vst.msk [vmem:[%s405 + $0x118] sm:$0xff] %vm514, %v4514
        %4531 = vst.msk [vmem:[%s405 + $0x120] sm:$0xff] %vm514, %v4515
        %4532 = vst.msk [vmem:[%s405 + $0x128] sm:$0xff] %vm514, %v4516
        %4533 = vst.msk [vmem:[%s405 + $0x130] sm:$0xff] %vm514, %v4517
        %4534 = vst.msk [vmem:[%s405 + $0x138] sm:$0xff] %vm514, %v4518
        %v4535 = vld [vmem:[%s2787] sm:$0xff]
        %v4536 = vld [vmem:[%s2787 + $0x8] sm:$0xff]
        %v4537 = vld [vmem:[%s2787 + $0x10] sm:$0xff]
        %v4538 = vld [vmem:[%s2787 + $0x18] sm:$0xff]
        %v4539 = vld [vmem:[%s2787 + $0x20] sm:$0xff]
        %v4540 = vld [vmem:[%s2787 + $0x28] sm:$0xff]
        %v4541 = vld [vmem:[%s2787 + $0x30] sm:$0xff]
        %v4542 = vld [vmem:[%s2787 + $0x38] sm:$0xff]
        %v4543 = vld [vmem:[%s2787 + $0x100] sm:$0xff]
        %v4544 = vld [vmem:[%s2787 + $0x108] sm:$0xff]
        %v4545 = vld [vmem:[%s2787 + $0x110] sm:$0xff]
        %v4546 = vld [vmem:[%s2787 + $0x118] sm:$0xff]
        %v4547 = vld [vmem:[%s2787 + $0x120] sm:$0xff]
        %v4548 = vld [vmem:[%s2787 + $0x128] sm:$0xff]
        %v4549 = vld [vmem:[%s2787 + $0x130] sm:$0xff]
        %v4550 = vld [vmem:[%s2787 + $0x138] sm:$0xff]
        %v4551 = vmul.f32 %v4535, %v4176
        %v4552 = vmul.f32 %v4536, %v4176
        %v4553 = vmul.f32 %v4537, %v4176
        %v4554 = vmul.f32 %v4538, %v4176
        %v4555 = vmul.f32 %v4539, %v4176
        %v4556 = vmul.f32 %v4540, %v4176
        %v4557 = vmul.f32 %v4541, %v4176
        %v4558 = vmul.f32 %v4542, %v4176
        %v4559 = vmul.f32 %v4543, %v4180
        %v4560 = vmul.f32 %v4544, %v4180
        %v4561 = vmul.f32 %v4545, %v4180
        %v4562 = vmul.f32 %v4546, %v4180
        %v4563 = vmul.f32 %v4547, %v4180
        %v4564 = vmul.f32 %v4548, %v4180
        %v4565 = vmul.f32 %v4549, %v4180
        %v4566 = vmul.f32 %v4550, %v4180
        %v4567 = vadd.f32 %v4551, 3.0
        %v4568 = vadd.f32 %v4552, 3.0
        %v4569 = vadd.f32 %v4553, 3.0
        %v4570 = vadd.f32 %v4554, 3.0
        %v4571 = vadd.f32 %v4555, 3.0
        %v4572 = vadd.f32 %v4556, 3.0
        %v4573 = vadd.f32 %v4557, 3.0
        %v4574 = vadd.f32 %v4558, 3.0
        %v4575 = vadd.f32 %v4559, 3.0
        %v4576 = vadd.f32 %v4560, 3.0
        %v4577 = vadd.f32 %v4561, 3.0
        %v4578 = vadd.f32 %v4562, 3.0
        %v4579 = vadd.f32 %v4563, 3.0
        %v4580 = vadd.f32 %v4564, 3.0
        %v4581 = vadd.f32 %v4565, 3.0
        %v4582 = vadd.f32 %v4566, 3.0
        %v4583 = vmax.f32 %v4567, 0.0
        %v4584 = vmax.f32 %v4568, 0.0
        %v4585 = vmax.f32 %v4569, 0.0
        %v4586 = vmax.f32 %v4570, 0.0
        %v4587 = vmax.f32 %v4571, 0.0
        %v4588 = vmax.f32 %v4572, 0.0
        %v4589 = vmax.f32 %v4573, 0.0
        %v4590 = vmax.f32 %v4574, 0.0
        %v4591 = vmax.f32 %v4575, 0.0
        %v4592 = vmax.f32 %v4576, 0.0
        %v4593 = vmax.f32 %v4577, 0.0
        %v4594 = vmax.f32 %v4578, 0.0
        %v4595 = vmax.f32 %v4579, 0.0
        %v4596 = vmax.f32 %v4580, 0.0
        %v4597 = vmax.f32 %v4581, 0.0
        %v4598 = vmax.f32 %v4582, 0.0
        %v4599 = vmin.f32 %v4583, 6.0
        %v4600 = vmin.f32 %v4584, 6.0
        %v4601 = vmin.f32 %v4585, 6.0
        %v4602 = vmin.f32 %v4586, 6.0
        %v4603 = vmin.f32 %v4587, 6.0
        %v4604 = vmin.f32 %v4588, 6.0
        %v4605 = vmin.f32 %v4589, 6.0
        %v4606 = vmin.f32 %v4590, 6.0
        %v4607 = vmin.f32 %v4591, 6.0
        %v4608 = vmin.f32 %v4592, 6.0
        %v4609 = vmin.f32 %v4593, 6.0
        %v4610 = vmin.f32 %v4594, 6.0
        %v4611 = vmin.f32 %v4595, 6.0
        %v4612 = vmin.f32 %v4596, 6.0
        %v4613 = vmin.f32 %v4597, 6.0
        %v4614 = vmin.f32 %v4598, 6.0
        %v4615 = vmul.f32 %v4599, 0.16666667
        %v4616 = vmul.f32 %v4600, 0.16666667
        %v4617 = vmul.f32 %v4601, 0.16666667
        %v4618 = vmul.f32 %v4602, 0.16666667
        %v4619 = vmul.f32 %v4603, 0.16666667
        %v4620 = vmul.f32 %v4604, 0.16666667
        %v4621 = vmul.f32 %v4605, 0.16666667
        %v4622 = vmul.f32 %v4606, 0.16666667
        %v4623 = vmul.f32 %v4607, 0.16666667
        %v4624 = vmul.f32 %v4608, 0.16666667
        %v4625 = vmul.f32 %v4609, 0.16666667
        %v4626 = vmul.f32 %v4610, 0.16666667
        %v4627 = vmul.f32 %v4611, 0.16666667
        %v4628 = vmul.f32 %v4612, 0.16666667
        %v4629 = vmul.f32 %v4613, 0.16666667
        %v4630 = vmul.f32 %v4614, 0.16666667
        %v4631 = vmul.f32 %v4551, %v4615
        %v4632 = vmul.f32 %v4552, %v4616
        %v4633 = vmul.f32 %v4553, %v4617
        %v4634 = vmul.f32 %v4554, %v4618
        %v4635 = vmul.f32 %v4555, %v4619
        %v4636 = vmul.f32 %v4556, %v4620
        %v4637 = vmul.f32 %v4557, %v4621
        %v4638 = vmul.f32 %v4558, %v4622
        %v4639 = vmul.f32 %v4559, %v4623
        %v4640 = vmul.f32 %v4560, %v4624
        %v4641 = vmul.f32 %v4561, %v4625
        %v4642 = vmul.f32 %v4562, %v4626
        %v4643 = vmul.f32 %v4563, %v4627
        %v4644 = vmul.f32 %v4564, %v4628
        %v4645 = vmul.f32 %v4565, %v4629
        %v4646 = vmul.f32 %v4566, %v4630
        %v4647 = vld [vmem:[%s9] sm:$0xff]
        %v4648 = vld [vmem:[%s9 + $0x8] sm:$0xff]
        %v4649 = vld [vmem:[%s9 + $0x10] sm:$0xff]
        %v4650 = vld [vmem:[%s9 + $0x18] sm:$0xff]
        %v4651 = vld [vmem:[%s9 + $0x20] sm:$0xff]
        %v4652 = vld [vmem:[%s9 + $0x28] sm:$0xff]
        %v4653 = vld [vmem:[%s9 + $0x30] sm:$0xff]
        %v4654 = vld [vmem:[%s9 + $0x38] sm:$0xff]
        %v4655 = vld [vmem:[%s10] sm:$0x1]
        %v4657 = vlaneseq
        %v4658 = vshrl.u32 %v4657, 7
        %v4659 = vsub.s32 0, %v4658
        %v4660 = vrot.slane %v4655, %v4659
        %v4663 = vsel %vm408, %v4631, 0
        %v4666 = vsel %vm408, %v4632, 0
        %v4669 = vsel %vm408, %v4633, 0
        %v4672 = vsel %vm408, %v4634, 0
        %v4675 = vsel %vm408, %v4635, 0
        %v4678 = vsel %vm408, %v4636, 0
        %v4681 = vsel %vm408, %v4637, 0
        %v4684 = vsel %vm408, %v4638, 0
        %v4687 = vsel %vm408, %v4639, 0
        %v4690 = vsel %vm408, %v4640, 0
        %v4693 = vsel %vm408, %v4641, 0
        %v4696 = vsel %vm408, %v4642, 0
        %v4699 = vsel %vm408, %v4643, 0
        %v4702 = vsel %vm408, %v4644, 0
        %v4705 = vsel %vm408, %v4645, 0
        %v4708 = vsel %vm408, %v4646, 0
        %4710 = vmatprep.subr.mxu0 0.0
        %4711 = vmatpush1.msra.mxu0 %v4647
        %4712 = vmatprep.subr.mxu0 0.0
        %4713 = vmatpush1.msra.mxu0 %v4648
        %4714 = vmatprep.subr.mxu0 0.0
        %4715 = vmatpush1.msra.mxu0 %v4649
        %4716 = vmatprep.subr.mxu0 0.0
        %4717 = vmatpush1.msra.mxu0 %v4650
        %4718 = vmatprep.subr.mxu0 0.0
        %4719 = vmatpush1.msra.mxu0 %v4651
        %4720 = vmatprep.subr.mxu0 0.0
        %4721 = vmatpush1.msra.mxu0 %v4652
        %4722 = vmatprep.subr.mxu0 0.0
        %4723 = vmatpush1.msra.mxu0 %v4653
        %4724 = vmatprep.subr.mxu0 0.0
        %4725 = vmatpush1.msra.mxu0 %v4654
        %4726 = vmatprep.subr.mxu0 0.0
        %4727 = vmatpush1.msra.mxu0 0.0
        %4728 = vmatprep.subr.mxu0 0.0
        %4729 = vmatpush1.msra.mxu0 0.0
        %4730 = vmatprep.subr.mxu0 0.0
        %4731 = vmatpush1.msra.mxu0 0.0
        %4732 = vmatprep.subr.mxu0 0.0
        %4733 = vmatpush1.msra.mxu0 0.0
        %4734 = vmatprep.subr.mxu0 0.0
        %4735 = vmatpush1.msra.mxu0 0.0
        %4736 = vmatprep.subr.mxu0 0.0
        %4737 = vmatpush1.msra.mxu0 0.0
        %4738 = vmatprep.subr.mxu0 0.0
        %4739 = vmatpush1.msra.mxu0 0.0
        %4740 = vmatprep.subr.mxu0 0.0
        %4741 = vmatpush1.msra.mxu0 0.0
        %4742 = vmatprep.subr.mxu0 0.0
        %4743 = vmatpush1.msra.mxu0 0.0
        %4744 = vmatprep.subr.mxu0 0.0
        %4745 = vmatpush1.msra.mxu0 0.0
        %4746 = vmatprep.subr.mxu0 0.0
        %4747 = vmatpush1.msra.mxu0 0.0
        %4748 = vmatprep.subr.mxu0 0.0
        %4749 = vmatpush1.msra.mxu0 0.0
        %4750 = vmatprep.subr.mxu0 0.0
        %4751 = vmatpush1.msra.mxu0 0.0
        %4752 = vmatprep.subr.mxu0 0.0
        %4753 = vmatpush1.msra.mxu0 0.0
        %4754 = vmatprep.subr.mxu0 0.0
        %4755 = vmatpush1.msra.mxu0 0.0
        %4756 = vmatprep.subr.mxu0 0.0
        %4757 = vmatpush1.msra.mxu0 0.0
        %4758 = vmatprep.subr.mxu0 0.0
        %4759 = vmatpush1.msra.mxu0 0.0
        %4760 = vmatprep.subr.mxu0 0.0
        %4761 = vmatpush1.msra.mxu0 0.0
        %4762 = vmatprep.subr.mxu0 0.0
        %4763 = vmatpush1.msra.mxu0 0.0
        %4764 = vmatprep.subr.mxu0 0.0
        %4765 = vmatpush1.msra.mxu0 0.0
        %4766 = vmatprep.subr.mxu0 0.0
        %4767 = vmatpush1.msra.mxu0 0.0
        %4768 = vmatprep.subr.mxu0 0.0
        %4769 = vmatpush1.msra.mxu0 0.0
        %4770 = vmatprep.subr.mxu0 0.0
        %4771 = vmatpush1.msra.mxu0 0.0
        %4772 = vmatprep.subr.mxu0 0.0
        %4773 = vmatpush1.msra.mxu0 0.0
        %4774 = vmatprep.mubr.f32.mxu0 0.0
        %4775 = vmatmul.mubr.f32.gmra.mrb[0].mxu0 %v4663
        %v4776 = vpop.f32.mrb[0].mxu0
        %v4777 = vadd.f32 %v4660, %v4776
        %v4778 = vpop.f32.mrb[0].mxu0
        %4779 = vmatprep.mubr.f32.mxu0 0.0
        %4780 = vmatmul.mubr.f32.gmra.mrb[0].mxu0 %v4666
        %v4781 = vpop.f32.mrb[0].mxu0
        %v4782 = vadd.f32 %v4660, %v4781
        %v4783 = vpop.f32.mrb[0].mxu0
        %4784 = vmatprep.mubr.f32.mxu0 0.0
        %4785 = vmatmul.mubr.f32.gmra.mrb[0].mxu0 %v4669
        %v4786 = vpop.f32.mrb[0].mxu0
        %v4787 = vadd.f32 %v4660, %v4786
        %v4788 = vpop.f32.mrb[0].mxu0
        %4789 = vmatprep.mubr.f32.mxu0 0.0
        %4790 = vmatmul.mubr.f32.gmra.mrb[0].mxu0 %v4672
        %v4791 = vpop.f32.mrb[0].mxu0
        %v4792 = vadd.f32 %v4660, %v4791
        %v4793 = vpop.f32.mrb[0].mxu0
        %4794 = vmatprep.mubr.f32.mxu0 0.0
        %4795 = vmatmul.mubr.f32.gmra.mrb[0].mxu0 %v4675
        %v4796 = vpop.f32.mrb[0].mxu0
        %v4797 = vadd.f32 %v4660, %v4796
        %v4798 = vpop.f32.mrb[0].mxu0
        %4799 = vmatprep.mubr.f32.mxu0 0.0
        %4800 = vmatmul.mubr.f32.gmra.mrb[0].mxu0 %v4678
        %v4801 = vpop.f32.mrb[0].mxu0
        %v4802 = vadd.f32 %v4660, %v4801
        %v4803 = vpop.f32.mrb[0].mxu0
        %4804 = vmatprep.mubr.f32.mxu0 0.0
        %4805 = vmatmul.mubr.f32.gmra.mrb[0].mxu0 %v4681
        %v4806 = vpop.f32.mrb[0].mxu0
        %v4807 = vadd.f32 %v4660, %v4806
        %v4808 = vpop.f32.mrb[0].mxu0
        %4809 = vmatprep.mubr.f32.mxu0 0.0
        %4810 = vmatmul.mubr.f32.gmra.mrb[0].mxu0 %v4684
        %v4811 = vpop.f32.mrb[0].mxu0
        %v4812 = vadd.f32 %v4660, %v4811
        %v4813 = vpop.f32.mrb[0].mxu0
        %4814 = vmatprep.mubr.f32.mxu0 0.0
        %4815 = vmatmul.mubr.f32.gmra.mrb[0].mxu0 %v4687
        %v4816 = vpop.f32.mrb[0].mxu0
        %v4817 = vadd.f32 %v4660, %v4816
        %v4818 = vpop.f32.mrb[0].mxu0
        %4819 = vmatprep.mubr.f32.mxu0 0.0
        %4820 = vmatmul.mubr.f32.gmra.mrb[0].mxu0 %v4690
        %v4821 = vpop.f32.mrb[0].mxu0
        %v4822 = vadd.f32 %v4660, %v4821
        %v4823 = vpop.f32.mrb[0].mxu0
        %4824 = vmatprep.mubr.f32.mxu0 0.0
        %4825 = vmatmul.mubr.f32.gmra.mrb[0].mxu0 %v4693
        %v4826 = vpop.f32.mrb[0].mxu0
        %v4827 = vadd.f32 %v4660, %v4826
        %v4828 = vpop.f32.mrb[0].mxu0
        %4829 = vmatprep.mubr.f32.mxu0 0.0
        %4830 = vmatmul.mubr.f32.gmra.mrb[0].mxu0 %v4696
        %v4831 = vpop.f32.mrb[0].mxu0
        %v4832 = vadd.f32 %v4660, %v4831
        %v4833 = vpop.f32.mrb[0].mxu0
        %4834 = vmatprep.mubr.f32.mxu0 0.0
        %4835 = vmatmul.mubr.f32.gmra.mrb[0].mxu0 %v4699
        %v4836 = vpop.f32.mrb[0].mxu0
        %v4837 = vadd.f32 %v4660, %v4836
        %v4838 = vpop.f32.mrb[0].mxu0
        %4839 = vmatprep.mubr.f32.mxu0 0.0
        %4840 = vmatmul.mubr.f32.gmra.mrb[0].mxu0 %v4702
        %v4841 = vpop.f32.mrb[0].mxu0
        %v4842 = vadd.f32 %v4660, %v4841
        %v4843 = vpop.f32.mrb[0].mxu0
        %4844 = vmatprep.mubr.f32.mxu0 0.0
        %4845 = vmatmul.mubr.f32.gmra.mrb[0].mxu0 %v4705
        %v4846 = vpop.f32.mrb[0].mxu0
        %v4847 = vadd.f32 %v4660, %v4846
        %v4848 = vpop.f32.mrb[0].mxu0
        %4849 = vmatprep.mubr.f32.mxu0 0.0
        %4850 = vmatmul.mubr.f32.gmra.mrb[0].mxu0 %v4708
        %v4851 = vpop.f32.mrb[0].mxu0
        %v4852 = vadd.f32 %v4660, %v4851
        %v4853 = vpop.f32.mrb[0].mxu0
        %4854 = vdwg.mxu0
        %v4855 = vld [vmem:[%s804] sm:$0xff]
        %v4856 = vld [vmem:[%s804 + $0x8] sm:$0xff]
        %v4857 = vld [vmem:[%s804 + $0x10] sm:$0xff]
        %v4858 = vld [vmem:[%s804 + $0x18] sm:$0xff]
        %v4859 = vld [vmem:[%s804 + $0x20] sm:$0xff]
        %v4860 = vld [vmem:[%s804 + $0x28] sm:$0xff]
        %v4861 = vld [vmem:[%s804 + $0x30] sm:$0xff]
        %v4862 = vld [vmem:[%s804 + $0x38] sm:$0xff]
        %v4863 = vld [vmem:[%s804 + $0x100] sm:$0xff]
        %v4864 = vld [vmem:[%s804 + $0x108] sm:$0xff]
        %v4865 = vld [vmem:[%s804 + $0x110] sm:$0xff]
        %v4866 = vld [vmem:[%s804 + $0x118] sm:$0xff]
        %v4867 = vld [vmem:[%s804 + $0x120] sm:$0xff]
        %v4868 = vld [vmem:[%s804 + $0x128] sm:$0xff]
        %v4869 = vld [vmem:[%s804 + $0x130] sm:$0xff]
        %v4870 = vld [vmem:[%s804 + $0x138] sm:$0xff]
        %v4871 = vadd.f32 %v4777, %v4855
        %v4872 = vadd.f32 %v4782, %v4856
        %v4873 = vadd.f32 %v4787, %v4857
        %v4874 = vadd.f32 %v4792, %v4858
        %v4875 = vadd.f32 %v4797, %v4859
        %v4876 = vadd.f32 %v4802, %v4860
        %v4877 = vadd.f32 %v4807, %v4861
        %v4878 = vadd.f32 %v4812, %v4862
        %v4879 = vadd.f32 %v4817, %v4863
        %v4880 = vadd.f32 %v4822, %v4864
        %v4881 = vadd.f32 %v4827, %v4865
        %v4882 = vadd.f32 %v4832, %v4866
        %v4883 = vadd.f32 %v4837, %v4867
        %v4884 = vadd.f32 %v4842, %v4868
        %v4885 = vadd.f32 %v4847, %v4869
        %v4886 = vadd.f32 %v4852, %v4870
        %s4887 = scalar_lea.vmem %s405, 64 [#allocation7]
        %4888 = vst.msk [vmem:[%s4887] sm:$0xff] %vm514, %v4871
        %4889 = vst.msk [vmem:[%s4887 + $0x8] sm:$0xff] %vm514, %v4872
        %4890 = vst.msk [vmem:[%s4887 + $0x10] sm:$0xff] %vm514, %v4873
        %4891 = vst.msk [vmem:[%s4887 + $0x18] sm:$0xff] %vm514, %v4874
        %4892 = vst.msk [vmem:[%s4887 + $0x20] sm:$0xff] %vm514, %v4875
        %4893 = vst.msk [vmem:[%s4887 + $0x28] sm:$0xff] %vm514, %v4876
        %4894 = vst.msk [vmem:[%s4887 + $0x30] sm:$0xff] %vm514, %v4877
        %4895 = vst.msk [vmem:[%s4887 + $0x38] sm:$0xff] %vm514, %v4878
        %4896 = vst.msk [vmem:[%s4887 + $0x100] sm:$0xff] %vm514, %v4879
        %4897 = vst.msk [vmem:[%s4887 + $0x108] sm:$0xff] %vm514, %v4880
        %4898 = vst.msk [vmem:[%s4887 + $0x110] sm:$0xff] %vm514, %v4881
        %4899 = vst.msk [vmem:[%s4887 + $0x118] sm:$0xff] %vm514, %v4882
        %4900 = vst.msk [vmem:[%s4887 + $0x120] sm:$0xff] %vm514, %v4883
        %4901 = vst.msk [vmem:[%s4887 + $0x128] sm:$0xff] %vm514, %v4884
        %4902 = vst.msk [vmem:[%s4887 + $0x130] sm:$0xff] %vm514, %v4885
        %4903 = vst.msk [vmem:[%s4887 + $0x138] sm:$0xff] %vm514, %v4886
        %v4904 = vld [vmem:[%s3338] sm:$0xff]
        %v4905 = vld [vmem:[%s3338 + $0x8] sm:$0xff]
        %v4906 = vld [vmem:[%s3338 + $0x10] sm:$0xff]
        %v4907 = vld [vmem:[%s3338 + $0x18] sm:$0xff]
        %v4908 = vld [vmem:[%s3338 + $0x20] sm:$0xff]
        %v4909 = vld [vmem:[%s3338 + $0x28] sm:$0xff]
        %v4910 = vld [vmem:[%s3338 + $0x30] sm:$0xff]
        %v4911 = vld [vmem:[%s3338 + $0x38] sm:$0xff]
        %v4912 = vld [vmem:[%s3338 + $0x100] sm:$0xff]
        %v4913 = vld [vmem:[%s3338 + $0x108] sm:$0xff]
        %v4914 = vld [vmem:[%s3338 + $0x110] sm:$0xff]
        %v4915 = vld [vmem:[%s3338 + $0x118] sm:$0xff]
        %v4916 = vld [vmem:[%s3338 + $0x120] sm:$0xff]
        %v4917 = vld [vmem:[%s3338 + $0x128] sm:$0xff]
        %v4918 = vld [vmem:[%s3338 + $0x130] sm:$0xff]
        %v4919 = vld [vmem:[%s3338 + $0x138] sm:$0xff]
        %v4920 = vmul.f32 %v4904, %v4176
        %v4921 = vmul.f32 %v4905, %v4176
        %v4922 = vmul.f32 %v4906, %v4176
        %v4923 = vmul.f32 %v4907, %v4176
        %v4924 = vmul.f32 %v4908, %v4176
        %v4925 = vmul.f32 %v4909, %v4176
        %v4926 = vmul.f32 %v4910, %v4176
        %v4927 = vmul.f32 %v4911, %v4176
        %v4928 = vmul.f32 %v4912, %v4180
        %v4929 = vmul.f32 %v4913, %v4180
        %v4930 = vmul.f32 %v4914, %v4180
        %v4931 = vmul.f32 %v4915, %v4180
        %v4932 = vmul.f32 %v4916, %v4180
        %v4933 = vmul.f32 %v4917, %v4180
        %v4934 = vmul.f32 %v4918, %v4180
        %v4935 = vmul.f32 %v4919, %v4180
        %v4936 = vadd.f32 %v4920, 3.0
        %v4937 = vadd.f32 %v4921, 3.0
        %v4938 = vadd.f32 %v4922, 3.0
        %v4939 = vadd.f32 %v4923, 3.0
        %v4940 = vadd.f32 %v4924, 3.0
        %v4941 = vadd.f32 %v4925, 3.0
        %v4942 = vadd.f32 %v4926, 3.0
        %v4943 = vadd.f32 %v4927, 3.0
        %v4944 = vadd.f32 %v4928, 3.0
        %v4945 = vadd.f32 %v4929, 3.0
        %v4946 = vadd.f32 %v4930, 3.0
        %v4947 = vadd.f32 %v4931, 3.0
        %v4948 = vadd.f32 %v4932, 3.0
        %v4949 = vadd.f32 %v4933, 3.0
        %v4950 = vadd.f32 %v4934, 3.0
        %v4951 = vadd.f32 %v4935, 3.0
        %v4952 = vmax.f32 %v4936, 0.0
        %v4953 = vmax.f32 %v4937, 0.0
        %v4954 = vmax.f32 %v4938, 0.0
        %v4955 = vmax.f32 %v4939, 0.0
        %v4956 = vmax.f32 %v4940, 0.0
        %v4957 = vmax.f32 %v4941, 0.0
        %v4958 = vmax.f32 %v4942, 0.0
        %v4959 = vmax.f32 %v4943, 0.0
        %v4960 = vmax.f32 %v4944, 0.0
        %v4961 = vmax.f32 %v4945, 0.0
        %v4962 = vmax.f32 %v4946, 0.0
        %v4963 = vmax.f32 %v4947, 0.0
        %v4964 = vmax.f32 %v4948, 0.0
        %v4965 = vmax.f32 %v4949, 0.0
        %v4966 = vmax.f32 %v4950, 0.0
        %v4967 = vmax.f32 %v4951, 0.0
        %v4968 = vmin.f32 %v4952, 6.0
        %v4969 = vmin.f32 %v4953, 6.0
        %v4970 = vmin.f32 %v4954, 6.0
        %v4971 = vmin.f32 %v4955, 6.0
        %v4972 = vmin.f32 %v4956, 6.0
        %v4973 = vmin.f32 %v4957, 6.0
        %v4974 = vmin.f32 %v4958, 6.0
        %v4975 = vmin.f32 %v4959, 6.0
        %v4976 = vmin.f32 %v4960, 6.0
        %v4977 = vmin.f32 %v4961, 6.0
        %v4978 = vmin.f32 %v4962, 6.0
        %v4979 = vmin.f32 %v4963, 6.0
        %v4980 = vmin.f32 %v4964, 6.0
        %v4981 = vmin.f32 %v4965, 6.0
        %v4982 = vmin.f32 %v4966, 6.0
        %v4983 = vmin.f32 %v4967, 6.0
        %v4984 = vmul.f32 %v4968, 0.16666667
        %v4985 = vmul.f32 %v4969, 0.16666667
        %v4986 = vmul.f32 %v4970, 0.16666667
        %v4987 = vmul.f32 %v4971, 0.16666667
        %v4988 = vmul.f32 %v4972, 0.16666667
        %v4989 = vmul.f32 %v4973, 0.16666667
        %v4990 = vmul.f32 %v4974, 0.16666667
        %v4991 = vmul.f32 %v4975, 0.16666667
        %v4992 = vmul.f32 %v4976, 0.16666667
        %v4993 = vmul.f32 %v4977, 0.16666667
        %v4994 = vmul.f32 %v4978, 0.16666667
        %v4995 = vmul.f32 %v4979, 0.16666667
        %v4996 = vmul.f32 %v4980, 0.16666667
        %v4997 = vmul.f32 %v4981, 0.16666667
        %v4998 = vmul.f32 %v4982, 0.16666667
        %v4999 = vmul.f32 %v4983, 0.16666667
        %v5000 = vmul.f32 %v4920, %v4984
        %v5001 = vmul.f32 %v4921, %v4985
        %v5002 = vmul.f32 %v4922, %v4986
        %v5003 = vmul.f32 %v4923, %v4987
        %v5004 = vmul.f32 %v4924, %v4988
        %v5005 = vmul.f32 %v4925, %v4989
        %v5006 = vmul.f32 %v4926, %v4990
        %v5007 = vmul.f32 %v4927, %v4991
        %v5008 = vmul.f32 %v4928, %v4992
        %v5009 = vmul.f32 %v4929, %v4993
        %v5010 = vmul.f32 %v4930, %v4994
        %v5011 = vmul.f32 %v4931, %v4995
        %v5012 = vmul.f32 %v4932, %v4996
        %v5013 = vmul.f32 %v4933, %v4997
        %v5014 = vmul.f32 %v4934, %v4998
        %v5015 = vmul.f32 %v4935, %v4999
        %v5016 = vld [vmem:[%s9] sm:$0xff]
        %v5017 = vld [vmem:[%s9 + $0x8] sm:$0xff]
        %v5018 = vld [vmem:[%s9 + $0x10] sm:$0xff]
        %v5019 = vld [vmem:[%s9 + $0x18] sm:$0xff]
        %v5020 = vld [vmem:[%s9 + $0x20] sm:$0xff]
        %v5021 = vld [vmem:[%s9 + $0x28] sm:$0xff]
        %v5022 = vld [vmem:[%s9 + $0x30] sm:$0xff]
        %v5023 = vld [vmem:[%s9 + $0x38] sm:$0xff]
        %v5024 = vld [vmem:[%s10] sm:$0x1]
        %v5026 = vlaneseq
        %v5027 = vshrl.u32 %v5026, 7
        %v5028 = vsub.s32 0, %v5027
        %v5029 = vrot.slane %v5024, %v5028
        %v5032 = vsel %vm408, %v5000, 0
        %v5035 = vsel %vm408, %v5001, 0
        %v5038 = vsel %vm408, %v5002, 0
        %v5041 = vsel %vm408, %v5003, 0
        %v5044 = vsel %vm408, %v5004, 0
        %v5047 = vsel %vm408, %v5005, 0
        %v5050 = vsel %vm408, %v5006, 0
        %v5053 = vsel %vm408, %v5007, 0
        %v5056 = vsel %vm408, %v5008, 0
        %v5059 = vsel %vm408, %v5009, 0
        %v5062 = vsel %vm408, %v5010, 0
        %v5065 = vsel %vm408, %v5011, 0
        %v5068 = vsel %vm408, %v5012, 0
        %v5071 = vsel %vm408, %v5013, 0
        %v5074 = vsel %vm408, %v5014, 0
        %v5077 = vsel %vm408, %v5015, 0
        %5079 = vmatprep.subr.mxu0 0.0
        %5080 = vmatpush1.msra.mxu0 %v5016
        %5081 = vmatprep.subr.mxu0 0.0
        %5082 = vmatpush1.msra.mxu0 %v5017
        %5083 = vmatprep.subr.mxu0 0.0
        %5084 = vmatpush1.msra.mxu0 %v5018
        %5085 = vmatprep.subr.mxu0 0.0
        %5086 = vmatpush1.msra.mxu0 %v5019
        %5087 = vmatprep.subr.mxu0 0.0
        %5088 = vmatpush1.msra.mxu0 %v5020
        %5089 = vmatprep.subr.mxu0 0.0
        %5090 = vmatpush1.msra.mxu0 %v5021
        %5091 = vmatprep.subr.mxu0 0.0
        %5092 = vmatpush1.msra.mxu0 %v5022
        %5093 = vmatprep.subr.mxu0 0.0
        %5094 = vmatpush1.msra.mxu0 %v5023
        %5095 = vmatprep.subr.mxu0 0.0
        %5096 = vmatpush1.msra.mxu0 0.0
        %5097 = vmatprep.subr.mxu0 0.0
        %5098 = vmatpush1.msra.mxu0 0.0
        %5099 = vmatprep.subr.mxu0 0.0
        %5100 = vmatpush1.msra.mxu0 0.0
        %5101 = vmatprep.subr.mxu0 0.0
        %5102 = vmatpush1.msra.mxu0 0.0
        %5103 = vmatprep.subr.mxu0 0.0
        %5104 = vmatpush1.msra.mxu0 0.0
        %5105 = vmatprep.subr.mxu0 0.0
        %5106 = vmatpush1.msra.mxu0 0.0
        %5107 = vmatprep.subr.mxu0 0.0
        %5108 = vmatpush1.msra.mxu0 0.0
        %5109 = vmatprep.subr.mxu0 0.0
        %5110 = vmatpush1.msra.mxu0 0.0
        %5111 = vmatprep.subr.mxu0 0.0
        %5112 = vmatpush1.msra.mxu0 0.0
        %5113 = vmatprep.subr.mxu0 0.0
        %5114 = vmatpush1.msra.mxu0 0.0
        %5115 = vmatprep.subr.mxu0 0.0
        %5116 = vmatpush1.msra.mxu0 0.0
        %5117 = vmatprep.subr.mxu0 0.0
        %5118 = vmatpush1.msra.mxu0 0.0
        %5119 = vmatprep.subr.mxu0 0.0
        %5120 = vmatpush1.msra.mxu0 0.0
        %5121 = vmatprep.subr.mxu0 0.0
        %5122 = vmatpush1.msra.mxu0 0.0
        %5123 = vmatprep.subr.mxu0 0.0
        %5124 = vmatpush1.msra.mxu0 0.0
        %5125 = vmatprep.subr.mxu0 0.0
        %5126 = vmatpush1.msra.mxu0 0.0
        %5127 = vmatprep.subr.mxu0 0.0
        %5128 = vmatpush1.msra.mxu0 0.0
        %5129 = vmatprep.subr.mxu0 0.0
        %5130 = vmatpush1.msra.mxu0 0.0
        %5131 = vmatprep.subr.mxu0 0.0
        %5132 = vmatpush1.msra.mxu0 0.0
        %5133 = vmatprep.subr.mxu0 0.0
        %5134 = vmatpush1.msra.mxu0 0.0
        %5135 = vmatprep.subr.mxu0 0.0
        %5136 = vmatpush1.msra.mxu0 0.0
        %5137 = vmatprep.subr.mxu0 0.0
        %5138 = vmatpush1.msra.mxu0 0.0
        %5139 = vmatprep.subr.mxu0 0.0
        %5140 = vmatpush1.msra.mxu0 0.0
        %5141 = vmatprep.subr.mxu0 0.0
        %5142 = vmatpush1.msra.mxu0 0.0
        %5143 = vmatprep.mubr.f32.mxu0 0.0
        %5144 = vmatmul.mubr.f32.gmra.mrb[0].mxu0 %v5032
        %v5145 = vpop.f32.mrb[0].mxu0
        %v5146 = vadd.f32 %v5029, %v5145
        %v5147 = vpop.f32.mrb[0].mxu0
        %5148 = vmatprep.mubr.f32.mxu0 0.0
        %5149 = vmatmul.mubr.f32.gmra.mrb[0].mxu0 %v5035
        %v5150 = vpop.f32.mrb[0].mxu0
        %v5151 = vadd.f32 %v5029, %v5150
        %v5152 = vpop.f32.mrb[0].mxu0
        %5153 = vmatprep.mubr.f32.mxu0 0.0
        %5154 = vmatmul.mubr.f32.gmra.mrb[0].mxu0 %v5038
        %v5155 = vpop.f32.mrb[0].mxu0
        %v5156 = vadd.f32 %v5029, %v5155
        %v5157 = vpop.f32.mrb[0].mxu0
        %5158 = vmatprep.mubr.f32.mxu0 0.0
        %5159 = vmatmul.mubr.f32.gmra.mrb[0].mxu0 %v5041
        %v5160 = vpop.f32.mrb[0].mxu0
        %v5161 = vadd.f32 %v5029, %v5160
        %v5162 = vpop.f32.mrb[0].mxu0
        %5163 = vmatprep.mubr.f32.mxu0 0.0
        %5164 = vmatmul.mubr.f32.gmra.mrb[0].mxu0 %v5044
        %v5165 = vpop.f32.mrb[0].mxu0
        %v5166 = vadd.f32 %v5029, %v5165
        %v5167 = vpop.f32.mrb[0].mxu0
        %5168 = vmatprep.mubr.f32.mxu0 0.0
        %5169 = vmatmul.mubr.f32.gmra.mrb[0].mxu0 %v5047
        %v5170 = vpop.f32.mrb[0].mxu0
        %v5171 = vadd.f32 %v5029, %v5170
        %v5172 = vpop.f32.mrb[0].mxu0
        %5173 = vmatprep.mubr.f32.mxu0 0.0
        %5174 = vmatmul.mubr.f32.gmra.mrb[0].mxu0 %v5050
        %v5175 = vpop.f32.mrb[0].mxu0
        %v5176 = vadd.f32 %v5029, %v5175
        %v5177 = vpop.f32.mrb[0].mxu0
        %5178 = vmatprep.mubr.f32.mxu0 0.0
        %5179 = vmatmul.mubr.f32.gmra.mrb[0].mxu0 %v5053
        %v5180 = vpop.f32.mrb[0].mxu0
        %v5181 = vadd.f32 %v5029, %v5180
        %v5182 = vpop.f32.mrb[0].mxu0
        %5183 = vmatprep.mubr.f32.mxu0 0.0
        %5184 = vmatmul.mubr.f32.gmra.mrb[0].mxu0 %v5056
        %v5185 = vpop.f32.mrb[0].mxu0
        %v5186 = vadd.f32 %v5029, %v5185
        %v5187 = vpop.f32.mrb[0].mxu0
        %5188 = vmatprep.mubr.f32.mxu0 0.0
        %5189 = vmatmul.mubr.f32.gmra.mrb[0].mxu0 %v5059
        %v5190 = vpop.f32.mrb[0].mxu0
        %v5191 = vadd.f32 %v5029, %v5190
        %v5192 = vpop.f32.mrb[0].mxu0
        %5193 = vmatprep.mubr.f32.mxu0 0.0
        %5194 = vmatmul.mubr.f32.gmra.mrb[0].mxu0 %v5062
        %v5195 = vpop.f32.mrb[0].mxu0
        %v5196 = vadd.f32 %v5029, %v5195
        %v5197 = vpop.f32.mrb[0].mxu0
        %5198 = vmatprep.mubr.f32.mxu0 0.0
        %5199 = vmatmul.mubr.f32.gmra.mrb[0].mxu0 %v5065
        %v5200 = vpop.f32.mrb[0].mxu0
        %v5201 = vadd.f32 %v5029, %v5200
        %v5202 = vpop.f32.mrb[0].mxu0
        %5203 = vmatprep.mubr.f32.mxu0 0.0
        %5204 = vmatmul.mubr.f32.gmra.mrb[0].mxu0 %v5068
        %v5205 = vpop.f32.mrb[0].mxu0
        %v5206 = vadd.f32 %v5029, %v5205
        %v5207 = vpop.f32.mrb[0].mxu0
        %5208 = vmatprep.mubr.f32.mxu0 0.0
        %5209 = vmatmul.mubr.f32.gmra.mrb[0].mxu0 %v5071
        %v5210 = vpop.f32.mrb[0].mxu0
        %v5211 = vadd.f32 %v5029, %v5210
        %v5212 = vpop.f32.mrb[0].mxu0
        %5213 = vmatprep.mubr.f32.mxu0 0.0
        %5214 = vmatmul.mubr.f32.gmra.mrb[0].mxu0 %v5074
        %v5215 = vpop.f32.mrb[0].mxu0
        %v5216 = vadd.f32 %v5029, %v5215
        %v5217 = vpop.f32.mrb[0].mxu0
        %5218 = vmatprep.mubr.f32.mxu0 0.0
        %5219 = vmatmul.mubr.f32.gmra.mrb[0].mxu0 %v5077
        %v5220 = vpop.f32.mrb[0].mxu0
        %v5221 = vadd.f32 %v5029, %v5220
        %v5222 = vpop.f32.mrb[0].mxu0
        %5223 = vdwg.mxu0
        %v5224 = vld [vmem:[%s1120] sm:$0xff]
        %v5225 = vld [vmem:[%s1120 + $0x8] sm:$0xff]
        %v5226 = vld [vmem:[%s1120 + $0x10] sm:$0xff]
        %v5227 = vld [vmem:[%s1120 + $0x18] sm:$0xff]
        %v5228 = vld [vmem:[%s1120 + $0x20] sm:$0xff]
        %v5229 = vld [vmem:[%s1120 + $0x28] sm:$0xff]
        %v5230 = vld [vmem:[%s1120 + $0x30] sm:$0xff]
        %v5231 = vld [vmem:[%s1120 + $0x38] sm:$0xff]
        %v5232 = vld [vmem:[%s1120 + $0x100] sm:$0xff]
        %v5233 = vld [vmem:[%s1120 + $0x108] sm:$0xff]
        %v5234 = vld [vmem:[%s1120 + $0x110] sm:$0xff]
        %v5235 = vld [vmem:[%s1120 + $0x118] sm:$0xff]
        %v5236 = vld [vmem:[%s1120 + $0x120] sm:$0xff]
        %v5237 = vld [vmem:[%s1120 + $0x128] sm:$0xff]
        %v5238 = vld [vmem:[%s1120 + $0x130] sm:$0xff]
        %v5239 = vld [vmem:[%s1120 + $0x138] sm:$0xff]
        %v5240 = vadd.f32 %v5146, %v5224
        %v5241 = vadd.f32 %v5151, %v5225
        %v5242 = vadd.f32 %v5156, %v5226
        %v5243 = vadd.f32 %v5161, %v5227
        %v5244 = vadd.f32 %v5166, %v5228
        %v5245 = vadd.f32 %v5171, %v5229
        %v5246 = vadd.f32 %v5176, %v5230
        %v5247 = vadd.f32 %v5181, %v5231
        %v5248 = vadd.f32 %v5186, %v5232
        %v5249 = vadd.f32 %v5191, %v5233
        %v5250 = vadd.f32 %v5196, %v5234
        %v5251 = vadd.f32 %v5201, %v5235
        %v5252 = vadd.f32 %v5206, %v5236
        %v5253 = vadd.f32 %v5211, %v5237
        %v5254 = vadd.f32 %v5216, %v5238
        %v5255 = vadd.f32 %v5221, %v5239
        %s5256 = scalar_lea.vmem %s405, 128 [#allocation7]
        %5257 = vst.msk [vmem:[%s5256] sm:$0xff] %vm514, %v5240
        %5258 = vst.msk [vmem:[%s5256 + $0x8] sm:$0xff] %vm514, %v5241
        %5259 = vst.msk [vmem:[%s5256 + $0x10] sm:$0xff] %vm514, %v5242
        %5260 = vst.msk [vmem:[%s5256 + $0x18] sm:$0xff] %vm514, %v5243
        %5261 = vst.msk [vmem:[%s5256 + $0x20] sm:$0xff] %vm514, %v5244
        %5262 = vst.msk [vmem:[%s5256 + $0x28] sm:$0xff] %vm514, %v5245
        %5263 = vst.msk [vmem:[%s5256 + $0x30] sm:$0xff] %vm514, %v5246
        %5264 = vst.msk [vmem:[%s5256 + $0x38] sm:$0xff] %vm514, %v5247
        %5265 = vst.msk [vmem:[%s5256 + $0x100] sm:$0xff] %vm514, %v5248
        %5266 = vst.msk [vmem:[%s5256 + $0x108] sm:$0xff] %vm514, %v5249
        %5267 = vst.msk [vmem:[%s5256 + $0x110] sm:$0xff] %vm514, %v5250
        %5268 = vst.msk [vmem:[%s5256 + $0x118] sm:$0xff] %vm514, %v5251
        %5269 = vst.msk [vmem:[%s5256 + $0x120] sm:$0xff] %vm514, %v5252
        %5270 = vst.msk [vmem:[%s5256 + $0x128] sm:$0xff] %vm514, %v5253
        %5271 = vst.msk [vmem:[%s5256 + $0x130] sm:$0xff] %vm514, %v5254
        %5272 = vst.msk [vmem:[%s5256 + $0x138] sm:$0xff] %vm514, %v5255
        %v5273 = vld [vmem:[%s3889] sm:$0xff]
        %v5274 = vld [vmem:[%s3889 + $0x8] sm:$0xff]
        %v5275 = vld [vmem:[%s3889 + $0x10] sm:$0xff]
        %v5276 = vld [vmem:[%s3889 + $0x18] sm:$0xff]
        %v5277 = vld [vmem:[%s3889 + $0x20] sm:$0xff]
        %v5278 = vld [vmem:[%s3889 + $0x28] sm:$0xff]
        %v5279 = vld [vmem:[%s3889 + $0x30] sm:$0xff]
        %v5280 = vld [vmem:[%s3889 + $0x38] sm:$0xff]
        %v5281 = vld [vmem:[%s3889 + $0x100] sm:$0xff]
        %v5282 = vld [vmem:[%s3889 + $0x108] sm:$0xff]
        %v5283 = vld [vmem:[%s3889 + $0x110] sm:$0xff]
        %v5284 = vld [vmem:[%s3889 + $0x118] sm:$0xff]
        %v5285 = vld [vmem:[%s3889 + $0x120] sm:$0xff]
        %v5286 = vld [vmem:[%s3889 + $0x128] sm:$0xff]
        %v5287 = vld [vmem:[%s3889 + $0x130] sm:$0xff]
        %v5288 = vld [vmem:[%s3889 + $0x138] sm:$0xff]
        %v5289 = vmul.f32 %v5273, %v4176
        %v5290 = vmul.f32 %v5274, %v4176
        %v5291 = vmul.f32 %v5275, %v4176
        %v5292 = vmul.f32 %v5276, %v4176
        %v5293 = vmul.f32 %v5277, %v4176
        %v5294 = vmul.f32 %v5278, %v4176
        %v5295 = vmul.f32 %v5279, %v4176
        %v5296 = vmul.f32 %v5280, %v4176
        %v5297 = vmul.f32 %v5281, %v4180
        %v5298 = vmul.f32 %v5282, %v4180
        %v5299 = vmul.f32 %v5283, %v4180
        %v5300 = vmul.f32 %v5284, %v4180
        %v5301 = vmul.f32 %v5285, %v4180
        %v5302 = vmul.f32 %v5286, %v4180
        %v5303 = vmul.f32 %v5287, %v4180
        %v5304 = vmul.f32 %v5288, %v4180
        %v5305 = vadd.f32 %v5289, 3.0
        %v5306 = vadd.f32 %v5290, 3.0
        %v5307 = vadd.f32 %v5291, 3.0
        %v5308 = vadd.f32 %v5292, 3.0
        %v5309 = vadd.f32 %v5293, 3.0
        %v5310 = vadd.f32 %v5294, 3.0
        %v5311 = vadd.f32 %v5295, 3.0
        %v5312 = vadd.f32 %v5296, 3.0
        %v5313 = vadd.f32 %v5297, 3.0
        %v5314 = vadd.f32 %v5298, 3.0
        %v5315 = vadd.f32 %v5299, 3.0
        %v5316 = vadd.f32 %v5300, 3.0
        %v5317 = vadd.f32 %v5301, 3.0
        %v5318 = vadd.f32 %v5302, 3.0
        %v5319 = vadd.f32 %v5303, 3.0
        %v5320 = vadd.f32 %v5304, 3.0
        %v5321 = vmax.f32 %v5305, 0.0
        %v5322 = vmax.f32 %v5306, 0.0
        %v5323 = vmax.f32 %v5307, 0.0
        %v5324 = vmax.f32 %v5308, 0.0
        %v5325 = vmax.f32 %v5309, 0.0
        %v5326 = vmax.f32 %v5310, 0.0
        %v5327 = vmax.f32 %v5311, 0.0
        %v5328 = vmax.f32 %v5312, 0.0
        %v5329 = vmax.f32 %v5313, 0.0
        %v5330 = vmax.f32 %v5314, 0.0
        %v5331 = vmax.f32 %v5315, 0.0
        %v5332 = vmax.f32 %v5316, 0.0
        %v5333 = vmax.f32 %v5317, 0.0
        %v5334 = vmax.f32 %v5318, 0.0
        %v5335 = vmax.f32 %v5319, 0.0
        %v5336 = vmax.f32 %v5320, 0.0
        %v5337 = vmin.f32 %v5321, 6.0
        %v5338 = vmin.f32 %v5322, 6.0
        %v5339 = vmin.f32 %v5323, 6.0
        %v5340 = vmin.f32 %v5324, 6.0
        %v5341 = vmin.f32 %v5325, 6.0
        %v5342 = vmin.f32 %v5326, 6.0
        %v5343 = vmin.f32 %v5327, 6.0
        %v5344 = vmin.f32 %v5328, 6.0
        %v5345 = vmin.f32 %v5329, 6.0
        %v5346 = vmin.f32 %v5330, 6.0
        %v5347 = vmin.f32 %v5331, 6.0
        %v5348 = vmin.f32 %v5332, 6.0
        %v5349 = vmin.f32 %v5333, 6.0
        %v5350 = vmin.f32 %v5334, 6.0
        %v5351 = vmin.f32 %v5335, 6.0
        %v5352 = vmin.f32 %v5336, 6.0
        %v5353 = vmul.f32 %v5337, 0.16666667
        %v5354 = vmul.f32 %v5338, 0.16666667
        %v5355 = vmul.f32 %v5339, 0.16666667
        %v5356 = vmul.f32 %v5340, 0.16666667
        %v5357 = vmul.f32 %v5341, 0.16666667
        %v5358 = vmul.f32 %v5342, 0.16666667
        %v5359 = vmul.f32 %v5343, 0.16666667
        %v5360 = vmul.f32 %v5344, 0.16666667
        %v5361 = vmul.f32 %v5345, 0.16666667
        %v5362 = vmul.f32 %v5346, 0.16666667
        %v5363 = vmul.f32 %v5347, 0.16666667
        %v5364 = vmul.f32 %v5348, 0.16666667
        %v5365 = vmul.f32 %v5349, 0.16666667
        %v5366 = vmul.f32 %v5350, 0.16666667
        %v5367 = vmul.f32 %v5351, 0.16666667
        %v5368 = vmul.f32 %v5352, 0.16666667
        %v5369 = vmul.f32 %v5289, %v5353
        %v5370 = vmul.f32 %v5290, %v5354
        %v5371 = vmul.f32 %v5291, %v5355
        %v5372 = vmul.f32 %v5292, %v5356
        %v5373 = vmul.f32 %v5293, %v5357
        %v5374 = vmul.f32 %v5294, %v5358
        %v5375 = vmul.f32 %v5295, %v5359
        %v5376 = vmul.f32 %v5296, %v5360
        %v5377 = vmul.f32 %v5297, %v5361
        %v5378 = vmul.f32 %v5298, %v5362
        %v5379 = vmul.f32 %v5299, %v5363
        %v5380 = vmul.f32 %v5300, %v5364
        %v5381 = vmul.f32 %v5301, %v5365
        %v5382 = vmul.f32 %v5302, %v5366
        %v5383 = vmul.f32 %v5303, %v5367
        %v5384 = vmul.f32 %v5304, %v5368
        %v5385 = vld [vmem:[%s9] sm:$0xff]
        %v5386 = vld [vmem:[%s9 + $0x8] sm:$0xff]
        %v5387 = vld [vmem:[%s9 + $0x10] sm:$0xff]
        %v5388 = vld [vmem:[%s9 + $0x18] sm:$0xff]
        %v5389 = vld [vmem:[%s9 + $0x20] sm:$0xff]
        %v5390 = vld [vmem:[%s9 + $0x28] sm:$0xff]
        %v5391 = vld [vmem:[%s9 + $0x30] sm:$0xff]
        %v5392 = vld [vmem:[%s9 + $0x38] sm:$0xff]
        %v5393 = vld [vmem:[%s10] sm:$0x1]
        %v5395 = vlaneseq
        %v5396 = vshrl.u32 %v5395, 7
        %v5397 = vsub.s32 0, %v5396
        %v5398 = vrot.slane %v5393, %v5397
        %v5401 = vsel %vm408, %v5369, 0
        %v5404 = vsel %vm408, %v5370, 0
        %v5407 = vsel %vm408, %v5371, 0
        %v5410 = vsel %vm408, %v5372, 0
        %v5413 = vsel %vm408, %v5373, 0
        %v5416 = vsel %vm408, %v5374, 0
        %v5419 = vsel %vm408, %v5375, 0
        %v5422 = vsel %vm408, %v5376, 0
        %v5425 = vsel %vm408, %v5377, 0
        %v5428 = vsel %vm408, %v5378, 0
        %v5431 = vsel %vm408, %v5379, 0
        %v5434 = vsel %vm408, %v5380, 0
        %v5437 = vsel %vm408, %v5381, 0
        %v5440 = vsel %vm408, %v5382, 0
        %v5443 = vsel %vm408, %v5383, 0
        %v5446 = vsel %vm408, %v5384, 0
        %5448 = vmatprep.subr.mxu0 0.0
        %5449 = vmatpush1.msra.mxu0 %v5385
        %5450 = vmatprep.subr.mxu0 0.0
        %5451 = vmatpush1.msra.mxu0 %v5386
        %5452 = vmatprep.subr.mxu0 0.0
        %5453 = vmatpush1.msra.mxu0 %v5387
        %5454 = vmatprep.subr.mxu0 0.0
        %5455 = vmatpush1.msra.mxu0 %v5388
        %5456 = vmatprep.subr.mxu0 0.0
        %5457 = vmatpush1.msra.mxu0 %v5389
        %5458 = vmatprep.subr.mxu0 0.0
        %5459 = vmatpush1.msra.mxu0 %v5390
        %5460 = vmatprep.subr.mxu0 0.0
        %5461 = vmatpush1.msra.mxu0 %v5391
        %5462 = vmatprep.subr.mxu0 0.0
        %5463 = vmatpush1.msra.mxu0 %v5392
        %5464 = vmatprep.subr.mxu0 0.0
        %5465 = vmatpush1.msra.mxu0 0.0
        %5466 = vmatprep.subr.mxu0 0.0
        %5467 = vmatpush1.msra.mxu0 0.0
        %5468 = vmatprep.subr.mxu0 0.0
        %5469 = vmatpush1.msra.mxu0 0.0
        %5470 = vmatprep.subr.mxu0 0.0
        %5471 = vmatpush1.msra.mxu0 0.0
        %5472 = vmatprep.subr.mxu0 0.0
        %5473 = vmatpush1.msra.mxu0 0.0
        %5474 = vmatprep.subr.mxu0 0.0
        %5475 = vmatpush1.msra.mxu0 0.0
        %5476 = vmatprep.subr.mxu0 0.0
        %5477 = vmatpush1.msra.mxu0 0.0
        %5478 = vmatprep.subr.mxu0 0.0
        %5479 = vmatpush1.msra.mxu0 0.0
        %5480 = vmatprep.subr.mxu0 0.0
        %5481 = vmatpush1.msra.mxu0 0.0
        %5482 = vmatprep.subr.mxu0 0.0
        %5483 = vmatpush1.msra.mxu0 0.0
        %5484 = vmatprep.subr.mxu0 0.0
        %5485 = vmatpush1.msra.mxu0 0.0
        %5486 = vmatprep.subr.mxu0 0.0
        %5487 = vmatpush1.msra.mxu0 0.0
        %5488 = vmatprep.subr.mxu0 0.0
        %5489 = vmatpush1.msra.mxu0 0.0
        %5490 = vmatprep.subr.mxu0 0.0
        %5491 = vmatpush1.msra.mxu0 0.0
        %5492 = vmatprep.subr.mxu0 0.0
        %5493 = vmatpush1.msra.mxu0 0.0
        %5494 = vmatprep.subr.mxu0 0.0
        %5495 = vmatpush1.msra.mxu0 0.0
        %5496 = vmatprep.subr.mxu0 0.0
        %5497 = vmatpush1.msra.mxu0 0.0
        %5498 = vmatprep.subr.mxu0 0.0
        %5499 = vmatpush1.msra.mxu0 0.0
        %5500 = vmatprep.subr.mxu0 0.0
        %5501 = vmatpush1.msra.mxu0 0.0
        %5502 = vmatprep.subr.mxu0 0.0
        %5503 = vmatpush1.msra.mxu0 0.0
        %5504 = vmatprep.subr.mxu0 0.0
        %5505 = vmatpush1.msra.mxu0 0.0
        %5506 = vmatprep.subr.mxu0 0.0
        %5507 = vmatpush1.msra.mxu0 0.0
        %5508 = vmatprep.subr.mxu0 0.0
        %5509 = vmatpush1.msra.mxu0 0.0
        %5510 = vmatprep.subr.mxu0 0.0
        %5511 = vmatpush1.msra.mxu0 0.0
        %5512 = vmatprep.mubr.f32.mxu0 0.0
        %5513 = vmatmul.mubr.f32.gmra.mrb[0].mxu0 %v5401
        %v5514 = vpop.f32.mrb[0].mxu0
        %v5515 = vadd.f32 %v5398, %v5514
        %v5516 = vpop.f32.mrb[0].mxu0
        %5517 = vmatprep.mubr.f32.mxu0 0.0
        %5518 = vmatmul.mubr.f32.gmra.mrb[0].mxu0 %v5404
        %v5519 = vpop.f32.mrb[0].mxu0
        %v5520 = vadd.f32 %v5398, %v5519
        %v5521 = vpop.f32.mrb[0].mxu0
        %5522 = vmatprep.mubr.f32.mxu0 0.0
        %5523 = vmatmul.mubr.f32.gmra.mrb[0].mxu0 %v5407
        %v5524 = vpop.f32.mrb[0].mxu0
        %v5525 = vadd.f32 %v5398, %v5524
        %v5526 = vpop.f32.mrb[0].mxu0
        %5527 = vmatprep.mubr.f32.mxu0 0.0
        %5528 = vmatmul.mubr.f32.gmra.mrb[0].mxu0 %v5410
        %v5529 = vpop.f32.mrb[0].mxu0
        %v5530 = vadd.f32 %v5398, %v5529
        %v5531 = vpop.f32.mrb[0].mxu0
        %5532 = vmatprep.mubr.f32.mxu0 0.0
        %5533 = vmatmul.mubr.f32.gmra.mrb[0].mxu0 %v5413
        %v5534 = vpop.f32.mrb[0].mxu0
        %v5535 = vadd.f32 %v5398, %v5534
        %v5536 = vpop.f32.mrb[0].mxu0
        %5537 = vmatprep.mubr.f32.mxu0 0.0
        %5538 = vmatmul.mubr.f32.gmra.mrb[0].mxu0 %v5416
        %v5539 = vpop.f32.mrb[0].mxu0
        %v5540 = vadd.f32 %v5398, %v5539
        %v5541 = vpop.f32.mrb[0].mxu0
        %5542 = vmatprep.mubr.f32.mxu0 0.0
        %5543 = vmatmul.mubr.f32.gmra.mrb[0].mxu0 %v5419
        %v5544 = vpop.f32.mrb[0].mxu0
        %v5545 = vadd.f32 %v5398, %v5544
        %v5546 = vpop.f32.mrb[0].mxu0
        %5547 = vmatprep.mubr.f32.mxu0 0.0
        %5548 = vmatmul.mubr.f32.gmra.mrb[0].mxu0 %v5422
        %v5549 = vpop.f32.mrb[0].mxu0
        %v5550 = vadd.f32 %v5398, %v5549
        %v5551 = vpop.f32.mrb[0].mxu0
        %5552 = vmatprep.mubr.f32.mxu0 0.0
        %5553 = vmatmul.mubr.f32.gmra.mrb[0].mxu0 %v5425
        %v5554 = vpop.f32.mrb[0].mxu0
        %v5555 = vadd.f32 %v5398, %v5554
        %v5556 = vpop.f32.mrb[0].mxu0
        %5557 = vmatprep.mubr.f32.mxu0 0.0
        %5558 = vmatmul.mubr.f32.gmra.mrb[0].mxu0 %v5428
        %v5559 = vpop.f32.mrb[0].mxu0
        %v5560 = vadd.f32 %v5398, %v5559
        %v5561 = vpop.f32.mrb[0].mxu0
        %5562 = vmatprep.mubr.f32.mxu0 0.0
        %5563 = vmatmul.mubr.f32.gmra.mrb[0].mxu0 %v5431
        %v5564 = vpop.f32.mrb[0].mxu0
        %v5565 = vadd.f32 %v5398, %v5564
        %v5566 = vpop.f32.mrb[0].mxu0
        %5567 = vmatprep.mubr.f32.mxu0 0.0
        %5568 = vmatmul.mubr.f32.gmra.mrb[0].mxu0 %v5434
        %v5569 = vpop.f32.mrb[0].mxu0
        %v5570 = vadd.f32 %v5398, %v5569
        %v5571 = vpop.f32.mrb[0].mxu0
        %5572 = vmatprep.mubr.f32.mxu0 0.0
        %5573 = vmatmul.mubr.f32.gmra.mrb[0].mxu0 %v5437
        %v5574 = vpop.f32.mrb[0].mxu0
        %v5575 = vadd.f32 %v5398, %v5574
        %v5576 = vpop.f32.mrb[0].mxu0
        %5577 = vmatprep.mubr.f32.mxu0 0.0
        %5578 = vmatmul.mubr.f32.gmra.mrb[0].mxu0 %v5440
        %v5579 = vpop.f32.mrb[0].mxu0
        %v5580 = vadd.f32 %v5398, %v5579
        %v5581 = vpop.f32.mrb[0].mxu0
        %5582 = vmatprep.mubr.f32.mxu0 0.0
        %5583 = vmatmul.mubr.f32.gmra.mrb[0].mxu0 %v5443
        %v5584 = vpop.f32.mrb[0].mxu0
        %v5585 = vadd.f32 %v5398, %v5584
        %v5586 = vpop.f32.mrb[0].mxu0
        %5587 = vmatprep.mubr.f32.mxu0 0.0
        %5588 = vmatmul.mubr.f32.gmra.mrb[0].mxu0 %v5446
        %v5589 = vpop.f32.mrb[0].mxu0
        %v5590 = vadd.f32 %v5398, %v5589
        %v5591 = vpop.f32.mrb[0].mxu0
        %5592 = vdwg.mxu0
        %v5593 = vld [vmem:[%s1436] sm:$0xff]
        %v5594 = vld [vmem:[%s1436 + $0x8] sm:$0xff]
        %v5595 = vld [vmem:[%s1436 + $0x10] sm:$0xff]
        %v5596 = vld [vmem:[%s1436 + $0x18] sm:$0xff]
        %v5597 = vld [vmem:[%s1436 + $0x20] sm:$0xff]
        %v5598 = vld [vmem:[%s1436 + $0x28] sm:$0xff]
        %v5599 = vld [vmem:[%s1436 + $0x30] sm:$0xff]
        %v5600 = vld [vmem:[%s1436 + $0x38] sm:$0xff]
        %v5601 = vld [vmem:[%s1436 + $0x100] sm:$0xff]
        %v5602 = vld [vmem:[%s1436 + $0x108] sm:$0xff]
        %v5603 = vld [vmem:[%s1436 + $0x110] sm:$0xff]
        %v5604 = vld [vmem:[%s1436 + $0x118] sm:$0xff]
        %v5605 = vld [vmem:[%s1436 + $0x120] sm:$0xff]
        %v5606 = vld [vmem:[%s1436 + $0x128] sm:$0xff]
        %v5607 = vld [vmem:[%s1436 + $0x130] sm:$0xff]
        %v5608 = vld [vmem:[%s1436 + $0x138] sm:$0xff]
        %v5609 = vadd.f32 %v5515, %v5593
        %v5610 = vadd.f32 %v5520, %v5594
        %v5611 = vadd.f32 %v5525, %v5595
        %v5612 = vadd.f32 %v5530, %v5596
        %v5613 = vadd.f32 %v5535, %v5597
        %v5614 = vadd.f32 %v5540, %v5598
        %v5615 = vadd.f32 %v5545, %v5599
        %v5616 = vadd.f32 %v5550, %v5600
        %v5617 = vadd.f32 %v5555, %v5601
        %v5618 = vadd.f32 %v5560, %v5602
        %v5619 = vadd.f32 %v5565, %v5603
        %v5620 = vadd.f32 %v5570, %v5604
        %v5621 = vadd.f32 %v5575, %v5605
        %v5622 = vadd.f32 %v5580, %v5606
        %v5623 = vadd.f32 %v5585, %v5607
        %v5624 = vadd.f32 %v5590, %v5608
        %s5625 = scalar_lea.vmem %s405, 192 [#allocation7]
        %5626 = vst.msk [vmem:[%s5625] sm:$0xff] %vm514, %v5609
        %5627 = vst.msk [vmem:[%s5625 + $0x8] sm:$0xff] %vm514, %v5610
        %5628 = vst.msk [vmem:[%s5625 + $0x10] sm:$0xff] %vm514, %v5611
        %5629 = vst.msk [vmem:[%s5625 + $0x18] sm:$0xff] %vm514, %v5612
        %5630 = vst.msk [vmem:[%s5625 + $0x20] sm:$0xff] %vm514, %v5613
        %5631 = vst.msk [vmem:[%s5625 + $0x28] sm:$0xff] %vm514, %v5614
        %5632 = vst.msk [vmem:[%s5625 + $0x30] sm:$0xff] %vm514, %v5615
        %5633 = vst.msk [vmem:[%s5625 + $0x38] sm:$0xff] %vm514, %v5616
        %5634 = vst.msk [vmem:[%s5625 + $0x100] sm:$0xff] %vm514, %v5617
        %5635 = vst.msk [vmem:[%s5625 + $0x108] sm:$0xff] %vm514, %v5618
        %5636 = vst.msk [vmem:[%s5625 + $0x110] sm:$0xff] %vm514, %v5619
        %5637 = vst.msk [vmem:[%s5625 + $0x118] sm:$0xff] %vm514, %v5620
        %5638 = vst.msk [vmem:[%s5625 + $0x120] sm:$0xff] %vm514, %v5621
        %5639 = vst.msk [vmem:[%s5625 + $0x128] sm:$0xff] %vm514, %v5622
        %5640 = vst.msk [vmem:[%s5625 + $0x130] sm:$0xff] %vm514, %v5623
        %5641 = vst.msk [vmem:[%s5625 + $0x138] sm:$0xff] %vm514, %v5624
        %s5642 = sand.u32 %s272, 1
        %s5643 = scalar_lea.sflag [#allocation6], %s5642
        %s5644 = sand.u32 %s272, 1
        %s5645 = smul.addr %s5644, 512
        %s5646 = scalar_lea.vmem [#allocation7], %s5645
        // Predicated region
        $region69: #{tpu_custom_call.1} parent=63 // pred_check
          %p5647 = pneg %p282
        $region70: #{tpu_custom_call.1} parent=63 // pred_check_branch
          %5649 = sbr.rel (%p5647) target = $region72
        $region71: #{tpu_custom_call.1} parent=63 // pred_region
          %s5650 = smul.u32 2, %s28
          %s5652 = ssub.s32 8192, 8192
          %5653 = vsyncadd %s5643, %s5652
          %s5654 = smul.addr %s5650, 32
          %s5655 = smul.addr %s5654, 128
          %s5656 = scalar_lea.hbm %s11, %s5655
          %s5657 = sshll.u32 %s5646, 4
          %s5658 = int_to_ptr.vmem [resolvable:$true] %s5657
          %5663 = dma.vmem_to_hbm [thread:$0]  %s5658, 8192, %s5656, %s5643, 128, 128, 8
        $region72: #{tpu_custom_call.1} parent=63 // pred_fallthru
          _
      $region64: #{tpu_custom_call.1} parent=5 // pred_fallthru
        _
      %p5664 = scmp.le.s32.totalorder 2, %s23
      // Predicated region
      $region73: #{tpu_custom_call.1} parent=5 // pred_check
        %p5665 = pneg %p5664
      $region74: #{tpu_custom_call.1} parent=5 // pred_check_branch
        %5667 = sbr.rel (%p5665) target = $region76
      $region75: #{tpu_custom_call.1} parent=5 // pred_region
        %s5668 = ssub.s32 %s23, 2
        // Predicated region
        $region77: #{tpu_custom_call.1} parent=75 // pred_check
          %p5669 = pneg %p288
        $region78: #{tpu_custom_call.1} parent=75 // pred_check_branch
          %5671 = sbr.rel (%p5669) target = $region80
        $region79: #{tpu_custom_call.1} parent=75 // pred_region
          %s5672 = sand.u32 %s273, 1
          %s5673 = scalar_lea.sflag [#allocation6], %s5672
          %s5674 = sand.u32 %s273, 1
          %s5675 = smul.addr %s5674, 512
          %s5676 = scalar_lea.vmem [#allocation7], %s5675
          %5677 = dma.done %s5673, 8192
        $region80: #{tpu_custom_call.1} parent=75 // pred_fallthru
          _
      $region76: #{tpu_custom_call.1} parent=5 // pred_fallthru
        _
    $region6: #{tpu_custom_call.1} parent=1 // loop_footer
      %s27 = sadd.s32 1, %s23
    $region7: #{tpu_custom_call.1} parent=1 // loop_footer_branch
      %22 = sbr.rel target = $region3
    $region8: #{tpu_custom_call.1} parent=1 // loop_exit
      _
    %5678 = vsyncpa [#allocation5], 1
    %s5679 = scalar_lea.sflag [#allocation5], 1
    %5680 = vsyncpa %s5679, 1
    %5681 = vsyncpa [#allocation6], 1
    %s5682 = scalar_lea.sflag [#allocation6], 1
    %5683 = vsyncpa %s5682, 1

</llo_original>
